<compile_context>
chip_gen: v6e
topology: v6e:2x2x1
jax: 0.10.0
libtpu: 0.0.40
codegen_flags: <defaults>
</compile_context>

<pallas_src>
import functools

import jax
import jax.numpy as jnp
from jax import lax
from jax.experimental import pallas as pl
from jax.experimental.pallas import tpu as pltpu

_GATE_SCALE = (0.5, 0.5, 1.0, 0.5)   # i, f, g, o  (sigmoid pre-scale folded for i/f/o)
_STATIC_UNROLL_MAX_SEQ = 32


def _round_up(x, m):
    return (x + m - 1) // m * m


def _sigmoid(x):
    # Numerically safe sigmoid; tanh goes to the EUP slot (no divide on VALU).
    return 0.5 * (jnp.tanh(0.5 * x) + 1.0)


def decoder_lstm_kernel(x_ref, wih_ref, whh_ref, b_ref, wlin_ref, blin_ref,
                        out_ref, seq_buf, gx_buf, *, seq_len, batch_blk):
    """One batch shard's full forward pass.

    x_ref:    (S*Bblk, Hp)   bf16 time-major flattened input (rows: t-major)
    wih_ref:  (L, Hp, 4Hp)   bf16 input->gates weights (pre-transposed, padded,
                             sigmoid pre-scale folded into i/f/o columns)
    whh_ref:  (L, Hp, 4Hp)   bf16 hidden->gates weights (same layout)
    b_ref:    (L, 1, 4Hp)    f32 combined bias (b_ih + b_hh, pre-scaled)
    wlin_ref: (Hp, Ip)       bf16 output projection (pre-transposed, padded)
    blin_ref: (1, Ip)        f32 output projection bias (padded)
    out_ref:  (S*Bblk, Ip)   sigmoid(linear(lstm(x)))
    seq_buf:  VMEM (S*Bblk, Hp)  bf16 current layer's hidden-state sequence
    gx_buf:   VMEM (S*Bblk, 4Hp) f32 precomputed input->gates (+ bias)
    """
    Hp = x_ref.shape[1]
    L = wih_ref.shape[0]

    for l in range(L):                       # trace-time constant -> static unroll
        wih = wih_ref[l]                     # (Hp, 4Hp) bf16
        whh = whh_ref[l]                     # (Hp, 4Hp) bf16
        b = b_ref[l]                         # (1, 4Hp)  f32

        # Layer-0 reads the input ref directly; deeper layers read the previous
        # layer's hidden sequence (already bf16) from seq_buf.
        layer_in = x_ref[...] if l == 0 else seq_buf[...]

        # Hoisted input->gates matmul for the entire sequence: one big MXU call,
        # bias folded in so nothing but h @ whh remains on the serial path.
        gx_buf[...] = jnp.dot(layer_in, wih,
                              preferred_element_type=jnp.float32) + b

        h = jnp.zeros((batch_blk, Hp), jnp.float32)
        c = jnp.zeros((batch_blk, Hp), jnp.float32)

        def cell(row, h, c):
            gx = gx_buf[pl.ds(row, batch_blk), :]
            gates = gx + jnp.dot(h.astype(whh.dtype), whh,
                                 preferred_element_type=jnp.float32)
            # One full-width tanh over all 4 gates (sigmoid pre-scale already in
            # the weights); per-gate slices are whole lane tiles (Hp % 128 == 0).
            t_all = jnp.tanh(gates)
            i_g = 0.5 * (t_all[:, 0 * Hp:1 * Hp] + 1.0)
            f_g = 0.5 * (t_all[:, 1 * Hp:2 * Hp] + 1.0)
            g_g = t_all[:, 2 * Hp:3 * Hp]
            o_g = 0.5 * (t_all[:, 3 * Hp:4 * Hp] + 1.0)
            c = f_g * c + i_g * g_g
            h = o_g * jnp.tanh(c)
            seq_buf[pl.ds(row, batch_blk), :] = h.astype(seq_buf.dtype)
            return h, c

        if seq_len <= _STATIC_UNROLL_MAX_SEQ:
            for t in range(seq_len):         # static unroll; all slices static
                h, c = cell(t * batch_blk, h, c)
        else:
            def body(t, carry):
                h, c = carry
                row = pl.multiple_of(t * batch_blk, batch_blk)
                return cell(row, h, c)
            h, c = lax.fori_loop(0, seq_len, body, (h, c), unroll=4)

    # Final projection + sigmoid for the whole sequence: one lane-dense matmul,
    # one unmasked store.
    y = jnp.dot(seq_buf[...], wlin_ref[...],
                preferred_element_type=jnp.float32) + blin_ref[...]
    out_ref[...] = _sigmoid(y).astype(out_ref.dtype)


def _pack_gate_weights(w, H, Hp):
    """(L, 4H, H) -> (L, Hp, 4Hp): per-gate transpose + zero pad + sigmoid pre-scale."""
    L = w.shape[0]
    out = jnp.zeros((L, Hp, 4 * Hp), jnp.float32)
    for g in range(4):
        blk = jnp.transpose(w[:, g * H:(g + 1) * H, :], (0, 2, 1)) * _GATE_SCALE[g]
        out = out.at[:, :H, g * Hp:g * Hp + H].set(blk)
    return out.astype(jnp.bfloat16)


def _pack_gate_bias(b, H, Hp):
    """(L, 4H) -> (L, 1, 4Hp): zero pad + sigmoid pre-scale (kept f32)."""
    L = b.shape[0]
    out = jnp.zeros((L, 1, 4 * Hp), jnp.float32)
    for g in range(4):
        out = out.at[:, 0, g * Hp:g * Hp + H].set(b[:, g * H:(g + 1) * H] * _GATE_SCALE[g])
    return out


def decoder_lstm_forward(x, params, *, batch_shards=1):
    """x: (B, S, H) batch_first, like the PyTorch module. Returns (B, S, I).

    batch_shards: number of independent batch shards run as grid programs with
    dimension_semantics=("parallel",) (use 2 on v7x). Automatically disabled
    when a shard would hold fewer than 8 real batch rows.
    """
    B, S, H = x.shape
    wih, whh = params["wih"], params["whh"]       # (L, 4H, H)
    bih, bhh = params["bih"], params["bhh"]       # (L, 4H)
    wlin, blin = params["wlin"], params["blin"]   # (I, H), (I,)
    L = wih.shape[0]
    I = wlin.shape[0]

    # ---- layout / padding decisions -------------------------------------
    n = max(1, int(batch_shards))
    if (B + n - 1) // n < 8:          # sharding would leave <1 sublane tile of
        n = 1                         # real rows per core -> run on one core.
    Bblk = _round_up((B + n - 1) // n, 8)      # sublane-aligned batch block
    Bp = n * Bblk
    Hp = _round_up(H, 128)                     # lane-aligned gate stride
    Ip = _round_up(I, 128)                     # lane-dense output width
    SB = S * Bblk

    # ---- glue (plain JAX, outside the kernel) ----------------------------
    x_p = jnp.zeros((Bp, S, Hp), jnp.float32).at[:B, :, :H].set(
        x.astype(jnp.float32))
    # (Bp,S,Hp) -> (n, Bblk, S, Hp) -> (n, S, Bblk, Hp) -> (n, S*Bblk, Hp)
    x_sh = x_p.reshape(n, Bblk, S, Hp).transpose(0, 2, 1, 3).reshape(
        n, SB, Hp).astype(jnp.bfloat16)

    wih_t = _pack_gate_weights(wih.astype(jnp.float32), H, Hp)   # (L, Hp, 4Hp) bf16
    whh_t = _pack_gate_weights(whh.astype(jnp.float32), H, Hp)   # (L, Hp, 4Hp) bf16
    b_t = _pack_gate_bias((bih + bhh).astype(jnp.float32), H, Hp)  # (L, 1, 4Hp) f32
    wlin_t = jnp.zeros((Hp, Ip), jnp.float32).at[:H, :I].set(
        jnp.transpose(wlin, (1, 0)).astype(jnp.float32)).astype(jnp.bfloat16)
    blin_t = jnp.zeros((1, Ip), jnp.float32).at[0, :I].set(
        blin.astype(jnp.float32))

    # ---- VMEM budget (conservative: double-buffered everything) ----------
    f32b, bf16b = 4, 2
    resident = (
        2 * SB * Hp * bf16b                    # x block
        + 2 * 2 * L * Hp * 4 * Hp * bf16b      # wih + whh
        + 2 * L * 4 * Hp * f32b                # bias
        + 2 * (Hp * Ip * bf16b + Ip * f32b)    # projection weights
        + 2 * SB * Ip * f32b                   # out block
        + SB * Hp * bf16b                      # seq_buf scratch
        + SB * 4 * Hp * f32b                   # gx_buf scratch
    )
    try:
        vmem_cap = int(pltpu.get_tpu_info().vmem_capacity_bytes)
    except Exception:
        vmem_cap = 128 * 2**20
    ceiling = max(vmem_cap - max(16 * 2**20, vmem_cap // 8), 32 * 2**20)
    vmem_limit = int(min(max(2 * resident, 32 * 2**20), ceiling))

    kernel = functools.partial(decoder_lstm_kernel, seq_len=S, batch_blk=Bblk)

    def run(single_buffer_weights):
        weight_kw = ({"pipeline_mode": pl.Buffered(1)}
                     if single_buffer_weights else {})
        call = pl.pallas_call(
            kernel,
            out_shape=jax.ShapeDtypeStruct((n, SB, Ip), jnp.float32),
            grid_spec=pltpu.PrefetchScalarGridSpec(
                num_scalar_prefetch=0,
                grid=(n,),
                in_specs=[
                    pl.BlockSpec((None, SB, Hp), lambda j: (j, 0, 0)),         # x shard
                    pl.BlockSpec((L, Hp, 4 * Hp), lambda j: (0, 0, 0), **weight_kw),
                    pl.BlockSpec((L, Hp, 4 * Hp), lambda j: (0, 0, 0), **weight_kw),
                    pl.BlockSpec((L, 1, 4 * Hp), lambda j: (0, 0, 0), **weight_kw),
                    pl.BlockSpec((Hp, Ip), lambda j: (0, 0), **weight_kw),
                    pl.BlockSpec((1, Ip), lambda j: (0, 0), **weight_kw),
                ],
                out_specs=pl.BlockSpec((None, SB, Ip), lambda j: (j, 0, 0)),
                scratch_shapes=[
                    pltpu.VMEM((SB, Hp), jnp.bfloat16),      # hidden-state sequence
                    pltpu.VMEM((SB, 4 * Hp), jnp.float32),   # precomputed input gates
                ],
            ),
            compiler_params=pltpu.CompilerParams(
                dimension_semantics=("parallel",),
                vmem_limit_bytes=vmem_limit),
        )
        return jax.block_until_ready(
            call(x_sh, wih_t, whh_t, b_t, wlin_t, blin_t))

    try:
        out_sh = run(True)
    except Exception:
        # TODO(synk): drop fallback once pipeline_mode=pl.Buffered(1) is
        # guaranteed by the minimum supported jax version.
        out_sh = run(False)

    # (n, S*Bblk, Ip) -> (n, S, Bblk, Ip) -> (Bp, S, Ip) -> slice off padding.
    out = out_sh.reshape(n, S, Bblk, Ip).transpose(0, 2, 1, 3).reshape(Bp, S, Ip)
    return out[:B, :, :I]


def decoder_lstm_reference(x, params):
    """Pure-JAX reference matching torch.nn.LSTM + Linear + Sigmoid (f32, HIGHEST)."""
    B, S, H = x.shape
    L = params["wih"].shape[0]
    inp = x.astype(jnp.float32)
    hp = lax.Precision.HIGHEST
    for l in range(L):
        wih, whh = params["wih"][l], params["whh"][l]
        b = params["bih"][l] + params["bhh"][l]
        h = jnp.zeros((B, H), jnp.float32)
        c = jnp.zeros((B, H), jnp.float32)
        outs = []
        for t in range(S):
            gates = (jnp.dot(inp[:, t, :], wih.T, precision=hp)
                     + jnp.dot(h, whh.T, precision=hp) + b)
            i_g = jax.nn.sigmoid(gates[:, 0 * H:1 * H])
            f_g = jax.nn.sigmoid(gates[:, 1 * H:2 * H])
            g_g = jnp.tanh(gates[:, 2 * H:3 * H])
            o_g = jax.nn.sigmoid(gates[:, 3 * H:4 * H])
            c = f_g * c + i_g * g_g
            h = o_g * jnp.tanh(c)
            outs.append(h)
        inp = jnp.stack(outs, axis=1)
    y = jnp.dot(inp, params["wlin"].T, precision=hp) + params["blin"]
    return jax.nn.sigmoid(y)


def init_params(key, input_size, hidden_size, num_layers):
    """Deterministic synthetic params, PyTorch-like uniform(-1/sqrt(H), 1/sqrt(H))."""
    H, I, L = hidden_size, input_size, num_layers
    k = 1.0 / jnp.sqrt(jnp.float32(H))
    keys = jax.random.split(key, 6)
    u = lambda kk, shape: jax.random.uniform(kk, shape, jnp.float32, -k, k)
    return {
        "wih": u(keys[0], (L, 4 * H, H)),
        "whh": u(keys[1], (L, 4 * H, H)),
        "bih": u(keys[2], (L, 4 * H)),
        "bhh": u(keys[3], (L, 4 * H)),
        "wlin": u(keys[4], (I, H)),
        "blin": u(keys[5], (I,)),
    }


if __name__ == "__main__":
    input_size = 16   # decoder output feature size
    hidden_size = 32  # LSTM hidden size (also the input feature size of x)
    num_layers = 2
    batch = 2
    seq = 8

    root = jax.random.PRNGKey(0)
    kx, kp = jax.random.split(root)
    x = jax.random.uniform(kx, (batch, seq, hidden_size), jnp.float32)
    params = init_params(kp, input_size, hidden_size, num_layers)

    # batch_shards=2 is requested but auto-disabled here (B/2 < 8 real rows).
    out = decoder_lstm_forward(x, params, batch_shards=2)
    out = jax.block_until_ready(out)

    ref = jax.block_until_ready(decoder_lstm_reference(x, params))

    assert out.shape == (batch, seq, input_size), out.shape
    assert bool(jnp.all(jnp.isfinite(out)))
    # bf16 matmul operands (same rounding as default MXU precision) vs. the
    # f32-HIGHEST reference -> loosened tolerance.
    assert bool(jnp.allclose(out, ref, rtol=5e-3, atol=5e-3)), (
        float(jnp.max(jnp.abs(out - ref))))

    print("KERNEL_OK")
</pallas_src>

<mosaic_0001>
module attributes {stable_mosaic.version = 11 : i64} {
  func.func @decoder_lstm_kernel(%arg0: i32, %arg1: memref<1x64x128xbf16, #tpu.memory_space<vmem>>, %arg2: memref<2x128x512xbf16, #tpu.memory_space<vmem>>, %arg3: memref<2x128x512xbf16, #tpu.memory_space<vmem>>, %arg4: memref<2x1x512xf32, #tpu.memory_space<vmem>>, %arg5: memref<128x128xbf16, #tpu.memory_space<vmem>>, %arg6: memref<1x128xf32, #tpu.memory_space<vmem>>, %arg7: memref<1x64x128xf32, #tpu.memory_space<vmem>>, %arg8: memref<64x128xbf16, #tpu.memory_space<vmem>>, %arg9: memref<64x512xf32, #tpu.memory_space<vmem>>) attributes {dimension_semantics = [#tpu.dimension_semantics<parallel>], iteration_bounds = array<i64: 1>, scalar_prefetch = 0 : i64, scratch_operands = 2 : i64, tpu.core_type = #tpu.core_type<tc>, window_params = [{transform_indices = @transform_0, window_bounds = array<i64: 1, 64, 128>}, {pipeline_mode = #tpu.pipeline_mode<synchronous>, transform_indices = @transform_1, window_bounds = array<i64: 2, 128, 512>}, {pipeline_mode = #tpu.pipeline_mode<synchronous>, transform_indices = @transform_2, window_bounds = array<i64: 2, 128, 512>}, {pipeline_mode = #tpu.pipeline_mode<synchronous>, transform_indices = @transform_3, window_bounds = array<i64: 2, 1, 512>}, {pipeline_mode = #tpu.pipeline_mode<synchronous>, transform_indices = @transform_4, window_bounds = array<i64: 128, 128>}, {pipeline_mode = #tpu.pipeline_mode<synchronous>, transform_indices = @transform_5, window_bounds = array<i64: 1, 128>}, {transform_indices = @transform_6, window_bounds = array<i64: 1, 64, 128>}]} {
    %c0 = arith.constant 0 : index
    %c0_0 = arith.constant 0 : index
    %c0_1 = arith.constant 0 : index
    %0 = vector.load %arg2[%c0, %c0_0, %c0_1] : memref<2x128x512xbf16, #tpu.memory_space<vmem>>, vector<1x128x512xbf16>
    %1 = vector.shape_cast %0 : vector<1x128x512xbf16> to vector<128x512xbf16>
    %c0_2 = arith.constant 0 : index
    %c0_3 = arith.constant 0 : index
    %c0_4 = arith.constant 0 : index
    %2 = vector.load %arg3[%c0_2, %c0_3, %c0_4] : memref<2x128x512xbf16, #tpu.memory_space<vmem>>, vector<1x128x512xbf16>
    %3 = vector.shape_cast %2 : vector<1x128x512xbf16> to vector<128x512xbf16>
    %c0_5 = arith.constant 0 : index
    %c0_6 = arith.constant 0 : index
    %c0_7 = arith.constant 0 : index
    %4 = vector.load %arg4[%c0_5, %c0_6, %c0_7] : memref<2x1x512xf32, #tpu.memory_space<vmem>>, vector<1x1x512xf32>
    %5 = vector.shape_cast %4 : vector<1x1x512xf32> to vector<1x512xf32>
    %c0_8 = arith.constant 0 : index
    %c0_9 = arith.constant 0 : index
    %c0_10 = arith.constant 0 : index
    %6 = vector.load %arg1[%c0_8, %c0_9, %c0_10] : memref<1x64x128xbf16, #tpu.memory_space<vmem>>, vector<1x64x128xbf16>
    %7 = vector.shape_cast %6 : vector<1x64x128xbf16> to vector<64x128xbf16>
    %cst = arith.constant dense<0.000000e+00> : vector<64x512xf32>
    %8 = tpu.matmul %7, %1, %cst {dimension_numbers = #tpu.dot_dimension_numbers<[1], [0], [0], [1], [0, 0, 1, 1], [], []>} : vector<64x128xbf16>, vector<128x512xbf16>, vector<64x512xf32> -> vector<64x512xf32>
    %9 = vector.broadcast %5 : vector<1x512xf32> to vector<64x512xf32>
    %10 = arith.addf %8, %9 : vector<64x512xf32>
    %c0_11 = arith.constant 0 : index
    %c0_12 = arith.constant 0 : index
    %11 = vector.load %arg9[%c0_11, %c0_12] : memref<64x512xf32, #tpu.memory_space<vmem>>, vector<64x512xf32>
    tpu.vector_store %arg9[%c0_11, %c0_12], %10 {strides = array<i32>} : memref<64x512xf32, #tpu.memory_space<vmem>>, vector<64x512xf32>,
    %cst_13 = arith.constant 0.000000e+00 : f32
    %12 = vector.broadcast %cst_13 : f32 to vector<8x128xf32>
    %cst_14 = arith.constant 0.000000e+00 : f32
    %13 = vector.broadcast %cst_14 : f32 to vector<8x128xf32>
    %c0_15 = arith.constant 0 : index
    %c0_16 = arith.constant 0 : index
    %14 = vector.load %arg9[%c0_15, %c0_16] : memref<64x512xf32, #tpu.memory_space<vmem>>, vector<8x512xf32>
    %15 = arith.truncf %12 : vector<8x128xf32> to vector<8x128xbf16>
    %cst_17 = arith.constant dense<0.000000e+00> : vector<8x512xf32>
    %16 = tpu.matmul %15, %3, %cst_17 {dimension_numbers = #tpu.dot_dimension_numbers<[1], [0], [0], [1], [0, 0, 1, 1], [], []>} : vector<8x128xbf16>, vector<128x512xbf16>, vector<8x512xf32> -> vector<8x512xf32>
    %17 = arith.addf %14, %16 : vector<8x512xf32>
    %18 = math.tanh %17 : vector<8x512xf32>
    %19 = vector.extract_strided_slice %18 {offsets = [0, 0], sizes = [8, 128], strides = [1, 1]} : vector<8x512xf32> to vector<8x128xf32>
    %cst_18 = arith.constant 1.000000e+00 : f32
    %20 = vector.broadcast %cst_18 : f32 to vector<8x128xf32>
    %21 = arith.addf %19, %20 : vector<8x128xf32>
    %cst_19 = arith.constant 5.000000e-01 : f32
    %22 = vector.broadcast %cst_19 : f32 to vector<8x128xf32>
    %23 = arith.mulf %22, %21 : vector<8x128xf32>
    %24 = vector.extract_strided_slice %18 {offsets = [0, 128], sizes = [8, 128], strides = [1, 1]} : vector<8x512xf32> to vector<8x128xf32>
    %cst_20 = arith.constant 1.000000e+00 : f32
    %25 = vector.broadcast %cst_20 : f32 to vector<8x128xf32>
    %26 = arith.addf %24, %25 : vector<8x128xf32>
    %cst_21 = arith.constant 5.000000e-01 : f32
    %27 = vector.broadcast %cst_21 : f32 to vector<8x128xf32>
    %28 = arith.mulf %27, %26 : vector<8x128xf32>
    %29 = vector.extract_strided_slice %18 {offsets = [0, 256], sizes = [8, 128], strides = [1, 1]} : vector<8x512xf32> to vector<8x128xf32>
    %30 = vector.extract_strided_slice %18 {offsets = [0, 384], sizes = [8, 128], strides = [1, 1]} : vector<8x512xf32> to vector<8x128xf32>
    %cst_22 = arith.constant 1.000000e+00 : f32
    %31 = vector.broadcast %cst_22 : f32 to vector<8x128xf32>
    %32 = arith.addf %30, %31 : vector<8x128xf32>
    %cst_23 = arith.constant 5.000000e-01 : f32
    %33 = vector.broadcast %cst_23 : f32 to vector<8x128xf32>
    %34 = arith.mulf %33, %32 : vector<8x128xf32>
    %35 = arith.mulf %28, %13 : vector<8x128xf32>
    %36 = arith.mulf %23, %29 : vector<8x128xf32>
    %37 = arith.addf %35, %36 : vector<8x128xf32>
    %38 = math.tanh %37 : vector<8x128xf32>
    %39 = arith.mulf %34, %38 : vector<8x128xf32>
    %40 = arith.truncf %39 : vector<8x128xf32> to vector<8x128xbf16>
    %c0_24 = arith.constant 0 : index
    %c0_25 = arith.constant 0 : index
    %41 = vector.load %arg8[%c0_24, %c0_25] : memref<64x128xbf16, #tpu.memory_space<vmem>>, vector<8x128xbf16>
    tpu.vector_store %arg8[%c0_24, %c0_25], %40 {strides = array<i32>} : memref<64x128xbf16, #tpu.memory_space<vmem>>, vector<8x128xbf16>,
    %c8 = arith.constant 8 : index
    %c0_26 = arith.constant 0 : index
    %42 = vector.load %arg9[%c8, %c0_26] : memref<64x512xf32, #tpu.memory_space<vmem>>, vector<8x512xf32>
    %43 = arith.truncf %39 : vector<8x128xf32> to vector<8x128xbf16>
    %cst_27 = arith.constant dense<0.000000e+00> : vector<8x512xf32>
    %44 = tpu.matmul %43, %3, %cst_27 {dimension_numbers = #tpu.dot_dimension_numbers<[1], [0], [0], [1], [0, 0, 1, 1], [], []>} : vector<8x128xbf16>, vector<128x512xbf16>, vector<8x512xf32> -> vector<8x512xf32>
    %45 = arith.addf %42, %44 : vector<8x512xf32>
    %46 = math.tanh %45 : vector<8x512xf32>
    %47 = vector.extract_strided_slice %46 {offsets = [0, 0], sizes = [8, 128], strides = [1, 1]} : vector<8x512xf32> to vector<8x128xf32>
    %cst_28 = arith.constant 1.000000e+00 : f32
    %48 = vector.broadcast %cst_28 : f32 to vector<8x128xf32>
    %49 = arith.addf %47, %48 : vector<8x128xf32>
    %cst_29 = arith.constant 5.000000e-01 : f32
    %50 = vector.broadcast %cst_29 : f32 to vector<8x128xf32>
    %51 = arith.mulf %50, %49 : vector<8x128xf32>
    %52 = vector.extract_strided_slice %46 {offsets = [0, 128], sizes = [8, 128], strides = [1, 1]} : vector<8x512xf32> to vector<8x128xf32>
    %cst_30 = arith.constant 1.000000e+00 : f32
    %53 = vector.broadcast %cst_30 : f32 to vector<8x128xf32>
    %54 = arith.addf %52, %53 : vector<8x128xf32>
    %cst_31 = arith.constant 5.000000e-01 : f32
    %55 = vector.broadcast %cst_31 : f32 to vector<8x128xf32>
    %56 = arith.mulf %55, %54 : vector<8x128xf32>
    %57 = vector.extract_strided_slice %46 {offsets = [0, 256], sizes = [8, 128], strides = [1, 1]} : vector<8x512xf32> to vector<8x128xf32>
    %58 = vector.extract_strided_slice %46 {offsets = [0, 384], sizes = [8, 128], strides = [1, 1]} : vector<8x512xf32> to vector<8x128xf32>
    %cst_32 = arith.constant 1.000000e+00 : f32
    %59 = vector.broadcast %cst_32 : f32 to vector<8x128xf32>
    %60 = arith.addf %58, %59 : vector<8x128xf32>
    %cst_33 = arith.constant 5.000000e-01 : f32
    %61 = vector.broadcast %cst_33 : f32 to vector<8x128xf32>
    %62 = arith.mulf %61, %60 : vector<8x128xf32>
    %63 = arith.mulf %56, %37 : vector<8x128xf32>
    %64 = arith.mulf %51, %57 : vector<8x128xf32>
    %65 = arith.addf %63, %64 : vector<8x128xf32>
    %66 = math.tanh %65 : vector<8x128xf32>
    %67 = arith.mulf %62, %66 : vector<8x128xf32>
    %68 = arith.truncf %67 : vector<8x128xf32> to vector<8x128xbf16>
    %c8_34 = arith.constant 8 : index
    %c0_35 = arith.constant 0 : index
    %69 = vector.load %arg8[%c8_34, %c0_35] : memref<64x128xbf16, #tpu.memory_space<vmem>>, vector<8x128xbf16>
    tpu.vector_store %arg8[%c8_34, %c0_35], %68 {strides = array<i32>} : memref<64x128xbf16, #tpu.memory_space<vmem>>, vector<8x128xbf16>,
    %c16 = arith.constant 16 : index
    %c0_36 = arith.constant 0 : index
    %70 = vector.load %arg9[%c16, %c0_36] : memref<64x512xf32, #tpu.memory_space<vmem>>, vector<8x512xf32>
    %71 = arith.truncf %67 : vector<8x128xf32> to vector<8x128xbf16>
    %cst_37 = arith.constant dense<0.000000e+00> : vector<8x512xf32>
    %72 = tpu.matmul %71, %3, %cst_37 {dimension_numbers = #tpu.dot_dimension_numbers<[1], [0], [0], [1], [0, 0, 1, 1], [], []>} : vector<8x128xbf16>, vector<128x512xbf16>, vector<8x512xf32> -> vector<8x512xf32>
    %73 = arith.addf %70, %72 : vector<8x512xf32>
    %74 = math.tanh %73 : vector<8x512xf32>
    %75 = vector.extract_strided_slice %74 {offsets = [0, 0], sizes = [8, 128], strides = [1, 1]} : vector<8x512xf32> to vector<8x128xf32>
    %cst_38 = arith.constant 1.000000e+00 : f32
    %76 = vector.broadcast %cst_38 : f32 to vector<8x128xf32>
    %77 = arith.addf %75, %76 : vector<8x128xf32>
    %cst_39 = arith.constant 5.000000e-01 : f32
    %78 = vector.broadcast %cst_39 : f32 to vector<8x128xf32>
    %79 = arith.mulf %78, %77 : vector<8x128xf32>
    %80 = vector.extract_strided_slice %74 {offsets = [0, 128], sizes = [8, 128], strides = [1, 1]} : vector<8x512xf32> to vector<8x128xf32>
    %cst_40 = arith.constant 1.000000e+00 : f32
    %81 = vector.broadcast %cst_40 : f32 to vector<8x128xf32>
    %82 = arith.addf %80, %81 : vector<8x128xf32>
    %cst_41 = arith.constant 5.000000e-01 : f32
    %83 = vector.broadcast %cst_41 : f32 to vector<8x128xf32>
    %84 = arith.mulf %83, %82 : vector<8x128xf32>
    %85 = vector.extract_strided_slice %74 {offsets = [0, 256], sizes = [8, 128], strides = [1, 1]} : vector<8x512xf32> to vector<8x128xf32>
    %86 = vector.extract_strided_slice %74 {offsets = [0, 384], sizes = [8, 128], strides = [1, 1]} : vector<8x512xf32> to vector<8x128xf32>
    %cst_42 = arith.constant 1.000000e+00 : f32
    %87 = vector.broadcast %cst_42 : f32 to vector<8x128xf32>
    %88 = arith.addf %86, %87 : vector<8x128xf32>
    %cst_43 = arith.constant 5.000000e-01 : f32
    %89 = vector.broadcast %cst_43 : f32 to vector<8x128xf32>
    %90 = arith.mulf %89, %88 : vector<8x128xf32>
    %91 = arith.mulf %84, %65 : vector<8x128xf32>
    %92 = arith.mulf %79, %85 : vector<8x128xf32>
    %93 = arith.addf %91, %92 : vector<8x128xf32>
    %94 = math.tanh %93 : vector<8x128xf32>
    %95 = arith.mulf %90, %94 : vector<8x128xf32>
    %96 = arith.truncf %95 : vector<8x128xf32> to vector<8x128xbf16>
    %c16_44 = arith.constant 16 : index
    %c0_45 = arith.constant 0 : index
    %97 = vector.load %arg8[%c16_44, %c0_45] : memref<64x128xbf16, #tpu.memory_space<vmem>>, vector<8x128xbf16>
    tpu.vector_store %arg8[%c16_44, %c0_45], %96 {strides = array<i32>} : memref<64x128xbf16, #tpu.memory_space<vmem>>, vector<8x128xbf16>,
    %c24 = arith.constant 24 : index
    %c0_46 = arith.constant 0 : index
    %98 = vector.load %arg9[%c24, %c0_46] : memref<64x512xf32, #tpu.memory_space<vmem>>, vector<8x512xf32>
    %99 = arith.truncf %95 : vector<8x128xf32> to vector<8x128xbf16>
    %cst_47 = arith.constant dense<0.000000e+00> : vector<8x512xf32>
    %100 = tpu.matmul %99, %3, %cst_47 {dimension_numbers = #tpu.dot_dimension_numbers<[1], [0], [0], [1], [0, 0, 1, 1], [], []>} : vector<8x128xbf16>, vector<128x512xbf16>, vector<8x512xf32> -> vector<8x512xf32>
    %101 = arith.addf %98, %100 : vector<8x512xf32>
    %102 = math.tanh %101 : vector<8x512xf32>
    %103 = vector.extract_strided_slice %102 {offsets = [0, 0], sizes = [8, 128], strides = [1, 1]} : vector<8x512xf32> to vector<8x128xf32>
    %cst_48 = arith.constant 1.000000e+00 : f32
    %104 = vector.broadcast %cst_48 : f32 to vector<8x128xf32>
    %105 = arith.addf %103, %104 : vector<8x128xf32>
    %cst_49 = arith.constant 5.000000e-01 : f32
    %106 = vector.broadcast %cst_49 : f32 to vector<8x128xf32>
    %107 = arith.mulf %106, %105 : vector<8x128xf32>
    %108 = vector.extract_strided_slice %102 {offsets = [0, 128], sizes = [8, 128], strides = [1, 1]} : vector<8x512xf32> to vector<8x128xf32>
    %cst_50 = arith.constant 1.000000e+00 : f32
    %109 = vector.broadcast %cst_50 : f32 to vector<8x128xf32>
    %110 = arith.addf %108, %109 : vector<8x128xf32>
    %cst_51 = arith.constant 5.000000e-01 : f32
    %111 = vector.broadcast %cst_51 : f32 to vector<8x128xf32>
    %112 = arith.mulf %111, %110 : vector<8x128xf32>
    %113 = vector.extract_strided_slice %102 {offsets = [0, 256], sizes = [8, 128], strides = [1, 1]} : vector<8x512xf32> to vector<8x128xf32>
    %114 = vector.extract_strided_slice %102 {offsets = [0, 384], sizes = [8, 128], strides = [1, 1]} : vector<8x512xf32> to vector<8x128xf32>
    %cst_52 = arith.constant 1.000000e+00 : f32
    %115 = vector.broadcast %cst_52 : f32 to vector<8x128xf32>
    %116 = arith.addf %114, %115 : vector<8x128xf32>
    %cst_53 = arith.constant 5.000000e-01 : f32
    %117 = vector.broadcast %cst_53 : f32 to vector<8x128xf32>
    %118 = arith.mulf %117, %116 : vector<8x128xf32>
    %119 = arith.mulf %112, %93 : vector<8x128xf32>
    %120 = arith.mulf %107, %113 : vector<8x128xf32>
    %121 = arith.addf %119, %120 : vector<8x128xf32>
    %122 = math.tanh %121 : vector<8x128xf32>
    %123 = arith.mulf %118, %122 : vector<8x128xf32>
    %124 = arith.truncf %123 : vector<8x128xf32> to vector<8x128xbf16>
    %c24_54 = arith.constant 24 : index
    %c0_55 = arith.constant 0 : index
    %125 = vector.load %arg8[%c24_54, %c0_55] : memref<64x128xbf16, #tpu.memory_space<vmem>>, vector<8x128xbf16>
    tpu.vector_store %arg8[%c24_54, %c0_55], %124 {strides = array<i32>} : memref<64x128xbf16, #tpu.memory_space<vmem>>, vector<8x128xbf16>,
    %c32 = arith.constant 32 : index
    %c0_56 = arith.constant 0 : index
    %126 = vector.load %arg9[%c32, %c0_56] : memref<64x512xf32, #tpu.memory_space<vmem>>, vector<8x512xf32>
    %127 = arith.truncf %123 : vector<8x128xf32> to vector<8x128xbf16>
    %cst_57 = arith.constant dense<0.000000e+00> : vector<8x512xf32>
    %128 = tpu.matmul %127, %3, %cst_57 {dimension_numbers = #tpu.dot_dimension_numbers<[1], [0], [0], [1], [0, 0, 1, 1], [], []>} : vector<8x128xbf16>, vector<128x512xbf16>, vector<8x512xf32> -> vector<8x512xf32>
    %129 = arith.addf %126, %128 : vector<8x512xf32>
    %130 = math.tanh %129 : vector<8x512xf32>
    %131 = vector.extract_strided_slice %130 {offsets = [0, 0], sizes = [8, 128], strides = [1, 1]} : vector<8x512xf32> to vector<8x128xf32>
    %cst_58 = arith.constant 1.000000e+00 : f32
    %132 = vector.broadcast %cst_58 : f32 to vector<8x128xf32>
    %133 = arith.addf %131, %132 : vector<8x128xf32>
    %cst_59 = arith.constant 5.000000e-01 : f32
    %134 = vector.broadcast %cst_59 : f32 to vector<8x128xf32>
    %135 = arith.mulf %134, %133 : vector<8x128xf32>
    %136 = vector.extract_strided_slice %130 {offsets = [0, 128], sizes = [8, 128], strides = [1, 1]} : vector<8x512xf32> to vector<8x128xf32>
    %cst_60 = arith.constant 1.000000e+00 : f32
    %137 = vector.broadcast %cst_60 : f32 to vector<8x128xf32>
    %138 = arith.addf %136, %137 : vector<8x128xf32>
    %cst_61 = arith.constant 5.000000e-01 : f32
    %139 = vector.broadcast %cst_61 : f32 to vector<8x128xf32>
    %140 = arith.mulf %139, %138 : vector<8x128xf32>
    %141 = vector.extract_strided_slice %130 {offsets = [0, 256], sizes = [8, 128], strides = [1, 1]} : vector<8x512xf32> to vector<8x128xf32>
    %142 = vector.extract_strided_slice %130 {offsets = [0, 384], sizes = [8, 128], strides = [1, 1]} : vector<8x512xf32> to vector<8x128xf32>
    %cst_62 = arith.constant 1.000000e+00 : f32
    %143 = vector.broadcast %cst_62 : f32 to vector<8x128xf32>
    %144 = arith.addf %142, %143 : vector<8x128xf32>
    %cst_63 = arith.constant 5.000000e-01 : f32
    %145 = vector.broadcast %cst_63 : f32 to vector<8x128xf32>
    %146 = arith.mulf %145, %144 : vector<8x128xf32>
    %147 = arith.mulf %140, %121 : vector<8x128xf32>
    %148 = arith.mulf %135, %141 : vector<8x128xf32>
    %149 = arith.addf %147, %148 : vector<8x128xf32>
    %150 = math.tanh %149 : vector<8x128xf32>
    %151 = arith.mulf %146, %150 : vector<8x128xf32>
    %152 = arith.truncf %151 : vector<8x128xf32> to vector<8x128xbf16>
    %c32_64 = arith.constant 32 : index
    %c0_65 = arith.constant 0 : index
    %153 = vector.load %arg8[%c32_64, %c0_65] : memref<64x128xbf16, #tpu.memory_space<vmem>>, vector<8x128xbf16>
    tpu.vector_store %arg8[%c32_64, %c0_65], %152 {strides = array<i32>} : memref<64x128xbf16, #tpu.memory_space<vmem>>, vector<8x128xbf16>,
    %c40 = arith.constant 40 : index
    %c0_66 = arith.constant 0 : index
    %154 = vector.load %arg9[%c40, %c0_66] : memref<64x512xf32, #tpu.memory_space<vmem>>, vector<8x512xf32>
    %155 = arith.truncf %151 : vector<8x128xf32> to vector<8x128xbf16>
    %cst_67 = arith.constant dense<0.000000e+00> : vector<8x512xf32>
    %156 = tpu.matmul %155, %3, %cst_67 {dimension_numbers = #tpu.dot_dimension_numbers<[1], [0], [0], [1], [0, 0, 1, 1], [], []>} : vector<8x128xbf16>, vector<128x512xbf16>, vector<8x512xf32> -> vector<8x512xf32>
    %157 = arith.addf %154, %156 : vector<8x512xf32>
    %158 = math.tanh %157 : vector<8x512xf32>
    %159 = vector.extract_strided_slice %158 {offsets = [0, 0], sizes = [8, 128], strides = [1, 1]} : vector<8x512xf32> to vector<8x128xf32>
    %cst_68 = arith.constant 1.000000e+00 : f32
    %160 = vector.broadcast %cst_68 : f32 to vector<8x128xf32>
    %161 = arith.addf %159, %160 : vector<8x128xf32>
    %cst_69 = arith.constant 5.000000e-01 : f32
    %162 = vector.broadcast %cst_69 : f32 to vector<8x128xf32>
    %163 = arith.mulf %162, %161 : vector<8x128xf32>
    %164 = vector.extract_strided_slice %158 {offsets = [0, 128], sizes = [8, 128], strides = [1, 1]} : vector<8x512xf32> to vector<8x128xf32>
    %cst_70 = arith.constant 1.000000e+00 : f32
    %165 = vector.broadcast %cst_70 : f32 to vector<8x128xf32>
    %166 = arith.addf %164, %165 : vector<8x128xf32>
    %cst_71 = arith.constant 5.000000e-01 : f32
    %167 = vector.broadcast %cst_71 : f32 to vector<8x128xf32>
    %168 = arith.mulf %167, %166 : vector<8x128xf32>
    %169 = vector.extract_strided_slice %158 {offsets = [0, 256], sizes = [8, 128], strides = [1, 1]} : vector<8x512xf32> to vector<8x128xf32>
    %170 = vector.extract_strided_slice %158 {offsets = [0, 384], sizes = [8, 128], strides = [1, 1]} : vector<8x512xf32> to vector<8x128xf32>
    %cst_72 = arith.constant 1.000000e+00 : f32
    %171 = vector.broadcast %cst_72 : f32 to vector<8x128xf32>
    %172 = arith.addf %170, %171 : vector<8x128xf32>
    %cst_73 = arith.constant 5.000000e-01 : f32
    %173 = vector.broadcast %cst_73 : f32 to vector<8x128xf32>
    %174 = arith.mulf %173, %172 : vector<8x128xf32>
    %175 = arith.mulf %168, %149 : vector<8x128xf32>
    %176 = arith.mulf %163, %169 : vector<8x128xf32>
    %177 = arith.addf %175, %176 : vector<8x128xf32>
    %178 = math.tanh %177 : vector<8x128xf32>
    %179 = arith.mulf %174, %178 : vector<8x128xf32>
    %180 = arith.truncf %179 : vector<8x128xf32> to vector<8x128xbf16>
    %c40_74 = arith.constant 40 : index
    %c0_75 = arith.constant 0 : index
    %181 = vector.load %arg8[%c40_74, %c0_75] : memref<64x128xbf16, #tpu.memory_space<vmem>>, vector<8x128xbf16>
    tpu.vector_store %arg8[%c40_74, %c0_75], %180 {strides = array<i32>} : memref<64x128xbf16, #tpu.memory_space<vmem>>, vector<8x128xbf16>,
    %c48 = arith.constant 48 : index
    %c0_76 = arith.constant 0 : index
    %182 = vector.load %arg9[%c48, %c0_76] : memref<64x512xf32, #tpu.memory_space<vmem>>, vector<8x512xf32>
    %183 = arith.truncf %179 : vector<8x128xf32> to vector<8x128xbf16>
    %cst_77 = arith.constant dense<0.000000e+00> : vector<8x512xf32>
    %184 = tpu.matmul %183, %3, %cst_77 {dimension_numbers = #tpu.dot_dimension_numbers<[1], [0], [0], [1], [0, 0, 1, 1], [], []>} : vector<8x128xbf16>, vector<128x512xbf16>, vector<8x512xf32> -> vector<8x512xf32>
    %185 = arith.addf %182, %184 : vector<8x512xf32>
    %186 = math.tanh %185 : vector<8x512xf32>
    %187 = vector.extract_strided_slice %186 {offsets = [0, 0], sizes = [8, 128], strides = [1, 1]} : vector<8x512xf32> to vector<8x128xf32>
    %cst_78 = arith.constant 1.000000e+00 : f32
    %188 = vector.broadcast %cst_78 : f32 to vector<8x128xf32>
    %189 = arith.addf %187, %188 : vector<8x128xf32>
    %cst_79 = arith.constant 5.000000e-01 : f32
    %190 = vector.broadcast %cst_79 : f32 to vector<8x128xf32>
    %191 = arith.mulf %190, %189 : vector<8x128xf32>
    %192 = vector.extract_strided_slice %186 {offsets = [0, 128], sizes = [8, 128], strides = [1, 1]} : vector<8x512xf32> to vector<8x128xf32>
    %cst_80 = arith.constant 1.000000e+00 : f32
    %193 = vector.broadcast %cst_80 : f32 to vector<8x128xf32>
    %194 = arith.addf %192, %193 : vector<8x128xf32>
    %cst_81 = arith.constant 5.000000e-01 : f32
    %195 = vector.broadcast %cst_81 : f32 to vector<8x128xf32>
    %196 = arith.mulf %195, %194 : vector<8x128xf32>
    %197 = vector.extract_strided_slice %186 {offsets = [0, 256], sizes = [8, 128], strides = [1, 1]} : vector<8x512xf32> to vector<8x128xf32>
    %198 = vector.extract_strided_slice %186 {offsets = [0, 384], sizes = [8, 128], strides = [1, 1]} : vector<8x512xf32> to vector<8x128xf32>
    %cst_82 = arith.constant 1.000000e+00 : f32
    %199 = vector.broadcast %cst_82 : f32 to vector<8x128xf32>
    %200 = arith.addf %198, %199 : vector<8x128xf32>
    %cst_83 = arith.constant 5.000000e-01 : f32
    %201 = vector.broadcast %cst_83 : f32 to vector<8x128xf32>
    %202 = arith.mulf %201, %200 : vector<8x128xf32>
    %203 = arith.mulf %196, %177 : vector<8x128xf32>
    %204 = arith.mulf %191, %197 : vector<8x128xf32>
    %205 = arith.addf %203, %204 : vector<8x128xf32>
    %206 = math.tanh %205 : vector<8x128xf32>
    %207 = arith.mulf %202, %206 : vector<8x128xf32>
    %208 = arith.truncf %207 : vector<8x128xf32> to vector<8x128xbf16>
    %c48_84 = arith.constant 48 : index
    %c0_85 = arith.constant 0 : index
    %209 = vector.load %arg8[%c48_84, %c0_85] : memref<64x128xbf16, #tpu.memory_space<vmem>>, vector<8x128xbf16>
    tpu.vector_store %arg8[%c48_84, %c0_85], %208 {strides = array<i32>} : memref<64x128xbf16, #tpu.memory_space<vmem>>, vector<8x128xbf16>,
    %c56 = arith.constant 56 : index
    %c0_86 = arith.constant 0 : index
    %210 = vector.load %arg9[%c56, %c0_86] : memref<64x512xf32, #tpu.memory_space<vmem>>, vector<8x512xf32>
    %211 = arith.truncf %207 : vector<8x128xf32> to vector<8x128xbf16>
    %cst_87 = arith.constant dense<0.000000e+00> : vector<8x512xf32>
    %212 = tpu.matmul %211, %3, %cst_87 {dimension_numbers = #tpu.dot_dimension_numbers<[1], [0], [0], [1], [0, 0, 1, 1], [], []>} : vector<8x128xbf16>, vector<128x512xbf16>, vector<8x512xf32> -> vector<8x512xf32>
    %213 = arith.addf %210, %212 : vector<8x512xf32>
    %214 = math.tanh %213 : vector<8x512xf32>
    %215 = vector.extract_strided_slice %214 {offsets = [0, 0], sizes = [8, 128], strides = [1, 1]} : vector<8x512xf32> to vector<8x128xf32>
    %cst_88 = arith.constant 1.000000e+00 : f32
    %216 = vector.broadcast %cst_88 : f32 to vector<8x128xf32>
    %217 = arith.addf %215, %216 : vector<8x128xf32>
    %cst_89 = arith.constant 5.000000e-01 : f32
    %218 = vector.broadcast %cst_89 : f32 to vector<8x128xf32>
    %219 = arith.mulf %218, %217 : vector<8x128xf32>
    %220 = vector.extract_strided_slice %214 {offsets = [0, 128], sizes = [8, 128], strides = [1, 1]} : vector<8x512xf32> to vector<8x128xf32>
    %cst_90 = arith.constant 1.000000e+00 : f32
    %221 = vector.broadcast %cst_90 : f32 to vector<8x128xf32>
    %222 = arith.addf %220, %221 : vector<8x128xf32>
    %cst_91 = arith.constant 5.000000e-01 : f32
    %223 = vector.broadcast %cst_91 : f32 to vector<8x128xf32>
    %224 = arith.mulf %223, %222 : vector<8x128xf32>
    %225 = vector.extract_strided_slice %214 {offsets = [0, 256], sizes = [8, 128], strides = [1, 1]} : vector<8x512xf32> to vector<8x128xf32>
    %226 = vector.extract_strided_slice %214 {offsets = [0, 384], sizes = [8, 128], strides = [1, 1]} : vector<8x512xf32> to vector<8x128xf32>
    %cst_92 = arith.constant 1.000000e+00 : f32
    %227 = vector.broadcast %cst_92 : f32 to vector<8x128xf32>
    %228 = arith.addf %226, %227 : vector<8x128xf32>
    %cst_93 = arith.constant 5.000000e-01 : f32
    %229 = vector.broadcast %cst_93 : f32 to vector<8x128xf32>
    %230 = arith.mulf %229, %228 : vector<8x128xf32>
    %231 = arith.mulf %224, %205 : vector<8x128xf32>
    %232 = arith.mulf %219, %225 : vector<8x128xf32>
    %233 = arith.addf %231, %232 : vector<8x128xf32>
    %234 = math.tanh %233 : vector<8x128xf32>
    %235 = arith.mulf %230, %234 : vector<8x128xf32>
    %236 = arith.truncf %235 : vector<8x128xf32> to vector<8x128xbf16>
    %c56_94 = arith.constant 56 : index
    %c0_95 = arith.constant 0 : index
    %237 = vector.load %arg8[%c56_94, %c0_95] : memref<64x128xbf16, #tpu.memory_space<vmem>>, vector<8x128xbf16>
    tpu.vector_store %arg8[%c56_94, %c0_95], %236 {strides = array<i32>} : memref<64x128xbf16, #tpu.memory_space<vmem>>, vector<8x128xbf16>,
    %c1 = arith.constant 1 : index
    %c0_96 = arith.constant 0 : index
    %c0_97 = arith.constant 0 : index
    %238 = vector.load %arg2[%c1, %c0_96, %c0_97] : memref<2x128x512xbf16, #tpu.memory_space<vmem>>, vector<1x128x512xbf16>
    %239 = vector.shape_cast %238 : vector<1x128x512xbf16> to vector<128x512xbf16>
    %c1_98 = arith.constant 1 : index
    %c0_99 = arith.constant 0 : index
    %c0_100 = arith.constant 0 : index
    %240 = vector.load %arg3[%c1_98, %c0_99, %c0_100] : memref<2x128x512xbf16, #tpu.memory_space<vmem>>, vector<1x128x512xbf16>
    %241 = vector.shape_cast %240 : vector<1x128x512xbf16> to vector<128x512xbf16>
    %c1_101 = arith.constant 1 : index
    %c0_102 = arith.constant 0 : index
    %c0_103 = arith.constant 0 : index
    %242 = vector.load %arg4[%c1_101, %c0_102, %c0_103] : memref<2x1x512xf32, #tpu.memory_space<vmem>>, vector<1x1x512xf32>
    %243 = vector.shape_cast %242 : vector<1x1x512xf32> to vector<1x512xf32>
    %c0_104 = arith.constant 0 : index
    %c0_105 = arith.constant 0 : index
    %244 = vector.load %arg8[%c0_104, %c0_105] : memref<64x128xbf16, #tpu.memory_space<vmem>>, vector<64x128xbf16>
    %cst_106 = arith.constant dense<0.000000e+00> : vector<64x512xf32>
    %245 = tpu.matmul %244, %239, %cst_106 {dimension_numbers = #tpu.dot_dimension_numbers<[1], [0], [0], [1], [0, 0, 1, 1], [], []>} : vector<64x128xbf16>, vector<128x512xbf16>, vector<64x512xf32> -> vector<64x512xf32>
    %246 = vector.broadcast %243 : vector<1x512xf32> to vector<64x512xf32>
    %247 = arith.addf %245, %246 : vector<64x512xf32>
    %c0_107 = arith.constant 0 : index
    %c0_108 = arith.constant 0 : index
    %248 = vector.load %arg9[%c0_107, %c0_108] : memref<64x512xf32, #tpu.memory_space<vmem>>, vector<64x512xf32>
    tpu.vector_store %arg9[%c0_107, %c0_108], %247 {strides = array<i32>} : memref<64x512xf32, #tpu.memory_space<vmem>>, vector<64x512xf32>,
    %cst_109 = arith.constant 0.000000e+00 : f32
    %249 = vector.broadcast %cst_109 : f32 to vector<8x128xf32>
    %cst_110 = arith.constant 0.000000e+00 : f32
    %250 = vector.broadcast %cst_110 : f32 to vector<8x128xf32>
    %c0_111 = arith.constant 0 : index
    %c0_112 = arith.constant 0 : index
    %251 = vector.load %arg9[%c0_111, %c0_112] : memref<64x512xf32, #tpu.memory_space<vmem>>, vector<8x512xf32>
    %252 = arith.truncf %249 : vector<8x128xf32> to vector<8x128xbf16>
    %cst_113 = arith.constant dense<0.000000e+00> : vector<8x512xf32>
    %253 = tpu.matmul %252, %241, %cst_113 {dimension_numbers = #tpu.dot_dimension_numbers<[1], [0], [0], [1], [0, 0, 1, 1], [], []>} : vector<8x128xbf16>, vector<128x512xbf16>, vector<8x512xf32> -> vector<8x512xf32>
    %254 = arith.addf %251, %253 : vector<8x512xf32>
    %255 = math.tanh %254 : vector<8x512xf32>
    %256 = vector.extract_strided_slice %255 {offsets = [0, 0], sizes = [8, 128], strides = [1, 1]} : vector<8x512xf32> to vector<8x128xf32>
    %cst_114 = arith.constant 1.000000e+00 : f32
    %257 = vector.broadcast %cst_114 : f32 to vector<8x128xf32>
    %258 = arith.addf %256, %257 : vector<8x128xf32>
    %cst_115 = arith.constant 5.000000e-01 : f32
    %259 = vector.broadcast %cst_115 : f32 to vector<8x128xf32>
    %260 = arith.mulf %259, %258 : vector<8x128xf32>
    %261 = vector.extract_strided_slice %255 {offsets = [0, 128], sizes = [8, 128], strides = [1, 1]} : vector<8x512xf32> to vector<8x128xf32>
    %cst_116 = arith.constant 1.000000e+00 : f32
    %262 = vector.broadcast %cst_116 : f32 to vector<8x128xf32>
    %263 = arith.addf %261, %262 : vector<8x128xf32>
    %cst_117 = arith.constant 5.000000e-01 : f32
    %264 = vector.broadcast %cst_117 : f32 to vector<8x128xf32>
    %265 = arith.mulf %264, %263 : vector<8x128xf32>
    %266 = vector.extract_strided_slice %255 {offsets = [0, 256], sizes = [8, 128], strides = [1, 1]} : vector<8x512xf32> to vector<8x128xf32>
    %267 = vector.extract_strided_slice %255 {offsets = [0, 384], sizes = [8, 128], strides = [1, 1]} : vector<8x512xf32> to vector<8x128xf32>
    %cst_118 = arith.constant 1.000000e+00 : f32
    %268 = vector.broadcast %cst_118 : f32 to vector<8x128xf32>
    %269 = arith.addf %267, %268 : vector<8x128xf32>
    %cst_119 = arith.constant 5.000000e-01 : f32
    %270 = vector.broadcast %cst_119 : f32 to vector<8x128xf32>
    %271 = arith.mulf %270, %269 : vector<8x128xf32>
    %272 = arith.mulf %265, %250 : vector<8x128xf32>
    %273 = arith.mulf %260, %266 : vector<8x128xf32>
    %274 = arith.addf %272, %273 : vector<8x128xf32>
    %275 = math.tanh %274 : vector<8x128xf32>
    %276 = arith.mulf %271, %275 : vector<8x128xf32>
    %277 = arith.truncf %276 : vector<8x128xf32> to vector<8x128xbf16>
    %c0_120 = arith.constant 0 : index
    %c0_121 = arith.constant 0 : index
    %278 = vector.load %arg8[%c0_120, %c0_121] : memref<64x128xbf16, #tpu.memory_space<vmem>>, vector<8x128xbf16>
    tpu.vector_store %arg8[%c0_120, %c0_121], %277 {strides = array<i32>} : memref<64x128xbf16, #tpu.memory_space<vmem>>, vector<8x128xbf16>,
    %c8_122 = arith.constant 8 : index
    %c0_123 = arith.constant 0 : index
    %279 = vector.load %arg9[%c8_122, %c0_123] : memref<64x512xf32, #tpu.memory_space<vmem>>, vector<8x512xf32>
    %280 = arith.truncf %276 : vector<8x128xf32> to vector<8x128xbf16>
    %cst_124 = arith.constant dense<0.000000e+00> : vector<8x512xf32>
    %281 = tpu.matmul %280, %241, %cst_124 {dimension_numbers = #tpu.dot_dimension_numbers<[1], [0], [0], [1], [0, 0, 1, 1], [], []>} : vector<8x128xbf16>, vector<128x512xbf16>, vector<8x512xf32> -> vector<8x512xf32>
    %282 = arith.addf %279, %281 : vector<8x512xf32>
    %283 = math.tanh %282 : vector<8x512xf32>
    %284 = vector.extract_strided_slice %283 {offsets = [0, 0], sizes = [8, 128], strides = [1, 1]} : vector<8x512xf32> to vector<8x128xf32>
    %cst_125 = arith.constant 1.000000e+00 : f32
    %285 = vector.broadcast %cst_125 : f32 to vector<8x128xf32>
    %286 = arith.addf %284, %285 : vector<8x128xf32>
    %cst_126 = arith.constant 5.000000e-01 : f32
    %287 = vector.broadcast %cst_126 : f32 to vector<8x128xf32>
    %288 = arith.mulf %287, %286 : vector<8x128xf32>
    %289 = vector.extract_strided_slice %283 {offsets = [0, 128], sizes = [8, 128], strides = [1, 1]} : vector<8x512xf32> to vector<8x128xf32>
    %cst_127 = arith.constant 1.000000e+00 : f32
    %290 = vector.broadcast %cst_127 : f32 to vector<8x128xf32>
    %291 = arith.addf %289, %290 : vector<8x128xf32>
    %cst_128 = arith.constant 5.000000e-01 : f32
    %292 = vector.broadcast %cst_128 : f32 to vector<8x128xf32>
    %293 = arith.mulf %292, %291 : vector<8x128xf32>
    %294 = vector.extract_strided_slice %283 {offsets = [0, 256], sizes = [8, 128], strides = [1, 1]} : vector<8x512xf32> to vector<8x128xf32>
    %295 = vector.extract_strided_slice %283 {offsets = [0, 384], sizes = [8, 128], strides = [1, 1]} : vector<8x512xf32> to vector<8x128xf32>
    %cst_129 = arith.constant 1.000000e+00 : f32
    %296 = vector.broadcast %cst_129 : f32 to vector<8x128xf32>
    %297 = arith.addf %295, %296 : vector<8x128xf32>
    %cst_130 = arith.constant 5.000000e-01 : f32
    %298 = vector.broadcast %cst_130 : f32 to vector<8x128xf32>
    %299 = arith.mulf %298, %297 : vector<8x128xf32>
    %300 = arith.mulf %293, %274 : vector<8x128xf32>
    %301 = arith.mulf %288, %294 : vector<8x128xf32>
    %302 = arith.addf %300, %301 : vector<8x128xf32>
    %303 = math.tanh %302 : vector<8x128xf32>
    %304 = arith.mulf %299, %303 : vector<8x128xf32>
    %305 = arith.truncf %304 : vector<8x128xf32> to vector<8x128xbf16>
    %c8_131 = arith.constant 8 : index
    %c0_132 = arith.constant 0 : index
    %306 = vector.load %arg8[%c8_131, %c0_132] : memref<64x128xbf16, #tpu.memory_space<vmem>>, vector<8x128xbf16>
    tpu.vector_store %arg8[%c8_131, %c0_132], %305 {strides = array<i32>} : memref<64x128xbf16, #tpu.memory_space<vmem>>, vector<8x128xbf16>,
    %c16_133 = arith.constant 16 : index
    %c0_134 = arith.constant 0 : index
    %307 = vector.load %arg9[%c16_133, %c0_134] : memref<64x512xf32, #tpu.memory_space<vmem>>, vector<8x512xf32>
    %308 = arith.truncf %304 : vector<8x128xf32> to vector<8x128xbf16>
    %cst_135 = arith.constant dense<0.000000e+00> : vector<8x512xf32>
    %309 = tpu.matmul %308, %241, %cst_135 {dimension_numbers = #tpu.dot_dimension_numbers<[1], [0], [0], [1], [0, 0, 1, 1], [], []>} : vector<8x128xbf16>, vector<128x512xbf16>, vector<8x512xf32> -> vector<8x512xf32>
    %310 = arith.addf %307, %309 : vector<8x512xf32>
    %311 = math.tanh %310 : vector<8x512xf32>
    %312 = vector.extract_strided_slice %311 {offsets = [0, 0], sizes = [8, 128], strides = [1, 1]} : vector<8x512xf32> to vector<8x128xf32>
    %cst_136 = arith.constant 1.000000e+00 : f32
    %313 = vector.broadcast %cst_136 : f32 to vector<8x128xf32>
    %314 = arith.addf %312, %313 : vector<8x128xf32>
    %cst_137 = arith.constant 5.000000e-01 : f32
    %315 = vector.broadcast %cst_137 : f32 to vector<8x128xf32>
    %316 = arith.mulf %315, %314 : vector<8x128xf32>
    %317 = vector.extract_strided_slice %311 {offsets = [0, 128], sizes = [8, 128], strides = [1, 1]} : vector<8x512xf32> to vector<8x128xf32>
    %cst_138 = arith.constant 1.000000e+00 : f32
    %318 = vector.broadcast %cst_138 : f32 to vector<8x128xf32>
    %319 = arith.addf %317, %318 : vector<8x128xf32>
    %cst_139 = arith.constant 5.000000e-01 : f32
    %320 = vector.broadcast %cst_139 : f32 to vector<8x128xf32>
    %321 = arith.mulf %320, %319 : vector<8x128xf32>
    %322 = vector.extract_strided_slice %311 {offsets = [0, 256], sizes = [8, 128], strides = [1, 1]} : vector<8x512xf32> to vector<8x128xf32>
    %323 = vector.extract_strided_slice %311 {offsets = [0, 384], sizes = [8, 128], strides = [1, 1]} : vector<8x512xf32> to vector<8x128xf32>
    %cst_140 = arith.constant 1.000000e+00 : f32
    %324 = vector.broadcast %cst_140 : f32 to vector<8x128xf32>
    %325 = arith.addf %323, %324 : vector<8x128xf32>
    %cst_141 = arith.constant 5.000000e-01 : f32
    %326 = vector.broadcast %cst_141 : f32 to vector<8x128xf32>
    %327 = arith.mulf %326, %325 : vector<8x128xf32>
    %328 = arith.mulf %321, %302 : vector<8x128xf32>
    %329 = arith.mulf %316, %322 : vector<8x128xf32>
    %330 = arith.addf %328, %329 : vector<8x128xf32>
    %331 = math.tanh %330 : vector<8x128xf32>
    %332 = arith.mulf %327, %331 : vector<8x128xf32>
    %333 = arith.truncf %332 : vector<8x128xf32> to vector<8x128xbf16>
    %c16_142 = arith.constant 16 : index
    %c0_143 = arith.constant 0 : index
    %334 = vector.load %arg8[%c16_142, %c0_143] : memref<64x128xbf16, #tpu.memory_space<vmem>>, vector<8x128xbf16>
    tpu.vector_store %arg8[%c16_142, %c0_143], %333 {strides = array<i32>} : memref<64x128xbf16, #tpu.memory_space<vmem>>, vector<8x128xbf16>,
    %c24_144 = arith.constant 24 : index
    %c0_145 = arith.constant 0 : index
    %335 = vector.load %arg9[%c24_144, %c0_145] : memref<64x512xf32, #tpu.memory_space<vmem>>, vector<8x512xf32>
    %336 = arith.truncf %332 : vector<8x128xf32> to vector<8x128xbf16>
    %cst_146 = arith.constant dense<0.000000e+00> : vector<8x512xf32>
    %337 = tpu.matmul %336, %241, %cst_146 {dimension_numbers = #tpu.dot_dimension_numbers<[1], [0], [0], [1], [0, 0, 1, 1], [], []>} : vector<8x128xbf16>, vector<128x512xbf16>, vector<8x512xf32> -> vector<8x512xf32>
    %338 = arith.addf %335, %337 : vector<8x512xf32>
    %339 = math.tanh %338 : vector<8x512xf32>
    %340 = vector.extract_strided_slice %339 {offsets = [0, 0], sizes = [8, 128], strides = [1, 1]} : vector<8x512xf32> to vector<8x128xf32>
    %cst_147 = arith.constant 1.000000e+00 : f32
    %341 = vector.broadcast %cst_147 : f32 to vector<8x128xf32>
    %342 = arith.addf %340, %341 : vector<8x128xf32>
    %cst_148 = arith.constant 5.000000e-01 : f32
    %343 = vector.broadcast %cst_148 : f32 to vector<8x128xf32>
    %344 = arith.mulf %343, %342 : vector<8x128xf32>
    %345 = vector.extract_strided_slice %339 {offsets = [0, 128], sizes = [8, 128], strides = [1, 1]} : vector<8x512xf32> to vector<8x128xf32>
    %cst_149 = arith.constant 1.000000e+00 : f32
    %346 = vector.broadcast %cst_149 : f32 to vector<8x128xf32>
    %347 = arith.addf %345, %346 : vector<8x128xf32>
    %cst_150 = arith.constant 5.000000e-01 : f32
    %348 = vector.broadcast %cst_150 : f32 to vector<8x128xf32>
    %349 = arith.mulf %348, %347 : vector<8x128xf32>
    %350 = vector.extract_strided_slice %339 {offsets = [0, 256], sizes = [8, 128], strides = [1, 1]} : vector<8x512xf32> to vector<8x128xf32>
    %351 = vector.extract_strided_slice %339 {offsets = [0, 384], sizes = [8, 128], strides = [1, 1]} : vector<8x512xf32> to vector<8x128xf32>
    %cst_151 = arith.constant 1.000000e+00 : f32
    %352 = vector.broadcast %cst_151 : f32 to vector<8x128xf32>
    %353 = arith.addf %351, %352 : vector<8x128xf32>
    %cst_152 = arith.constant 5.000000e-01 : f32
    %354 = vector.broadcast %cst_152 : f32 to vector<8x128xf32>
    %355 = arith.mulf %354, %353 : vector<8x128xf32>
    %356 = arith.mulf %349, %330 : vector<8x128xf32>
    %357 = arith.mulf %344, %350 : vector<8x128xf32>
    %358 = arith.addf %356, %357 : vector<8x128xf32>
    %359 = math.tanh %358 : vector<8x128xf32>
    %360 = arith.mulf %355, %359 : vector<8x128xf32>
    %361 = arith.truncf %360 : vector<8x128xf32> to vector<8x128xbf16>
    %c24_153 = arith.constant 24 : index
    %c0_154 = arith.constant 0 : index
    %362 = vector.load %arg8[%c24_153, %c0_154] : memref<64x128xbf16, #tpu.memory_space<vmem>>, vector<8x128xbf16>
    tpu.vector_store %arg8[%c24_153, %c0_154], %361 {strides = array<i32>} : memref<64x128xbf16, #tpu.memory_space<vmem>>, vector<8x128xbf16>,
    %c32_155 = arith.constant 32 : index
    %c0_156 = arith.constant 0 : index
    %363 = vector.load %arg9[%c32_155, %c0_156] : memref<64x512xf32, #tpu.memory_space<vmem>>, vector<8x512xf32>
    %364 = arith.truncf %360 : vector<8x128xf32> to vector<8x128xbf16>
    %cst_157 = arith.constant dense<0.000000e+00> : vector<8x512xf32>
    %365 = tpu.matmul %364, %241, %cst_157 {dimension_numbers = #tpu.dot_dimension_numbers<[1], [0], [0], [1], [0, 0, 1, 1], [], []>} : vector<8x128xbf16>, vector<128x512xbf16>, vector<8x512xf32> -> vector<8x512xf32>
    %366 = arith.addf %363, %365 : vector<8x512xf32>
    %367 = math.tanh %366 : vector<8x512xf32>
    %368 = vector.extract_strided_slice %367 {offsets = [0, 0], sizes = [8, 128], strides = [1, 1]} : vector<8x512xf32> to vector<8x128xf32>
    %cst_158 = arith.constant 1.000000e+00 : f32
    %369 = vector.broadcast %cst_158 : f32 to vector<8x128xf32>
    %370 = arith.addf %368, %369 : vector<8x128xf32>
    %cst_159 = arith.constant 5.000000e-01 : f32
    %371 = vector.broadcast %cst_159 : f32 to vector<8x128xf32>
    %372 = arith.mulf %371, %370 : vector<8x128xf32>
    %373 = vector.extract_strided_slice %367 {offsets = [0, 128], sizes = [8, 128], strides = [1, 1]} : vector<8x512xf32> to vector<8x128xf32>
    %cst_160 = arith.constant 1.000000e+00 : f32
    %374 = vector.broadcast %cst_160 : f32 to vector<8x128xf32>
    %375 = arith.addf %373, %374 : vector<8x128xf32>
    %cst_161 = arith.constant 5.000000e-01 : f32
    %376 = vector.broadcast %cst_161 : f32 to vector<8x128xf32>
    %377 = arith.mulf %376, %375 : vector<8x128xf32>
    %378 = vector.extract_strided_slice %367 {offsets = [0, 256], sizes = [8, 128], strides = [1, 1]} : vector<8x512xf32> to vector<8x128xf32>
    %379 = vector.extract_strided_slice %367 {offsets = [0, 384], sizes = [8, 128], strides = [1, 1]} : vector<8x512xf32> to vector<8x128xf32>
    %cst_162 = arith.constant 1.000000e+00 : f32
    %380 = vector.broadcast %cst_162 : f32 to vector<8x128xf32>
    %381 = arith.addf %379, %380 : vector<8x128xf32>
    %cst_163 = arith.constant 5.000000e-01 : f32
    %382 = vector.broadcast %cst_163 : f32 to vector<8x128xf32>
    %383 = arith.mulf %382, %381 : vector<8x128xf32>
    %384 = arith.mulf %377, %358 : vector<8x128xf32>
    %385 = arith.mulf %372, %378 : vector<8x128xf32>
    %386 = arith.addf %384, %385 : vector<8x128xf32>
    %387 = math.tanh %386 : vector<8x128xf32>
    %388 = arith.mulf %383, %387 : vector<8x128xf32>
    %389 = arith.truncf %388 : vector<8x128xf32> to vector<8x128xbf16>
    %c32_164 = arith.constant 32 : index
    %c0_165 = arith.constant 0 : index
    %390 = vector.load %arg8[%c32_164, %c0_165] : memref<64x128xbf16, #tpu.memory_space<vmem>>, vector<8x128xbf16>
    tpu.vector_store %arg8[%c32_164, %c0_165], %389 {strides = array<i32>} : memref<64x128xbf16, #tpu.memory_space<vmem>>, vector<8x128xbf16>,
    %c40_166 = arith.constant 40 : index
    %c0_167 = arith.constant 0 : index
    %391 = vector.load %arg9[%c40_166, %c0_167] : memref<64x512xf32, #tpu.memory_space<vmem>>, vector<8x512xf32>
    %392 = arith.truncf %388 : vector<8x128xf32> to vector<8x128xbf16>
    %cst_168 = arith.constant dense<0.000000e+00> : vector<8x512xf32>
    %393 = tpu.matmul %392, %241, %cst_168 {dimension_numbers = #tpu.dot_dimension_numbers<[1], [0], [0], [1], [0, 0, 1, 1], [], []>} : vector<8x128xbf16>, vector<128x512xbf16>, vector<8x512xf32> -> vector<8x512xf32>
    %394 = arith.addf %391, %393 : vector<8x512xf32>
    %395 = math.tanh %394 : vector<8x512xf32>
    %396 = vector.extract_strided_slice %395 {offsets = [0, 0], sizes = [8, 128], strides = [1, 1]} : vector<8x512xf32> to vector<8x128xf32>
    %cst_169 = arith.constant 1.000000e+00 : f32
    %397 = vector.broadcast %cst_169 : f32 to vector<8x128xf32>
    %398 = arith.addf %396, %397 : vector<8x128xf32>
    %cst_170 = arith.constant 5.000000e-01 : f32
    %399 = vector.broadcast %cst_170 : f32 to vector<8x128xf32>
    %400 = arith.mulf %399, %398 : vector<8x128xf32>
    %401 = vector.extract_strided_slice %395 {offsets = [0, 128], sizes = [8, 128], strides = [1, 1]} : vector<8x512xf32> to vector<8x128xf32>
    %cst_171 = arith.constant 1.000000e+00 : f32
    %402 = vector.broadcast %cst_171 : f32 to vector<8x128xf32>
    %403 = arith.addf %401, %402 : vector<8x128xf32>
    %cst_172 = arith.constant 5.000000e-01 : f32
    %404 = vector.broadcast %cst_172 : f32 to vector<8x128xf32>
    %405 = arith.mulf %404, %403 : vector<8x128xf32>
    %406 = vector.extract_strided_slice %395 {offsets = [0, 256], sizes = [8, 128], strides = [1, 1]} : vector<8x512xf32> to vector<8x128xf32>
    %407 = vector.extract_strided_slice %395 {offsets = [0, 384], sizes = [8, 128], strides = [1, 1]} : vector<8x512xf32> to vector<8x128xf32>
    %cst_173 = arith.constant 1.000000e+00 : f32
    %408 = vector.broadcast %cst_173 : f32 to vector<8x128xf32>
    %409 = arith.addf %407, %408 : vector<8x128xf32>
    %cst_174 = arith.constant 5.000000e-01 : f32
    %410 = vector.broadcast %cst_174 : f32 to vector<8x128xf32>
    %411 = arith.mulf %410, %409 : vector<8x128xf32>
    %412 = arith.mulf %405, %386 : vector<8x128xf32>
    %413 = arith.mulf %400, %406 : vector<8x128xf32>
    %414 = arith.addf %412, %413 : vector<8x128xf32>
    %415 = math.tanh %414 : vector<8x128xf32>
    %416 = arith.mulf %411, %415 : vector<8x128xf32>
    %417 = arith.truncf %416 : vector<8x128xf32> to vector<8x128xbf16>
    %c40_175 = arith.constant 40 : index
    %c0_176 = arith.constant 0 : index
    %418 = vector.load %arg8[%c40_175, %c0_176] : memref<64x128xbf16, #tpu.memory_space<vmem>>, vector<8x128xbf16>
    tpu.vector_store %arg8[%c40_175, %c0_176], %417 {strides = array<i32>} : memref<64x128xbf16, #tpu.memory_space<vmem>>, vector<8x128xbf16>,
    %c48_177 = arith.constant 48 : index
    %c0_178 = arith.constant 0 : index
    %419 = vector.load %arg9[%c48_177, %c0_178] : memref<64x512xf32, #tpu.memory_space<vmem>>, vector<8x512xf32>
    %420 = arith.truncf %416 : vector<8x128xf32> to vector<8x128xbf16>
    %cst_179 = arith.constant dense<0.000000e+00> : vector<8x512xf32>
    %421 = tpu.matmul %420, %241, %cst_179 {dimension_numbers = #tpu.dot_dimension_numbers<[1], [0], [0], [1], [0, 0, 1, 1], [], []>} : vector<8x128xbf16>, vector<128x512xbf16>, vector<8x512xf32> -> vector<8x512xf32>
    %422 = arith.addf %419, %421 : vector<8x512xf32>
    %423 = math.tanh %422 : vector<8x512xf32>
    %424 = vector.extract_strided_slice %423 {offsets = [0, 0], sizes = [8, 128], strides = [1, 1]} : vector<8x512xf32> to vector<8x128xf32>
    %cst_180 = arith.constant 1.000000e+00 : f32
    %425 = vector.broadcast %cst_180 : f32 to vector<8x128xf32>
    %426 = arith.addf %424, %425 : vector<8x128xf32>
    %cst_181 = arith.constant 5.000000e-01 : f32
    %427 = vector.broadcast %cst_181 : f32 to vector<8x128xf32>
    %428 = arith.mulf %427, %426 : vector<8x128xf32>
    %429 = vector.extract_strided_slice %423 {offsets = [0, 128], sizes = [8, 128], strides = [1, 1]} : vector<8x512xf32> to vector<8x128xf32>
    %cst_182 = arith.constant 1.000000e+00 : f32
    %430 = vector.broadcast %cst_182 : f32 to vector<8x128xf32>
    %431 = arith.addf %429, %430 : vector<8x128xf32>
    %cst_183 = arith.constant 5.000000e-01 : f32
    %432 = vector.broadcast %cst_183 : f32 to vector<8x128xf32>
    %433 = arith.mulf %432, %431 : vector<8x128xf32>
    %434 = vector.extract_strided_slice %423 {offsets = [0, 256], sizes = [8, 128], strides = [1, 1]} : vector<8x512xf32> to vector<8x128xf32>
    %435 = vector.extract_strided_slice %423 {offsets = [0, 384], sizes = [8, 128], strides = [1, 1]} : vector<8x512xf32> to vector<8x128xf32>
    %cst_184 = arith.constant 1.000000e+00 : f32
    %436 = vector.broadcast %cst_184 : f32 to vector<8x128xf32>
    %437 = arith.addf %435, %436 : vector<8x128xf32>
    %cst_185 = arith.constant 5.000000e-01 : f32
    %438 = vector.broadcast %cst_185 : f32 to vector<8x128xf32>
    %439 = arith.mulf %438, %437 : vector<8x128xf32>
    %440 = arith.mulf %433, %414 : vector<8x128xf32>
    %441 = arith.mulf %428, %434 : vector<8x128xf32>
    %442 = arith.addf %440, %441 : vector<8x128xf32>
    %443 = math.tanh %442 : vector<8x128xf32>
    %444 = arith.mulf %439, %443 : vector<8x128xf32>
    %445 = arith.truncf %444 : vector<8x128xf32> to vector<8x128xbf16>
    %c48_186 = arith.constant 48 : index
    %c0_187 = arith.constant 0 : index
    %446 = vector.load %arg8[%c48_186, %c0_187] : memref<64x128xbf16, #tpu.memory_space<vmem>>, vector<8x128xbf16>
    tpu.vector_store %arg8[%c48_186, %c0_187], %445 {strides = array<i32>} : memref<64x128xbf16, #tpu.memory_space<vmem>>, vector<8x128xbf16>,
    %c56_188 = arith.constant 56 : index
    %c0_189 = arith.constant 0 : index
    %447 = vector.load %arg9[%c56_188, %c0_189] : memref<64x512xf32, #tpu.memory_space<vmem>>, vector<8x512xf32>
    %448 = arith.truncf %444 : vector<8x128xf32> to vector<8x128xbf16>
    %cst_190 = arith.constant dense<0.000000e+00> : vector<8x512xf32>
    %449 = tpu.matmul %448, %241, %cst_190 {dimension_numbers = #tpu.dot_dimension_numbers<[1], [0], [0], [1], [0, 0, 1, 1], [], []>} : vector<8x128xbf16>, vector<128x512xbf16>, vector<8x512xf32> -> vector<8x512xf32>
    %450 = arith.addf %447, %449 : vector<8x512xf32>
    %451 = math.tanh %450 : vector<8x512xf32>
    %452 = vector.extract_strided_slice %451 {offsets = [0, 0], sizes = [8, 128], strides = [1, 1]} : vector<8x512xf32> to vector<8x128xf32>
    %cst_191 = arith.constant 1.000000e+00 : f32
    %453 = vector.broadcast %cst_191 : f32 to vector<8x128xf32>
    %454 = arith.addf %452, %453 : vector<8x128xf32>
    %cst_192 = arith.constant 5.000000e-01 : f32
    %455 = vector.broadcast %cst_192 : f32 to vector<8x128xf32>
    %456 = arith.mulf %455, %454 : vector<8x128xf32>
    %457 = vector.extract_strided_slice %451 {offsets = [0, 128], sizes = [8, 128], strides = [1, 1]} : vector<8x512xf32> to vector<8x128xf32>
    %cst_193 = arith.constant 1.000000e+00 : f32
    %458 = vector.broadcast %cst_193 : f32 to vector<8x128xf32>
    %459 = arith.addf %457, %458 : vector<8x128xf32>
    %cst_194 = arith.constant 5.000000e-01 : f32
    %460 = vector.broadcast %cst_194 : f32 to vector<8x128xf32>
    %461 = arith.mulf %460, %459 : vector<8x128xf32>
    %462 = vector.extract_strided_slice %451 {offsets = [0, 256], sizes = [8, 128], strides = [1, 1]} : vector<8x512xf32> to vector<8x128xf32>
    %463 = vector.extract_strided_slice %451 {offsets = [0, 384], sizes = [8, 128], strides = [1, 1]} : vector<8x512xf32> to vector<8x128xf32>
    %cst_195 = arith.constant 1.000000e+00 : f32
    %464 = vector.broadcast %cst_195 : f32 to vector<8x128xf32>
    %465 = arith.addf %463, %464 : vector<8x128xf32>
    %cst_196 = arith.constant 5.000000e-01 : f32
    %466 = vector.broadcast %cst_196 : f32 to vector<8x128xf32>
    %467 = arith.mulf %466, %465 : vector<8x128xf32>
    %468 = arith.mulf %461, %442 : vector<8x128xf32>
    %469 = arith.mulf %456, %462 : vector<8x128xf32>
    %470 = arith.addf %468, %469 : vector<8x128xf32>
    %471 = math.tanh %470 : vector<8x128xf32>
    %472 = arith.mulf %467, %471 : vector<8x128xf32>
    %473 = arith.truncf %472 : vector<8x128xf32> to vector<8x128xbf16>
    %c56_197 = arith.constant 56 : index
    %c0_198 = arith.constant 0 : index
    %474 = vector.load %arg8[%c56_197, %c0_198] : memref<64x128xbf16, #tpu.memory_space<vmem>>, vector<8x128xbf16>
    tpu.vector_store %arg8[%c56_197, %c0_198], %473 {strides = array<i32>} : memref<64x128xbf16, #tpu.memory_space<vmem>>, vector<8x128xbf16>,
    %c0_199 = arith.constant 0 : index
    %c0_200 = arith.constant 0 : index
    %475 = vector.load %arg8[%c0_199, %c0_200] : memref<64x128xbf16, #tpu.memory_space<vmem>>, vector<64x128xbf16>
    %c0_201 = arith.constant 0 : index
    %c0_202 = arith.constant 0 : index
    %476 = vector.load %arg5[%c0_201, %c0_202] : memref<128x128xbf16, #tpu.memory_space<vmem>>, vector<128x128xbf16>
    %cst_203 = arith.constant dense<0.000000e+00> : vector<64x128xf32>
    %477 = tpu.matmul %475, %476, %cst_203 {dimension_numbers = #tpu.dot_dimension_numbers<[1], [0], [0], [1], [0, 0, 1, 1], [], []>} : vector<64x128xbf16>, vector<128x128xbf16>, vector<64x128xf32> -> vector<64x128xf32>
    %c0_204 = arith.constant 0 : index
    %c0_205 = arith.constant 0 : index
    %478 = vector.load %arg6[%c0_204, %c0_205] : memref<1x128xf32, #tpu.memory_space<vmem>>, vector<1x128xf32>
    %479 = vector.broadcast %478 : vector<1x128xf32> to vector<64x128xf32>
    %480 = arith.addf %477, %479 : vector<64x128xf32>
    %cst_206 = arith.constant 5.000000e-01 : f32
    %481 = vector.broadcast %cst_206 : f32 to vector<64x128xf32>
    %482 = arith.mulf %481, %480 : vector<64x128xf32>
    %483 = math.tanh %482 : vector<64x128xf32>
    %cst_207 = arith.constant 1.000000e+00 : f32
    %484 = vector.broadcast %cst_207 : f32 to vector<64x128xf32>
    %485 = arith.addf %483, %484 : vector<64x128xf32>
    %cst_208 = arith.constant 5.000000e-01 : f32
    %486 = vector.broadcast %cst_208 : f32 to vector<64x128xf32>
    %487 = arith.mulf %486, %485 : vector<64x128xf32>
    %c0_209 = arith.constant 0 : index
    %c0_210 = arith.constant 0 : index
    %c0_211 = arith.constant 0 : index
    %488 = vector.load %arg7[%c0_209, %c0_210, %c0_211] : memref<1x64x128xf32, #tpu.memory_space<vmem>>, vector<1x64x128xf32>
    %489 = vector.shape_cast %488 : vector<1x64x128xf32> to vector<64x128xf32>
    %490 = vector.shape_cast %487 : vector<64x128xf32> to vector<1x64x128xf32>
    tpu.vector_store %arg7[%c0_209, %c0_210, %c0_211], %490 {strides = array<i32>} : memref<1x64x128xf32, #tpu.memory_space<vmem>>, vector<1x64x128xf32>,
    return
  }
  func.func @transform_0(%arg0: i32) -> (i32, i32, i32) {
    %c0_i32 = arith.constant 0 : i32
    %c0_i32_0 = arith.constant 0 : i32
    %c0_i32_1 = arith.constant 0 : i32
    return %arg0, %c0_i32, %c0_i32_0 : i32, i32, i32
  }
  func.func @transform_1(%arg0: i32) -> (i32, i32, i32) {
    %c0_i32 = arith.constant 0 : i32
    %c0_i32_0 = arith.constant 0 : i32
    %c0_i32_1 = arith.constant 0 : i32
    %c0_i32_2 = arith.constant 0 : i32
    return %c0_i32, %c0_i32_0, %c0_i32_1 : i32, i32, i32
  }
  func.func @transform_2(%arg0: i32) -> (i32, i32, i32) {
    %c0_i32 = arith.constant 0 : i32
    %c0_i32_0 = arith.constant 0 : i32
    %c0_i32_1 = arith.constant 0 : i32
    %c0_i32_2 = arith.constant 0 : i32
    return %c0_i32, %c0_i32_0, %c0_i32_1 : i32, i32, i32
  }
  func.func @transform_3(%arg0: i32) -> (i32, i32, i32) {
    %c0_i32 = arith.constant 0 : i32
    %c0_i32_0 = arith.constant 0 : i32
    %c0_i32_1 = arith.constant 0 : i32
    %c0_i32_2 = arith.constant 0 : i32
    return %c0_i32, %c0_i32_0, %c0_i32_1 : i32, i32, i32
  }
  func.func @transform_4(%arg0: i32) -> (i32, i32) {
    %c0_i32 = arith.constant 0 : i32
    %c0_i32_0 = arith.constant 0 : i32
    %c0_i32_1 = arith.constant 0 : i32
    return %c0_i32, %c0_i32_0 : i32, i32
  }
  func.func @transform_5(%arg0: i32) -> (i32, i32) {
    %c0_i32 = arith.constant 0 : i32
    %c0_i32_0 = arith.constant 0 : i32
    %c0_i32_1 = arith.constant 0 : i32
    return %c0_i32, %c0_i32_0 : i32, i32
  }
  func.func @transform_6(%arg0: i32) -> (i32, i32, i32) {
    %c0_i32 = arith.constant 0 : i32
    %c0_i32_0 = arith.constant 0 : i32
    %c0_i32_1 = arith.constant 0 : i32
    return %arg0, %c0_i32, %c0_i32_0 : i32, i32, i32
  }
}

module attributes {stable_mosaic.version = 11 : i64} {
  func.func @decoder_lstm_kernel(%arg0: i32, %arg1: memref<1x64x128xbf16, #tpu.memory_space<vmem>>, %arg2: memref<2x128x512xbf16, #tpu.memory_space<vmem>>, %arg3: memref<2x128x512xbf16, #tpu.memory_space<vmem>>, %arg4: memref<2x1x512xf32, #tpu.memory_space<vmem>>, %arg5: memref<128x128xbf16, #tpu.memory_space<vmem>>, %arg6: memref<1x128xf32, #tpu.memory_space<vmem>>, %arg7: memref<1x64x128xf32, #tpu.memory_space<vmem>>, %arg8: memref<64x128xbf16, #tpu.memory_space<vmem>>, %arg9: memref<64x512xf32, #tpu.memory_space<vmem>>) attributes {dimension_semantics = [#tpu.dimension_semantics<parallel>], iteration_bounds = array<i64: 1>, scalar_prefetch = 0 : i64, scratch_operands = 2 : i64, tpu.core_type = #tpu.core_type<tc>, window_params = [{transform_indices = @transform_0, window_bounds = array<i64: 1, 64, 128>}, {pipeline_mode = #tpu.pipeline_mode<synchronous>, transform_indices = @transform_1, window_bounds = array<i64: 2, 128, 512>}, {pipeline_mode = #tpu.pipeline_mode<synchronous>, transform_indices = @transform_2, window_bounds = array<i64: 2, 128, 512>}, {pipeline_mode = #tpu.pipeline_mode<synchronous>, transform_indices = @transform_3, window_bounds = array<i64: 2, 1, 512>}, {pipeline_mode = #tpu.pipeline_mode<synchronous>, transform_indices = @transform_4, window_bounds = array<i64: 128, 128>}, {pipeline_mode = #tpu.pipeline_mode<synchronous>, transform_indices = @transform_5, window_bounds = array<i64: 1, 128>}, {transform_indices = @transform_6, window_bounds = array<i64: 1, 64, 128>}]} {
    %c0 = arith.constant 0 : index
    %c0_0 = arith.constant 0 : index
    %c0_1 = arith.constant 0 : index
    %0 = vector.load %arg2[%c0, %c0_0, %c0_1] : memref<2x128x512xbf16, #tpu.memory_space<vmem>>, vector<1x128x512xbf16>
    %1 = vector.shape_cast %0 : vector<1x128x512xbf16> to vector<128x512xbf16>
    %c0_2 = arith.constant 0 : index
    %c0_3 = arith.constant 0 : index
    %c0_4 = arith.constant 0 : index
    %2 = vector.load %arg3[%c0_2, %c0_3, %c0_4] : memref<2x128x512xbf16, #tpu.memory_space<vmem>>, vector<1x128x512xbf16>
    %3 = vector.shape_cast %2 : vector<1x128x512xbf16> to vector<128x512xbf16>
    %c0_5 = arith.constant 0 : index
    %c0_6 = arith.constant 0 : index
    %c0_7 = arith.constant 0 : index
    %4 = vector.load %arg4[%c0_5, %c0_6, %c0_7] : memref<2x1x512xf32, #tpu.memory_space<vmem>>, vector<1x1x512xf32>
    %5 = vector.shape_cast %4 : vector<1x1x512xf32> to vector<1x512xf32>
    %c0_8 = arith.constant 0 : index
    %c0_9 = arith.constant 0 : index
    %c0_10 = arith.constant 0 : index
    %6 = vector.load %arg1[%c0_8, %c0_9, %c0_10] : memref<1x64x128xbf16, #tpu.memory_space<vmem>>, vector<1x64x128xbf16>
    %7 = vector.shape_cast %6 : vector<1x64x128xbf16> to vector<64x128xbf16>
    %cst = arith.constant dense<0.000000e+00> : vector<64x512xf32>
    %8 = tpu.matmul %7, %1, %cst {dimension_numbers = #tpu.dot_dimension_numbers<[1], [0], [0], [1], [0, 0, 1, 1], [], []>} : vector<64x128xbf16>, vector<128x512xbf16>, vector<64x512xf32> -> vector<64x512xf32>
    %9 = vector.broadcast %5 : vector<1x512xf32> to vector<64x512xf32>
    %10 = arith.addf %8, %9 : vector<64x512xf32>
    %c0_11 = arith.constant 0 : index
    %c0_12 = arith.constant 0 : index
    %11 = vector.load %arg9[%c0_11, %c0_12] : memref<64x512xf32, #tpu.memory_space<vmem>>, vector<64x512xf32>
    tpu.vector_store %arg9[%c0_11, %c0_12], %10 {strides = array<i32>} : memref<64x512xf32, #tpu.memory_space<vmem>>, vector<64x512xf32>,
    %cst_13 = arith.constant 0.000000e+00 : f32
    %12 = vector.broadcast %cst_13 : f32 to vector<8x128xf32>
    %cst_14 = arith.constant 0.000000e+00 : f32
    %13 = vector.broadcast %cst_14 : f32 to vector<8x128xf32>
    %c0_15 = arith.constant 0 : index
    %c0_16 = arith.constant 0 : index
    %14 = vector.load %arg9[%c0_15, %c0_16] : memref<64x512xf32, #tpu.memory_space<vmem>>, vector<8x512xf32>
    %15 = arith.truncf %12 : vector<8x128xf32> to vector<8x128xbf16>
    %cst_17 = arith.constant dense<0.000000e+00> : vector<8x512xf32>
    %16 = tpu.matmul %15, %3, %cst_17 {dimension_numbers = #tpu.dot_dimension_numbers<[1], [0], [0], [1], [0, 0, 1, 1], [], []>} : vector<8x128xbf16>, vector<128x512xbf16>, vector<8x512xf32> -> vector<8x512xf32>
    %17 = arith.addf %14, %16 : vector<8x512xf32>
    %18 = math.tanh %17 : vector<8x512xf32>
    %19 = vector.extract_strided_slice %18 {offsets = [0, 0], sizes = [8, 128], strides = [1, 1]} : vector<8x512xf32> to vector<8x128xf32>
    %cst_18 = arith.constant 1.000000e+00 : f32
    %20 = vector.broadcast %cst_18 : f32 to vector<8x128xf32>
    %21 = arith.addf %19, %20 : vector<8x128xf32>
    %cst_19 = arith.constant 5.000000e-01 : f32
    %22 = vector.broadcast %cst_19 : f32 to vector<8x128xf32>
    %23 = arith.mulf %22, %21 : vector<8x128xf32>
    %24 = vector.extract_strided_slice %18 {offsets = [0, 128], sizes = [8, 128], strides = [1, 1]} : vector<8x512xf32> to vector<8x128xf32>
    %cst_20 = arith.constant 1.000000e+00 : f32
    %25 = vector.broadcast %cst_20 : f32 to vector<8x128xf32>
    %26 = arith.addf %24, %25 : vector<8x128xf32>
    %cst_21 = arith.constant 5.000000e-01 : f32
    %27 = vector.broadcast %cst_21 : f32 to vector<8x128xf32>
    %28 = arith.mulf %27, %26 : vector<8x128xf32>
    %29 = vector.extract_strided_slice %18 {offsets = [0, 256], sizes = [8, 128], strides = [1, 1]} : vector<8x512xf32> to vector<8x128xf32>
    %30 = vector.extract_strided_slice %18 {offsets = [0, 384], sizes = [8, 128], strides = [1, 1]} : vector<8x512xf32> to vector<8x128xf32>
    %cst_22 = arith.constant 1.000000e+00 : f32
    %31 = vector.broadcast %cst_22 : f32 to vector<8x128xf32>
    %32 = arith.addf %30, %31 : vector<8x128xf32>
    %cst_23 = arith.constant 5.000000e-01 : f32
    %33 = vector.broadcast %cst_23 : f32 to vector<8x128xf32>
    %34 = arith.mulf %33, %32 : vector<8x128xf32>
    %35 = arith.mulf %28, %13 : vector<8x128xf32>
    %36 = arith.mulf %23, %29 : vector<8x128xf32>
    %37 = arith.addf %35, %36 : vector<8x128xf32>
    %38 = math.tanh %37 : vector<8x128xf32>
    %39 = arith.mulf %34, %38 : vector<8x128xf32>
    %40 = arith.truncf %39 : vector<8x128xf32> to vector<8x128xbf16>
    %c0_24 = arith.constant 0 : index
    %c0_25 = arith.constant 0 : index
    %41 = vector.load %arg8[%c0_24, %c0_25] : memref<64x128xbf16, #tpu.memory_space<vmem>>, vector<8x128xbf16>
    tpu.vector_store %arg8[%c0_24, %c0_25], %40 {strides = array<i32>} : memref<64x128xbf16, #tpu.memory_space<vmem>>, vector<8x128xbf16>,
    %c8 = arith.constant 8 : index
    %c0_26 = arith.constant 0 : index
    %42 = vector.load %arg9[%c8, %c0_26] : memref<64x512xf32, #tpu.memory_space<vmem>>, vector<8x512xf32>
    %43 = arith.truncf %39 : vector<8x128xf32> to vector<8x128xbf16>
    %cst_27 = arith.constant dense<0.000000e+00> : vector<8x512xf32>
    %44 = tpu.matmul %43, %3, %cst_27 {dimension_numbers = #tpu.dot_dimension_numbers<[1], [0], [0], [1], [0, 0, 1, 1], [], []>} : vector<8x128xbf16>, vector<128x512xbf16>, vector<8x512xf32> -> vector<8x512xf32>
    %45 = arith.addf %42, %44 : vector<8x512xf32>
    %46 = math.tanh %45 : vector<8x512xf32>
    %47 = vector.extract_strided_slice %46 {offsets = [0, 0], sizes = [8, 128], strides = [1, 1]} : vector<8x512xf32> to vector<8x128xf32>
    %cst_28 = arith.constant 1.000000e+00 : f32
    %48 = vector.broadcast %cst_28 : f32 to vector<8x128xf32>
    %49 = arith.addf %47, %48 : vector<8x128xf32>
    %cst_29 = arith.constant 5.000000e-01 : f32
    %50 = vector.broadcast %cst_29 : f32 to vector<8x128xf32>
    %51 = arith.mulf %50, %49 : vector<8x128xf32>
    %52 = vector.extract_strided_slice %46 {offsets = [0, 128], sizes = [8, 128], strides = [1, 1]} : vector<8x512xf32> to vector<8x128xf32>
    %cst_30 = arith.constant 1.000000e+00 : f32
    %53 = vector.broadcast %cst_30 : f32 to vector<8x128xf32>
    %54 = arith.addf %52, %53 : vector<8x128xf32>
    %cst_31 = arith.constant 5.000000e-01 : f32
    %55 = vector.broadcast %cst_31 : f32 to vector<8x128xf32>
    %56 = arith.mulf %55, %54 : vector<8x128xf32>
    %57 = vector.extract_strided_slice %46 {offsets = [0, 256], sizes = [8, 128], strides = [1, 1]} : vector<8x512xf32> to vector<8x128xf32>
    %58 = vector.extract_strided_slice %46 {offsets = [0, 384], sizes = [8, 128], strides = [1, 1]} : vector<8x512xf32> to vector<8x128xf32>
    %cst_32 = arith.constant 1.000000e+00 : f32
    %59 = vector.broadcast %cst_32 : f32 to vector<8x128xf32>
    %60 = arith.addf %58, %59 : vector<8x128xf32>
    %cst_33 = arith.constant 5.000000e-01 : f32
    %61 = vector.broadcast %cst_33 : f32 to vector<8x128xf32>
    %62 = arith.mulf %61, %60 : vector<8x128xf32>
    %63 = arith.mulf %56, %37 : vector<8x128xf32>
    %64 = arith.mulf %51, %57 : vector<8x128xf32>
    %65 = arith.addf %63, %64 : vector<8x128xf32>
    %66 = math.tanh %65 : vector<8x128xf32>
    %67 = arith.mulf %62, %66 : vector<8x128xf32>
    %68 = arith.truncf %67 : vector<8x128xf32> to vector<8x128xbf16>
    %c8_34 = arith.constant 8 : index
    %c0_35 = arith.constant 0 : index
    %69 = vector.load %arg8[%c8_34, %c0_35] : memref<64x128xbf16, #tpu.memory_space<vmem>>, vector<8x128xbf16>
    tpu.vector_store %arg8[%c8_34, %c0_35], %68 {strides = array<i32>} : memref<64x128xbf16, #tpu.memory_space<vmem>>, vector<8x128xbf16>,
    %c16 = arith.constant 16 : index
    %c0_36 = arith.constant 0 : index
    %70 = vector.load %arg9[%c16, %c0_36] : memref<64x512xf32, #tpu.memory_space<vmem>>, vector<8x512xf32>
    %71 = arith.truncf %67 : vector<8x128xf32> to vector<8x128xbf16>
    %cst_37 = arith.constant dense<0.000000e+00> : vector<8x512xf32>
    %72 = tpu.matmul %71, %3, %cst_37 {dimension_numbers = #tpu.dot_dimension_numbers<[1], [0], [0], [1], [0, 0, 1, 1], [], []>} : vector<8x128xbf16>, vector<128x512xbf16>, vector<8x512xf32> -> vector<8x512xf32>
    %73 = arith.addf %70, %72 : vector<8x512xf32>
    %74 = math.tanh %73 : vector<8x512xf32>
    %75 = vector.extract_strided_slice %74 {offsets = [0, 0], sizes = [8, 128], strides = [1, 1]} : vector<8x512xf32> to vector<8x128xf32>
    %cst_38 = arith.constant 1.000000e+00 : f32
    %76 = vector.broadcast %cst_38 : f32 to vector<8x128xf32>
    %77 = arith.addf %75, %76 : vector<8x128xf32>
    %cst_39 = arith.constant 5.000000e-01 : f32
    %78 = vector.broadcast %cst_39 : f32 to vector<8x128xf32>
    %79 = arith.mulf %78, %77 : vector<8x128xf32>
    %80 = vector.extract_strided_slice %74 {offsets = [0, 128], sizes = [8, 128], strides = [1, 1]} : vector<8x512xf32> to vector<8x128xf32>
    %cst_40 = arith.constant 1.000000e+00 : f32
    %81 = vector.broadcast %cst_40 : f32 to vector<8x128xf32>
    %82 = arith.addf %80, %81 : vector<8x128xf32>
    %cst_41 = arith.constant 5.000000e-01 : f32
    %83 = vector.broadcast %cst_41 : f32 to vector<8x128xf32>
    %84 = arith.mulf %83, %82 : vector<8x128xf32>
    %85 = vector.extract_strided_slice %74 {offsets = [0, 256], sizes = [8, 128], strides = [1, 1]} : vector<8x512xf32> to vector<8x128xf32>
    %86 = vector.extract_strided_slice %74 {offsets = [0, 384], sizes = [8, 128], strides = [1, 1]} : vector<8x512xf32> to vector<8x128xf32>
    %cst_42 = arith.constant 1.000000e+00 : f32
    %87 = vector.broadcast %cst_42 : f32 to vector<8x128xf32>
    %88 = arith.addf %86, %87 : vector<8x128xf32>
    %cst_43 = arith.constant 5.000000e-01 : f32
    %89 = vector.broadcast %cst_43 : f32 to vector<8x128xf32>
    %90 = arith.mulf %89, %88 : vector<8x128xf32>
    %91 = arith.mulf %84, %65 : vector<8x128xf32>
    %92 = arith.mulf %79, %85 : vector<8x128xf32>
    %93 = arith.addf %91, %92 : vector<8x128xf32>
    %94 = math.tanh %93 : vector<8x128xf32>
    %95 = arith.mulf %90, %94 : vector<8x128xf32>
    %96 = arith.truncf %95 : vector<8x128xf32> to vector<8x128xbf16>
    %c16_44 = arith.constant 16 : index
    %c0_45 = arith.constant 0 : index
    %97 = vector.load %arg8[%c16_44, %c0_45] : memref<64x128xbf16, #tpu.memory_space<vmem>>, vector<8x128xbf16>
    tpu.vector_store %arg8[%c16_44, %c0_45], %96 {strides = array<i32>} : memref<64x128xbf16, #tpu.memory_space<vmem>>, vector<8x128xbf16>,
    %c24 = arith.constant 24 : index
    %c0_46 = arith.constant 0 : index
    %98 = vector.load %arg9[%c24, %c0_46] : memref<64x512xf32, #tpu.memory_space<vmem>>, vector<8x512xf32>
    %99 = arith.truncf %95 : vector<8x128xf32> to vector<8x128xbf16>
    %cst_47 = arith.constant dense<0.000000e+00> : vector<8x512xf32>
    %100 = tpu.matmul %99, %3, %cst_47 {dimension_numbers = #tpu.dot_dimension_numbers<[1], [0], [0], [1], [0, 0, 1, 1], [], []>} : vector<8x128xbf16>, vector<128x512xbf16>, vector<8x512xf32> -> vector<8x512xf32>
    %101 = arith.addf %98, %100 : vector<8x512xf32>
    %102 = math.tanh %101 : vector<8x512xf32>
    %103 = vector.extract_strided_slice %102 {offsets = [0, 0], sizes = [8, 128], strides = [1, 1]} : vector<8x512xf32> to vector<8x128xf32>
    %cst_48 = arith.constant 1.000000e+00 : f32
    %104 = vector.broadcast %cst_48 : f32 to vector<8x128xf32>
    %105 = arith.addf %103, %104 : vector<8x128xf32>
    %cst_49 = arith.constant 5.000000e-01 : f32
    %106 = vector.broadcast %cst_49 : f32 to vector<8x128xf32>
    %107 = arith.mulf %106, %105 : vector<8x128xf32>
    %108 = vector.extract_strided_slice %102 {offsets = [0, 128], sizes = [8, 128], strides = [1, 1]} : vector<8x512xf32> to vector<8x128xf32>
    %cst_50 = arith.constant 1.000000e+00 : f32
    %109 = vector.broadcast %cst_50 : f32 to vector<8x128xf32>
    %110 = arith.addf %108, %109 : vector<8x128xf32>
    %cst_51 = arith.constant 5.000000e-01 : f32
    %111 = vector.broadcast %cst_51 : f32 to vector<8x128xf32>
    %112 = arith.mulf %111, %110 : vector<8x128xf32>
    %113 = vector.extract_strided_slice %102 {offsets = [0, 256], sizes = [8, 128], strides = [1, 1]} : vector<8x512xf32> to vector<8x128xf32>
    %114 = vector.extract_strided_slice %102 {offsets = [0, 384], sizes = [8, 128], strides = [1, 1]} : vector<8x512xf32> to vector<8x128xf32>
    %cst_52 = arith.constant 1.000000e+00 : f32
    %115 = vector.broadcast %cst_52 : f32 to vector<8x128xf32>
    %116 = arith.addf %114, %115 : vector<8x128xf32>
    %cst_53 = arith.constant 5.000000e-01 : f32
    %117 = vector.broadcast %cst_53 : f32 to vector<8x128xf32>
    %118 = arith.mulf %117, %116 : vector<8x128xf32>
    %119 = arith.mulf %112, %93 : vector<8x128xf32>
    %120 = arith.mulf %107, %113 : vector<8x128xf32>
    %121 = arith.addf %119, %120 : vector<8x128xf32>
    %122 = math.tanh %121 : vector<8x128xf32>
    %123 = arith.mulf %118, %122 : vector<8x128xf32>
    %124 = arith.truncf %123 : vector<8x128xf32> to vector<8x128xbf16>
    %c24_54 = arith.constant 24 : index
    %c0_55 = arith.constant 0 : index
    %125 = vector.load %arg8[%c24_54, %c0_55] : memref<64x128xbf16, #tpu.memory_space<vmem>>, vector<8x128xbf16>
    tpu.vector_store %arg8[%c24_54, %c0_55], %124 {strides = array<i32>} : memref<64x128xbf16, #tpu.memory_space<vmem>>, vector<8x128xbf16>,
    %c32 = arith.constant 32 : index
    %c0_56 = arith.constant 0 : index
    %126 = vector.load %arg9[%c32, %c0_56] : memref<64x512xf32, #tpu.memory_space<vmem>>, vector<8x512xf32>
    %127 = arith.truncf %123 : vector<8x128xf32> to vector<8x128xbf16>
    %cst_57 = arith.constant dense<0.000000e+00> : vector<8x512xf32>
    %128 = tpu.matmul %127, %3, %cst_57 {dimension_numbers = #tpu.dot_dimension_numbers<[1], [0], [0], [1], [0, 0, 1, 1], [], []>} : vector<8x128xbf16>, vector<128x512xbf16>, vector<8x512xf32> -> vector<8x512xf32>
    %129 = arith.addf %126, %128 : vector<8x512xf32>
    %130 = math.tanh %129 : vector<8x512xf32>
    %131 = vector.extract_strided_slice %130 {offsets = [0, 0], sizes = [8, 128], strides = [1, 1]} : vector<8x512xf32> to vector<8x128xf32>
    %cst_58 = arith.constant 1.000000e+00 : f32
    %132 = vector.broadcast %cst_58 : f32 to vector<8x128xf32>
    %133 = arith.addf %131, %132 : vector<8x128xf32>
    %cst_59 = arith.constant 5.000000e-01 : f32
    %134 = vector.broadcast %cst_59 : f32 to vector<8x128xf32>
    %135 = arith.mulf %134, %133 : vector<8x128xf32>
    %136 = vector.extract_strided_slice %130 {offsets = [0, 128], sizes = [8, 128], strides = [1, 1]} : vector<8x512xf32> to vector<8x128xf32>
    %cst_60 = arith.constant 1.000000e+00 : f32
    %137 = vector.broadcast %cst_60 : f32 to vector<8x128xf32>
    %138 = arith.addf %136, %137 : vector<8x128xf32>
    %cst_61 = arith.constant 5.000000e-01 : f32
    %139 = vector.broadcast %cst_61 : f32 to vector<8x128xf32>
    %140 = arith.mulf %139, %138 : vector<8x128xf32>
    %141 = vector.extract_strided_slice %130 {offsets = [0, 256], sizes = [8, 128], strides = [1, 1]} : vector<8x512xf32> to vector<8x128xf32>
    %142 = vector.extract_strided_slice %130 {offsets = [0, 384], sizes = [8, 128], strides = [1, 1]} : vector<8x512xf32> to vector<8x128xf32>
    %cst_62 = arith.constant 1.000000e+00 : f32
    %143 = vector.broadcast %cst_62 : f32 to vector<8x128xf32>
    %144 = arith.addf %142, %143 : vector<8x128xf32>
    %cst_63 = arith.constant 5.000000e-01 : f32
    %145 = vector.broadcast %cst_63 : f32 to vector<8x128xf32>
    %146 = arith.mulf %145, %144 : vector<8x128xf32>
    %147 = arith.mulf %140, %121 : vector<8x128xf32>
    %148 = arith.mulf %135, %141 : vector<8x128xf32>
    %149 = arith.addf %147, %148 : vector<8x128xf32>
    %150 = math.tanh %149 : vector<8x128xf32>
    %151 = arith.mulf %146, %150 : vector<8x128xf32>
    %152 = arith.truncf %151 : vector<8x128xf32> to vector<8x128xbf16>
    %c32_64 = arith.constant 32 : index
    %c0_65 = arith.constant 0 : index
    %153 = vector.load %arg8[%c32_64, %c0_65] : memref<64x128xbf16, #tpu.memory_space<vmem>>, vector<8x128xbf16>
    tpu.vector_store %arg8[%c32_64, %c0_65], %152 {strides = array<i32>} : memref<64x128xbf16, #tpu.memory_space<vmem>>, vector<8x128xbf16>,
    %c40 = arith.constant 40 : index
    %c0_66 = arith.constant 0 : index
    %154 = vector.load %arg9[%c40, %c0_66] : memref<64x512xf32, #tpu.memory_space<vmem>>, vector<8x512xf32>
    %155 = arith.truncf %151 : vector<8x128xf32> to vector<8x128xbf16>
    %cst_67 = arith.constant dense<0.000000e+00> : vector<8x512xf32>
    %156 = tpu.matmul %155, %3, %cst_67 {dimension_numbers = #tpu.dot_dimension_numbers<[1], [0], [0], [1], [0, 0, 1, 1], [], []>} : vector<8x128xbf16>, vector<128x512xbf16>, vector<8x512xf32> -> vector<8x512xf32>
    %157 = arith.addf %154, %156 : vector<8x512xf32>
    %158 = math.tanh %157 : vector<8x512xf32>
    %159 = vector.extract_strided_slice %158 {offsets = [0, 0], sizes = [8, 128], strides = [1, 1]} : vector<8x512xf32> to vector<8x128xf32>
    %cst_68 = arith.constant 1.000000e+00 : f32
    %160 = vector.broadcast %cst_68 : f32 to vector<8x128xf32>
    %161 = arith.addf %159, %160 : vector<8x128xf32>
    %cst_69 = arith.constant 5.000000e-01 : f32
    %162 = vector.broadcast %cst_69 : f32 to vector<8x128xf32>
    %163 = arith.mulf %162, %161 : vector<8x128xf32>
    %164 = vector.extract_strided_slice %158 {offsets = [0, 128], sizes = [8, 128], strides = [1, 1]} : vector<8x512xf32> to vector<8x128xf32>
    %cst_70 = arith.constant 1.000000e+00 : f32
    %165 = vector.broadcast %cst_70 : f32 to vector<8x128xf32>
    %166 = arith.addf %164, %165 : vector<8x128xf32>
    %cst_71 = arith.constant 5.000000e-01 : f32
    %167 = vector.broadcast %cst_71 : f32 to vector<8x128xf32>
    %168 = arith.mulf %167, %166 : vector<8x128xf32>
    %169 = vector.extract_strided_slice %158 {offsets = [0, 256], sizes = [8, 128], strides = [1, 1]} : vector<8x512xf32> to vector<8x128xf32>
    %170 = vector.extract_strided_slice %158 {offsets = [0, 384], sizes = [8, 128], strides = [1, 1]} : vector<8x512xf32> to vector<8x128xf32>
    %cst_72 = arith.constant 1.000000e+00 : f32
    %171 = vector.broadcast %cst_72 : f32 to vector<8x128xf32>
    %172 = arith.addf %170, %171 : vector<8x128xf32>
    %cst_73 = arith.constant 5.000000e-01 : f32
    %173 = vector.broadcast %cst_73 : f32 to vector<8x128xf32>
    %174 = arith.mulf %173, %172 : vector<8x128xf32>
    %175 = arith.mulf %168, %149 : vector<8x128xf32>
    %176 = arith.mulf %163, %169 : vector<8x128xf32>
    %177 = arith.addf %175, %176 : vector<8x128xf32>
    %178 = math.tanh %177 : vector<8x128xf32>
    %179 = arith.mulf %174, %178 : vector<8x128xf32>
    %180 = arith.truncf %179 : vector<8x128xf32> to vector<8x128xbf16>
    %c40_74 = arith.constant 40 : index
    %c0_75 = arith.constant 0 : index
    %181 = vector.load %arg8[%c40_74, %c0_75] : memref<64x128xbf16, #tpu.memory_space<vmem>>, vector<8x128xbf16>
    tpu.vector_store %arg8[%c40_74, %c0_75], %180 {strides = array<i32>} : memref<64x128xbf16, #tpu.memory_space<vmem>>, vector<8x128xbf16>,
    %c48 = arith.constant 48 : index
    %c0_76 = arith.constant 0 : index
    %182 = vector.load %arg9[%c48, %c0_76] : memref<64x512xf32, #tpu.memory_space<vmem>>, vector<8x512xf32>
    %183 = arith.truncf %179 : vector<8x128xf32> to vector<8x128xbf16>
    %cst_77 = arith.constant dense<0.000000e+00> : vector<8x512xf32>
    %184 = tpu.matmul %183, %3, %cst_77 {dimension_numbers = #tpu.dot_dimension_numbers<[1], [0], [0], [1], [0, 0, 1, 1], [], []>} : vector<8x128xbf16>, vector<128x512xbf16>, vector<8x512xf32> -> vector<8x512xf32>
    %185 = arith.addf %182, %184 : vector<8x512xf32>
    %186 = math.tanh %185 : vector<8x512xf32>
    %187 = vector.extract_strided_slice %186 {offsets = [0, 0], sizes = [8, 128], strides = [1, 1]} : vector<8x512xf32> to vector<8x128xf32>
    %cst_78 = arith.constant 1.000000e+00 : f32
    %188 = vector.broadcast %cst_78 : f32 to vector<8x128xf32>
    %189 = arith.addf %187, %188 : vector<8x128xf32>
    %cst_79 = arith.constant 5.000000e-01 : f32
    %190 = vector.broadcast %cst_79 : f32 to vector<8x128xf32>
    %191 = arith.mulf %190, %189 : vector<8x128xf32>
    %192 = vector.extract_strided_slice %186 {offsets = [0, 128], sizes = [8, 128], strides = [1, 1]} : vector<8x512xf32> to vector<8x128xf32>
    %cst_80 = arith.constant 1.000000e+00 : f32
    %193 = vector.broadcast %cst_80 : f32 to vector<8x128xf32>
    %194 = arith.addf %192, %193 : vector<8x128xf32>
    %cst_81 = arith.constant 5.000000e-01 : f32
    %195 = vector.broadcast %cst_81 : f32 to vector<8x128xf32>
    %196 = arith.mulf %195, %194 : vector<8x128xf32>
    %197 = vector.extract_strided_slice %186 {offsets = [0, 256], sizes = [8, 128], strides = [1, 1]} : vector<8x512xf32> to vector<8x128xf32>
    %198 = vector.extract_strided_slice %186 {offsets = [0, 384], sizes = [8, 128], strides = [1, 1]} : vector<8x512xf32> to vector<8x128xf32>
    %cst_82 = arith.constant 1.000000e+00 : f32
    %199 = vector.broadcast %cst_82 : f32 to vector<8x128xf32>
    %200 = arith.addf %198, %199 : vector<8x128xf32>
    %cst_83 = arith.constant 5.000000e-01 : f32
    %201 = vector.broadcast %cst_83 : f32 to vector<8x128xf32>
    %202 = arith.mulf %201, %200 : vector<8x128xf32>
    %203 = arith.mulf %196, %177 : vector<8x128xf32>
    %204 = arith.mulf %191, %197 : vector<8x128xf32>
    %205 = arith.addf %203, %204 : vector<8x128xf32>
    %206 = math.tanh %205 : vector<8x128xf32>
    %207 = arith.mulf %202, %206 : vector<8x128xf32>
    %208 = arith.truncf %207 : vector<8x128xf32> to vector<8x128xbf16>
    %c48_84 = arith.constant 48 : index
    %c0_85 = arith.constant 0 : index
    %209 = vector.load %arg8[%c48_84, %c0_85] : memref<64x128xbf16, #tpu.memory_space<vmem>>, vector<8x128xbf16>
    tpu.vector_store %arg8[%c48_84, %c0_85], %208 {strides = array<i32>} : memref<64x128xbf16, #tpu.memory_space<vmem>>, vector<8x128xbf16>,
    %c56 = arith.constant 56 : index
    %c0_86 = arith.constant 0 : index
    %210 = vector.load %arg9[%c56, %c0_86] : memref<64x512xf32, #tpu.memory_space<vmem>>, vector<8x512xf32>
    %211 = arith.truncf %207 : vector<8x128xf32> to vector<8x128xbf16>
    %cst_87 = arith.constant dense<0.000000e+00> : vector<8x512xf32>
    %212 = tpu.matmul %211, %3, %cst_87 {dimension_numbers = #tpu.dot_dimension_numbers<[1], [0], [0], [1], [0, 0, 1, 1], [], []>} : vector<8x128xbf16>, vector<128x512xbf16>, vector<8x512xf32> -> vector<8x512xf32>
    %213 = arith.addf %210, %212 : vector<8x512xf32>
    %214 = math.tanh %213 : vector<8x512xf32>
    %215 = vector.extract_strided_slice %214 {offsets = [0, 0], sizes = [8, 128], strides = [1, 1]} : vector<8x512xf32> to vector<8x128xf32>
    %cst_88 = arith.constant 1.000000e+00 : f32
    %216 = vector.broadcast %cst_88 : f32 to vector<8x128xf32>
    %217 = arith.addf %215, %216 : vector<8x128xf32>
    %cst_89 = arith.constant 5.000000e-01 : f32
    %218 = vector.broadcast %cst_89 : f32 to vector<8x128xf32>
    %219 = arith.mulf %218, %217 : vector<8x128xf32>
    %220 = vector.extract_strided_slice %214 {offsets = [0, 128], sizes = [8, 128], strides = [1, 1]} : vector<8x512xf32> to vector<8x128xf32>
    %cst_90 = arith.constant 1.000000e+00 : f32
    %221 = vector.broadcast %cst_90 : f32 to vector<8x128xf32>
    %222 = arith.addf %220, %221 : vector<8x128xf32>
    %cst_91 = arith.constant 5.000000e-01 : f32
    %223 = vector.broadcast %cst_91 : f32 to vector<8x128xf32>
    %224 = arith.mulf %223, %222 : vector<8x128xf32>
    %225 = vector.extract_strided_slice %214 {offsets = [0, 256], sizes = [8, 128], strides = [1, 1]} : vector<8x512xf32> to vector<8x128xf32>
    %226 = vector.extract_strided_slice %214 {offsets = [0, 384], sizes = [8, 128], strides = [1, 1]} : vector<8x512xf32> to vector<8x128xf32>
    %cst_92 = arith.constant 1.000000e+00 : f32
    %227 = vector.broadcast %cst_92 : f32 to vector<8x128xf32>
    %228 = arith.addf %226, %227 : vector<8x128xf32>
    %cst_93 = arith.constant 5.000000e-01 : f32
    %229 = vector.broadcast %cst_93 : f32 to vector<8x128xf32>
    %230 = arith.mulf %229, %228 : vector<8x128xf32>
    %231 = arith.mulf %224, %205 : vector<8x128xf32>
    %232 = arith.mulf %219, %225 : vector<8x128xf32>
    %233 = arith.addf %231, %232 : vector<8x128xf32>
    %234 = math.tanh %233 : vector<8x128xf32>
    %235 = arith.mulf %230, %234 : vector<8x128xf32>
    %236 = arith.truncf %235 : vector<8x128xf32> to vector<8x128xbf16>
    %c56_94 = arith.constant 56 : index
    %c0_95 = arith.constant 0 : index
    %237 = vector.load %arg8[%c56_94, %c0_95] : memref<64x128xbf16, #tpu.memory_space<vmem>>, vector<8x128xbf16>
    tpu.vector_store %arg8[%c56_94, %c0_95], %236 {strides = array<i32>} : memref<64x128xbf16, #tpu.memory_space<vmem>>, vector<8x128xbf16>,
    %c1 = arith.constant 1 : index
    %c0_96 = arith.constant 0 : index
    %c0_97 = arith.constant 0 : index
    %238 = vector.load %arg2[%c1, %c0_96, %c0_97] : memref<2x128x512xbf16, #tpu.memory_space<vmem>>, vector<1x128x512xbf16>
    %239 = vector.shape_cast %238 : vector<1x128x512xbf16> to vector<128x512xbf16>
    %c1_98 = arith.constant 1 : index
    %c0_99 = arith.constant 0 : index
    %c0_100 = arith.constant 0 : index
    %240 = vector.load %arg3[%c1_98, %c0_99, %c0_100] : memref<2x128x512xbf16, #tpu.memory_space<vmem>>, vector<1x128x512xbf16>
    %241 = vector.shape_cast %240 : vector<1x128x512xbf16> to vector<128x512xbf16>
    %c1_101 = arith.constant 1 : index
    %c0_102 = arith.constant 0 : index
    %c0_103 = arith.constant 0 : index
    %242 = vector.load %arg4[%c1_101, %c0_102, %c0_103] : memref<2x1x512xf32, #tpu.memory_space<vmem>>, vector<1x1x512xf32>
    %243 = vector.shape_cast %242 : vector<1x1x512xf32> to vector<1x512xf32>
    %c0_104 = arith.constant 0 : index
    %c0_105 = arith.constant 0 : index
    %244 = vector.load %arg8[%c0_104, %c0_105] : memref<64x128xbf16, #tpu.memory_space<vmem>>, vector<64x128xbf16>
    %cst_106 = arith.constant dense<0.000000e+00> : vector<64x512xf32>
    %245 = tpu.matmul %244, %239, %cst_106 {dimension_numbers = #tpu.dot_dimension_numbers<[1], [0], [0], [1], [0, 0, 1, 1], [], []>} : vector<64x128xbf16>, vector<128x512xbf16>, vector<64x512xf32> -> vector<64x512xf32>
    %246 = vector.broadcast %243 : vector<1x512xf32> to vector<64x512xf32>
    %247 = arith.addf %245, %246 : vector<64x512xf32>
    %c0_107 = arith.constant 0 : index
    %c0_108 = arith.constant 0 : index
    %248 = vector.load %arg9[%c0_107, %c0_108] : memref<64x512xf32, #tpu.memory_space<vmem>>, vector<64x512xf32>
    tpu.vector_store %arg9[%c0_107, %c0_108], %247 {strides = array<i32>} : memref<64x512xf32, #tpu.memory_space<vmem>>, vector<64x512xf32>,
    %cst_109 = arith.constant 0.000000e+00 : f32
    %249 = vector.broadcast %cst_109 : f32 to vector<8x128xf32>
    %cst_110 = arith.constant 0.000000e+00 : f32
    %250 = vector.broadcast %cst_110 : f32 to vector<8x128xf32>
    %c0_111 = arith.constant 0 : index
    %c0_112 = arith.constant 0 : index
    %251 = vector.load %arg9[%c0_111, %c0_112] : memref<64x512xf32, #tpu.memory_space<vmem>>, vector<8x512xf32>
    %252 = arith.truncf %249 : vector<8x128xf32> to vector<8x128xbf16>
    %cst_113 = arith.constant dense<0.000000e+00> : vector<8x512xf32>
    %253 = tpu.matmul %252, %241, %cst_113 {dimension_numbers = #tpu.dot_dimension_numbers<[1], [0], [0], [1], [0, 0, 1, 1], [], []>} : vector<8x128xbf16>, vector<128x512xbf16>, vector<8x512xf32> -> vector<8x512xf32>
    %254 = arith.addf %251, %253 : vector<8x512xf32>
    %255 = math.tanh %254 : vector<8x512xf32>
    %256 = vector.extract_strided_slice %255 {offsets = [0, 0], sizes = [8, 128], strides = [1, 1]} : vector<8x512xf32> to vector<8x128xf32>
    %cst_114 = arith.constant 1.000000e+00 : f32
    %257 = vector.broadcast %cst_114 : f32 to vector<8x128xf32>
    %258 = arith.addf %256, %257 : vector<8x128xf32>
    %cst_115 = arith.constant 5.000000e-01 : f32
    %259 = vector.broadcast %cst_115 : f32 to vector<8x128xf32>
    %260 = arith.mulf %259, %258 : vector<8x128xf32>
    %261 = vector.extract_strided_slice %255 {offsets = [0, 128], sizes = [8, 128], strides = [1, 1]} : vector<8x512xf32> to vector<8x128xf32>
    %cst_116 = arith.constant 1.000000e+00 : f32
    %262 = vector.broadcast %cst_116 : f32 to vector<8x128xf32>
    %263 = arith.addf %261, %262 : vector<8x128xf32>
    %cst_117 = arith.constant 5.000000e-01 : f32
    %264 = vector.broadcast %cst_117 : f32 to vector<8x128xf32>
    %265 = arith.mulf %264, %263 : vector<8x128xf32>
    %266 = vector.extract_strided_slice %255 {offsets = [0, 256], sizes = [8, 128], strides = [1, 1]} : vector<8x512xf32> to vector<8x128xf32>
    %267 = vector.extract_strided_slice %255 {offsets = [0, 384], sizes = [8, 128], strides = [1, 1]} : vector<8x512xf32> to vector<8x128xf32>
    %cst_118 = arith.constant 1.000000e+00 : f32
    %268 = vector.broadcast %cst_118 : f32 to vector<8x128xf32>
    %269 = arith.addf %267, %268 : vector<8x128xf32>
    %cst_119 = arith.constant 5.000000e-01 : f32
    %270 = vector.broadcast %cst_119 : f32 to vector<8x128xf32>
    %271 = arith.mulf %270, %269 : vector<8x128xf32>
    %272 = arith.mulf %265, %250 : vector<8x128xf32>
    %273 = arith.mulf %260, %266 : vector<8x128xf32>
    %274 = arith.addf %272, %273 : vector<8x128xf32>
    %275 = math.tanh %274 : vector<8x128xf32>
    %276 = arith.mulf %271, %275 : vector<8x128xf32>
    %277 = arith.truncf %276 : vector<8x128xf32> to vector<8x128xbf16>
    %c0_120 = arith.constant 0 : index
    %c0_121 = arith.constant 0 : index
    %278 = vector.load %arg8[%c0_120, %c0_121] : memref<64x128xbf16, #tpu.memory_space<vmem>>, vector<8x128xbf16>
    tpu.vector_store %arg8[%c0_120, %c0_121], %277 {strides = array<i32>} : memref<64x128xbf16, #tpu.memory_space<vmem>>, vector<8x128xbf16>,
    %c8_122 = arith.constant 8 : index
    %c0_123 = arith.constant 0 : index
    %279 = vector.load %arg9[%c8_122, %c0_123] : memref<64x512xf32, #tpu.memory_space<vmem>>, vector<8x512xf32>
    %280 = arith.truncf %276 : vector<8x128xf32> to vector<8x128xbf16>
    %cst_124 = arith.constant dense<0.000000e+00> : vector<8x512xf32>
    %281 = tpu.matmul %280, %241, %cst_124 {dimension_numbers = #tpu.dot_dimension_numbers<[1], [0], [0], [1], [0, 0, 1, 1], [], []>} : vector<8x128xbf16>, vector<128x512xbf16>, vector<8x512xf32> -> vector<8x512xf32>
    %282 = arith.addf %279, %281 : vector<8x512xf32>
    %283 = math.tanh %282 : vector<8x512xf32>
    %284 = vector.extract_strided_slice %283 {offsets = [0, 0], sizes = [8, 128], strides = [1, 1]} : vector<8x512xf32> to vector<8x128xf32>
    %cst_125 = arith.constant 1.000000e+00 : f32
    %285 = vector.broadcast %cst_125 : f32 to vector<8x128xf32>
    %286 = arith.addf %284, %285 : vector<8x128xf32>
    %cst_126 = arith.constant 5.000000e-01 : f32
    %287 = vector.broadcast %cst_126 : f32 to vector<8x128xf32>
    %288 = arith.mulf %287, %286 : vector<8x128xf32>
    %289 = vector.extract_strided_slice %283 {offsets = [0, 128], sizes = [8, 128], strides = [1, 1]} : vector<8x512xf32> to vector<8x128xf32>
    %cst_127 = arith.constant 1.000000e+00 : f32
    %290 = vector.broadcast %cst_127 : f32 to vector<8x128xf32>
    %291 = arith.addf %289, %290 : vector<8x128xf32>
    %cst_128 = arith.constant 5.000000e-01 : f32
    %292 = vector.broadcast %cst_128 : f32 to vector<8x128xf32>
    %293 = arith.mulf %292, %291 : vector<8x128xf32>
    %294 = vector.extract_strided_slice %283 {offsets = [0, 256], sizes = [8, 128], strides = [1, 1]} : vector<8x512xf32> to vector<8x128xf32>
    %295 = vector.extract_strided_slice %283 {offsets = [0, 384], sizes = [8, 128], strides = [1, 1]} : vector<8x512xf32> to vector<8x128xf32>
    %cst_129 = arith.constant 1.000000e+00 : f32
    %296 = vector.broadcast %cst_129 : f32 to vector<8x128xf32>
    %297 = arith.addf %295, %296 : vector<8x128xf32>
    %cst_130 = arith.constant 5.000000e-01 : f32
    %298 = vector.broadcast %cst_130 : f32 to vector<8x128xf32>
    %299 = arith.mulf %298, %297 : vector<8x128xf32>
    %300 = arith.mulf %293, %274 : vector<8x128xf32>
    %301 = arith.mulf %288, %294 : vector<8x128xf32>
    %302 = arith.addf %300, %301 : vector<8x128xf32>
    %303 = math.tanh %302 : vector<8x128xf32>
    %304 = arith.mulf %299, %303 : vector<8x128xf32>
    %305 = arith.truncf %304 : vector<8x128xf32> to vector<8x128xbf16>
    %c8_131 = arith.constant 8 : index
    %c0_132 = arith.constant 0 : index
    %306 = vector.load %arg8[%c8_131, %c0_132] : memref<64x128xbf16, #tpu.memory_space<vmem>>, vector<8x128xbf16>
    tpu.vector_store %arg8[%c8_131, %c0_132], %305 {strides = array<i32>} : memref<64x128xbf16, #tpu.memory_space<vmem>>, vector<8x128xbf16>,
    %c16_133 = arith.constant 16 : index
    %c0_134 = arith.constant 0 : index
    %307 = vector.load %arg9[%c16_133, %c0_134] : memref<64x512xf32, #tpu.memory_space<vmem>>, vector<8x512xf32>
    %308 = arith.truncf %304 : vector<8x128xf32> to vector<8x128xbf16>
    %cst_135 = arith.constant dense<0.000000e+00> : vector<8x512xf32>
    %309 = tpu.matmul %308, %241, %cst_135 {dimension_numbers = #tpu.dot_dimension_numbers<[1], [0], [0], [1], [0, 0, 1, 1], [], []>} : vector<8x128xbf16>, vector<128x512xbf16>, vector<8x512xf32> -> vector<8x512xf32>
    %310 = arith.addf %307, %309 : vector<8x512xf32>
    %311 = math.tanh %310 : vector<8x512xf32>
    %312 = vector.extract_strided_slice %311 {offsets = [0, 0], sizes = [8, 128], strides = [1, 1]} : vector<8x512xf32> to vector<8x128xf32>
    %cst_136 = arith.constant 1.000000e+00 : f32
    %313 = vector.broadcast %cst_136 : f32 to vector<8x128xf32>
    %314 = arith.addf %312, %313 : vector<8x128xf32>
    %cst_137 = arith.constant 5.000000e-01 : f32
    %315 = vector.broadcast %cst_137 : f32 to vector<8x128xf32>
    %316 = arith.mulf %315, %314 : vector<8x128xf32>
    %317 = vector.extract_strided_slice %311 {offsets = [0, 128], sizes = [8, 128], strides = [1, 1]} : vector<8x512xf32> to vector<8x128xf32>
    %cst_138 = arith.constant 1.000000e+00 : f32
    %318 = vector.broadcast %cst_138 : f32 to vector<8x128xf32>
    %319 = arith.addf %317, %318 : vector<8x128xf32>
    %cst_139 = arith.constant 5.000000e-01 : f32
    %320 = vector.broadcast %cst_139 : f32 to vector<8x128xf32>
    %321 = arith.mulf %320, %319 : vector<8x128xf32>
    %322 = vector.extract_strided_slice %311 {offsets = [0, 256], sizes = [8, 128], strides = [1, 1]} : vector<8x512xf32> to vector<8x128xf32>
    %323 = vector.extract_strided_slice %311 {offsets = [0, 384], sizes = [8, 128], strides = [1, 1]} : vector<8x512xf32> to vector<8x128xf32>
    %cst_140 = arith.constant 1.000000e+00 : f32
    %324 = vector.broadcast %cst_140 : f32 to vector<8x128xf32>
    %325 = arith.addf %323, %324 : vector<8x128xf32>
    %cst_141 = arith.constant 5.000000e-01 : f32
    %326 = vector.broadcast %cst_141 : f32 to vector<8x128xf32>
    %327 = arith.mulf %326, %325 : vector<8x128xf32>
    %328 = arith.mulf %321, %302 : vector<8x128xf32>
    %329 = arith.mulf %316, %322 : vector<8x128xf32>
    %330 = arith.addf %328, %329 : vector<8x128xf32>
    %331 = math.tanh %330 : vector<8x128xf32>
    %332 = arith.mulf %327, %331 : vector<8x128xf32>
    %333 = arith.truncf %332 : vector<8x128xf32> to vector<8x128xbf16>
    %c16_142 = arith.constant 16 : index
    %c0_143 = arith.constant 0 : index
    %334 = vector.load %arg8[%c16_142, %c0_143] : memref<64x128xbf16, #tpu.memory_space<vmem>>, vector<8x128xbf16>
    tpu.vector_store %arg8[%c16_142, %c0_143], %333 {strides = array<i32>} : memref<64x128xbf16, #tpu.memory_space<vmem>>, vector<8x128xbf16>,
    %c24_144 = arith.constant 24 : index
    %c0_145 = arith.constant 0 : index
    %335 = vector.load %arg9[%c24_144, %c0_145] : memref<64x512xf32, #tpu.memory_space<vmem>>, vector<8x512xf32>
    %336 = arith.truncf %332 : vector<8x128xf32> to vector<8x128xbf16>
    %cst_146 = arith.constant dense<0.000000e+00> : vector<8x512xf32>
    %337 = tpu.matmul %336, %241, %cst_146 {dimension_numbers = #tpu.dot_dimension_numbers<[1], [0], [0], [1], [0, 0, 1, 1], [], []>} : vector<8x128xbf16>, vector<128x512xbf16>, vector<8x512xf32> -> vector<8x512xf32>
    %338 = arith.addf %335, %337 : vector<8x512xf32>
    %339 = math.tanh %338 : vector<8x512xf32>
    %340 = vector.extract_strided_slice %339 {offsets = [0, 0], sizes = [8, 128], strides = [1, 1]} : vector<8x512xf32> to vector<8x128xf32>
    %cst_147 = arith.constant 1.000000e+00 : f32
    %341 = vector.broadcast %cst_147 : f32 to vector<8x128xf32>
    %342 = arith.addf %340, %341 : vector<8x128xf32>
    %cst_148 = arith.constant 5.000000e-01 : f32
    %343 = vector.broadcast %cst_148 : f32 to vector<8x128xf32>
    %344 = arith.mulf %343, %342 : vector<8x128xf32>
    %345 = vector.extract_strided_slice %339 {offsets = [0, 128], sizes = [8, 128], strides = [1, 1]} : vector<8x512xf32> to vector<8x128xf32>
    %cst_149 = arith.constant 1.000000e+00 : f32
    %346 = vector.broadcast %cst_149 : f32 to vector<8x128xf32>
    %347 = arith.addf %345, %346 : vector<8x128xf32>
    %cst_150 = arith.constant 5.000000e-01 : f32
    %348 = vector.broadcast %cst_150 : f32 to vector<8x128xf32>
    %349 = arith.mulf %348, %347 : vector<8x128xf32>
    %350 = vector.extract_strided_slice %339 {offsets = [0, 256], sizes = [8, 128], strides = [1, 1]} : vector<8x512xf32> to vector<8x128xf32>
    %351 = vector.extract_strided_slice %339 {offsets = [0, 384], sizes = [8, 128], strides = [1, 1]} : vector<8x512xf32> to vector<8x128xf32>
    %cst_151 = arith.constant 1.000000e+00 : f32
    %352 = vector.broadcast %cst_151 : f32 to vector<8x128xf32>
    %353 = arith.addf %351, %352 : vector<8x128xf32>
    %cst_152 = arith.constant 5.000000e-01 : f32
    %354 = vector.broadcast %cst_152 : f32 to vector<8x128xf32>
    %355 = arith.mulf %354, %353 : vector<8x128xf32>
    %356 = arith.mulf %349, %330 : vector<8x128xf32>
    %357 = arith.mulf %344, %350 : vector<8x128xf32>
    %358 = arith.addf %356, %357 : vector<8x128xf32>
    %359 = math.tanh %358 : vector<8x128xf32>
    %360 = arith.mulf %355, %359 : vector<8x128xf32>
    %361 = arith.truncf %360 : vector<8x128xf32> to vector<8x128xbf16>
    %c24_153 = arith.constant 24 : index
    %c0_154 = arith.constant 0 : index
    %362 = vector.load %arg8[%c24_153, %c0_154] : memref<64x128xbf16, #tpu.memory_space<vmem>>, vector<8x128xbf16>
    tpu.vector_store %arg8[%c24_153, %c0_154], %361 {strides = array<i32>} : memref<64x128xbf16, #tpu.memory_space<vmem>>, vector<8x128xbf16>,
    %c32_155 = arith.constant 32 : index
    %c0_156 = arith.constant 0 : index
    %363 = vector.load %arg9[%c32_155, %c0_156] : memref<64x512xf32, #tpu.memory_space<vmem>>, vector<8x512xf32>
    %364 = arith.truncf %360 : vector<8x128xf32> to vector<8x128xbf16>
    %cst_157 = arith.constant dense<0.000000e+00> : vector<8x512xf32>
    %365 = tpu.matmul %364, %241, %cst_157 {dimension_numbers = #tpu.dot_dimension_numbers<[1], [0], [0], [1], [0, 0, 1, 1], [], []>} : vector<8x128xbf16>, vector<128x512xbf16>, vector<8x512xf32> -> vector<8x512xf32>
    %366 = arith.addf %363, %365 : vector<8x512xf32>
    %367 = math.tanh %366 : vector<8x512xf32>
    %368 = vector.extract_strided_slice %367 {offsets = [0, 0], sizes = [8, 128], strides = [1, 1]} : vector<8x512xf32> to vector<8x128xf32>
    %cst_158 = arith.constant 1.000000e+00 : f32
    %369 = vector.broadcast %cst_158 : f32 to vector<8x128xf32>
    %370 = arith.addf %368, %369 : vector<8x128xf32>
    %cst_159 = arith.constant 5.000000e-01 : f32
    %371 = vector.broadcast %cst_159 : f32 to vector<8x128xf32>
    %372 = arith.mulf %371, %370 : vector<8x128xf32>
    %373 = vector.extract_strided_slice %367 {offsets = [0, 128], sizes = [8, 128], strides = [1, 1]} : vector<8x512xf32> to vector<8x128xf32>
    %cst_160 = arith.constant 1.000000e+00 : f32
    %374 = vector.broadcast %cst_160 : f32 to vector<8x128xf32>
    %375 = arith.addf %373, %374 : vector<8x128xf32>
    %cst_161 = arith.constant 5.000000e-01 : f32
    %376 = vector.broadcast %cst_161 : f32 to vector<8x128xf32>
    %377 = arith.mulf %376, %375 : vector<8x128xf32>
    %378 = vector.extract_strided_slice %367 {offsets = [0, 256], sizes = [8, 128], strides = [1, 1]} : vector<8x512xf32> to vector<8x128xf32>
    %379 = vector.extract_strided_slice %367 {offsets = [0, 384], sizes = [8, 128], strides = [1, 1]} : vector<8x512xf32> to vector<8x128xf32>
    %cst_162 = arith.constant 1.000000e+00 : f32
    %380 = vector.broadcast %cst_162 : f32 to vector<8x128xf32>
    %381 = arith.addf %379, %380 : vector<8x128xf32>
    %cst_163 = arith.constant 5.000000e-01 : f32
    %382 = vector.broadcast %cst_163 : f32 to vector<8x128xf32>
    %383 = arith.mulf %382, %381 : vector<8x128xf32>
    %384 = arith.mulf %377, %358 : vector<8x128xf32>
    %385 = arith.mulf %372, %378 : vector<8x128xf32>
    %386 = arith.addf %384, %385 : vector<8x128xf32>
    %387 = math.tanh %386 : vector<8x128xf32>
    %388 = arith.mulf %383, %387 : vector<8x128xf32>
    %389 = arith.truncf %388 : vector<8x128xf32> to vector<8x128xbf16>
    %c32_164 = arith.constant 32 : index
    %c0_165 = arith.constant 0 : index
    %390 = vector.load %arg8[%c32_164, %c0_165] : memref<64x128xbf16, #tpu.memory_space<vmem>>, vector<8x128xbf16>
    tpu.vector_store %arg8[%c32_164, %c0_165], %389 {strides = array<i32>} : memref<64x128xbf16, #tpu.memory_space<vmem>>, vector<8x128xbf16>,
    %c40_166 = arith.constant 40 : index
    %c0_167 = arith.constant 0 : index
    %391 = vector.load %arg9[%c40_166, %c0_167] : memref<64x512xf32, #tpu.memory_space<vmem>>, vector<8x512xf32>
    %392 = arith.truncf %388 : vector<8x128xf32> to vector<8x128xbf16>
    %cst_168 = arith.constant dense<0.000000e+00> : vector<8x512xf32>
    %393 = tpu.matmul %392, %241, %cst_168 {dimension_numbers = #tpu.dot_dimension_numbers<[1], [0], [0], [1], [0, 0, 1, 1], [], []>} : vector<8x128xbf16>, vector<128x512xbf16>, vector<8x512xf32> -> vector<8x512xf32>
    %394 = arith.addf %391, %393 : vector<8x512xf32>
    %395 = math.tanh %394 : vector<8x512xf32>
    %396 = vector.extract_strided_slice %395 {offsets = [0, 0], sizes = [8, 128], strides = [1, 1]} : vector<8x512xf32> to vector<8x128xf32>
    %cst_169 = arith.constant 1.000000e+00 : f32
    %397 = vector.broadcast %cst_169 : f32 to vector<8x128xf32>
    %398 = arith.addf %396, %397 : vector<8x128xf32>
    %cst_170 = arith.constant 5.000000e-01 : f32
    %399 = vector.broadcast %cst_170 : f32 to vector<8x128xf32>
    %400 = arith.mulf %399, %398 : vector<8x128xf32>
    %401 = vector.extract_strided_slice %395 {offsets = [0, 128], sizes = [8, 128], strides = [1, 1]} : vector<8x512xf32> to vector<8x128xf32>
    %cst_171 = arith.constant 1.000000e+00 : f32
    %402 = vector.broadcast %cst_171 : f32 to vector<8x128xf32>
    %403 = arith.addf %401, %402 : vector<8x128xf32>
    %cst_172 = arith.constant 5.000000e-01 : f32
    %404 = vector.broadcast %cst_172 : f32 to vector<8x128xf32>
    %405 = arith.mulf %404, %403 : vector<8x128xf32>
    %406 = vector.extract_strided_slice %395 {offsets = [0, 256], sizes = [8, 128], strides = [1, 1]} : vector<8x512xf32> to vector<8x128xf32>
    %407 = vector.extract_strided_slice %395 {offsets = [0, 384], sizes = [8, 128], strides = [1, 1]} : vector<8x512xf32> to vector<8x128xf32>
    %cst_173 = arith.constant 1.000000e+00 : f32
    %408 = vector.broadcast %cst_173 : f32 to vector<8x128xf32>
    %409 = arith.addf %407, %408 : vector<8x128xf32>
    %cst_174 = arith.constant 5.000000e-01 : f32
    %410 = vector.broadcast %cst_174 : f32 to vector<8x128xf32>
    %411 = arith.mulf %410, %409 : vector<8x128xf32>
    %412 = arith.mulf %405, %386 : vector<8x128xf32>
    %413 = arith.mulf %400, %406 : vector<8x128xf32>
    %414 = arith.addf %412, %413 : vector<8x128xf32>
    %415 = math.tanh %414 : vector<8x128xf32>
    %416 = arith.mulf %411, %415 : vector<8x128xf32>
    %417 = arith.truncf %416 : vector<8x128xf32> to vector<8x128xbf16>
    %c40_175 = arith.constant 40 : index
    %c0_176 = arith.constant 0 : index
    %418 = vector.load %arg8[%c40_175, %c0_176] : memref<64x128xbf16, #tpu.memory_space<vmem>>, vector<8x128xbf16>
    tpu.vector_store %arg8[%c40_175, %c0_176], %417 {strides = array<i32>} : memref<64x128xbf16, #tpu.memory_space<vmem>>, vector<8x128xbf16>,
    %c48_177 = arith.constant 48 : index
    %c0_178 = arith.constant 0 : index
    %419 = vector.load %arg9[%c48_177, %c0_178] : memref<64x512xf32, #tpu.memory_space<vmem>>, vector<8x512xf32>
    %420 = arith.truncf %416 : vector<8x128xf32> to vector<8x128xbf16>
    %cst_179 = arith.constant dense<0.000000e+00> : vector<8x512xf32>
    %421 = tpu.matmul %420, %241, %cst_179 {dimension_numbers = #tpu.dot_dimension_numbers<[1], [0], [0], [1], [0, 0, 1, 1], [], []>} : vector<8x128xbf16>, vector<128x512xbf16>, vector<8x512xf32> -> vector<8x512xf32>
    %422 = arith.addf %419, %421 : vector<8x512xf32>
    %423 = math.tanh %422 : vector<8x512xf32>
    %424 = vector.extract_strided_slice %423 {offsets = [0, 0], sizes = [8, 128], strides = [1, 1]} : vector<8x512xf32> to vector<8x128xf32>
    %cst_180 = arith.constant 1.000000e+00 : f32
    %425 = vector.broadcast %cst_180 : f32 to vector<8x128xf32>
    %426 = arith.addf %424, %425 : vector<8x128xf32>
    %cst_181 = arith.constant 5.000000e-01 : f32
    %427 = vector.broadcast %cst_181 : f32 to vector<8x128xf32>
    %428 = arith.mulf %427, %426 : vector<8x128xf32>
    %429 = vector.extract_strided_slice %423 {offsets = [0, 128], sizes = [8, 128], strides = [1, 1]} : vector<8x512xf32> to vector<8x128xf32>
    %cst_182 = arith.constant 1.000000e+00 : f32
    %430 = vector.broadcast %cst_182 : f32 to vector<8x128xf32>
    %431 = arith.addf %429, %430 : vector<8x128xf32>
    %cst_183 = arith.constant 5.000000e-01 : f32
    %432 = vector.broadcast %cst_183 : f32 to vector<8x128xf32>
    %433 = arith.mulf %432, %431 : vector<8x128xf32>
    %434 = vector.extract_strided_slice %423 {offsets = [0, 256], sizes = [8, 128], strides = [1, 1]} : vector<8x512xf32> to vector<8x128xf32>
    %435 = vector.extract_strided_slice %423 {offsets = [0, 384], sizes = [8, 128], strides = [1, 1]} : vector<8x512xf32> to vector<8x128xf32>
    %cst_184 = arith.constant 1.000000e+00 : f32
    %436 = vector.broadcast %cst_184 : f32 to vector<8x128xf32>
    %437 = arith.addf %435, %436 : vector<8x128xf32>
    %cst_185 = arith.constant 5.000000e-01 : f32
    %438 = vector.broadcast %cst_185 : f32 to vector<8x128xf32>
    %439 = arith.mulf %438, %437 : vector<8x128xf32>
    %440 = arith.mulf %433, %414 : vector<8x128xf32>
    %441 = arith.mulf %428, %434 : vector<8x128xf32>
    %442 = arith.addf %440, %441 : vector<8x128xf32>
    %443 = math.tanh %442 : vector<8x128xf32>
    %444 = arith.mulf %439, %443 : vector<8x128xf32>
    %445 = arith.truncf %444 : vector<8x128xf32> to vector<8x128xbf16>
    %c48_186 = arith.constant 48 : index
    %c0_187 = arith.constant 0 : index
    %446 = vector.load %arg8[%c48_186, %c0_187] : memref<64x128xbf16, #tpu.memory_space<vmem>>, vector<8x128xbf16>
    tpu.vector_store %arg8[%c48_186, %c0_187], %445 {strides = array<i32>} : memref<64x128xbf16, #tpu.memory_space<vmem>>, vector<8x128xbf16>,
    %c56_188 = arith.constant 56 : index
    %c0_189 = arith.constant 0 : index
    %447 = vector.load %arg9[%c56_188, %c0_189] : memref<64x512xf32, #tpu.memory_space<vmem>>, vector<8x512xf32>
    %448 = arith.truncf %444 : vector<8x128xf32> to vector<8x128xbf16>
    %cst_190 = arith.constant dense<0.000000e+00> : vector<8x512xf32>
    %449 = tpu.matmul %448, %241, %cst_190 {dimension_numbers = #tpu.dot_dimension_numbers<[1], [0], [0], [1], [0, 0, 1, 1], [], []>} : vector<8x128xbf16>, vector<128x512xbf16>, vector<8x512xf32> -> vector<8x512xf32>
    %450 = arith.addf %447, %449 : vector<8x512xf32>
    %451 = math.tanh %450 : vector<8x512xf32>
    %452 = vector.extract_strided_slice %451 {offsets = [0, 0], sizes = [8, 128], strides = [1, 1]} : vector<8x512xf32> to vector<8x128xf32>
    %cst_191 = arith.constant 1.000000e+00 : f32
    %453 = vector.broadcast %cst_191 : f32 to vector<8x128xf32>
    %454 = arith.addf %452, %453 : vector<8x128xf32>
    %cst_192 = arith.constant 5.000000e-01 : f32
    %455 = vector.broadcast %cst_192 : f32 to vector<8x128xf32>
    %456 = arith.mulf %455, %454 : vector<8x128xf32>
    %457 = vector.extract_strided_slice %451 {offsets = [0, 128], sizes = [8, 128], strides = [1, 1]} : vector<8x512xf32> to vector<8x128xf32>
    %cst_193 = arith.constant 1.000000e+00 : f32
    %458 = vector.broadcast %cst_193 : f32 to vector<8x128xf32>
    %459 = arith.addf %457, %458 : vector<8x128xf32>
    %cst_194 = arith.constant 5.000000e-01 : f32
    %460 = vector.broadcast %cst_194 : f32 to vector<8x128xf32>
    %461 = arith.mulf %460, %459 : vector<8x128xf32>
    %462 = vector.extract_strided_slice %451 {offsets = [0, 256], sizes = [8, 128], strides = [1, 1]} : vector<8x512xf32> to vector<8x128xf32>
    %463 = vector.extract_strided_slice %451 {offsets = [0, 384], sizes = [8, 128], strides = [1, 1]} : vector<8x512xf32> to vector<8x128xf32>
    %cst_195 = arith.constant 1.000000e+00 : f32
    %464 = vector.broadcast %cst_195 : f32 to vector<8x128xf32>
    %465 = arith.addf %463, %464 : vector<8x128xf32>
    %cst_196 = arith.constant 5.000000e-01 : f32
    %466 = vector.broadcast %cst_196 : f32 to vector<8x128xf32>
    %467 = arith.mulf %466, %465 : vector<8x128xf32>
    %468 = arith.mulf %461, %442 : vector<8x128xf32>
    %469 = arith.mulf %456, %462 : vector<8x128xf32>
    %470 = arith.addf %468, %469 : vector<8x128xf32>
    %471 = math.tanh %470 : vector<8x128xf32>
    %472 = arith.mulf %467, %471 : vector<8x128xf32>
    %473 = arith.truncf %472 : vector<8x128xf32> to vector<8x128xbf16>
    %c56_197 = arith.constant 56 : index
    %c0_198 = arith.constant 0 : index
    %474 = vector.load %arg8[%c56_197, %c0_198] : memref<64x128xbf16, #tpu.memory_space<vmem>>, vector<8x128xbf16>
    tpu.vector_store %arg8[%c56_197, %c0_198], %473 {strides = array<i32>} : memref<64x128xbf16, #tpu.memory_space<vmem>>, vector<8x128xbf16>,
    %c0_199 = arith.constant 0 : index
    %c0_200 = arith.constant 0 : index
    %475 = vector.load %arg8[%c0_199, %c0_200] : memref<64x128xbf16, #tpu.memory_space<vmem>>, vector<64x128xbf16>
    %c0_201 = arith.constant 0 : index
    %c0_202 = arith.constant 0 : index
    %476 = vector.load %arg5[%c0_201, %c0_202] : memref<128x128xbf16, #tpu.memory_space<vmem>>, vector<128x128xbf16>
    %cst_203 = arith.constant dense<0.000000e+00> : vector<64x128xf32>
    %477 = tpu.matmul %475, %476, %cst_203 {dimension_numbers = #tpu.dot_dimension_numbers<[1], [0], [0], [1], [0, 0, 1, 1], [], []>} : vector<64x128xbf16>, vector<128x128xbf16>, vector<64x128xf32> -> vector<64x128xf32>
    %c0_204 = arith.constant 0 : index
    %c0_205 = arith.constant 0 : index
    %478 = vector.load %arg6[%c0_204, %c0_205] : memref<1x128xf32, #tpu.memory_space<vmem>>, vector<1x128xf32>
    %479 = vector.broadcast %478 : vector<1x128xf32> to vector<64x128xf32>
    %480 = arith.addf %477, %479 : vector<64x128xf32>
    %cst_206 = arith.constant 5.000000e-01 : f32
    %481 = vector.broadcast %cst_206 : f32 to vector<64x128xf32>
    %482 = arith.mulf %481, %480 : vector<64x128xf32>
    %483 = math.tanh %482 : vector<64x128xf32>
    %cst_207 = arith.constant 1.000000e+00 : f32
    %484 = vector.broadcast %cst_207 : f32 to vector<64x128xf32>
    %485 = arith.addf %483, %484 : vector<64x128xf32>
    %cst_208 = arith.constant 5.000000e-01 : f32
    %486 = vector.broadcast %cst_208 : f32 to vector<64x128xf32>
    %487 = arith.mulf %486, %485 : vector<64x128xf32>
    %c0_209 = arith.constant 0 : index
    %c0_210 = arith.constant 0 : index
    %c0_211 = arith.constant 0 : index
    %488 = vector.load %arg7[%c0_209, %c0_210, %c0_211] : memref<1x64x128xf32, #tpu.memory_space<vmem>>, vector<1x64x128xf32>
    %489 = vector.shape_cast %488 : vector<1x64x128xf32> to vector<64x128xf32>
    %490 = vector.shape_cast %487 : vector<64x128xf32> to vector<1x64x128xf32>
    tpu.vector_store %arg7[%c0_209, %c0_210, %c0_211], %490 {strides = array<i32>} : memref<1x64x128xf32, #tpu.memory_space<vmem>>, vector<1x64x128xf32>,
    return
  }
  func.func @transform_0(%arg0: i32) -> (i32, i32, i32) {
    %c0_i32 = arith.constant 0 : i32
    %c0_i32_0 = arith.constant 0 : i32
    %c0_i32_1 = arith.constant 0 : i32
    return %arg0, %c0_i32, %c0_i32_0 : i32, i32, i32
  }
  func.func @transform_1(%arg0: i32) -> (i32, i32, i32) {
    %c0_i32 = arith.constant 0 : i32
    %c0_i32_0 = arith.constant 0 : i32
    %c0_i32_1 = arith.constant 0 : i32
    %c0_i32_2 = arith.constant 0 : i32
    return %c0_i32, %c0_i32_0, %c0_i32_1 : i32, i32, i32
  }
  func.func @transform_2(%arg0: i32) -> (i32, i32, i32) {
    %c0_i32 = arith.constant 0 : i32
    %c0_i32_0 = arith.constant 0 : i32
    %c0_i32_1 = arith.constant 0 : i32
    %c0_i32_2 = arith.constant 0 : i32
    return %c0_i32, %c0_i32_0, %c0_i32_1 : i32, i32, i32
  }
  func.func @transform_3(%arg0: i32) -> (i32, i32, i32) {
    %c0_i32 = arith.constant 0 : i32
    %c0_i32_0 = arith.constant 0 : i32
    %c0_i32_1 = arith.constant 0 : i32
    %c0_i32_2 = arith.constant 0 : i32
    return %c0_i32, %c0_i32_0, %c0_i32_1 : i32, i32, i32
  }
  func.func @transform_4(%arg0: i32) -> (i32, i32) {
    %c0_i32 = arith.constant 0 : i32
    %c0_i32_0 = arith.constant 0 : i32
    %c0_i32_1 = arith.constant 0 : i32
    return %c0_i32, %c0_i32_0 : i32, i32
  }
  func.func @transform_5(%arg0: i32) -> (i32, i32) {
    %c0_i32 = arith.constant 0 : i32
    %c0_i32_0 = arith.constant 0 : i32
    %c0_i32_1 = arith.constant 0 : i32
    return %c0_i32, %c0_i32_0 : i32, i32
  }
  func.func @transform_6(%arg0: i32) -> (i32, i32, i32) {
    %c0_i32 = arith.constant 0 : i32
    %c0_i32_0 = arith.constant 0 : i32
    %c0_i32_1 = arith.constant 0 : i32
    return %arg0, %c0_i32, %c0_i32_0 : i32, i32, i32
  }
}

</mosaic_0001>

<llo_original>
// kernel: tpu_custom_call.1
$region0: #{tpu_custom_call.1}
  #allocation0 [shape = 'u32[]', space=smem, size = 0x4, offset = 0x4, fixed_abs, tag = 'smem constant byte address 0x4 - core index']
  #allocation1 [shape = 'u32[144,128]{1,0:T(1,128)}', space=vmem, size = 0x12000, scoped, tag = 'internal scratch']
  #allocation2 [shape = 'bf16[64,128]{1,0:T(8,128)(2,1)}', space=vmem, size = 0x4000, scoped, tag = 'scratch operand']
  #allocation3 [shape = 'f32[64,512]{1,0:T(8,128)}', space=vmem, size = 0x20000, scoped, tag = 'scratch operand']
  %s0 = inlined_call_operand.hbm [shape: bf16[1,64,128], index: 0, kind: input, shape index: {}]
  %s1 = inlined_call_operand.hbm [shape: bf16[2,128,512], index: 1, kind: input, shape index: {}]
  %s2 = inlined_call_operand.hbm [shape: bf16[2,128,512], index: 2, kind: input, shape index: {}]
  %s3 = inlined_call_operand.hbm [shape: f32[2,1,512], index: 3, kind: input, shape index: {}]
  %s4 = inlined_call_operand.hbm [shape: bf16[128,128], index: 4, kind: input, shape index: {}]
  %s5 = inlined_call_operand.vmem [shape: f32[1,128], index: 5, kind: input, shape index: {}]
  %s6 = inlined_call_operand.hbm [shape: f32[1,64,128], index: 6, kind: output, shape index: {}]
  %s7 = sld [smem:[#allocation0]]
  $region54: #{tpu_custom_call.1} parent=0
    _
  %s9 = ssub.s32 1, %s7
  %s10 = scalar_select 0, %s9, %s7
  $region1: #{tpu_custom_call.1} parent=0
    #allocation4 [shape = 'u8[16384]{0}', space=vmem, size = 0x4000, scoped, tag = 'input window, operand 0, single buffered']
    #allocation5 [shape = 's32[1]{0}', space=sflag, size = 0x4, scoped, tag = 'scoped memory for tpu_custom_call.1']
    #allocation6 [shape = 's32[1]{0}', space=sflag, size = 0x4, scoped, tag = 'scoped memory for tpu_custom_call.1']
    #allocation7 [shape = 'u8[262144]{0}', space=vmem, size = 0x40000, scoped, tag = 'input window, operand 1, single buffered']
    #allocation8 [shape = 's32[1]{0}', space=sflag, size = 0x4, scoped, tag = 'scoped memory for tpu_custom_call.1']
    #allocation9 [shape = 'u8[262144]{0}', space=vmem, size = 0x40000, scoped, tag = 'input window, operand 2, single buffered']
    #allocation10 [shape = 'u8[4096]{0}', space=vmem, size = 0x1000, scoped, tag = 'input window, operand 3, single buffered']
    #allocation11 [shape = 's32[1]{0}', space=sflag, size = 0x4, scoped, tag = 'scoped memory for tpu_custom_call.1']
    #allocation12 [shape = 'u8[32768]{0}', space=vmem, size = 0x8000, scoped, tag = 'input window, operand 4, single buffered']
    #allocation13 [shape = 'u8[32768]{0}', space=vmem, size = 0x8000, scoped, tag = 'output window, operand 0, single buffered']
    %11 = vsyncpa [#allocation5], 0
    %12 = vsyncpa [#allocation8], 0
    %13 = vsyncpa [#allocation11], 0
    %14 = vsyncpa [#allocation6], 0
    // Predicated region
    $region2: #{tpu_custom_call.1} parent=1 // pred_check
      _
    $region3: #{tpu_custom_call.1} parent=1 // pred_check_branch
      %16 = sbr.rel (0) target = $region5
    $region4: #{tpu_custom_call.1} parent=1 // pred_region
      %s18 = ssub.s32 512, 512
      %19 = vsyncadd [#allocation5], %s18
      %s20 = sshll.u32 [#allocation4], 4
      %s21 = int_to_ptr.vmem [resolvable:$true] %s20
      %26 = dma.hbm_to_vmem [thread:$0]  %s0, 512, %s21, [#allocation5], 64, 64, 4
    $region5: #{tpu_custom_call.1} parent=1 // pred_fallthru
      _
    // Predicated region
    $region6: #{tpu_custom_call.1} parent=1 // pred_check
      _
    $region7: #{tpu_custom_call.1} parent=1 // pred_check_branch
      %28 = sbr.rel (0) target = $region9
    $region8: #{tpu_custom_call.1} parent=1 // pred_region
      %s30 = ssub.s32 8192, 8192
      %31 = vsyncadd [#allocation8], %s30
      %s32 = sshll.u32 [#allocation7], 4
      %s33 = int_to_ptr.vmem [resolvable:$true] %s32
      %38 = dma.hbm_to_vmem [thread:$0]  %s1, 8192, %s33, [#allocation8], 256, 256, 16
    $region9: #{tpu_custom_call.1} parent=1 // pred_fallthru
      _
    // Predicated region
    $region10: #{tpu_custom_call.1} parent=1 // pred_check
      _
    $region11: #{tpu_custom_call.1} parent=1 // pred_check_branch
      %40 = sbr.rel (0) target = $region13
    $region12: #{tpu_custom_call.1} parent=1 // pred_region
      %s42 = ssub.s32 8192, 8192
      %43 = vsyncadd [#allocation8], %s42
      %s44 = sshll.u32 [#allocation9], 4
      %s45 = int_to_ptr.vmem [resolvable:$true] %s44
      %50 = dma.hbm_to_vmem [thread:$0]  %s2, 8192, %s45, [#allocation8], 256, 256, 16
    $region13: #{tpu_custom_call.1} parent=1 // pred_fallthru
      _
    // Predicated region
    $region14: #{tpu_custom_call.1} parent=1 // pred_check
      _
    $region15: #{tpu_custom_call.1} parent=1 // pred_check_branch
      %52 = sbr.rel (0) target = $region17
    $region16: #{tpu_custom_call.1} parent=1 // pred_region
      %s54 = ssub.s32 128, 128
      %55 = vsyncadd [#allocation11], %s54
      %s56 = sshll.u32 [#allocation10], 4
      %s57 = int_to_ptr.vmem [resolvable:$true] %s56
      %62 = dma.hbm_to_vmem [thread:$0]  %s3, 128, %s57, [#allocation11], 64, 64, 4
    $region17: #{tpu_custom_call.1} parent=1 // pred_fallthru
      _
    // Predicated region
    $region18: #{tpu_custom_call.1} parent=1 // pred_check
      _
    $region19: #{tpu_custom_call.1} parent=1 // pred_check_branch
      %64 = sbr.rel (0) target = $region21
    $region20: #{tpu_custom_call.1} parent=1 // pred_region
      %s66 = ssub.s32 1024, 1024
      %67 = vsyncadd [#allocation11], %s66
      %s68 = sshll.u32 [#allocation12], 4
      %s69 = int_to_ptr.vmem [resolvable:$true] %s68
      %74 = dma.hbm_to_vmem [thread:$0]  %s4, 1024, %s69, [#allocation11], 64, 64, 4
    $region21: #{tpu_custom_call.1} parent=1 // pred_fallthru
      _
    // Predicated region
    $region22: #{tpu_custom_call.1} parent=1 // pred_check
      _
    $region23: #{tpu_custom_call.1} parent=1 // pred_check_branch
      %76 = sbr.rel (0) target = $region25
    $region24: #{tpu_custom_call.1} parent=1 // pred_region
      _
    $region25: #{tpu_custom_call.1} parent=1 // pred_fallthru
      _
    // Predicated region
    $region26: #{tpu_custom_call.1} parent=1 // pred_check
      _
    $region27: #{tpu_custom_call.1} parent=1 // pred_check_branch
      %78 = sbr.rel (0) target = $region29
    $region28: #{tpu_custom_call.1} parent=1 // pred_region
      %79 = dma.done [#allocation5], 512
    $region29: #{tpu_custom_call.1} parent=1 // pred_fallthru
      _
    // Predicated region
    $region30: #{tpu_custom_call.1} parent=1 // pred_check
      _
    $region31: #{tpu_custom_call.1} parent=1 // pred_check_branch
      %81 = sbr.rel (0) target = $region33
    $region32: #{tpu_custom_call.1} parent=1 // pred_region
      %82 = dma.done [#allocation8], 8192
    $region33: #{tpu_custom_call.1} parent=1 // pred_fallthru
      _
    // Predicated region
    $region34: #{tpu_custom_call.1} parent=1 // pred_check
      _
    $region35: #{tpu_custom_call.1} parent=1 // pred_check_branch
      %84 = sbr.rel (0) target = $region37
    $region36: #{tpu_custom_call.1} parent=1 // pred_region
      %85 = dma.done [#allocation8], 8192
    $region37: #{tpu_custom_call.1} parent=1 // pred_fallthru
      _
    // Predicated region
    $region38: #{tpu_custom_call.1} parent=1 // pred_check
      _
    $region39: #{tpu_custom_call.1} parent=1 // pred_check_branch
      %87 = sbr.rel (0) target = $region41
    $region40: #{tpu_custom_call.1} parent=1 // pred_region
      %88 = dma.done [#allocation11], 128
    $region41: #{tpu_custom_call.1} parent=1 // pred_fallthru
      _
    // Predicated region
    $region42: #{tpu_custom_call.1} parent=1 // pred_check
      _
    $region43: #{tpu_custom_call.1} parent=1 // pred_check_branch
      %90 = sbr.rel (0) target = $region45
    $region44: #{tpu_custom_call.1} parent=1 // pred_region
      %91 = dma.done [#allocation11], 1024
    $region45: #{tpu_custom_call.1} parent=1 // pred_fallthru
      _
    %v93 = vld [vmem:[#allocation7] sm:$0xff]
    %v94 = vld [vmem:[#allocation7 + $0x8] sm:$0xff]
    %v95 = vld [vmem:[#allocation7 + $0x10] sm:$0xff]
    %v96 = vld [vmem:[#allocation7 + $0x18] sm:$0xff]
    %v97 = vld [vmem:[#allocation7 + $0x20] sm:$0xff]
    %v98 = vld [vmem:[#allocation7 + $0x28] sm:$0xff]
    %v99 = vld [vmem:[#allocation7 + $0x30] sm:$0xff]
    %v100 = vld [vmem:[#allocation7 + $0x38] sm:$0xff]
    %v101 = vld [vmem:[#allocation7 + $0x40] sm:$0xff]
    %v102 = vld [vmem:[#allocation7 + $0x48] sm:$0xff]
    %v103 = vld [vmem:[#allocation7 + $0x50] sm:$0xff]
    %v104 = vld [vmem:[#allocation7 + $0x58] sm:$0xff]
    %v105 = vld [vmem:[#allocation7 + $0x60] sm:$0xff]
    %v106 = vld [vmem:[#allocation7 + $0x68] sm:$0xff]
    %v107 = vld [vmem:[#allocation7 + $0x70] sm:$0xff]
    %v108 = vld [vmem:[#allocation7 + $0x78] sm:$0xff]
    %v109 = vld [vmem:[#allocation7 + $0x80] sm:$0xff]
    %v110 = vld [vmem:[#allocation7 + $0x88] sm:$0xff]
    %v111 = vld [vmem:[#allocation7 + $0x90] sm:$0xff]
    %v112 = vld [vmem:[#allocation7 + $0x98] sm:$0xff]
    %v113 = vld [vmem:[#allocation7 + $0xa0] sm:$0xff]
    %v114 = vld [vmem:[#allocation7 + $0xa8] sm:$0xff]
    %v115 = vld [vmem:[#allocation7 + $0xb0] sm:$0xff]
    %v116 = vld [vmem:[#allocation7 + $0xb8] sm:$0xff]
    %v117 = vld [vmem:[#allocation7 + $0xc0] sm:$0xff]
    %v118 = vld [vmem:[#allocation7 + $0xc8] sm:$0xff]
    %v119 = vld [vmem:[#allocation7 + $0xd0] sm:$0xff]
    %v120 = vld [vmem:[#allocation7 + $0xd8] sm:$0xff]
    %v121 = vld [vmem:[#allocation7 + $0xe0] sm:$0xff]
    %v122 = vld [vmem:[#allocation7 + $0xe8] sm:$0xff]
    %v123 = vld [vmem:[#allocation7 + $0xf0] sm:$0xff]
    %v124 = vld [vmem:[#allocation7 + $0xf8] sm:$0xff]
    %v125 = vld [vmem:[#allocation9] sm:$0xff]
    %v126 = vld [vmem:[#allocation9 + $0x8] sm:$0xff]
    %v127 = vld [vmem:[#allocation9 + $0x10] sm:$0xff]
    %v128 = vld [vmem:[#allocation9 + $0x18] sm:$0xff]
    %v129 = vld [vmem:[#allocation9 + $0x20] sm:$0xff]
    %v130 = vld [vmem:[#allocation9 + $0x28] sm:$0xff]
    %v131 = vld [vmem:[#allocation9 + $0x30] sm:$0xff]
    %v132 = vld [vmem:[#allocation9 + $0x38] sm:$0xff]
    %v133 = vld [vmem:[#allocation9 + $0x40] sm:$0xff]
    %v134 = vld [vmem:[#allocation9 + $0x48] sm:$0xff]
    %v135 = vld [vmem:[#allocation9 + $0x50] sm:$0xff]
    %v136 = vld [vmem:[#allocation9 + $0x58] sm:$0xff]
    %v137 = vld [vmem:[#allocation9 + $0x60] sm:$0xff]
    %v138 = vld [vmem:[#allocation9 + $0x68] sm:$0xff]
    %v139 = vld [vmem:[#allocation9 + $0x70] sm:$0xff]
    %v140 = vld [vmem:[#allocation9 + $0x78] sm:$0xff]
    %v141 = vld [vmem:[#allocation9 + $0x80] sm:$0xff]
    %v142 = vld [vmem:[#allocation9 + $0x88] sm:$0xff]
    %v143 = vld [vmem:[#allocation9 + $0x90] sm:$0xff]
    %v144 = vld [vmem:[#allocation9 + $0x98] sm:$0xff]
    %v145 = vld [vmem:[#allocation9 + $0xa0] sm:$0xff]
    %v146 = vld [vmem:[#allocation9 + $0xa8] sm:$0xff]
    %v147 = vld [vmem:[#allocation9 + $0xb0] sm:$0xff]
    %v148 = vld [vmem:[#allocation9 + $0xb8] sm:$0xff]
    %v149 = vld [vmem:[#allocation9 + $0xc0] sm:$0xff]
    %v150 = vld [vmem:[#allocation9 + $0xc8] sm:$0xff]
    %v151 = vld [vmem:[#allocation9 + $0xd0] sm:$0xff]
    %v152 = vld [vmem:[#allocation9 + $0xd8] sm:$0xff]
    %v153 = vld [vmem:[#allocation9 + $0xe0] sm:$0xff]
    %v154 = vld [vmem:[#allocation9 + $0xe8] sm:$0xff]
    %v155 = vld [vmem:[#allocation9 + $0xf0] sm:$0xff]
    %v156 = vld [vmem:[#allocation9 + $0xf8] sm:$0xff]
    %v157 = vld [vmem:[#allocation10] sm:$0xf]
    %v158 = vld [vmem:[#allocation4] sm:$0xf]
    %v159 = vld [vmem:[#allocation4 + $0x4] sm:$0xf]
    %v160 = vld [vmem:[#allocation4 + $0x8] sm:$0xf]
    %v161 = vld [vmem:[#allocation4 + $0xc] sm:$0xf]
    %v162 = vld [vmem:[#allocation4 + $0x10] sm:$0xf]
    %v163 = vld [vmem:[#allocation4 + $0x14] sm:$0xf]
    %v164 = vld [vmem:[#allocation4 + $0x18] sm:$0xf]
    %v165 = vld [vmem:[#allocation4 + $0x1c] sm:$0xf]
    %v167 = vlaneseq
    %v168 = vshrl.u32 %v167, 7
    %v169 = vsub.s32 0, %v168
    %v170 = vrot.slane %v157, %v169
    %v171 = vlaneseq
    %v172 = vshrl.u32 %v171, 7
    %v173 = vsub.s32 1, %v172
    %v174 = vrot.slane %v157, %v173
    %v175 = vlaneseq
    %v176 = vshrl.u32 %v175, 7
    %v177 = vsub.s32 2, %v176
    %v178 = vrot.slane %v157, %v177
    %v179 = vlaneseq
    %v180 = vshrl.u32 %v179, 7
    %v181 = vsub.s32 3, %v180
    %v182 = vrot.slane %v157, %v181
    %v195 = vunpack.c.l.b16 %v158
    %v196 = vunpack.c.l.b16 %v159
    %v197 = vunpack.c.l.b16 %v160
    %v198 = vunpack.c.l.b16 %v161
    %v199 = vunpack.c.l.b16 %v162
    %v200 = vunpack.c.l.b16 %v163
    %v201 = vunpack.c.l.b16 %v164
    %v202 = vunpack.c.l.b16 %v165
    %v203 = vpack.c.b16 %v196, %v195
    %v204 = vpack.c.b16 %v198, %v197
    %v205 = vpack.c.b16 %v200, %v199
    %v206 = vpack.c.b16 %v202, %v201
    %v243 = vunpack.c.l.b16 %v93
    %v244 = vunpack.c.h.b16 %v93
    %v245 = vunpack.c.l.b16 %v94
    %v246 = vunpack.c.h.b16 %v94
    %v247 = vunpack.c.l.b16 %v95
    %v248 = vunpack.c.h.b16 %v95
    %v249 = vunpack.c.l.b16 %v96
    %v250 = vunpack.c.h.b16 %v96
    %v251 = vunpack.c.l.b16 %v97
    %v252 = vunpack.c.h.b16 %v97
    %v253 = vunpack.c.l.b16 %v98
    %v254 = vunpack.c.h.b16 %v98
    %v255 = vunpack.c.l.b16 %v99
    %v256 = vunpack.c.h.b16 %v99
    %v257 = vunpack.c.l.b16 %v100
    %v258 = vunpack.c.h.b16 %v100
    %v259 = vunpack.c.l.b16 %v101
    %v260 = vunpack.c.h.b16 %v101
    %v261 = vunpack.c.l.b16 %v102
    %v262 = vunpack.c.h.b16 %v102
    %v263 = vunpack.c.l.b16 %v103
    %v264 = vunpack.c.h.b16 %v103
    %v265 = vunpack.c.l.b16 %v104
    %v266 = vunpack.c.h.b16 %v104
    %v267 = vunpack.c.l.b16 %v105
    %v268 = vunpack.c.h.b16 %v105
    %v269 = vunpack.c.l.b16 %v106
    %v270 = vunpack.c.h.b16 %v106
    %v271 = vunpack.c.l.b16 %v107
    %v272 = vunpack.c.h.b16 %v107
    %v273 = vunpack.c.l.b16 %v108
    %v274 = vunpack.c.h.b16 %v108
    %v275 = vunpack.c.l.b16 %v109
    %v276 = vunpack.c.h.b16 %v109
    %v277 = vunpack.c.l.b16 %v110
    %v278 = vunpack.c.h.b16 %v110
    %v279 = vunpack.c.l.b16 %v111
    %v280 = vunpack.c.h.b16 %v111
    %v281 = vunpack.c.l.b16 %v112
    %v282 = vunpack.c.h.b16 %v112
    %v283 = vunpack.c.l.b16 %v113
    %v284 = vunpack.c.h.b16 %v113
    %v285 = vunpack.c.l.b16 %v114
    %v286 = vunpack.c.h.b16 %v114
    %v287 = vunpack.c.l.b16 %v115
    %v288 = vunpack.c.h.b16 %v115
    %v289 = vunpack.c.l.b16 %v116
    %v290 = vunpack.c.h.b16 %v116
    %v291 = vunpack.c.l.b16 %v117
    %v292 = vunpack.c.h.b16 %v117
    %v293 = vunpack.c.l.b16 %v118
    %v294 = vunpack.c.h.b16 %v118
    %v295 = vunpack.c.l.b16 %v119
    %v296 = vunpack.c.h.b16 %v119
    %v297 = vunpack.c.l.b16 %v120
    %v298 = vunpack.c.h.b16 %v120
    %v299 = vunpack.c.l.b16 %v121
    %v300 = vunpack.c.h.b16 %v121
    %v301 = vunpack.c.l.b16 %v122
    %v302 = vunpack.c.h.b16 %v122
    %v303 = vunpack.c.l.b16 %v123
    %v304 = vunpack.c.h.b16 %v123
    %v305 = vunpack.c.l.b16 %v124
    %v306 = vunpack.c.h.b16 %v124
    %v307 = vpack.c.b16 %v247, %v243
    %v308 = vpack.c.b16 %v248, %v244
    %v309 = vpack.c.b16 %v249, %v245
    %v310 = vpack.c.b16 %v250, %v246
    %v311 = vpack.c.b16 %v255, %v251
    %v312 = vpack.c.b16 %v256, %v252
    %v313 = vpack.c.b16 %v257, %v253
    %v314 = vpack.c.b16 %v258, %v254
    %v315 = vpack.c.b16 %v263, %v259
    %v316 = vpack.c.b16 %v264, %v260
    %v317 = vpack.c.b16 %v265, %v261
    %v318 = vpack.c.b16 %v266, %v262
    %v319 = vpack.c.b16 %v271, %v267
    %v320 = vpack.c.b16 %v272, %v268
    %v321 = vpack.c.b16 %v273, %v269
    %v322 = vpack.c.b16 %v274, %v270
    %v323 = vpack.c.b16 %v279, %v275
    %v324 = vpack.c.b16 %v280, %v276
    %v325 = vpack.c.b16 %v281, %v277
    %v326 = vpack.c.b16 %v282, %v278
    %v327 = vpack.c.b16 %v287, %v283
    %v328 = vpack.c.b16 %v288, %v284
    %v329 = vpack.c.b16 %v289, %v285
    %v330 = vpack.c.b16 %v290, %v286
    %v331 = vpack.c.b16 %v295, %v291
    %v332 = vpack.c.b16 %v296, %v292
    %v333 = vpack.c.b16 %v297, %v293
    %v334 = vpack.c.b16 %v298, %v294
    %v335 = vpack.c.b16 %v303, %v299
    %v336 = vpack.c.b16 %v304, %v300
    %v337 = vpack.c.b16 %v305, %v301
    %v338 = vpack.c.b16 %v306, %v302
    %371 = vmatprep.subr.bf16.mxu0 %v336
    %372 = vmatpush1.bf16.msra.mxu0 %v335
    %373 = vmatprep.subr.bf16.mxu0 %v332
    %374 = vmatpush1.bf16.msra.mxu0 %v331
    %375 = vmatprep.subr.bf16.mxu0 %v328
    %376 = vmatpush1.bf16.msra.mxu0 %v327
    %377 = vmatprep.subr.bf16.mxu0 %v324
    %378 = vmatpush1.bf16.msra.mxu0 %v323
    %379 = vmatprep.subr.bf16.mxu0 %v320
    %380 = vmatpush1.bf16.msra.mxu0 %v319
    %381 = vmatprep.subr.bf16.mxu0 %v316
    %382 = vmatpush1.bf16.msra.mxu0 %v315
    %383 = vmatprep.subr.bf16.mxu0 %v312
    %384 = vmatpush1.bf16.msra.mxu0 %v311
    %385 = vmatprep.subr.bf16.mxu0 %v308
    %386 = vmatpush1.bf16.msra.mxu0 %v307
    %387 = vmatprep.subr.bf16.mxu0 0
    %388 = vmatpush2.bf16.msra.mxu0 0
    %389 = vmatprep.subr.bf16.mxu0 0
    %390 = vmatpush2.bf16.msra.mxu0 0
    %391 = vmatprep.subr.bf16.mxu0 0
    %392 = vmatpush2.bf16.msra.mxu0 0
    %393 = vmatprep.subr.bf16.mxu0 0
    %394 = vmatpush2.bf16.msra.mxu0 0
    %395 = vmatprep.subr.bf16.mxu0 0
    %396 = vmatpush2.bf16.msra.mxu0 0
    %397 = vmatprep.subr.bf16.mxu0 0
    %398 = vmatpush2.bf16.msra.mxu0 0
    %399 = vmatprep.subr.bf16.mxu0 0
    %400 = vmatpush2.bf16.msra.mxu0 0
    %401 = vmatprep.subr.bf16.mxu0 0
    %402 = vmatpush2.bf16.msra.mxu0 0
    %403 = vmatprep.mubr.bf16.mxu0 0
    %404 = vmatmul.mubr.bf16.gmra.mxu0 %v203
    %v405 = vpop.f32.mrf.mxu0
    %v406 = vadd.f32 %v170, %v405
    %v407 = vpop.f32.mrf.mxu0
    %v408 = vadd.f32 %v174, %v407
    %v409 = vpop.f32.mrf.mxu0
    %v410 = vadd.f32 %v170, %v409
    %v411 = vpop.f32.mrf.mxu0
    %v412 = vadd.f32 %v174, %v411
    %413 = vmatprep.mubr.bf16.mxu0 0
    %414 = vmatmul.mubr.bf16.gmra.mxu0 %v204
    %v415 = vpop.f32.mrf.mxu0
    %v416 = vadd.f32 %v170, %v415
    %v417 = vpop.f32.mrf.mxu0
    %v418 = vadd.f32 %v174, %v417
    %v419 = vpop.f32.mrf.mxu0
    %v420 = vadd.f32 %v170, %v419
    %v421 = vpop.f32.mrf.mxu0
    %v422 = vadd.f32 %v174, %v421
    %423 = vmatprep.mubr.bf16.mxu0 0
    %424 = vmatmul.mubr.bf16.gmra.mxu0 %v205
    %v425 = vpop.f32.mrf.mxu0
    %v426 = vadd.f32 %v170, %v425
    %v427 = vpop.f32.mrf.mxu0
    %v428 = vadd.f32 %v174, %v427
    %v429 = vpop.f32.mrf.mxu0
    %v430 = vadd.f32 %v170, %v429
    %v431 = vpop.f32.mrf.mxu0
    %v432 = vadd.f32 %v174, %v431
    %433 = vmatprep.mubr.bf16.mxu0 0
    %434 = vmatmul.mubr.bf16.gmra.mxu0 %v206
    %v435 = vpop.f32.mrf.mxu0
    %v436 = vadd.f32 %v170, %v435
    %v437 = vpop.f32.mrf.mxu0
    %v438 = vadd.f32 %v174, %v437
    %v439 = vpop.f32.mrf.mxu0
    %v440 = vadd.f32 %v170, %v439
    %v441 = vpop.f32.mrf.mxu0
    %v442 = vadd.f32 %v174, %v441
    %443 = vdwg.mxu0
    %444 = vmatprep.subr.bf16.mxu0 %v338
    %445 = vmatpush1.bf16.msra.mxu0 %v337
    %446 = vmatprep.subr.bf16.mxu0 %v334
    %447 = vmatpush1.bf16.msra.mxu0 %v333
    %448 = vmatprep.subr.bf16.mxu0 %v330
    %449 = vmatpush1.bf16.msra.mxu0 %v329
    %450 = vmatprep.subr.bf16.mxu0 %v326
    %451 = vmatpush1.bf16.msra.mxu0 %v325
    %452 = vmatprep.subr.bf16.mxu0 %v322
    %453 = vmatpush1.bf16.msra.mxu0 %v321
    %454 = vmatprep.subr.bf16.mxu0 %v318
    %455 = vmatpush1.bf16.msra.mxu0 %v317
    %456 = vmatprep.subr.bf16.mxu0 %v314
    %457 = vmatpush1.bf16.msra.mxu0 %v313
    %458 = vmatprep.subr.bf16.mxu0 %v310
    %459 = vmatpush1.bf16.msra.mxu0 %v309
    %460 = vmatprep.subr.bf16.mxu0 0
    %461 = vmatpush2.bf16.msra.mxu0 0
    %462 = vmatprep.subr.bf16.mxu0 0
    %463 = vmatpush2.bf16.msra.mxu0 0
    %464 = vmatprep.subr.bf16.mxu0 0
    %465 = vmatpush2.bf16.msra.mxu0 0
    %466 = vmatprep.subr.bf16.mxu0 0
    %467 = vmatpush2.bf16.msra.mxu0 0
    %468 = vmatprep.subr.bf16.mxu0 0
    %469 = vmatpush2.bf16.msra.mxu0 0
    %470 = vmatprep.subr.bf16.mxu0 0
    %471 = vmatpush2.bf16.msra.mxu0 0
    %472 = vmatprep.subr.bf16.mxu0 0
    %473 = vmatpush2.bf16.msra.mxu0 0
    %474 = vmatprep.subr.bf16.mxu0 0
    %475 = vmatpush2.bf16.msra.mxu0 0
    %476 = vmatprep.mubr.bf16.mxu0 0
    %477 = vmatmul.mubr.bf16.gmra.mxu0 %v203
    %v478 = vpop.f32.mrf.mxu0
    %v479 = vadd.f32 %v178, %v478
    %v480 = vpop.f32.mrf.mxu0
    %v481 = vadd.f32 %v182, %v480
    %v482 = vpop.f32.mrf.mxu0
    %v483 = vadd.f32 %v178, %v482
    %v484 = vpop.f32.mrf.mxu0
    %v485 = vadd.f32 %v182, %v484
    %486 = vmatprep.mubr.bf16.mxu0 0
    %487 = vmatmul.mubr.bf16.gmra.mxu0 %v204
    %v488 = vpop.f32.mrf.mxu0
    %v489 = vadd.f32 %v178, %v488
    %v490 = vpop.f32.mrf.mxu0
    %v491 = vadd.f32 %v182, %v490
    %v492 = vpop.f32.mrf.mxu0
    %v493 = vadd.f32 %v178, %v492
    %v494 = vpop.f32.mrf.mxu0
    %v495 = vadd.f32 %v182, %v494
    %496 = vmatprep.mubr.bf16.mxu0 0
    %497 = vmatmul.mubr.bf16.gmra.mxu0 %v205
    %v498 = vpop.f32.mrf.mxu0
    %v499 = vadd.f32 %v178, %v498
    %v500 = vpop.f32.mrf.mxu0
    %v501 = vadd.f32 %v182, %v500
    %v502 = vpop.f32.mrf.mxu0
    %v503 = vadd.f32 %v178, %v502
    %v504 = vpop.f32.mrf.mxu0
    %v505 = vadd.f32 %v182, %v504
    %506 = vmatprep.mubr.bf16.mxu0 0
    %507 = vmatmul.mubr.bf16.gmra.mxu0 %v206
    %v508 = vpop.f32.mrf.mxu0
    %v509 = vadd.f32 %v178, %v508
    %v510 = vpop.f32.mrf.mxu0
    %v511 = vadd.f32 %v182, %v510
    %v512 = vpop.f32.mrf.mxu0
    %v513 = vadd.f32 %v178, %v512
    %v514 = vpop.f32.mrf.mxu0
    %v515 = vadd.f32 %v182, %v514
    %516 = vdwg.mxu0
    %517 = vst [vmem:[#allocation3] sm:$0xff] %v406
    %518 = vst [vmem:[#allocation3 + $0x8] sm:$0xff] %v408
    %519 = vst [vmem:[#allocation3 + $0x10] sm:$0xff] %v479
    %520 = vst [vmem:[#allocation3 + $0x18] sm:$0xff] %v481
    %521 = vst [vmem:[#allocation3 + $0x20] sm:$0xff] %v410
    %522 = vst [vmem:[#allocation3 + $0x28] sm:$0xff] %v412
    %523 = vst [vmem:[#allocation3 + $0x30] sm:$0xff] %v483
    %524 = vst [vmem:[#allocation3 + $0x38] sm:$0xff] %v485
    %525 = vst [vmem:[#allocation3 + $0x40] sm:$0xff] %v416
    %526 = vst [vmem:[#allocation3 + $0x48] sm:$0xff] %v418
    %527 = vst [vmem:[#allocation3 + $0x50] sm:$0xff] %v489
    %528 = vst [vmem:[#allocation3 + $0x58] sm:$0xff] %v491
    %529 = vst [vmem:[#allocation3 + $0x60] sm:$0xff] %v420
    %530 = vst [vmem:[#allocation3 + $0x68] sm:$0xff] %v422
    %531 = vst [vmem:[#allocation3 + $0x70] sm:$0xff] %v493
    %532 = vst [vmem:[#allocation3 + $0x78] sm:$0xff] %v495
    %533 = vst [vmem:[#allocation3 + $0x80] sm:$0xff] %v426
    %534 = vst [vmem:[#allocation3 + $0x88] sm:$0xff] %v428
    %535 = vst [vmem:[#allocation3 + $0x90] sm:$0xff] %v499
    %536 = vst [vmem:[#allocation3 + $0x98] sm:$0xff] %v501
    %537 = vst [vmem:[#allocation3 + $0xa0] sm:$0xff] %v430
    %538 = vst [vmem:[#allocation3 + $0xa8] sm:$0xff] %v432
    %539 = vst [vmem:[#allocation3 + $0xb0] sm:$0xff] %v503
    %540 = vst [vmem:[#allocation3 + $0xb8] sm:$0xff] %v505
    %541 = vst [vmem:[#allocation3 + $0xc0] sm:$0xff] %v436
    %542 = vst [vmem:[#allocation3 + $0xc8] sm:$0xff] %v438
    %543 = vst [vmem:[#allocation3 + $0xd0] sm:$0xff] %v509
    %544 = vst [vmem:[#allocation3 + $0xd8] sm:$0xff] %v511
    %545 = vst [vmem:[#allocation3 + $0xe0] sm:$0xff] %v440
    %546 = vst [vmem:[#allocation3 + $0xe8] sm:$0xff] %v442
    %547 = vst [vmem:[#allocation3 + $0xf0] sm:$0xff] %v513
    %548 = vst [vmem:[#allocation3 + $0xf8] sm:$0xff] %v515
    %v549 = vld [vmem:[#allocation3] sm:$0xff]
    %v550 = vld [vmem:[#allocation3 + $0x8] sm:$0xff]
    %v551 = vld [vmem:[#allocation3 + $0x10] sm:$0xff]
    %v552 = vld [vmem:[#allocation3 + $0x18] sm:$0xff]
    %v585 = vunpack.c.l.b16 %v125
    %v586 = vunpack.c.h.b16 %v125
    %v587 = vunpack.c.l.b16 %v126
    %v588 = vunpack.c.h.b16 %v126
    %v589 = vunpack.c.l.b16 %v127
    %v590 = vunpack.c.h.b16 %v127
    %v591 = vunpack.c.l.b16 %v128
    %v592 = vunpack.c.h.b16 %v128
    %v593 = vunpack.c.l.b16 %v129
    %v594 = vunpack.c.h.b16 %v129
    %v595 = vunpack.c.l.b16 %v130
    %v596 = vunpack.c.h.b16 %v130
    %v597 = vunpack.c.l.b16 %v131
    %v598 = vunpack.c.h.b16 %v131
    %v599 = vunpack.c.l.b16 %v132
    %v600 = vunpack.c.h.b16 %v132
    %v601 = vunpack.c.l.b16 %v133
    %v602 = vunpack.c.h.b16 %v133
    %v603 = vunpack.c.l.b16 %v134
    %v604 = vunpack.c.h.b16 %v134
    %v605 = vunpack.c.l.b16 %v135
    %v606 = vunpack.c.h.b16 %v135
    %v607 = vunpack.c.l.b16 %v136
    %v608 = vunpack.c.h.b16 %v136
    %v609 = vunpack.c.l.b16 %v137
    %v610 = vunpack.c.h.b16 %v137
    %v611 = vunpack.c.l.b16 %v138
    %v612 = vunpack.c.h.b16 %v138
    %v613 = vunpack.c.l.b16 %v139
    %v614 = vunpack.c.h.b16 %v139
    %v615 = vunpack.c.l.b16 %v140
    %v616 = vunpack.c.h.b16 %v140
    %v617 = vunpack.c.l.b16 %v141
    %v618 = vunpack.c.h.b16 %v141
    %v619 = vunpack.c.l.b16 %v142
    %v620 = vunpack.c.h.b16 %v142
    %v621 = vunpack.c.l.b16 %v143
    %v622 = vunpack.c.h.b16 %v143
    %v623 = vunpack.c.l.b16 %v144
    %v624 = vunpack.c.h.b16 %v144
    %v625 = vunpack.c.l.b16 %v145
    %v626 = vunpack.c.h.b16 %v145
    %v627 = vunpack.c.l.b16 %v146
    %v628 = vunpack.c.h.b16 %v146
    %v629 = vunpack.c.l.b16 %v147
    %v630 = vunpack.c.h.b16 %v147
    %v631 = vunpack.c.l.b16 %v148
    %v632 = vunpack.c.h.b16 %v148
    %v633 = vunpack.c.l.b16 %v149
    %v634 = vunpack.c.h.b16 %v149
    %v635 = vunpack.c.l.b16 %v150
    %v636 = vunpack.c.h.b16 %v150
    %v637 = vunpack.c.l.b16 %v151
    %v638 = vunpack.c.h.b16 %v151
    %v639 = vunpack.c.l.b16 %v152
    %v640 = vunpack.c.h.b16 %v152
    %v641 = vunpack.c.l.b16 %v153
    %v642 = vunpack.c.h.b16 %v153
    %v643 = vunpack.c.l.b16 %v154
    %v644 = vunpack.c.h.b16 %v154
    %v645 = vunpack.c.l.b16 %v155
    %v646 = vunpack.c.h.b16 %v155
    %v647 = vunpack.c.l.b16 %v156
    %v648 = vunpack.c.h.b16 %v156
    %v649 = vpack.c.b16 %v589, %v585
    %v650 = vpack.c.b16 %v590, %v586
    %v651 = vpack.c.b16 %v591, %v587
    %v652 = vpack.c.b16 %v592, %v588
    %v653 = vpack.c.b16 %v597, %v593
    %v654 = vpack.c.b16 %v598, %v594
    %v655 = vpack.c.b16 %v599, %v595
    %v656 = vpack.c.b16 %v600, %v596
    %v657 = vpack.c.b16 %v605, %v601
    %v658 = vpack.c.b16 %v606, %v602
    %v659 = vpack.c.b16 %v607, %v603
    %v660 = vpack.c.b16 %v608, %v604
    %v661 = vpack.c.b16 %v613, %v609
    %v662 = vpack.c.b16 %v614, %v610
    %v663 = vpack.c.b16 %v615, %v611
    %v664 = vpack.c.b16 %v616, %v612
    %v665 = vpack.c.b16 %v621, %v617
    %v666 = vpack.c.b16 %v622, %v618
    %v667 = vpack.c.b16 %v623, %v619
    %v668 = vpack.c.b16 %v624, %v620
    %v669 = vpack.c.b16 %v629, %v625
    %v670 = vpack.c.b16 %v630, %v626
    %v671 = vpack.c.b16 %v631, %v627
    %v672 = vpack.c.b16 %v632, %v628
    %v673 = vpack.c.b16 %v637, %v633
    %v674 = vpack.c.b16 %v638, %v634
    %v675 = vpack.c.b16 %v639, %v635
    %v676 = vpack.c.b16 %v640, %v636
    %v677 = vpack.c.b16 %v645, %v641
    %v678 = vpack.c.b16 %v646, %v642
    %v679 = vpack.c.b16 %v647, %v643
    %v680 = vpack.c.b16 %v648, %v644
    %713 = vmatprep.subr.bf16.mxu0 %v678
    %714 = vmatpush1.bf16.msra.mxu0 %v677
    %715 = vmatprep.subr.bf16.mxu0 %v674
    %716 = vmatpush1.bf16.msra.mxu0 %v673
    %717 = vmatprep.subr.bf16.mxu0 %v670
    %718 = vmatpush1.bf16.msra.mxu0 %v669
    %719 = vmatprep.subr.bf16.mxu0 %v666
    %720 = vmatpush1.bf16.msra.mxu0 %v665
    %721 = vmatprep.subr.bf16.mxu0 %v662
    %722 = vmatpush1.bf16.msra.mxu0 %v661
    %723 = vmatprep.subr.bf16.mxu0 %v658
    %724 = vmatpush1.bf16.msra.mxu0 %v657
    %725 = vmatprep.subr.bf16.mxu0 %v654
    %726 = vmatpush1.bf16.msra.mxu0 %v653
    %727 = vmatprep.subr.bf16.mxu0 %v650
    %728 = vmatpush1.bf16.msra.mxu0 %v649
    %729 = vmatprep.subr.bf16.mxu0 0
    %730 = vmatpush2.bf16.msra.mxu0 0
    %731 = vmatprep.subr.bf16.mxu0 0
    %732 = vmatpush2.bf16.msra.mxu0 0
    %733 = vmatprep.subr.bf16.mxu0 0
    %734 = vmatpush2.bf16.msra.mxu0 0
    %735 = vmatprep.subr.bf16.mxu0 0
    %736 = vmatpush2.bf16.msra.mxu0 0
    %737 = vmatprep.subr.bf16.mxu0 0
    %738 = vmatpush2.bf16.msra.mxu0 0
    %739 = vmatprep.subr.bf16.mxu0 0
    %740 = vmatpush2.bf16.msra.mxu0 0
    %741 = vmatprep.subr.bf16.mxu0 0
    %742 = vmatpush2.bf16.msra.mxu0 0
    %743 = vmatprep.subr.bf16.mxu0 0
    %744 = vmatpush2.bf16.msra.mxu0 0
    %745 = vmatprep.mubr.bf16.mxu0 0
    %746 = vmatmul.mubr.bf16.gmra.mxu0 0
    %v747 = vpop.f32.mrf.mxu0
    %v748 = vadd.f32 0.0, %v747
    %v749 = vpop.f32.mrf.mxu0
    %v750 = vadd.f32 0.0, %v749
    %v751 = vpop.f32.mrf.mxu0
    %v752 = vpop.f32.mrf.mxu0
    %753 = vdwg.mxu0
    %754 = vmatprep.subr.bf16.mxu0 %v680
    %755 = vmatpush1.bf16.msra.mxu0 %v679
    %756 = vmatprep.subr.bf16.mxu0 %v676
    %757 = vmatpush1.bf16.msra.mxu0 %v675
    %758 = vmatprep.subr.bf16.mxu0 %v672
    %759 = vmatpush1.bf16.msra.mxu0 %v671
    %760 = vmatprep.subr.bf16.mxu0 %v668
    %761 = vmatpush1.bf16.msra.mxu0 %v667
    %762 = vmatprep.subr.bf16.mxu0 %v664
    %763 = vmatpush1.bf16.msra.mxu0 %v663
    %764 = vmatprep.subr.bf16.mxu0 %v660
    %765 = vmatpush1.bf16.msra.mxu0 %v659
    %766 = vmatprep.subr.bf16.mxu0 %v656
    %767 = vmatpush1.bf16.msra.mxu0 %v655
    %768 = vmatprep.subr.bf16.mxu0 %v652
    %769 = vmatpush1.bf16.msra.mxu0 %v651
    %770 = vmatprep.subr.bf16.mxu0 0
    %771 = vmatpush2.bf16.msra.mxu0 0
    %772 = vmatprep.subr.bf16.mxu0 0
    %773 = vmatpush2.bf16.msra.mxu0 0
    %774 = vmatprep.subr.bf16.mxu0 0
    %775 = vmatpush2.bf16.msra.mxu0 0
    %776 = vmatprep.subr.bf16.mxu0 0
    %777 = vmatpush2.bf16.msra.mxu0 0
    %778 = vmatprep.subr.bf16.mxu0 0
    %779 = vmatpush2.bf16.msra.mxu0 0
    %780 = vmatprep.subr.bf16.mxu0 0
    %781 = vmatpush2.bf16.msra.mxu0 0
    %782 = vmatprep.subr.bf16.mxu0 0
    %783 = vmatpush2.bf16.msra.mxu0 0
    %784 = vmatprep.subr.bf16.mxu0 0
    %785 = vmatpush2.bf16.msra.mxu0 0
    %786 = vmatprep.mubr.bf16.mxu0 0
    %787 = vmatmul.mubr.bf16.gmra.mxu0 0
    %v788 = vpop.f32.mrf.mxu0
    %v789 = vadd.f32 0.0, %v788
    %v790 = vpop.f32.mrf.mxu0
    %v791 = vadd.f32 0.0, %v790
    %v792 = vpop.f32.mrf.mxu0
    %v793 = vpop.f32.mrf.mxu0
    %794 = vdwg.mxu0
    %v795 = vadd.f32 %v549, %v748
    %v796 = vadd.f32 %v550, %v750
    %v797 = vadd.f32 %v551, %v789
    %v798 = vadd.f32 %v552, %v791
    %v799 = vtanh.pop %v795
    %v800 = vtanh.pop %v796
    %v801 = vtanh.pop %v797
    %v802 = vtanh.pop %v798
    %v803 = vadd.f32 %v799, 1.0
    %v804 = vmul.f32 %v803, 0.5
    %v805 = vadd.f32 %v800, 1.0
    %v806 = vmul.f32 %v805, 0.5
    %v807 = vadd.f32 %v802, 1.0
    %v808 = vmul.f32 %v807, 0.5
    %v809 = vmul.f32 %v806, 0.0
    %v810 = vmul.f32 %v804, %v801
    %v811 = vadd.f32 %v809, %v810
    %v812 = vtanh.pop %v811
    %v813 = vmul.f32 %v808, %v812
    %v814 = vpack.c.bf16 %v813, %v813
    %815 = vst [vmem:[#allocation2] sm:$0xf] %v814
    %v816 = vld [vmem:[#allocation3 + $0x20] sm:$0xff]
    %v817 = vld [vmem:[#allocation3 + $0x28] sm:$0xff]
    %v818 = vld [vmem:[#allocation3 + $0x30] sm:$0xff]
    %v819 = vld [vmem:[#allocation3 + $0x38] sm:$0xff]
    %820 = vmatprep.subr.bf16.mxu0 %v678
    %821 = vmatpush1.bf16.msra.mxu0 %v677
    %822 = vmatprep.subr.bf16.mxu0 %v674
    %823 = vmatpush1.bf16.msra.mxu0 %v673
    %824 = vmatprep.subr.bf16.mxu0 %v670
    %825 = vmatpush1.bf16.msra.mxu0 %v669
    %826 = vmatprep.subr.bf16.mxu0 %v666
    %827 = vmatpush1.bf16.msra.mxu0 %v665
    %828 = vmatprep.subr.bf16.mxu0 %v662
    %829 = vmatpush1.bf16.msra.mxu0 %v661
    %830 = vmatprep.subr.bf16.mxu0 %v658
    %831 = vmatpush1.bf16.msra.mxu0 %v657
    %832 = vmatprep.subr.bf16.mxu0 %v654
    %833 = vmatpush1.bf16.msra.mxu0 %v653
    %834 = vmatprep.subr.bf16.mxu0 %v650
    %835 = vmatpush1.bf16.msra.mxu0 %v649
    %836 = vmatprep.subr.bf16.mxu0 0
    %837 = vmatpush2.bf16.msra.mxu0 0
    %838 = vmatprep.subr.bf16.mxu0 0
    %839 = vmatpush2.bf16.msra.mxu0 0
    %840 = vmatprep.subr.bf16.mxu0 0
    %841 = vmatpush2.bf16.msra.mxu0 0
    %842 = vmatprep.subr.bf16.mxu0 0
    %843 = vmatpush2.bf16.msra.mxu0 0
    %844 = vmatprep.subr.bf16.mxu0 0
    %845 = vmatpush2.bf16.msra.mxu0 0
    %846 = vmatprep.subr.bf16.mxu0 0
    %847 = vmatpush2.bf16.msra.mxu0 0
    %848 = vmatprep.subr.bf16.mxu0 0
    %849 = vmatpush2.bf16.msra.mxu0 0
    %850 = vmatprep.subr.bf16.mxu0 0
    %851 = vmatpush2.bf16.msra.mxu0 0
    %852 = vmatprep.mubr.bf16.mxu0 0
    %853 = vmatmul.mubr.bf16.gmra.mxu0 %v814
    %v854 = vpop.f32.mrf.mxu0
    %v855 = vadd.f32 0.0, %v854
    %v856 = vpop.f32.mrf.mxu0
    %v857 = vadd.f32 0.0, %v856
    %v858 = vpop.f32.mrf.mxu0
    %v859 = vpop.f32.mrf.mxu0
    %860 = vdwg.mxu0
    %861 = vmatprep.subr.bf16.mxu0 %v680
    %862 = vmatpush1.bf16.msra.mxu0 %v679
    %863 = vmatprep.subr.bf16.mxu0 %v676
    %864 = vmatpush1.bf16.msra.mxu0 %v675
    %865 = vmatprep.subr.bf16.mxu0 %v672
    %866 = vmatpush1.bf16.msra.mxu0 %v671
    %867 = vmatprep.subr.bf16.mxu0 %v668
    %868 = vmatpush1.bf16.msra.mxu0 %v667
    %869 = vmatprep.subr.bf16.mxu0 %v664
    %870 = vmatpush1.bf16.msra.mxu0 %v663
    %871 = vmatprep.subr.bf16.mxu0 %v660
    %872 = vmatpush1.bf16.msra.mxu0 %v659
    %873 = vmatprep.subr.bf16.mxu0 %v656
    %874 = vmatpush1.bf16.msra.mxu0 %v655
    %875 = vmatprep.subr.bf16.mxu0 %v652
    %876 = vmatpush1.bf16.msra.mxu0 %v651
    %877 = vmatprep.subr.bf16.mxu0 0
    %878 = vmatpush2.bf16.msra.mxu0 0
    %879 = vmatprep.subr.bf16.mxu0 0
    %880 = vmatpush2.bf16.msra.mxu0 0
    %881 = vmatprep.subr.bf16.mxu0 0
    %882 = vmatpush2.bf16.msra.mxu0 0
    %883 = vmatprep.subr.bf16.mxu0 0
    %884 = vmatpush2.bf16.msra.mxu0 0
    %885 = vmatprep.subr.bf16.mxu0 0
    %886 = vmatpush2.bf16.msra.mxu0 0
    %887 = vmatprep.subr.bf16.mxu0 0
    %888 = vmatpush2.bf16.msra.mxu0 0
    %889 = vmatprep.subr.bf16.mxu0 0
    %890 = vmatpush2.bf16.msra.mxu0 0
    %891 = vmatprep.subr.bf16.mxu0 0
    %892 = vmatpush2.bf16.msra.mxu0 0
    %893 = vmatprep.mubr.bf16.mxu0 0
    %894 = vmatmul.mubr.bf16.gmra.mxu0 %v814
    %v895 = vpop.f32.mrf.mxu0
    %v896 = vadd.f32 0.0, %v895
    %v897 = vpop.f32.mrf.mxu0
    %v898 = vadd.f32 0.0, %v897
    %v899 = vpop.f32.mrf.mxu0
    %v900 = vpop.f32.mrf.mxu0
    %901 = vdwg.mxu0
    %v902 = vadd.f32 %v816, %v855
    %v903 = vadd.f32 %v817, %v857
    %v904 = vadd.f32 %v818, %v896
    %v905 = vadd.f32 %v819, %v898
    %v906 = vtanh.pop %v902
    %v907 = vtanh.pop %v903
    %v908 = vtanh.pop %v904
    %v909 = vtanh.pop %v905
    %v910 = vadd.f32 %v906, 1.0
    %v911 = vmul.f32 %v910, 0.5
    %v912 = vadd.f32 %v907, 1.0
    %v913 = vmul.f32 %v912, 0.5
    %v914 = vadd.f32 %v909, 1.0
    %v915 = vmul.f32 %v914, 0.5
    %v916 = vmul.f32 %v913, %v811
    %v917 = vmul.f32 %v911, %v908
    %v918 = vadd.f32 %v916, %v917
    %v919 = vtanh.pop %v918
    %v920 = vmul.f32 %v915, %v919
    %v921 = vpack.c.bf16 %v920, %v920
    %922 = vst [vmem:[#allocation2 + $0x4] sm:$0xf] %v921
    %v923 = vld [vmem:[#allocation3 + $0x40] sm:$0xff]
    %v924 = vld [vmem:[#allocation3 + $0x48] sm:$0xff]
    %v925 = vld [vmem:[#allocation3 + $0x50] sm:$0xff]
    %v926 = vld [vmem:[#allocation3 + $0x58] sm:$0xff]
    %927 = vmatprep.subr.bf16.mxu0 %v678
    %928 = vmatpush1.bf16.msra.mxu0 %v677
    %929 = vmatprep.subr.bf16.mxu0 %v674
    %930 = vmatpush1.bf16.msra.mxu0 %v673
    %931 = vmatprep.subr.bf16.mxu0 %v670
    %932 = vmatpush1.bf16.msra.mxu0 %v669
    %933 = vmatprep.subr.bf16.mxu0 %v666
    %934 = vmatpush1.bf16.msra.mxu0 %v665
    %935 = vmatprep.subr.bf16.mxu0 %v662
    %936 = vmatpush1.bf16.msra.mxu0 %v661
    %937 = vmatprep.subr.bf16.mxu0 %v658
    %938 = vmatpush1.bf16.msra.mxu0 %v657
    %939 = vmatprep.subr.bf16.mxu0 %v654
    %940 = vmatpush1.bf16.msra.mxu0 %v653
    %941 = vmatprep.subr.bf16.mxu0 %v650
    %942 = vmatpush1.bf16.msra.mxu0 %v649
    %943 = vmatprep.subr.bf16.mxu0 0
    %944 = vmatpush2.bf16.msra.mxu0 0
    %945 = vmatprep.subr.bf16.mxu0 0
    %946 = vmatpush2.bf16.msra.mxu0 0
    %947 = vmatprep.subr.bf16.mxu0 0
    %948 = vmatpush2.bf16.msra.mxu0 0
    %949 = vmatprep.subr.bf16.mxu0 0
    %950 = vmatpush2.bf16.msra.mxu0 0
    %951 = vmatprep.subr.bf16.mxu0 0
    %952 = vmatpush2.bf16.msra.mxu0 0
    %953 = vmatprep.subr.bf16.mxu0 0
    %954 = vmatpush2.bf16.msra.mxu0 0
    %955 = vmatprep.subr.bf16.mxu0 0
    %956 = vmatpush2.bf16.msra.mxu0 0
    %957 = vmatprep.subr.bf16.mxu0 0
    %958 = vmatpush2.bf16.msra.mxu0 0
    %959 = vmatprep.mubr.bf16.mxu0 0
    %960 = vmatmul.mubr.bf16.gmra.mxu0 %v921
    %v961 = vpop.f32.mrf.mxu0
    %v962 = vadd.f32 0.0, %v961
    %v963 = vpop.f32.mrf.mxu0
    %v964 = vadd.f32 0.0, %v963
    %v965 = vpop.f32.mrf.mxu0
    %v966 = vpop.f32.mrf.mxu0
    %967 = vdwg.mxu0
    %968 = vmatprep.subr.bf16.mxu0 %v680
    %969 = vmatpush1.bf16.msra.mxu0 %v679
    %970 = vmatprep.subr.bf16.mxu0 %v676
    %971 = vmatpush1.bf16.msra.mxu0 %v675
    %972 = vmatprep.subr.bf16.mxu0 %v672
    %973 = vmatpush1.bf16.msra.mxu0 %v671
    %974 = vmatprep.subr.bf16.mxu0 %v668
    %975 = vmatpush1.bf16.msra.mxu0 %v667
    %976 = vmatprep.subr.bf16.mxu0 %v664
    %977 = vmatpush1.bf16.msra.mxu0 %v663
    %978 = vmatprep.subr.bf16.mxu0 %v660
    %979 = vmatpush1.bf16.msra.mxu0 %v659
    %980 = vmatprep.subr.bf16.mxu0 %v656
    %981 = vmatpush1.bf16.msra.mxu0 %v655
    %982 = vmatprep.subr.bf16.mxu0 %v652
    %983 = vmatpush1.bf16.msra.mxu0 %v651
    %984 = vmatprep.subr.bf16.mxu0 0
    %985 = vmatpush2.bf16.msra.mxu0 0
    %986 = vmatprep.subr.bf16.mxu0 0
    %987 = vmatpush2.bf16.msra.mxu0 0
    %988 = vmatprep.subr.bf16.mxu0 0
    %989 = vmatpush2.bf16.msra.mxu0 0
    %990 = vmatprep.subr.bf16.mxu0 0
    %991 = vmatpush2.bf16.msra.mxu0 0
    %992 = vmatprep.subr.bf16.mxu0 0
    %993 = vmatpush2.bf16.msra.mxu0 0
    %994 = vmatprep.subr.bf16.mxu0 0
    %995 = vmatpush2.bf16.msra.mxu0 0
    %996 = vmatprep.subr.bf16.mxu0 0
    %997 = vmatpush2.bf16.msra.mxu0 0
    %998 = vmatprep.subr.bf16.mxu0 0
    %999 = vmatpush2.bf16.msra.mxu0 0
    %1000 = vmatprep.mubr.bf16.mxu0 0
    %1001 = vmatmul.mubr.bf16.gmra.mxu0 %v921
    %v1002 = vpop.f32.mrf.mxu0
    %v1003 = vadd.f32 0.0, %v1002
    %v1004 = vpop.f32.mrf.mxu0
    %v1005 = vadd.f32 0.0, %v1004
    %v1006 = vpop.f32.mrf.mxu0
    %v1007 = vpop.f32.mrf.mxu0
    %1008 = vdwg.mxu0
    %v1009 = vadd.f32 %v923, %v962
    %v1010 = vadd.f32 %v924, %v964
    %v1011 = vadd.f32 %v925, %v1003
    %v1012 = vadd.f32 %v926, %v1005
    %v1013 = vtanh.pop %v1009
    %v1014 = vtanh.pop %v1010
    %v1015 = vtanh.pop %v1011
    %v1016 = vtanh.pop %v1012
    %v1017 = vadd.f32 %v1013, 1.0
    %v1018 = vmul.f32 %v1017, 0.5
    %v1019 = vadd.f32 %v1014, 1.0
    %v1020 = vmul.f32 %v1019, 0.5
    %v1021 = vadd.f32 %v1016, 1.0
    %v1022 = vmul.f32 %v1021, 0.5
    %v1023 = vmul.f32 %v1020, %v918
    %v1024 = vmul.f32 %v1018, %v1015
    %v1025 = vadd.f32 %v1023, %v1024
    %v1026 = vtanh.pop %v1025
    %v1027 = vmul.f32 %v1022, %v1026
    %v1028 = vpack.c.bf16 %v1027, %v1027
    %1029 = vst [vmem:[#allocation2 + $0x8] sm:$0xf] %v1028
    %v1030 = vld [vmem:[#allocation3 + $0x60] sm:$0xff]
    %v1031 = vld [vmem:[#allocation3 + $0x68] sm:$0xff]
    %v1032 = vld [vmem:[#allocation3 + $0x70] sm:$0xff]
    %v1033 = vld [vmem:[#allocation3 + $0x78] sm:$0xff]
    %1034 = vmatprep.subr.bf16.mxu0 %v678
    %1035 = vmatpush1.bf16.msra.mxu0 %v677
    %1036 = vmatprep.subr.bf16.mxu0 %v674
    %1037 = vmatpush1.bf16.msra.mxu0 %v673
    %1038 = vmatprep.subr.bf16.mxu0 %v670
    %1039 = vmatpush1.bf16.msra.mxu0 %v669
    %1040 = vmatprep.subr.bf16.mxu0 %v666
    %1041 = vmatpush1.bf16.msra.mxu0 %v665
    %1042 = vmatprep.subr.bf16.mxu0 %v662
    %1043 = vmatpush1.bf16.msra.mxu0 %v661
    %1044 = vmatprep.subr.bf16.mxu0 %v658
    %1045 = vmatpush1.bf16.msra.mxu0 %v657
    %1046 = vmatprep.subr.bf16.mxu0 %v654
    %1047 = vmatpush1.bf16.msra.mxu0 %v653
    %1048 = vmatprep.subr.bf16.mxu0 %v650
    %1049 = vmatpush1.bf16.msra.mxu0 %v649
    %1050 = vmatprep.subr.bf16.mxu0 0
    %1051 = vmatpush2.bf16.msra.mxu0 0
    %1052 = vmatprep.subr.bf16.mxu0 0
    %1053 = vmatpush2.bf16.msra.mxu0 0
    %1054 = vmatprep.subr.bf16.mxu0 0
    %1055 = vmatpush2.bf16.msra.mxu0 0
    %1056 = vmatprep.subr.bf16.mxu0 0
    %1057 = vmatpush2.bf16.msra.mxu0 0
    %1058 = vmatprep.subr.bf16.mxu0 0
    %1059 = vmatpush2.bf16.msra.mxu0 0
    %1060 = vmatprep.subr.bf16.mxu0 0
    %1061 = vmatpush2.bf16.msra.mxu0 0
    %1062 = vmatprep.subr.bf16.mxu0 0
    %1063 = vmatpush2.bf16.msra.mxu0 0
    %1064 = vmatprep.subr.bf16.mxu0 0
    %1065 = vmatpush2.bf16.msra.mxu0 0
    %1066 = vmatprep.mubr.bf16.mxu0 0
    %1067 = vmatmul.mubr.bf16.gmra.mxu0 %v1028
    %v1068 = vpop.f32.mrf.mxu0
    %v1069 = vadd.f32 0.0, %v1068
    %v1070 = vpop.f32.mrf.mxu0
    %v1071 = vadd.f32 0.0, %v1070
    %v1072 = vpop.f32.mrf.mxu0
    %v1073 = vpop.f32.mrf.mxu0
    %1074 = vdwg.mxu0
    %1075 = vmatprep.subr.bf16.mxu0 %v680
    %1076 = vmatpush1.bf16.msra.mxu0 %v679
    %1077 = vmatprep.subr.bf16.mxu0 %v676
    %1078 = vmatpush1.bf16.msra.mxu0 %v675
    %1079 = vmatprep.subr.bf16.mxu0 %v672
    %1080 = vmatpush1.bf16.msra.mxu0 %v671
    %1081 = vmatprep.subr.bf16.mxu0 %v668
    %1082 = vmatpush1.bf16.msra.mxu0 %v667
    %1083 = vmatprep.subr.bf16.mxu0 %v664
    %1084 = vmatpush1.bf16.msra.mxu0 %v663
    %1085 = vmatprep.subr.bf16.mxu0 %v660
    %1086 = vmatpush1.bf16.msra.mxu0 %v659
    %1087 = vmatprep.subr.bf16.mxu0 %v656
    %1088 = vmatpush1.bf16.msra.mxu0 %v655
    %1089 = vmatprep.subr.bf16.mxu0 %v652
    %1090 = vmatpush1.bf16.msra.mxu0 %v651
    %1091 = vmatprep.subr.bf16.mxu0 0
    %1092 = vmatpush2.bf16.msra.mxu0 0
    %1093 = vmatprep.subr.bf16.mxu0 0
    %1094 = vmatpush2.bf16.msra.mxu0 0
    %1095 = vmatprep.subr.bf16.mxu0 0
    %1096 = vmatpush2.bf16.msra.mxu0 0
    %1097 = vmatprep.subr.bf16.mxu0 0
    %1098 = vmatpush2.bf16.msra.mxu0 0
    %1099 = vmatprep.subr.bf16.mxu0 0
    %1100 = vmatpush2.bf16.msra.mxu0 0
    %1101 = vmatprep.subr.bf16.mxu0 0
    %1102 = vmatpush2.bf16.msra.mxu0 0
    %1103 = vmatprep.subr.bf16.mxu0 0
    %1104 = vmatpush2.bf16.msra.mxu0 0
    %1105 = vmatprep.subr.bf16.mxu0 0
    %1106 = vmatpush2.bf16.msra.mxu0 0
    %1107 = vmatprep.mubr.bf16.mxu0 0
    %1108 = vmatmul.mubr.bf16.gmra.mxu0 %v1028
    %v1109 = vpop.f32.mrf.mxu0
    %v1110 = vadd.f32 0.0, %v1109
    %v1111 = vpop.f32.mrf.mxu0
    %v1112 = vadd.f32 0.0, %v1111
    %v1113 = vpop.f32.mrf.mxu0
    %v1114 = vpop.f32.mrf.mxu0
    %1115 = vdwg.mxu0
    %v1116 = vadd.f32 %v1030, %v1069
    %v1117 = vadd.f32 %v1031, %v1071
    %v1118 = vadd.f32 %v1032, %v1110
    %v1119 = vadd.f32 %v1033, %v1112
    %v1120 = vtanh.pop %v1116
    %v1121 = vtanh.pop %v1117
    %v1122 = vtanh.pop %v1118
    %v1123 = vtanh.pop %v1119
    %v1124 = vadd.f32 %v1120, 1.0
    %v1125 = vmul.f32 %v1124, 0.5
    %v1126 = vadd.f32 %v1121, 1.0
    %v1127 = vmul.f32 %v1126, 0.5
    %v1128 = vadd.f32 %v1123, 1.0
    %v1129 = vmul.f32 %v1128, 0.5
    %v1130 = vmul.f32 %v1127, %v1025
    %v1131 = vmul.f32 %v1125, %v1122
    %v1132 = vadd.f32 %v1130, %v1131
    %v1133 = vtanh.pop %v1132
    %v1134 = vmul.f32 %v1129, %v1133
    %v1135 = vpack.c.bf16 %v1134, %v1134
    %1136 = vst [vmem:[#allocation2 + $0xc] sm:$0xf] %v1135
    %v1137 = vld [vmem:[#allocation3 + $0x80] sm:$0xff]
    %v1138 = vld [vmem:[#allocation3 + $0x88] sm:$0xff]
    %v1139 = vld [vmem:[#allocation3 + $0x90] sm:$0xff]
    %v1140 = vld [vmem:[#allocation3 + $0x98] sm:$0xff]
    %1141 = vmatprep.subr.bf16.mxu0 %v678
    %1142 = vmatpush1.bf16.msra.mxu0 %v677
    %1143 = vmatprep.subr.bf16.mxu0 %v674
    %1144 = vmatpush1.bf16.msra.mxu0 %v673
    %1145 = vmatprep.subr.bf16.mxu0 %v670
    %1146 = vmatpush1.bf16.msra.mxu0 %v669
    %1147 = vmatprep.subr.bf16.mxu0 %v666
    %1148 = vmatpush1.bf16.msra.mxu0 %v665
    %1149 = vmatprep.subr.bf16.mxu0 %v662
    %1150 = vmatpush1.bf16.msra.mxu0 %v661
    %1151 = vmatprep.subr.bf16.mxu0 %v658
    %1152 = vmatpush1.bf16.msra.mxu0 %v657
    %1153 = vmatprep.subr.bf16.mxu0 %v654
    %1154 = vmatpush1.bf16.msra.mxu0 %v653
    %1155 = vmatprep.subr.bf16.mxu0 %v650
    %1156 = vmatpush1.bf16.msra.mxu0 %v649
    %1157 = vmatprep.subr.bf16.mxu0 0
    %1158 = vmatpush2.bf16.msra.mxu0 0
    %1159 = vmatprep.subr.bf16.mxu0 0
    %1160 = vmatpush2.bf16.msra.mxu0 0
    %1161 = vmatprep.subr.bf16.mxu0 0
    %1162 = vmatpush2.bf16.msra.mxu0 0
    %1163 = vmatprep.subr.bf16.mxu0 0
    %1164 = vmatpush2.bf16.msra.mxu0 0
    %1165 = vmatprep.subr.bf16.mxu0 0
    %1166 = vmatpush2.bf16.msra.mxu0 0
    %1167 = vmatprep.subr.bf16.mxu0 0
    %1168 = vmatpush2.bf16.msra.mxu0 0
    %1169 = vmatprep.subr.bf16.mxu0 0
    %1170 = vmatpush2.bf16.msra.mxu0 0
    %1171 = vmatprep.subr.bf16.mxu0 0
    %1172 = vmatpush2.bf16.msra.mxu0 0
    %1173 = vmatprep.mubr.bf16.mxu0 0
    %1174 = vmatmul.mubr.bf16.gmra.mxu0 %v1135
    %v1175 = vpop.f32.mrf.mxu0
    %v1176 = vadd.f32 0.0, %v1175
    %v1177 = vpop.f32.mrf.mxu0
    %v1178 = vadd.f32 0.0, %v1177
    %v1179 = vpop.f32.mrf.mxu0
    %v1180 = vpop.f32.mrf.mxu0
    %1181 = vdwg.mxu0
    %1182 = vmatprep.subr.bf16.mxu0 %v680
    %1183 = vmatpush1.bf16.msra.mxu0 %v679
    %1184 = vmatprep.subr.bf16.mxu0 %v676
    %1185 = vmatpush1.bf16.msra.mxu0 %v675
    %1186 = vmatprep.subr.bf16.mxu0 %v672
    %1187 = vmatpush1.bf16.msra.mxu0 %v671
    %1188 = vmatprep.subr.bf16.mxu0 %v668
    %1189 = vmatpush1.bf16.msra.mxu0 %v667
    %1190 = vmatprep.subr.bf16.mxu0 %v664
    %1191 = vmatpush1.bf16.msra.mxu0 %v663
    %1192 = vmatprep.subr.bf16.mxu0 %v660
    %1193 = vmatpush1.bf16.msra.mxu0 %v659
    %1194 = vmatprep.subr.bf16.mxu0 %v656
    %1195 = vmatpush1.bf16.msra.mxu0 %v655
    %1196 = vmatprep.subr.bf16.mxu0 %v652
    %1197 = vmatpush1.bf16.msra.mxu0 %v651
    %1198 = vmatprep.subr.bf16.mxu0 0
    %1199 = vmatpush2.bf16.msra.mxu0 0
    %1200 = vmatprep.subr.bf16.mxu0 0
    %1201 = vmatpush2.bf16.msra.mxu0 0
    %1202 = vmatprep.subr.bf16.mxu0 0
    %1203 = vmatpush2.bf16.msra.mxu0 0
    %1204 = vmatprep.subr.bf16.mxu0 0
    %1205 = vmatpush2.bf16.msra.mxu0 0
    %1206 = vmatprep.subr.bf16.mxu0 0
    %1207 = vmatpush2.bf16.msra.mxu0 0
    %1208 = vmatprep.subr.bf16.mxu0 0
    %1209 = vmatpush2.bf16.msra.mxu0 0
    %1210 = vmatprep.subr.bf16.mxu0 0
    %1211 = vmatpush2.bf16.msra.mxu0 0
    %1212 = vmatprep.subr.bf16.mxu0 0
    %1213 = vmatpush2.bf16.msra.mxu0 0
    %1214 = vmatprep.mubr.bf16.mxu0 0
    %1215 = vmatmul.mubr.bf16.gmra.mxu0 %v1135
    %v1216 = vpop.f32.mrf.mxu0
    %v1217 = vadd.f32 0.0, %v1216
    %v1218 = vpop.f32.mrf.mxu0
    %v1219 = vadd.f32 0.0, %v1218
    %v1220 = vpop.f32.mrf.mxu0
    %v1221 = vpop.f32.mrf.mxu0
    %1222 = vdwg.mxu0
    %v1223 = vadd.f32 %v1137, %v1176
    %v1224 = vadd.f32 %v1138, %v1178
    %v1225 = vadd.f32 %v1139, %v1217
    %v1226 = vadd.f32 %v1140, %v1219
    %v1227 = vtanh.pop %v1223
    %v1228 = vtanh.pop %v1224
    %v1229 = vtanh.pop %v1225
    %v1230 = vtanh.pop %v1226
    %v1231 = vadd.f32 %v1227, 1.0
    %v1232 = vmul.f32 %v1231, 0.5
    %v1233 = vadd.f32 %v1228, 1.0
    %v1234 = vmul.f32 %v1233, 0.5
    %v1235 = vadd.f32 %v1230, 1.0
    %v1236 = vmul.f32 %v1235, 0.5
    %v1237 = vmul.f32 %v1234, %v1132
    %v1238 = vmul.f32 %v1232, %v1229
    %v1239 = vadd.f32 %v1237, %v1238
    %v1240 = vtanh.pop %v1239
    %v1241 = vmul.f32 %v1236, %v1240
    %v1242 = vpack.c.bf16 %v1241, %v1241
    %1243 = vst [vmem:[#allocation2 + $0x10] sm:$0xf] %v1242
    %v1244 = vld [vmem:[#allocation3 + $0xa0] sm:$0xff]
    %v1245 = vld [vmem:[#allocation3 + $0xa8] sm:$0xff]
    %v1246 = vld [vmem:[#allocation3 + $0xb0] sm:$0xff]
    %v1247 = vld [vmem:[#allocation3 + $0xb8] sm:$0xff]
    %1248 = vmatprep.subr.bf16.mxu0 %v678
    %1249 = vmatpush1.bf16.msra.mxu0 %v677
    %1250 = vmatprep.subr.bf16.mxu0 %v674
    %1251 = vmatpush1.bf16.msra.mxu0 %v673
    %1252 = vmatprep.subr.bf16.mxu0 %v670
    %1253 = vmatpush1.bf16.msra.mxu0 %v669
    %1254 = vmatprep.subr.bf16.mxu0 %v666
    %1255 = vmatpush1.bf16.msra.mxu0 %v665
    %1256 = vmatprep.subr.bf16.mxu0 %v662
    %1257 = vmatpush1.bf16.msra.mxu0 %v661
    %1258 = vmatprep.subr.bf16.mxu0 %v658
    %1259 = vmatpush1.bf16.msra.mxu0 %v657
    %1260 = vmatprep.subr.bf16.mxu0 %v654
    %1261 = vmatpush1.bf16.msra.mxu0 %v653
    %1262 = vmatprep.subr.bf16.mxu0 %v650
    %1263 = vmatpush1.bf16.msra.mxu0 %v649
    %1264 = vmatprep.subr.bf16.mxu0 0
    %1265 = vmatpush2.bf16.msra.mxu0 0
    %1266 = vmatprep.subr.bf16.mxu0 0
    %1267 = vmatpush2.bf16.msra.mxu0 0
    %1268 = vmatprep.subr.bf16.mxu0 0
    %1269 = vmatpush2.bf16.msra.mxu0 0
    %1270 = vmatprep.subr.bf16.mxu0 0
    %1271 = vmatpush2.bf16.msra.mxu0 0
    %1272 = vmatprep.subr.bf16.mxu0 0
    %1273 = vmatpush2.bf16.msra.mxu0 0
    %1274 = vmatprep.subr.bf16.mxu0 0
    %1275 = vmatpush2.bf16.msra.mxu0 0
    %1276 = vmatprep.subr.bf16.mxu0 0
    %1277 = vmatpush2.bf16.msra.mxu0 0
    %1278 = vmatprep.subr.bf16.mxu0 0
    %1279 = vmatpush2.bf16.msra.mxu0 0
    %1280 = vmatprep.mubr.bf16.mxu0 0
    %1281 = vmatmul.mubr.bf16.gmra.mxu0 %v1242
    %v1282 = vpop.f32.mrf.mxu0
    %v1283 = vadd.f32 0.0, %v1282
    %v1284 = vpop.f32.mrf.mxu0
    %v1285 = vadd.f32 0.0, %v1284
    %v1286 = vpop.f32.mrf.mxu0
    %v1287 = vpop.f32.mrf.mxu0
    %1288 = vdwg.mxu0
    %1289 = vmatprep.subr.bf16.mxu0 %v680
    %1290 = vmatpush1.bf16.msra.mxu0 %v679
    %1291 = vmatprep.subr.bf16.mxu0 %v676
    %1292 = vmatpush1.bf16.msra.mxu0 %v675
    %1293 = vmatprep.subr.bf16.mxu0 %v672
    %1294 = vmatpush1.bf16.msra.mxu0 %v671
    %1295 = vmatprep.subr.bf16.mxu0 %v668
    %1296 = vmatpush1.bf16.msra.mxu0 %v667
    %1297 = vmatprep.subr.bf16.mxu0 %v664
    %1298 = vmatpush1.bf16.msra.mxu0 %v663
    %1299 = vmatprep.subr.bf16.mxu0 %v660
    %1300 = vmatpush1.bf16.msra.mxu0 %v659
    %1301 = vmatprep.subr.bf16.mxu0 %v656
    %1302 = vmatpush1.bf16.msra.mxu0 %v655
    %1303 = vmatprep.subr.bf16.mxu0 %v652
    %1304 = vmatpush1.bf16.msra.mxu0 %v651
    %1305 = vmatprep.subr.bf16.mxu0 0
    %1306 = vmatpush2.bf16.msra.mxu0 0
    %1307 = vmatprep.subr.bf16.mxu0 0
    %1308 = vmatpush2.bf16.msra.mxu0 0
    %1309 = vmatprep.subr.bf16.mxu0 0
    %1310 = vmatpush2.bf16.msra.mxu0 0
    %1311 = vmatprep.subr.bf16.mxu0 0
    %1312 = vmatpush2.bf16.msra.mxu0 0
    %1313 = vmatprep.subr.bf16.mxu0 0
    %1314 = vmatpush2.bf16.msra.mxu0 0
    %1315 = vmatprep.subr.bf16.mxu0 0
    %1316 = vmatpush2.bf16.msra.mxu0 0
    %1317 = vmatprep.subr.bf16.mxu0 0
    %1318 = vmatpush2.bf16.msra.mxu0 0
    %1319 = vmatprep.subr.bf16.mxu0 0
    %1320 = vmatpush2.bf16.msra.mxu0 0
    %1321 = vmatprep.mubr.bf16.mxu0 0
    %1322 = vmatmul.mubr.bf16.gmra.mxu0 %v1242
    %v1323 = vpop.f32.mrf.mxu0
    %v1324 = vadd.f32 0.0, %v1323
    %v1325 = vpop.f32.mrf.mxu0
    %v1326 = vadd.f32 0.0, %v1325
    %v1327 = vpop.f32.mrf.mxu0
    %v1328 = vpop.f32.mrf.mxu0
    %1329 = vdwg.mxu0
    %v1330 = vadd.f32 %v1244, %v1283
    %v1331 = vadd.f32 %v1245, %v1285
    %v1332 = vadd.f32 %v1246, %v1324
    %v1333 = vadd.f32 %v1247, %v1326
    %v1334 = vtanh.pop %v1330
    %v1335 = vtanh.pop %v1331
    %v1336 = vtanh.pop %v1332
    %v1337 = vtanh.pop %v1333
    %v1338 = vadd.f32 %v1334, 1.0
    %v1339 = vmul.f32 %v1338, 0.5
    %v1340 = vadd.f32 %v1335, 1.0
    %v1341 = vmul.f32 %v1340, 0.5
    %v1342 = vadd.f32 %v1337, 1.0
    %v1343 = vmul.f32 %v1342, 0.5
    %v1344 = vmul.f32 %v1341, %v1239
    %v1345 = vmul.f32 %v1339, %v1336
    %v1346 = vadd.f32 %v1344, %v1345
    %v1347 = vtanh.pop %v1346
    %v1348 = vmul.f32 %v1343, %v1347
    %v1349 = vpack.c.bf16 %v1348, %v1348
    %1350 = vst [vmem:[#allocation2 + $0x14] sm:$0xf] %v1349
    %v1351 = vld [vmem:[#allocation3 + $0xc0] sm:$0xff]
    %v1352 = vld [vmem:[#allocation3 + $0xc8] sm:$0xff]
    %v1353 = vld [vmem:[#allocation3 + $0xd0] sm:$0xff]
    %v1354 = vld [vmem:[#allocation3 + $0xd8] sm:$0xff]
    %1355 = vmatprep.subr.bf16.mxu0 %v678
    %1356 = vmatpush1.bf16.msra.mxu0 %v677
    %1357 = vmatprep.subr.bf16.mxu0 %v674
    %1358 = vmatpush1.bf16.msra.mxu0 %v673
    %1359 = vmatprep.subr.bf16.mxu0 %v670
    %1360 = vmatpush1.bf16.msra.mxu0 %v669
    %1361 = vmatprep.subr.bf16.mxu0 %v666
    %1362 = vmatpush1.bf16.msra.mxu0 %v665
    %1363 = vmatprep.subr.bf16.mxu0 %v662
    %1364 = vmatpush1.bf16.msra.mxu0 %v661
    %1365 = vmatprep.subr.bf16.mxu0 %v658
    %1366 = vmatpush1.bf16.msra.mxu0 %v657
    %1367 = vmatprep.subr.bf16.mxu0 %v654
    %1368 = vmatpush1.bf16.msra.mxu0 %v653
    %1369 = vmatprep.subr.bf16.mxu0 %v650
    %1370 = vmatpush1.bf16.msra.mxu0 %v649
    %1371 = vmatprep.subr.bf16.mxu0 0
    %1372 = vmatpush2.bf16.msra.mxu0 0
    %1373 = vmatprep.subr.bf16.mxu0 0
    %1374 = vmatpush2.bf16.msra.mxu0 0
    %1375 = vmatprep.subr.bf16.mxu0 0
    %1376 = vmatpush2.bf16.msra.mxu0 0
    %1377 = vmatprep.subr.bf16.mxu0 0
    %1378 = vmatpush2.bf16.msra.mxu0 0
    %1379 = vmatprep.subr.bf16.mxu0 0
    %1380 = vmatpush2.bf16.msra.mxu0 0
    %1381 = vmatprep.subr.bf16.mxu0 0
    %1382 = vmatpush2.bf16.msra.mxu0 0
    %1383 = vmatprep.subr.bf16.mxu0 0
    %1384 = vmatpush2.bf16.msra.mxu0 0
    %1385 = vmatprep.subr.bf16.mxu0 0
    %1386 = vmatpush2.bf16.msra.mxu0 0
    %1387 = vmatprep.mubr.bf16.mxu0 0
    %1388 = vmatmul.mubr.bf16.gmra.mxu0 %v1349
    %v1389 = vpop.f32.mrf.mxu0
    %v1390 = vadd.f32 0.0, %v1389
    %v1391 = vpop.f32.mrf.mxu0
    %v1392 = vadd.f32 0.0, %v1391
    %v1393 = vpop.f32.mrf.mxu0
    %v1394 = vpop.f32.mrf.mxu0
    %1395 = vdwg.mxu0
    %1396 = vmatprep.subr.bf16.mxu0 %v680
    %1397 = vmatpush1.bf16.msra.mxu0 %v679
    %1398 = vmatprep.subr.bf16.mxu0 %v676
    %1399 = vmatpush1.bf16.msra.mxu0 %v675
    %1400 = vmatprep.subr.bf16.mxu0 %v672
    %1401 = vmatpush1.bf16.msra.mxu0 %v671
    %1402 = vmatprep.subr.bf16.mxu0 %v668
    %1403 = vmatpush1.bf16.msra.mxu0 %v667
    %1404 = vmatprep.subr.bf16.mxu0 %v664
    %1405 = vmatpush1.bf16.msra.mxu0 %v663
    %1406 = vmatprep.subr.bf16.mxu0 %v660
    %1407 = vmatpush1.bf16.msra.mxu0 %v659
    %1408 = vmatprep.subr.bf16.mxu0 %v656
    %1409 = vmatpush1.bf16.msra.mxu0 %v655
    %1410 = vmatprep.subr.bf16.mxu0 %v652
    %1411 = vmatpush1.bf16.msra.mxu0 %v651
    %1412 = vmatprep.subr.bf16.mxu0 0
    %1413 = vmatpush2.bf16.msra.mxu0 0
    %1414 = vmatprep.subr.bf16.mxu0 0
    %1415 = vmatpush2.bf16.msra.mxu0 0
    %1416 = vmatprep.subr.bf16.mxu0 0
    %1417 = vmatpush2.bf16.msra.mxu0 0
    %1418 = vmatprep.subr.bf16.mxu0 0
    %1419 = vmatpush2.bf16.msra.mxu0 0
    %1420 = vmatprep.subr.bf16.mxu0 0
    %1421 = vmatpush2.bf16.msra.mxu0 0
    %1422 = vmatprep.subr.bf16.mxu0 0
    %1423 = vmatpush2.bf16.msra.mxu0 0
    %1424 = vmatprep.subr.bf16.mxu0 0
    %1425 = vmatpush2.bf16.msra.mxu0 0
    %1426 = vmatprep.subr.bf16.mxu0 0
    %1427 = vmatpush2.bf16.msra.mxu0 0
    %1428 = vmatprep.mubr.bf16.mxu0 0
    %1429 = vmatmul.mubr.bf16.gmra.mxu0 %v1349
    %v1430 = vpop.f32.mrf.mxu0
    %v1431 = vadd.f32 0.0, %v1430
    %v1432 = vpop.f32.mrf.mxu0
    %v1433 = vadd.f32 0.0, %v1432
    %v1434 = vpop.f32.mrf.mxu0
    %v1435 = vpop.f32.mrf.mxu0
    %1436 = vdwg.mxu0
    %v1437 = vadd.f32 %v1351, %v1390
    %v1438 = vadd.f32 %v1352, %v1392
    %v1439 = vadd.f32 %v1353, %v1431
    %v1440 = vadd.f32 %v1354, %v1433
    %v1441 = vtanh.pop %v1437
    %v1442 = vtanh.pop %v1438
    %v1443 = vtanh.pop %v1439
    %v1444 = vtanh.pop %v1440
    %v1445 = vadd.f32 %v1441, 1.0
    %v1446 = vmul.f32 %v1445, 0.5
    %v1447 = vadd.f32 %v1442, 1.0
    %v1448 = vmul.f32 %v1447, 0.5
    %v1449 = vadd.f32 %v1444, 1.0
    %v1450 = vmul.f32 %v1449, 0.5
    %v1451 = vmul.f32 %v1448, %v1346
    %v1452 = vmul.f32 %v1446, %v1443
    %v1453 = vadd.f32 %v1451, %v1452
    %v1454 = vtanh.pop %v1453
    %v1455 = vmul.f32 %v1450, %v1454
    %v1456 = vpack.c.bf16 %v1455, %v1455
    %1457 = vst [vmem:[#allocation2 + $0x18] sm:$0xf] %v1456
    %v1458 = vld [vmem:[#allocation3 + $0xe0] sm:$0xff]
    %v1459 = vld [vmem:[#allocation3 + $0xe8] sm:$0xff]
    %v1460 = vld [vmem:[#allocation3 + $0xf0] sm:$0xff]
    %v1461 = vld [vmem:[#allocation3 + $0xf8] sm:$0xff]
    %1462 = vmatprep.subr.bf16.mxu0 %v678
    %1463 = vmatpush1.bf16.msra.mxu0 %v677
    %1464 = vmatprep.subr.bf16.mxu0 %v674
    %1465 = vmatpush1.bf16.msra.mxu0 %v673
    %1466 = vmatprep.subr.bf16.mxu0 %v670
    %1467 = vmatpush1.bf16.msra.mxu0 %v669
    %1468 = vmatprep.subr.bf16.mxu0 %v666
    %1469 = vmatpush1.bf16.msra.mxu0 %v665
    %1470 = vmatprep.subr.bf16.mxu0 %v662
    %1471 = vmatpush1.bf16.msra.mxu0 %v661
    %1472 = vmatprep.subr.bf16.mxu0 %v658
    %1473 = vmatpush1.bf16.msra.mxu0 %v657
    %1474 = vmatprep.subr.bf16.mxu0 %v654
    %1475 = vmatpush1.bf16.msra.mxu0 %v653
    %1476 = vmatprep.subr.bf16.mxu0 %v650
    %1477 = vmatpush1.bf16.msra.mxu0 %v649
    %1478 = vmatprep.subr.bf16.mxu0 0
    %1479 = vmatpush2.bf16.msra.mxu0 0
    %1480 = vmatprep.subr.bf16.mxu0 0
    %1481 = vmatpush2.bf16.msra.mxu0 0
    %1482 = vmatprep.subr.bf16.mxu0 0
    %1483 = vmatpush2.bf16.msra.mxu0 0
    %1484 = vmatprep.subr.bf16.mxu0 0
    %1485 = vmatpush2.bf16.msra.mxu0 0
    %1486 = vmatprep.subr.bf16.mxu0 0
    %1487 = vmatpush2.bf16.msra.mxu0 0
    %1488 = vmatprep.subr.bf16.mxu0 0
    %1489 = vmatpush2.bf16.msra.mxu0 0
    %1490 = vmatprep.subr.bf16.mxu0 0
    %1491 = vmatpush2.bf16.msra.mxu0 0
    %1492 = vmatprep.subr.bf16.mxu0 0
    %1493 = vmatpush2.bf16.msra.mxu0 0
    %1494 = vmatprep.mubr.bf16.mxu0 0
    %1495 = vmatmul.mubr.bf16.gmra.mxu0 %v1456
    %v1496 = vpop.f32.mrf.mxu0
    %v1497 = vadd.f32 0.0, %v1496
    %v1498 = vpop.f32.mrf.mxu0
    %v1499 = vadd.f32 0.0, %v1498
    %v1500 = vpop.f32.mrf.mxu0
    %v1501 = vpop.f32.mrf.mxu0
    %1502 = vdwg.mxu0
    %1503 = vmatprep.subr.bf16.mxu0 %v680
    %1504 = vmatpush1.bf16.msra.mxu0 %v679
    %1505 = vmatprep.subr.bf16.mxu0 %v676
    %1506 = vmatpush1.bf16.msra.mxu0 %v675
    %1507 = vmatprep.subr.bf16.mxu0 %v672
    %1508 = vmatpush1.bf16.msra.mxu0 %v671
    %1509 = vmatprep.subr.bf16.mxu0 %v668
    %1510 = vmatpush1.bf16.msra.mxu0 %v667
    %1511 = vmatprep.subr.bf16.mxu0 %v664
    %1512 = vmatpush1.bf16.msra.mxu0 %v663
    %1513 = vmatprep.subr.bf16.mxu0 %v660
    %1514 = vmatpush1.bf16.msra.mxu0 %v659
    %1515 = vmatprep.subr.bf16.mxu0 %v656
    %1516 = vmatpush1.bf16.msra.mxu0 %v655
    %1517 = vmatprep.subr.bf16.mxu0 %v652
    %1518 = vmatpush1.bf16.msra.mxu0 %v651
    %1519 = vmatprep.subr.bf16.mxu0 0
    %1520 = vmatpush2.bf16.msra.mxu0 0
    %1521 = vmatprep.subr.bf16.mxu0 0
    %1522 = vmatpush2.bf16.msra.mxu0 0
    %1523 = vmatprep.subr.bf16.mxu0 0
    %1524 = vmatpush2.bf16.msra.mxu0 0
    %1525 = vmatprep.subr.bf16.mxu0 0
    %1526 = vmatpush2.bf16.msra.mxu0 0
    %1527 = vmatprep.subr.bf16.mxu0 0
    %1528 = vmatpush2.bf16.msra.mxu0 0
    %1529 = vmatprep.subr.bf16.mxu0 0
    %1530 = vmatpush2.bf16.msra.mxu0 0
    %1531 = vmatprep.subr.bf16.mxu0 0
    %1532 = vmatpush2.bf16.msra.mxu0 0
    %1533 = vmatprep.subr.bf16.mxu0 0
    %1534 = vmatpush2.bf16.msra.mxu0 0
    %1535 = vmatprep.mubr.bf16.mxu0 0
    %1536 = vmatmul.mubr.bf16.gmra.mxu0 %v1456
    %v1537 = vpop.f32.mrf.mxu0
    %v1538 = vadd.f32 0.0, %v1537
    %v1539 = vpop.f32.mrf.mxu0
    %v1540 = vadd.f32 0.0, %v1539
    %v1541 = vpop.f32.mrf.mxu0
    %v1542 = vpop.f32.mrf.mxu0
    %1543 = vdwg.mxu0
    %v1544 = vadd.f32 %v1458, %v1497
    %v1545 = vadd.f32 %v1459, %v1499
    %v1546 = vadd.f32 %v1460, %v1538
    %v1547 = vadd.f32 %v1461, %v1540
    %v1548 = vtanh.pop %v1544
    %v1549 = vtanh.pop %v1545
    %v1550 = vtanh.pop %v1546
    %v1551 = vtanh.pop %v1547
    %v1552 = vadd.f32 %v1548, 1.0
    %v1553 = vmul.f32 %v1552, 0.5
    %v1554 = vadd.f32 %v1549, 1.0
    %v1555 = vmul.f32 %v1554, 0.5
    %v1556 = vadd.f32 %v1551, 1.0
    %v1557 = vmul.f32 %v1556, 0.5
    %v1558 = vmul.f32 %v1555, %v1453
    %v1559 = vmul.f32 %v1553, %v1550
    %v1560 = vadd.f32 %v1558, %v1559
    %v1561 = vtanh.pop %v1560
    %v1562 = vmul.f32 %v1557, %v1561
    %v1563 = vpack.c.bf16 %v1562, %v1562
    %1564 = vst [vmem:[#allocation2 + $0x1c] sm:$0xf] %v1563
    %s1565 = scalar_lea.vmem [#allocation7], 256
    %v1566 = vld [vmem:[%s1565] sm:$0xff]
    %v1567 = vld [vmem:[%s1565 + $0x8] sm:$0xff]
    %v1568 = vld [vmem:[%s1565 + $0x10] sm:$0xff]
    %v1569 = vld [vmem:[%s1565 + $0x18] sm:$0xff]
    %v1570 = vld [vmem:[%s1565 + $0x20] sm:$0xff]
    %v1571 = vld [vmem:[%s1565 + $0x28] sm:$0xff]
    %v1572 = vld [vmem:[%s1565 + $0x30] sm:$0xff]
    %v1573 = vld [vmem:[%s1565 + $0x38] sm:$0xff]
    %v1574 = vld [vmem:[%s1565 + $0x40] sm:$0xff]
    %v1575 = vld [vmem:[%s1565 + $0x48] sm:$0xff]
    %v1576 = vld [vmem:[%s1565 + $0x50] sm:$0xff]
    %v1577 = vld [vmem:[%s1565 + $0x58] sm:$0xff]
    %v1578 = vld [vmem:[%s1565 + $0x60] sm:$0xff]
    %v1579 = vld [vmem:[%s1565 + $0x68] sm:$0xff]
    %v1580 = vld [vmem:[%s1565 + $0x70] sm:$0xff]
    %v1581 = vld [vmem:[%s1565 + $0x78] sm:$0xff]
    %v1582 = vld [vmem:[%s1565 + $0x80] sm:$0xff]
    %v1583 = vld [vmem:[%s1565 + $0x88] sm:$0xff]
    %v1584 = vld [vmem:[%s1565 + $0x90] sm:$0xff]
    %v1585 = vld [vmem:[%s1565 + $0x98] sm:$0xff]
    %v1586 = vld [vmem:[%s1565 + $0xa0] sm:$0xff]
    %v1587 = vld [vmem:[%s1565 + $0xa8] sm:$0xff]
    %v1588 = vld [vmem:[%s1565 + $0xb0] sm:$0xff]
    %v1589 = vld [vmem:[%s1565 + $0xb8] sm:$0xff]
    %v1590 = vld [vmem:[%s1565 + $0xc0] sm:$0xff]
    %v1591 = vld [vmem:[%s1565 + $0xc8] sm:$0xff]
    %v1592 = vld [vmem:[%s1565 + $0xd0] sm:$0xff]
    %v1593 = vld [vmem:[%s1565 + $0xd8] sm:$0xff]
    %v1594 = vld [vmem:[%s1565 + $0xe0] sm:$0xff]
    %v1595 = vld [vmem:[%s1565 + $0xe8] sm:$0xff]
    %v1596 = vld [vmem:[%s1565 + $0xf0] sm:$0xff]
    %v1597 = vld [vmem:[%s1565 + $0xf8] sm:$0xff]
    %s1598 = scalar_lea.vmem [#allocation9], 256
    %v1599 = vld [vmem:[%s1598] sm:$0xff]
    %v1600 = vld [vmem:[%s1598 + $0x8] sm:$0xff]
    %v1601 = vld [vmem:[%s1598 + $0x10] sm:$0xff]
    %v1602 = vld [vmem:[%s1598 + $0x18] sm:$0xff]
    %v1603 = vld [vmem:[%s1598 + $0x20] sm:$0xff]
    %v1604 = vld [vmem:[%s1598 + $0x28] sm:$0xff]
    %v1605 = vld [vmem:[%s1598 + $0x30] sm:$0xff]
    %v1606 = vld [vmem:[%s1598 + $0x38] sm:$0xff]
    %v1607 = vld [vmem:[%s1598 + $0x40] sm:$0xff]
    %v1608 = vld [vmem:[%s1598 + $0x48] sm:$0xff]
    %v1609 = vld [vmem:[%s1598 + $0x50] sm:$0xff]
    %v1610 = vld [vmem:[%s1598 + $0x58] sm:$0xff]
    %v1611 = vld [vmem:[%s1598 + $0x60] sm:$0xff]
    %v1612 = vld [vmem:[%s1598 + $0x68] sm:$0xff]
    %v1613 = vld [vmem:[%s1598 + $0x70] sm:$0xff]
    %v1614 = vld [vmem:[%s1598 + $0x78] sm:$0xff]
    %v1615 = vld [vmem:[%s1598 + $0x80] sm:$0xff]
    %v1616 = vld [vmem:[%s1598 + $0x88] sm:$0xff]
    %v1617 = vld [vmem:[%s1598 + $0x90] sm:$0xff]
    %v1618 = vld [vmem:[%s1598 + $0x98] sm:$0xff]
    %v1619 = vld [vmem:[%s1598 + $0xa0] sm:$0xff]
    %v1620 = vld [vmem:[%s1598 + $0xa8] sm:$0xff]
    %v1621 = vld [vmem:[%s1598 + $0xb0] sm:$0xff]
    %v1622 = vld [vmem:[%s1598 + $0xb8] sm:$0xff]
    %v1623 = vld [vmem:[%s1598 + $0xc0] sm:$0xff]
    %v1624 = vld [vmem:[%s1598 + $0xc8] sm:$0xff]
    %v1625 = vld [vmem:[%s1598 + $0xd0] sm:$0xff]
    %v1626 = vld [vmem:[%s1598 + $0xd8] sm:$0xff]
    %v1627 = vld [vmem:[%s1598 + $0xe0] sm:$0xff]
    %v1628 = vld [vmem:[%s1598 + $0xe8] sm:$0xff]
    %v1629 = vld [vmem:[%s1598 + $0xf0] sm:$0xff]
    %v1630 = vld [vmem:[%s1598 + $0xf8] sm:$0xff]
    %s1631 = scalar_lea.vmem [#allocation10], 4
    %v1632 = vld [vmem:[%s1631] sm:$0xf]
    %v1633 = vld [vmem:[#allocation2] sm:$0xf]
    %v1634 = vld [vmem:[#allocation2 + $0x4] sm:$0xf]
    %v1635 = vld [vmem:[#allocation2 + $0x8] sm:$0xf]
    %v1636 = vld [vmem:[#allocation2 + $0xc] sm:$0xf]
    %v1637 = vld [vmem:[#allocation2 + $0x10] sm:$0xf]
    %v1638 = vld [vmem:[#allocation2 + $0x14] sm:$0xf]
    %v1639 = vld [vmem:[#allocation2 + $0x18] sm:$0xf]
    %v1640 = vld [vmem:[#allocation2 + $0x1c] sm:$0xf]
    %v1642 = vlaneseq
    %v1643 = vshrl.u32 %v1642, 7
    %v1644 = vsub.s32 0, %v1643
    %v1645 = vrot.slane %v1632, %v1644
    %v1646 = vlaneseq
    %v1647 = vshrl.u32 %v1646, 7
    %v1648 = vsub.s32 1, %v1647
    %v1649 = vrot.slane %v1632, %v1648
    %v1650 = vlaneseq
    %v1651 = vshrl.u32 %v1650, 7
    %v1652 = vsub.s32 2, %v1651
    %v1653 = vrot.slane %v1632, %v1652
    %v1654 = vlaneseq
    %v1655 = vshrl.u32 %v1654, 7
    %v1656 = vsub.s32 3, %v1655
    %v1657 = vrot.slane %v1632, %v1656
    %v1670 = vunpack.c.l.b16 %v1633
    %v1671 = vunpack.c.l.b16 %v1634
    %v1672 = vunpack.c.l.b16 %v1635
    %v1673 = vunpack.c.l.b16 %v1636
    %v1674 = vunpack.c.l.b16 %v1637
    %v1675 = vunpack.c.l.b16 %v1638
    %v1676 = vunpack.c.l.b16 %v1639
    %v1677 = vunpack.c.l.b16 %v1640
    %v1678 = vpack.c.b16 %v1671, %v1670
    %v1679 = vpack.c.b16 %v1673, %v1672
    %v1680 = vpack.c.b16 %v1675, %v1674
    %v1681 = vpack.c.b16 %v1677, %v1676
    %v1718 = vunpack.c.l.b16 %v1566
    %v1719 = vunpack.c.h.b16 %v1566
    %v1720 = vunpack.c.l.b16 %v1567
    %v1721 = vunpack.c.h.b16 %v1567
    %v1722 = vunpack.c.l.b16 %v1568
    %v1723 = vunpack.c.h.b16 %v1568
    %v1724 = vunpack.c.l.b16 %v1569
    %v1725 = vunpack.c.h.b16 %v1569
    %v1726 = vunpack.c.l.b16 %v1570
    %v1727 = vunpack.c.h.b16 %v1570
    %v1728 = vunpack.c.l.b16 %v1571
    %v1729 = vunpack.c.h.b16 %v1571
    %v1730 = vunpack.c.l.b16 %v1572
    %v1731 = vunpack.c.h.b16 %v1572
    %v1732 = vunpack.c.l.b16 %v1573
    %v1733 = vunpack.c.h.b16 %v1573
    %v1734 = vunpack.c.l.b16 %v1574
    %v1735 = vunpack.c.h.b16 %v1574
    %v1736 = vunpack.c.l.b16 %v1575
    %v1737 = vunpack.c.h.b16 %v1575
    %v1738 = vunpack.c.l.b16 %v1576
    %v1739 = vunpack.c.h.b16 %v1576
    %v1740 = vunpack.c.l.b16 %v1577
    %v1741 = vunpack.c.h.b16 %v1577
    %v1742 = vunpack.c.l.b16 %v1578
    %v1743 = vunpack.c.h.b16 %v1578
    %v1744 = vunpack.c.l.b16 %v1579
    %v1745 = vunpack.c.h.b16 %v1579
    %v1746 = vunpack.c.l.b16 %v1580
    %v1747 = vunpack.c.h.b16 %v1580
    %v1748 = vunpack.c.l.b16 %v1581
    %v1749 = vunpack.c.h.b16 %v1581
    %v1750 = vunpack.c.l.b16 %v1582
    %v1751 = vunpack.c.h.b16 %v1582
    %v1752 = vunpack.c.l.b16 %v1583
    %v1753 = vunpack.c.h.b16 %v1583
    %v1754 = vunpack.c.l.b16 %v1584
    %v1755 = vunpack.c.h.b16 %v1584
    %v1756 = vunpack.c.l.b16 %v1585
    %v1757 = vunpack.c.h.b16 %v1585
    %v1758 = vunpack.c.l.b16 %v1586
    %v1759 = vunpack.c.h.b16 %v1586
    %v1760 = vunpack.c.l.b16 %v1587
    %v1761 = vunpack.c.h.b16 %v1587
    %v1762 = vunpack.c.l.b16 %v1588
    %v1763 = vunpack.c.h.b16 %v1588
    %v1764 = vunpack.c.l.b16 %v1589
    %v1765 = vunpack.c.h.b16 %v1589
    %v1766 = vunpack.c.l.b16 %v1590
    %v1767 = vunpack.c.h.b16 %v1590
    %v1768 = vunpack.c.l.b16 %v1591
    %v1769 = vunpack.c.h.b16 %v1591
    %v1770 = vunpack.c.l.b16 %v1592
    %v1771 = vunpack.c.h.b16 %v1592
    %v1772 = vunpack.c.l.b16 %v1593
    %v1773 = vunpack.c.h.b16 %v1593
    %v1774 = vunpack.c.l.b16 %v1594
    %v1775 = vunpack.c.h.b16 %v1594
    %v1776 = vunpack.c.l.b16 %v1595
    %v1777 = vunpack.c.h.b16 %v1595
    %v1778 = vunpack.c.l.b16 %v1596
    %v1779 = vunpack.c.h.b16 %v1596
    %v1780 = vunpack.c.l.b16 %v1597
    %v1781 = vunpack.c.h.b16 %v1597
    %v1782 = vpack.c.b16 %v1722, %v1718
    %v1783 = vpack.c.b16 %v1723, %v1719
    %v1784 = vpack.c.b16 %v1724, %v1720
    %v1785 = vpack.c.b16 %v1725, %v1721
    %v1786 = vpack.c.b16 %v1730, %v1726
    %v1787 = vpack.c.b16 %v1731, %v1727
    %v1788 = vpack.c.b16 %v1732, %v1728
    %v1789 = vpack.c.b16 %v1733, %v1729
    %v1790 = vpack.c.b16 %v1738, %v1734
    %v1791 = vpack.c.b16 %v1739, %v1735
    %v1792 = vpack.c.b16 %v1740, %v1736
    %v1793 = vpack.c.b16 %v1741, %v1737
    %v1794 = vpack.c.b16 %v1746, %v1742
    %v1795 = vpack.c.b16 %v1747, %v1743
    %v1796 = vpack.c.b16 %v1748, %v1744
    %v1797 = vpack.c.b16 %v1749, %v1745
    %v1798 = vpack.c.b16 %v1754, %v1750
    %v1799 = vpack.c.b16 %v1755, %v1751
    %v1800 = vpack.c.b16 %v1756, %v1752
    %v1801 = vpack.c.b16 %v1757, %v1753
    %v1802 = vpack.c.b16 %v1762, %v1758
    %v1803 = vpack.c.b16 %v1763, %v1759
    %v1804 = vpack.c.b16 %v1764, %v1760
    %v1805 = vpack.c.b16 %v1765, %v1761
    %v1806 = vpack.c.b16 %v1770, %v1766
    %v1807 = vpack.c.b16 %v1771, %v1767
    %v1808 = vpack.c.b16 %v1772, %v1768
    %v1809 = vpack.c.b16 %v1773, %v1769
    %v1810 = vpack.c.b16 %v1778, %v1774
    %v1811 = vpack.c.b16 %v1779, %v1775
    %v1812 = vpack.c.b16 %v1780, %v1776
    %v1813 = vpack.c.b16 %v1781, %v1777
    %1846 = vmatprep.subr.bf16.mxu0 %v1811
    %1847 = vmatpush1.bf16.msra.mxu0 %v1810
    %1848 = vmatprep.subr.bf16.mxu0 %v1807
    %1849 = vmatpush1.bf16.msra.mxu0 %v1806
    %1850 = vmatprep.subr.bf16.mxu0 %v1803
    %1851 = vmatpush1.bf16.msra.mxu0 %v1802
    %1852 = vmatprep.subr.bf16.mxu0 %v1799
    %1853 = vmatpush1.bf16.msra.mxu0 %v1798
    %1854 = vmatprep.subr.bf16.mxu0 %v1795
    %1855 = vmatpush1.bf16.msra.mxu0 %v1794
    %1856 = vmatprep.subr.bf16.mxu0 %v1791
    %1857 = vmatpush1.bf16.msra.mxu0 %v1790
    %1858 = vmatprep.subr.bf16.mxu0 %v1787
    %1859 = vmatpush1.bf16.msra.mxu0 %v1786
    %1860 = vmatprep.subr.bf16.mxu0 %v1783
    %1861 = vmatpush1.bf16.msra.mxu0 %v1782
    %1862 = vmatprep.subr.bf16.mxu0 0
    %1863 = vmatpush2.bf16.msra.mxu0 0
    %1864 = vmatprep.subr.bf16.mxu0 0
    %1865 = vmatpush2.bf16.msra.mxu0 0
    %1866 = vmatprep.subr.bf16.mxu0 0
    %1867 = vmatpush2.bf16.msra.mxu0 0
    %1868 = vmatprep.subr.bf16.mxu0 0
    %1869 = vmatpush2.bf16.msra.mxu0 0
    %1870 = vmatprep.subr.bf16.mxu0 0
    %1871 = vmatpush2.bf16.msra.mxu0 0
    %1872 = vmatprep.subr.bf16.mxu0 0
    %1873 = vmatpush2.bf16.msra.mxu0 0
    %1874 = vmatprep.subr.bf16.mxu0 0
    %1875 = vmatpush2.bf16.msra.mxu0 0
    %1876 = vmatprep.subr.bf16.mxu0 0
    %1877 = vmatpush2.bf16.msra.mxu0 0
    %1878 = vmatprep.mubr.bf16.mxu0 0
    %1879 = vmatmul.mubr.bf16.gmra.mxu0 %v1678
    %v1880 = vpop.f32.mrf.mxu0
    %v1881 = vadd.f32 %v1645, %v1880
    %v1882 = vpop.f32.mrf.mxu0
    %v1883 = vadd.f32 %v1649, %v1882
    %v1884 = vpop.f32.mrf.mxu0
    %v1885 = vadd.f32 %v1645, %v1884
    %v1886 = vpop.f32.mrf.mxu0
    %v1887 = vadd.f32 %v1649, %v1886
    %1888 = vmatprep.mubr.bf16.mxu0 0
    %1889 = vmatmul.mubr.bf16.gmra.mxu0 %v1679
    %v1890 = vpop.f32.mrf.mxu0
    %v1891 = vadd.f32 %v1645, %v1890
    %v1892 = vpop.f32.mrf.mxu0
    %v1893 = vadd.f32 %v1649, %v1892
    %v1894 = vpop.f32.mrf.mxu0
    %v1895 = vadd.f32 %v1645, %v1894
    %v1896 = vpop.f32.mrf.mxu0
    %v1897 = vadd.f32 %v1649, %v1896
    %1898 = vmatprep.mubr.bf16.mxu0 0
    %1899 = vmatmul.mubr.bf16.gmra.mxu0 %v1680
    %v1900 = vpop.f32.mrf.mxu0
    %v1901 = vadd.f32 %v1645, %v1900
    %v1902 = vpop.f32.mrf.mxu0
    %v1903 = vadd.f32 %v1649, %v1902
    %v1904 = vpop.f32.mrf.mxu0
    %v1905 = vadd.f32 %v1645, %v1904
    %v1906 = vpop.f32.mrf.mxu0
    %v1907 = vadd.f32 %v1649, %v1906
    %1908 = vmatprep.mubr.bf16.mxu0 0
    %1909 = vmatmul.mubr.bf16.gmra.mxu0 %v1681
    %v1910 = vpop.f32.mrf.mxu0
    %v1911 = vadd.f32 %v1645, %v1910
    %v1912 = vpop.f32.mrf.mxu0
    %v1913 = vadd.f32 %v1649, %v1912
    %v1914 = vpop.f32.mrf.mxu0
    %v1915 = vadd.f32 %v1645, %v1914
    %v1916 = vpop.f32.mrf.mxu0
    %v1917 = vadd.f32 %v1649, %v1916
    %1918 = vdwg.mxu0
    %1919 = vmatprep.subr.bf16.mxu0 %v1813
    %1920 = vmatpush1.bf16.msra.mxu0 %v1812
    %1921 = vmatprep.subr.bf16.mxu0 %v1809
    %1922 = vmatpush1.bf16.msra.mxu0 %v1808
    %1923 = vmatprep.subr.bf16.mxu0 %v1805
    %1924 = vmatpush1.bf16.msra.mxu0 %v1804
    %1925 = vmatprep.subr.bf16.mxu0 %v1801
    %1926 = vmatpush1.bf16.msra.mxu0 %v1800
    %1927 = vmatprep.subr.bf16.mxu0 %v1797
    %1928 = vmatpush1.bf16.msra.mxu0 %v1796
    %1929 = vmatprep.subr.bf16.mxu0 %v1793
    %1930 = vmatpush1.bf16.msra.mxu0 %v1792
    %1931 = vmatprep.subr.bf16.mxu0 %v1789
    %1932 = vmatpush1.bf16.msra.mxu0 %v1788
    %1933 = vmatprep.subr.bf16.mxu0 %v1785
    %1934 = vmatpush1.bf16.msra.mxu0 %v1784
    %1935 = vmatprep.subr.bf16.mxu0 0
    %1936 = vmatpush2.bf16.msra.mxu0 0
    %1937 = vmatprep.subr.bf16.mxu0 0
    %1938 = vmatpush2.bf16.msra.mxu0 0
    %1939 = vmatprep.subr.bf16.mxu0 0
    %1940 = vmatpush2.bf16.msra.mxu0 0
    %1941 = vmatprep.subr.bf16.mxu0 0
    %1942 = vmatpush2.bf16.msra.mxu0 0
    %1943 = vmatprep.subr.bf16.mxu0 0
    %1944 = vmatpush2.bf16.msra.mxu0 0
    %1945 = vmatprep.subr.bf16.mxu0 0
    %1946 = vmatpush2.bf16.msra.mxu0 0
    %1947 = vmatprep.subr.bf16.mxu0 0
    %1948 = vmatpush2.bf16.msra.mxu0 0
    %1949 = vmatprep.subr.bf16.mxu0 0
    %1950 = vmatpush2.bf16.msra.mxu0 0
    %1951 = vmatprep.mubr.bf16.mxu0 0
    %1952 = vmatmul.mubr.bf16.gmra.mxu0 %v1678
    %v1953 = vpop.f32.mrf.mxu0
    %v1954 = vadd.f32 %v1653, %v1953
    %v1955 = vpop.f32.mrf.mxu0
    %v1956 = vadd.f32 %v1657, %v1955
    %v1957 = vpop.f32.mrf.mxu0
    %v1958 = vadd.f32 %v1653, %v1957
    %v1959 = vpop.f32.mrf.mxu0
    %v1960 = vadd.f32 %v1657, %v1959
    %1961 = vmatprep.mubr.bf16.mxu0 0
    %1962 = vmatmul.mubr.bf16.gmra.mxu0 %v1679
    %v1963 = vpop.f32.mrf.mxu0
    %v1964 = vadd.f32 %v1653, %v1963
    %v1965 = vpop.f32.mrf.mxu0
    %v1966 = vadd.f32 %v1657, %v1965
    %v1967 = vpop.f32.mrf.mxu0
    %v1968 = vadd.f32 %v1653, %v1967
    %v1969 = vpop.f32.mrf.mxu0
    %v1970 = vadd.f32 %v1657, %v1969
    %1971 = vmatprep.mubr.bf16.mxu0 0
    %1972 = vmatmul.mubr.bf16.gmra.mxu0 %v1680
    %v1973 = vpop.f32.mrf.mxu0
    %v1974 = vadd.f32 %v1653, %v1973
    %v1975 = vpop.f32.mrf.mxu0
    %v1976 = vadd.f32 %v1657, %v1975
    %v1977 = vpop.f32.mrf.mxu0
    %v1978 = vadd.f32 %v1653, %v1977
    %v1979 = vpop.f32.mrf.mxu0
    %v1980 = vadd.f32 %v1657, %v1979
    %1981 = vmatprep.mubr.bf16.mxu0 0
    %1982 = vmatmul.mubr.bf16.gmra.mxu0 %v1681
    %v1983 = vpop.f32.mrf.mxu0
    %v1984 = vadd.f32 %v1653, %v1983
    %v1985 = vpop.f32.mrf.mxu0
    %v1986 = vadd.f32 %v1657, %v1985
    %v1987 = vpop.f32.mrf.mxu0
    %v1988 = vadd.f32 %v1653, %v1987
    %v1989 = vpop.f32.mrf.mxu0
    %v1990 = vadd.f32 %v1657, %v1989
    %1991 = vdwg.mxu0
    %1992 = vst [vmem:[#allocation3] sm:$0xff] %v1881
    %1993 = vst [vmem:[#allocation3 + $0x8] sm:$0xff] %v1883
    %1994 = vst [vmem:[#allocation3 + $0x10] sm:$0xff] %v1954
    %1995 = vst [vmem:[#allocation3 + $0x18] sm:$0xff] %v1956
    %1996 = vst [vmem:[#allocation3 + $0x20] sm:$0xff] %v1885
    %1997 = vst [vmem:[#allocation3 + $0x28] sm:$0xff] %v1887
    %1998 = vst [vmem:[#allocation3 + $0x30] sm:$0xff] %v1958
    %1999 = vst [vmem:[#allocation3 + $0x38] sm:$0xff] %v1960
    %2000 = vst [vmem:[#allocation3 + $0x40] sm:$0xff] %v1891
    %2001 = vst [vmem:[#allocation3 + $0x48] sm:$0xff] %v1893
    %2002 = vst [vmem:[#allocation3 + $0x50] sm:$0xff] %v1964
    %2003 = vst [vmem:[#allocation3 + $0x58] sm:$0xff] %v1966
    %2004 = vst [vmem:[#allocation3 + $0x60] sm:$0xff] %v1895
    %2005 = vst [vmem:[#allocation3 + $0x68] sm:$0xff] %v1897
    %2006 = vst [vmem:[#allocation3 + $0x70] sm:$0xff] %v1968
    %2007 = vst [vmem:[#allocation3 + $0x78] sm:$0xff] %v1970
    %2008 = vst [vmem:[#allocation3 + $0x80] sm:$0xff] %v1901
    %2009 = vst [vmem:[#allocation3 + $0x88] sm:$0xff] %v1903
    %2010 = vst [vmem:[#allocation3 + $0x90] sm:$0xff] %v1974
    %2011 = vst [vmem:[#allocation3 + $0x98] sm:$0xff] %v1976
    %2012 = vst [vmem:[#allocation3 + $0xa0] sm:$0xff] %v1905
    %2013 = vst [vmem:[#allocation3 + $0xa8] sm:$0xff] %v1907
    %2014 = vst [vmem:[#allocation3 + $0xb0] sm:$0xff] %v1978
    %2015 = vst [vmem:[#allocation3 + $0xb8] sm:$0xff] %v1980
    %2016 = vst [vmem:[#allocation3 + $0xc0] sm:$0xff] %v1911
    %2017 = vst [vmem:[#allocation3 + $0xc8] sm:$0xff] %v1913
    %2018 = vst [vmem:[#allocation3 + $0xd0] sm:$0xff] %v1984
    %2019 = vst [vmem:[#allocation3 + $0xd8] sm:$0xff] %v1986
    %2020 = vst [vmem:[#allocation3 + $0xe0] sm:$0xff] %v1915
    %2021 = vst [vmem:[#allocation3 + $0xe8] sm:$0xff] %v1917
    %2022 = vst [vmem:[#allocation3 + $0xf0] sm:$0xff] %v1988
    %2023 = vst [vmem:[#allocation3 + $0xf8] sm:$0xff] %v1990
    %v2024 = vld [vmem:[#allocation3] sm:$0xff]
    %v2025 = vld [vmem:[#allocation3 + $0x8] sm:$0xff]
    %v2026 = vld [vmem:[#allocation3 + $0x10] sm:$0xff]
    %v2027 = vld [vmem:[#allocation3 + $0x18] sm:$0xff]
    %v2060 = vunpack.c.l.b16 %v1599
    %v2061 = vunpack.c.h.b16 %v1599
    %v2062 = vunpack.c.l.b16 %v1600
    %v2063 = vunpack.c.h.b16 %v1600
    %v2064 = vunpack.c.l.b16 %v1601
    %v2065 = vunpack.c.h.b16 %v1601
    %v2066 = vunpack.c.l.b16 %v1602
    %v2067 = vunpack.c.h.b16 %v1602
    %v2068 = vunpack.c.l.b16 %v1603
    %v2069 = vunpack.c.h.b16 %v1603
    %v2070 = vunpack.c.l.b16 %v1604
    %v2071 = vunpack.c.h.b16 %v1604
    %v2072 = vunpack.c.l.b16 %v1605
    %v2073 = vunpack.c.h.b16 %v1605
    %v2074 = vunpack.c.l.b16 %v1606
    %v2075 = vunpack.c.h.b16 %v1606
    %v2076 = vunpack.c.l.b16 %v1607
    %v2077 = vunpack.c.h.b16 %v1607
    %v2078 = vunpack.c.l.b16 %v1608
    %v2079 = vunpack.c.h.b16 %v1608
    %v2080 = vunpack.c.l.b16 %v1609
    %v2081 = vunpack.c.h.b16 %v1609
    %v2082 = vunpack.c.l.b16 %v1610
    %v2083 = vunpack.c.h.b16 %v1610
    %v2084 = vunpack.c.l.b16 %v1611
    %v2085 = vunpack.c.h.b16 %v1611
    %v2086 = vunpack.c.l.b16 %v1612
    %v2087 = vunpack.c.h.b16 %v1612
    %v2088 = vunpack.c.l.b16 %v1613
    %v2089 = vunpack.c.h.b16 %v1613
    %v2090 = vunpack.c.l.b16 %v1614
    %v2091 = vunpack.c.h.b16 %v1614
    %v2092 = vunpack.c.l.b16 %v1615
    %v2093 = vunpack.c.h.b16 %v1615
    %v2094 = vunpack.c.l.b16 %v1616
    %v2095 = vunpack.c.h.b16 %v1616
    %v2096 = vunpack.c.l.b16 %v1617
    %v2097 = vunpack.c.h.b16 %v1617
    %v2098 = vunpack.c.l.b16 %v1618
    %v2099 = vunpack.c.h.b16 %v1618
    %v2100 = vunpack.c.l.b16 %v1619
    %v2101 = vunpack.c.h.b16 %v1619
    %v2102 = vunpack.c.l.b16 %v1620
    %v2103 = vunpack.c.h.b16 %v1620
    %v2104 = vunpack.c.l.b16 %v1621
    %v2105 = vunpack.c.h.b16 %v1621
    %v2106 = vunpack.c.l.b16 %v1622
    %v2107 = vunpack.c.h.b16 %v1622
    %v2108 = vunpack.c.l.b16 %v1623
    %v2109 = vunpack.c.h.b16 %v1623
    %v2110 = vunpack.c.l.b16 %v1624
    %v2111 = vunpack.c.h.b16 %v1624
    %v2112 = vunpack.c.l.b16 %v1625
    %v2113 = vunpack.c.h.b16 %v1625
    %v2114 = vunpack.c.l.b16 %v1626
    %v2115 = vunpack.c.h.b16 %v1626
    %v2116 = vunpack.c.l.b16 %v1627
    %v2117 = vunpack.c.h.b16 %v1627
    %v2118 = vunpack.c.l.b16 %v1628
    %v2119 = vunpack.c.h.b16 %v1628
    %v2120 = vunpack.c.l.b16 %v1629
    %v2121 = vunpack.c.h.b16 %v1629
    %v2122 = vunpack.c.l.b16 %v1630
    %v2123 = vunpack.c.h.b16 %v1630
    %v2124 = vpack.c.b16 %v2064, %v2060
    %v2125 = vpack.c.b16 %v2065, %v2061
    %v2126 = vpack.c.b16 %v2066, %v2062
    %v2127 = vpack.c.b16 %v2067, %v2063
    %v2128 = vpack.c.b16 %v2072, %v2068
    %v2129 = vpack.c.b16 %v2073, %v2069
    %v2130 = vpack.c.b16 %v2074, %v2070
    %v2131 = vpack.c.b16 %v2075, %v2071
    %v2132 = vpack.c.b16 %v2080, %v2076
    %v2133 = vpack.c.b16 %v2081, %v2077
    %v2134 = vpack.c.b16 %v2082, %v2078
    %v2135 = vpack.c.b16 %v2083, %v2079
    %v2136 = vpack.c.b16 %v2088, %v2084
    %v2137 = vpack.c.b16 %v2089, %v2085
    %v2138 = vpack.c.b16 %v2090, %v2086
    %v2139 = vpack.c.b16 %v2091, %v2087
    %v2140 = vpack.c.b16 %v2096, %v2092
    %v2141 = vpack.c.b16 %v2097, %v2093
    %v2142 = vpack.c.b16 %v2098, %v2094
    %v2143 = vpack.c.b16 %v2099, %v2095
    %v2144 = vpack.c.b16 %v2104, %v2100
    %v2145 = vpack.c.b16 %v2105, %v2101
    %v2146 = vpack.c.b16 %v2106, %v2102
    %v2147 = vpack.c.b16 %v2107, %v2103
    %v2148 = vpack.c.b16 %v2112, %v2108
    %v2149 = vpack.c.b16 %v2113, %v2109
    %v2150 = vpack.c.b16 %v2114, %v2110
    %v2151 = vpack.c.b16 %v2115, %v2111
    %v2152 = vpack.c.b16 %v2120, %v2116
    %v2153 = vpack.c.b16 %v2121, %v2117
    %v2154 = vpack.c.b16 %v2122, %v2118
    %v2155 = vpack.c.b16 %v2123, %v2119
    %2188 = vmatprep.subr.bf16.mxu0 %v2153
    %2189 = vmatpush1.bf16.msra.mxu0 %v2152
    %2190 = vmatprep.subr.bf16.mxu0 %v2149
    %2191 = vmatpush1.bf16.msra.mxu0 %v2148
    %2192 = vmatprep.subr.bf16.mxu0 %v2145
    %2193 = vmatpush1.bf16.msra.mxu0 %v2144
    %2194 = vmatprep.subr.bf16.mxu0 %v2141
    %2195 = vmatpush1.bf16.msra.mxu0 %v2140
    %2196 = vmatprep.subr.bf16.mxu0 %v2137
    %2197 = vmatpush1.bf16.msra.mxu0 %v2136
    %2198 = vmatprep.subr.bf16.mxu0 %v2133
    %2199 = vmatpush1.bf16.msra.mxu0 %v2132
    %2200 = vmatprep.subr.bf16.mxu0 %v2129
    %2201 = vmatpush1.bf16.msra.mxu0 %v2128
    %2202 = vmatprep.subr.bf16.mxu0 %v2125
    %2203 = vmatpush1.bf16.msra.mxu0 %v2124
    %2204 = vmatprep.subr.bf16.mxu0 0
    %2205 = vmatpush2.bf16.msra.mxu0 0
    %2206 = vmatprep.subr.bf16.mxu0 0
    %2207 = vmatpush2.bf16.msra.mxu0 0
    %2208 = vmatprep.subr.bf16.mxu0 0
    %2209 = vmatpush2.bf16.msra.mxu0 0
    %2210 = vmatprep.subr.bf16.mxu0 0
    %2211 = vmatpush2.bf16.msra.mxu0 0
    %2212 = vmatprep.subr.bf16.mxu0 0
    %2213 = vmatpush2.bf16.msra.mxu0 0
    %2214 = vmatprep.subr.bf16.mxu0 0
    %2215 = vmatpush2.bf16.msra.mxu0 0
    %2216 = vmatprep.subr.bf16.mxu0 0
    %2217 = vmatpush2.bf16.msra.mxu0 0
    %2218 = vmatprep.subr.bf16.mxu0 0
    %2219 = vmatpush2.bf16.msra.mxu0 0
    %2220 = vmatprep.mubr.bf16.mxu0 0
    %2221 = vmatmul.mubr.bf16.gmra.mxu0 0
    %v2222 = vpop.f32.mrf.mxu0
    %v2223 = vadd.f32 0.0, %v2222
    %v2224 = vpop.f32.mrf.mxu0
    %v2225 = vadd.f32 0.0, %v2224
    %v2226 = vpop.f32.mrf.mxu0
    %v2227 = vpop.f32.mrf.mxu0
    %2228 = vdwg.mxu0
    %2229 = vmatprep.subr.bf16.mxu0 %v2155
    %2230 = vmatpush1.bf16.msra.mxu0 %v2154
    %2231 = vmatprep.subr.bf16.mxu0 %v2151
    %2232 = vmatpush1.bf16.msra.mxu0 %v2150
    %2233 = vmatprep.subr.bf16.mxu0 %v2147
    %2234 = vmatpush1.bf16.msra.mxu0 %v2146
    %2235 = vmatprep.subr.bf16.mxu0 %v2143
    %2236 = vmatpush1.bf16.msra.mxu0 %v2142
    %2237 = vmatprep.subr.bf16.mxu0 %v2139
    %2238 = vmatpush1.bf16.msra.mxu0 %v2138
    %2239 = vmatprep.subr.bf16.mxu0 %v2135
    %2240 = vmatpush1.bf16.msra.mxu0 %v2134
    %2241 = vmatprep.subr.bf16.mxu0 %v2131
    %2242 = vmatpush1.bf16.msra.mxu0 %v2130
    %2243 = vmatprep.subr.bf16.mxu0 %v2127
    %2244 = vmatpush1.bf16.msra.mxu0 %v2126
    %2245 = vmatprep.subr.bf16.mxu0 0
    %2246 = vmatpush2.bf16.msra.mxu0 0
    %2247 = vmatprep.subr.bf16.mxu0 0
    %2248 = vmatpush2.bf16.msra.mxu0 0
    %2249 = vmatprep.subr.bf16.mxu0 0
    %2250 = vmatpush2.bf16.msra.mxu0 0
    %2251 = vmatprep.subr.bf16.mxu0 0
    %2252 = vmatpush2.bf16.msra.mxu0 0
    %2253 = vmatprep.subr.bf16.mxu0 0
    %2254 = vmatpush2.bf16.msra.mxu0 0
    %2255 = vmatprep.subr.bf16.mxu0 0
    %2256 = vmatpush2.bf16.msra.mxu0 0
    %2257 = vmatprep.subr.bf16.mxu0 0
    %2258 = vmatpush2.bf16.msra.mxu0 0
    %2259 = vmatprep.subr.bf16.mxu0 0
    %2260 = vmatpush2.bf16.msra.mxu0 0
    %2261 = vmatprep.mubr.bf16.mxu0 0
    %2262 = vmatmul.mubr.bf16.gmra.mxu0 0
    %v2263 = vpop.f32.mrf.mxu0
    %v2264 = vadd.f32 0.0, %v2263
    %v2265 = vpop.f32.mrf.mxu0
    %v2266 = vadd.f32 0.0, %v2265
    %v2267 = vpop.f32.mrf.mxu0
    %v2268 = vpop.f32.mrf.mxu0
    %2269 = vdwg.mxu0
    %v2270 = vadd.f32 %v2024, %v2223
    %v2271 = vadd.f32 %v2025, %v2225
    %v2272 = vadd.f32 %v2026, %v2264
    %v2273 = vadd.f32 %v2027, %v2266
    %v2274 = vtanh.pop %v2270
    %v2275 = vtanh.pop %v2271
    %v2276 = vtanh.pop %v2272
    %v2277 = vtanh.pop %v2273
    %v2278 = vadd.f32 %v2274, 1.0
    %v2279 = vmul.f32 %v2278, 0.5
    %v2280 = vadd.f32 %v2275, 1.0
    %v2281 = vmul.f32 %v2280, 0.5
    %v2282 = vadd.f32 %v2277, 1.0
    %v2283 = vmul.f32 %v2282, 0.5
    %v2284 = vmul.f32 %v2281, 0.0
    %v2285 = vmul.f32 %v2279, %v2276
    %v2286 = vadd.f32 %v2284, %v2285
    %v2287 = vtanh.pop %v2286
    %v2288 = vmul.f32 %v2283, %v2287
    %v2289 = vpack.c.bf16 %v2288, %v2288
    %2290 = vst [vmem:[#allocation2] sm:$0xf] %v2289
    %v2291 = vld [vmem:[#allocation3 + $0x20] sm:$0xff]
    %v2292 = vld [vmem:[#allocation3 + $0x28] sm:$0xff]
    %v2293 = vld [vmem:[#allocation3 + $0x30] sm:$0xff]
    %v2294 = vld [vmem:[#allocation3 + $0x38] sm:$0xff]
    %2295 = vmatprep.subr.bf16.mxu0 %v2153
    %2296 = vmatpush1.bf16.msra.mxu0 %v2152
    %2297 = vmatprep.subr.bf16.mxu0 %v2149
    %2298 = vmatpush1.bf16.msra.mxu0 %v2148
    %2299 = vmatprep.subr.bf16.mxu0 %v2145
    %2300 = vmatpush1.bf16.msra.mxu0 %v2144
    %2301 = vmatprep.subr.bf16.mxu0 %v2141
    %2302 = vmatpush1.bf16.msra.mxu0 %v2140
    %2303 = vmatprep.subr.bf16.mxu0 %v2137
    %2304 = vmatpush1.bf16.msra.mxu0 %v2136
    %2305 = vmatprep.subr.bf16.mxu0 %v2133
    %2306 = vmatpush1.bf16.msra.mxu0 %v2132
    %2307 = vmatprep.subr.bf16.mxu0 %v2129
    %2308 = vmatpush1.bf16.msra.mxu0 %v2128
    %2309 = vmatprep.subr.bf16.mxu0 %v2125
    %2310 = vmatpush1.bf16.msra.mxu0 %v2124
    %2311 = vmatprep.subr.bf16.mxu0 0
    %2312 = vmatpush2.bf16.msra.mxu0 0
    %2313 = vmatprep.subr.bf16.mxu0 0
    %2314 = vmatpush2.bf16.msra.mxu0 0
    %2315 = vmatprep.subr.bf16.mxu0 0
    %2316 = vmatpush2.bf16.msra.mxu0 0
    %2317 = vmatprep.subr.bf16.mxu0 0
    %2318 = vmatpush2.bf16.msra.mxu0 0
    %2319 = vmatprep.subr.bf16.mxu0 0
    %2320 = vmatpush2.bf16.msra.mxu0 0
    %2321 = vmatprep.subr.bf16.mxu0 0
    %2322 = vmatpush2.bf16.msra.mxu0 0
    %2323 = vmatprep.subr.bf16.mxu0 0
    %2324 = vmatpush2.bf16.msra.mxu0 0
    %2325 = vmatprep.subr.bf16.mxu0 0
    %2326 = vmatpush2.bf16.msra.mxu0 0
    %2327 = vmatprep.mubr.bf16.mxu0 0
    %2328 = vmatmul.mubr.bf16.gmra.mxu0 %v2289
    %v2329 = vpop.f32.mrf.mxu0
    %v2330 = vadd.f32 0.0, %v2329
    %v2331 = vpop.f32.mrf.mxu0
    %v2332 = vadd.f32 0.0, %v2331
    %v2333 = vpop.f32.mrf.mxu0
    %v2334 = vpop.f32.mrf.mxu0
    %2335 = vdwg.mxu0
    %2336 = vmatprep.subr.bf16.mxu0 %v2155
    %2337 = vmatpush1.bf16.msra.mxu0 %v2154
    %2338 = vmatprep.subr.bf16.mxu0 %v2151
    %2339 = vmatpush1.bf16.msra.mxu0 %v2150
    %2340 = vmatprep.subr.bf16.mxu0 %v2147
    %2341 = vmatpush1.bf16.msra.mxu0 %v2146
    %2342 = vmatprep.subr.bf16.mxu0 %v2143
    %2343 = vmatpush1.bf16.msra.mxu0 %v2142
    %2344 = vmatprep.subr.bf16.mxu0 %v2139
    %2345 = vmatpush1.bf16.msra.mxu0 %v2138
    %2346 = vmatprep.subr.bf16.mxu0 %v2135
    %2347 = vmatpush1.bf16.msra.mxu0 %v2134
    %2348 = vmatprep.subr.bf16.mxu0 %v2131
    %2349 = vmatpush1.bf16.msra.mxu0 %v2130
    %2350 = vmatprep.subr.bf16.mxu0 %v2127
    %2351 = vmatpush1.bf16.msra.mxu0 %v2126
    %2352 = vmatprep.subr.bf16.mxu0 0
    %2353 = vmatpush2.bf16.msra.mxu0 0
    %2354 = vmatprep.subr.bf16.mxu0 0
    %2355 = vmatpush2.bf16.msra.mxu0 0
    %2356 = vmatprep.subr.bf16.mxu0 0
    %2357 = vmatpush2.bf16.msra.mxu0 0
    %2358 = vmatprep.subr.bf16.mxu0 0
    %2359 = vmatpush2.bf16.msra.mxu0 0
    %2360 = vmatprep.subr.bf16.mxu0 0
    %2361 = vmatpush2.bf16.msra.mxu0 0
    %2362 = vmatprep.subr.bf16.mxu0 0
    %2363 = vmatpush2.bf16.msra.mxu0 0
    %2364 = vmatprep.subr.bf16.mxu0 0
    %2365 = vmatpush2.bf16.msra.mxu0 0
    %2366 = vmatprep.subr.bf16.mxu0 0
    %2367 = vmatpush2.bf16.msra.mxu0 0
    %2368 = vmatprep.mubr.bf16.mxu0 0
    %2369 = vmatmul.mubr.bf16.gmra.mxu0 %v2289
    %v2370 = vpop.f32.mrf.mxu0
    %v2371 = vadd.f32 0.0, %v2370
    %v2372 = vpop.f32.mrf.mxu0
    %v2373 = vadd.f32 0.0, %v2372
    %v2374 = vpop.f32.mrf.mxu0
    %v2375 = vpop.f32.mrf.mxu0
    %2376 = vdwg.mxu0
    %v2377 = vadd.f32 %v2291, %v2330
    %v2378 = vadd.f32 %v2292, %v2332
    %v2379 = vadd.f32 %v2293, %v2371
    %v2380 = vadd.f32 %v2294, %v2373
    %v2381 = vtanh.pop %v2377
    %v2382 = vtanh.pop %v2378
    %v2383 = vtanh.pop %v2379
    %v2384 = vtanh.pop %v2380
    %v2385 = vadd.f32 %v2381, 1.0
    %v2386 = vmul.f32 %v2385, 0.5
    %v2387 = vadd.f32 %v2382, 1.0
    %v2388 = vmul.f32 %v2387, 0.5
    %v2389 = vadd.f32 %v2384, 1.0
    %v2390 = vmul.f32 %v2389, 0.5
    %v2391 = vmul.f32 %v2388, %v2286
    %v2392 = vmul.f32 %v2386, %v2383
    %v2393 = vadd.f32 %v2391, %v2392
    %v2394 = vtanh.pop %v2393
    %v2395 = vmul.f32 %v2390, %v2394
    %v2396 = vpack.c.bf16 %v2395, %v2395
    %2397 = vst [vmem:[#allocation2 + $0x4] sm:$0xf] %v2396
    %v2398 = vld [vmem:[#allocation3 + $0x40] sm:$0xff]
    %v2399 = vld [vmem:[#allocation3 + $0x48] sm:$0xff]
    %v2400 = vld [vmem:[#allocation3 + $0x50] sm:$0xff]
    %v2401 = vld [vmem:[#allocation3 + $0x58] sm:$0xff]
    %2402 = vmatprep.subr.bf16.mxu0 %v2153
    %2403 = vmatpush1.bf16.msra.mxu0 %v2152
    %2404 = vmatprep.subr.bf16.mxu0 %v2149
    %2405 = vmatpush1.bf16.msra.mxu0 %v2148
    %2406 = vmatprep.subr.bf16.mxu0 %v2145
    %2407 = vmatpush1.bf16.msra.mxu0 %v2144
    %2408 = vmatprep.subr.bf16.mxu0 %v2141
    %2409 = vmatpush1.bf16.msra.mxu0 %v2140
    %2410 = vmatprep.subr.bf16.mxu0 %v2137
    %2411 = vmatpush1.bf16.msra.mxu0 %v2136
    %2412 = vmatprep.subr.bf16.mxu0 %v2133
    %2413 = vmatpush1.bf16.msra.mxu0 %v2132
    %2414 = vmatprep.subr.bf16.mxu0 %v2129
    %2415 = vmatpush1.bf16.msra.mxu0 %v2128
    %2416 = vmatprep.subr.bf16.mxu0 %v2125
    %2417 = vmatpush1.bf16.msra.mxu0 %v2124
    %2418 = vmatprep.subr.bf16.mxu0 0
    %2419 = vmatpush2.bf16.msra.mxu0 0
    %2420 = vmatprep.subr.bf16.mxu0 0
    %2421 = vmatpush2.bf16.msra.mxu0 0
    %2422 = vmatprep.subr.bf16.mxu0 0
    %2423 = vmatpush2.bf16.msra.mxu0 0
    %2424 = vmatprep.subr.bf16.mxu0 0
    %2425 = vmatpush2.bf16.msra.mxu0 0
    %2426 = vmatprep.subr.bf16.mxu0 0
    %2427 = vmatpush2.bf16.msra.mxu0 0
    %2428 = vmatprep.subr.bf16.mxu0 0
    %2429 = vmatpush2.bf16.msra.mxu0 0
    %2430 = vmatprep.subr.bf16.mxu0 0
    %2431 = vmatpush2.bf16.msra.mxu0 0
    %2432 = vmatprep.subr.bf16.mxu0 0
    %2433 = vmatpush2.bf16.msra.mxu0 0
    %2434 = vmatprep.mubr.bf16.mxu0 0
    %2435 = vmatmul.mubr.bf16.gmra.mxu0 %v2396
    %v2436 = vpop.f32.mrf.mxu0
    %v2437 = vadd.f32 0.0, %v2436
    %v2438 = vpop.f32.mrf.mxu0
    %v2439 = vadd.f32 0.0, %v2438
    %v2440 = vpop.f32.mrf.mxu0
    %v2441 = vpop.f32.mrf.mxu0
    %2442 = vdwg.mxu0
    %2443 = vmatprep.subr.bf16.mxu0 %v2155
    %2444 = vmatpush1.bf16.msra.mxu0 %v2154
    %2445 = vmatprep.subr.bf16.mxu0 %v2151
    %2446 = vmatpush1.bf16.msra.mxu0 %v2150
    %2447 = vmatprep.subr.bf16.mxu0 %v2147
    %2448 = vmatpush1.bf16.msra.mxu0 %v2146
    %2449 = vmatprep.subr.bf16.mxu0 %v2143
    %2450 = vmatpush1.bf16.msra.mxu0 %v2142
    %2451 = vmatprep.subr.bf16.mxu0 %v2139
    %2452 = vmatpush1.bf16.msra.mxu0 %v2138
    %2453 = vmatprep.subr.bf16.mxu0 %v2135
    %2454 = vmatpush1.bf16.msra.mxu0 %v2134
    %2455 = vmatprep.subr.bf16.mxu0 %v2131
    %2456 = vmatpush1.bf16.msra.mxu0 %v2130
    %2457 = vmatprep.subr.bf16.mxu0 %v2127
    %2458 = vmatpush1.bf16.msra.mxu0 %v2126
    %2459 = vmatprep.subr.bf16.mxu0 0
    %2460 = vmatpush2.bf16.msra.mxu0 0
    %2461 = vmatprep.subr.bf16.mxu0 0
    %2462 = vmatpush2.bf16.msra.mxu0 0
    %2463 = vmatprep.subr.bf16.mxu0 0
    %2464 = vmatpush2.bf16.msra.mxu0 0
    %2465 = vmatprep.subr.bf16.mxu0 0
    %2466 = vmatpush2.bf16.msra.mxu0 0
    %2467 = vmatprep.subr.bf16.mxu0 0
    %2468 = vmatpush2.bf16.msra.mxu0 0
    %2469 = vmatprep.subr.bf16.mxu0 0
    %2470 = vmatpush2.bf16.msra.mxu0 0
    %2471 = vmatprep.subr.bf16.mxu0 0
    %2472 = vmatpush2.bf16.msra.mxu0 0
    %2473 = vmatprep.subr.bf16.mxu0 0
    %2474 = vmatpush2.bf16.msra.mxu0 0
    %2475 = vmatprep.mubr.bf16.mxu0 0
    %2476 = vmatmul.mubr.bf16.gmra.mxu0 %v2396
    %v2477 = vpop.f32.mrf.mxu0
    %v2478 = vadd.f32 0.0, %v2477
    %v2479 = vpop.f32.mrf.mxu0
    %v2480 = vadd.f32 0.0, %v2479
    %v2481 = vpop.f32.mrf.mxu0
    %v2482 = vpop.f32.mrf.mxu0
    %2483 = vdwg.mxu0
    %v2484 = vadd.f32 %v2398, %v2437
    %v2485 = vadd.f32 %v2399, %v2439
    %v2486 = vadd.f32 %v2400, %v2478
    %v2487 = vadd.f32 %v2401, %v2480
    %v2488 = vtanh.pop %v2484
    %v2489 = vtanh.pop %v2485
    %v2490 = vtanh.pop %v2486
    %v2491 = vtanh.pop %v2487
    %v2492 = vadd.f32 %v2488, 1.0
    %v2493 = vmul.f32 %v2492, 0.5
    %v2494 = vadd.f32 %v2489, 1.0
    %v2495 = vmul.f32 %v2494, 0.5
    %v2496 = vadd.f32 %v2491, 1.0
    %v2497 = vmul.f32 %v2496, 0.5
    %v2498 = vmul.f32 %v2495, %v2393
    %v2499 = vmul.f32 %v2493, %v2490
    %v2500 = vadd.f32 %v2498, %v2499
    %v2501 = vtanh.pop %v2500
    %v2502 = vmul.f32 %v2497, %v2501
    %v2503 = vpack.c.bf16 %v2502, %v2502
    %2504 = vst [vmem:[#allocation2 + $0x8] sm:$0xf] %v2503
    %v2505 = vld [vmem:[#allocation3 + $0x60] sm:$0xff]
    %v2506 = vld [vmem:[#allocation3 + $0x68] sm:$0xff]
    %v2507 = vld [vmem:[#allocation3 + $0x70] sm:$0xff]
    %v2508 = vld [vmem:[#allocation3 + $0x78] sm:$0xff]
    %2509 = vmatprep.subr.bf16.mxu0 %v2153
    %2510 = vmatpush1.bf16.msra.mxu0 %v2152
    %2511 = vmatprep.subr.bf16.mxu0 %v2149
    %2512 = vmatpush1.bf16.msra.mxu0 %v2148
    %2513 = vmatprep.subr.bf16.mxu0 %v2145
    %2514 = vmatpush1.bf16.msra.mxu0 %v2144
    %2515 = vmatprep.subr.bf16.mxu0 %v2141
    %2516 = vmatpush1.bf16.msra.mxu0 %v2140
    %2517 = vmatprep.subr.bf16.mxu0 %v2137
    %2518 = vmatpush1.bf16.msra.mxu0 %v2136
    %2519 = vmatprep.subr.bf16.mxu0 %v2133
    %2520 = vmatpush1.bf16.msra.mxu0 %v2132
    %2521 = vmatprep.subr.bf16.mxu0 %v2129
    %2522 = vmatpush1.bf16.msra.mxu0 %v2128
    %2523 = vmatprep.subr.bf16.mxu0 %v2125
    %2524 = vmatpush1.bf16.msra.mxu0 %v2124
    %2525 = vmatprep.subr.bf16.mxu0 0
    %2526 = vmatpush2.bf16.msra.mxu0 0
    %2527 = vmatprep.subr.bf16.mxu0 0
    %2528 = vmatpush2.bf16.msra.mxu0 0
    %2529 = vmatprep.subr.bf16.mxu0 0
    %2530 = vmatpush2.bf16.msra.mxu0 0
    %2531 = vmatprep.subr.bf16.mxu0 0
    %2532 = vmatpush2.bf16.msra.mxu0 0
    %2533 = vmatprep.subr.bf16.mxu0 0
    %2534 = vmatpush2.bf16.msra.mxu0 0
    %2535 = vmatprep.subr.bf16.mxu0 0
    %2536 = vmatpush2.bf16.msra.mxu0 0
    %2537 = vmatprep.subr.bf16.mxu0 0
    %2538 = vmatpush2.bf16.msra.mxu0 0
    %2539 = vmatprep.subr.bf16.mxu0 0
    %2540 = vmatpush2.bf16.msra.mxu0 0
    %2541 = vmatprep.mubr.bf16.mxu0 0
    %2542 = vmatmul.mubr.bf16.gmra.mxu0 %v2503
    %v2543 = vpop.f32.mrf.mxu0
    %v2544 = vadd.f32 0.0, %v2543
    %v2545 = vpop.f32.mrf.mxu0
    %v2546 = vadd.f32 0.0, %v2545
    %v2547 = vpop.f32.mrf.mxu0
    %v2548 = vpop.f32.mrf.mxu0
    %2549 = vdwg.mxu0
    %2550 = vmatprep.subr.bf16.mxu0 %v2155
    %2551 = vmatpush1.bf16.msra.mxu0 %v2154
    %2552 = vmatprep.subr.bf16.mxu0 %v2151
    %2553 = vmatpush1.bf16.msra.mxu0 %v2150
    %2554 = vmatprep.subr.bf16.mxu0 %v2147
    %2555 = vmatpush1.bf16.msra.mxu0 %v2146
    %2556 = vmatprep.subr.bf16.mxu0 %v2143
    %2557 = vmatpush1.bf16.msra.mxu0 %v2142
    %2558 = vmatprep.subr.bf16.mxu0 %v2139
    %2559 = vmatpush1.bf16.msra.mxu0 %v2138
    %2560 = vmatprep.subr.bf16.mxu0 %v2135
    %2561 = vmatpush1.bf16.msra.mxu0 %v2134
    %2562 = vmatprep.subr.bf16.mxu0 %v2131
    %2563 = vmatpush1.bf16.msra.mxu0 %v2130
    %2564 = vmatprep.subr.bf16.mxu0 %v2127
    %2565 = vmatpush1.bf16.msra.mxu0 %v2126
    %2566 = vmatprep.subr.bf16.mxu0 0
    %2567 = vmatpush2.bf16.msra.mxu0 0
    %2568 = vmatprep.subr.bf16.mxu0 0
    %2569 = vmatpush2.bf16.msra.mxu0 0
    %2570 = vmatprep.subr.bf16.mxu0 0
    %2571 = vmatpush2.bf16.msra.mxu0 0
    %2572 = vmatprep.subr.bf16.mxu0 0
    %2573 = vmatpush2.bf16.msra.mxu0 0
    %2574 = vmatprep.subr.bf16.mxu0 0
    %2575 = vmatpush2.bf16.msra.mxu0 0
    %2576 = vmatprep.subr.bf16.mxu0 0
    %2577 = vmatpush2.bf16.msra.mxu0 0
    %2578 = vmatprep.subr.bf16.mxu0 0
    %2579 = vmatpush2.bf16.msra.mxu0 0
    %2580 = vmatprep.subr.bf16.mxu0 0
    %2581 = vmatpush2.bf16.msra.mxu0 0
    %2582 = vmatprep.mubr.bf16.mxu0 0
    %2583 = vmatmul.mubr.bf16.gmra.mxu0 %v2503
    %v2584 = vpop.f32.mrf.mxu0
    %v2585 = vadd.f32 0.0, %v2584
    %v2586 = vpop.f32.mrf.mxu0
    %v2587 = vadd.f32 0.0, %v2586
    %v2588 = vpop.f32.mrf.mxu0
    %v2589 = vpop.f32.mrf.mxu0
    %2590 = vdwg.mxu0
    %v2591 = vadd.f32 %v2505, %v2544
    %v2592 = vadd.f32 %v2506, %v2546
    %v2593 = vadd.f32 %v2507, %v2585
    %v2594 = vadd.f32 %v2508, %v2587
    %v2595 = vtanh.pop %v2591
    %v2596 = vtanh.pop %v2592
    %v2597 = vtanh.pop %v2593
    %v2598 = vtanh.pop %v2594
    %v2599 = vadd.f32 %v2595, 1.0
    %v2600 = vmul.f32 %v2599, 0.5
    %v2601 = vadd.f32 %v2596, 1.0
    %v2602 = vmul.f32 %v2601, 0.5
    %v2603 = vadd.f32 %v2598, 1.0
    %v2604 = vmul.f32 %v2603, 0.5
    %v2605 = vmul.f32 %v2602, %v2500
    %v2606 = vmul.f32 %v2600, %v2597
    %v2607 = vadd.f32 %v2605, %v2606
    %v2608 = vtanh.pop %v2607
    %v2609 = vmul.f32 %v2604, %v2608
    %v2610 = vpack.c.bf16 %v2609, %v2609
    %2611 = vst [vmem:[#allocation2 + $0xc] sm:$0xf] %v2610
    %v2612 = vld [vmem:[#allocation3 + $0x80] sm:$0xff]
    %v2613 = vld [vmem:[#allocation3 + $0x88] sm:$0xff]
    %v2614 = vld [vmem:[#allocation3 + $0x90] sm:$0xff]
    %v2615 = vld [vmem:[#allocation3 + $0x98] sm:$0xff]
    %2616 = vmatprep.subr.bf16.mxu0 %v2153
    %2617 = vmatpush1.bf16.msra.mxu0 %v2152
    %2618 = vmatprep.subr.bf16.mxu0 %v2149
    %2619 = vmatpush1.bf16.msra.mxu0 %v2148
    %2620 = vmatprep.subr.bf16.mxu0 %v2145
    %2621 = vmatpush1.bf16.msra.mxu0 %v2144
    %2622 = vmatprep.subr.bf16.mxu0 %v2141
    %2623 = vmatpush1.bf16.msra.mxu0 %v2140
    %2624 = vmatprep.subr.bf16.mxu0 %v2137
    %2625 = vmatpush1.bf16.msra.mxu0 %v2136
    %2626 = vmatprep.subr.bf16.mxu0 %v2133
    %2627 = vmatpush1.bf16.msra.mxu0 %v2132
    %2628 = vmatprep.subr.bf16.mxu0 %v2129
    %2629 = vmatpush1.bf16.msra.mxu0 %v2128
    %2630 = vmatprep.subr.bf16.mxu0 %v2125
    %2631 = vmatpush1.bf16.msra.mxu0 %v2124
    %2632 = vmatprep.subr.bf16.mxu0 0
    %2633 = vmatpush2.bf16.msra.mxu0 0
    %2634 = vmatprep.subr.bf16.mxu0 0
    %2635 = vmatpush2.bf16.msra.mxu0 0
    %2636 = vmatprep.subr.bf16.mxu0 0
    %2637 = vmatpush2.bf16.msra.mxu0 0
    %2638 = vmatprep.subr.bf16.mxu0 0
    %2639 = vmatpush2.bf16.msra.mxu0 0
    %2640 = vmatprep.subr.bf16.mxu0 0
    %2641 = vmatpush2.bf16.msra.mxu0 0
    %2642 = vmatprep.subr.bf16.mxu0 0
    %2643 = vmatpush2.bf16.msra.mxu0 0
    %2644 = vmatprep.subr.bf16.mxu0 0
    %2645 = vmatpush2.bf16.msra.mxu0 0
    %2646 = vmatprep.subr.bf16.mxu0 0
    %2647 = vmatpush2.bf16.msra.mxu0 0
    %2648 = vmatprep.mubr.bf16.mxu0 0
    %2649 = vmatmul.mubr.bf16.gmra.mxu0 %v2610
    %v2650 = vpop.f32.mrf.mxu0
    %v2651 = vadd.f32 0.0, %v2650
    %v2652 = vpop.f32.mrf.mxu0
    %v2653 = vadd.f32 0.0, %v2652
    %v2654 = vpop.f32.mrf.mxu0
    %v2655 = vpop.f32.mrf.mxu0
    %2656 = vdwg.mxu0
    %2657 = vmatprep.subr.bf16.mxu0 %v2155
    %2658 = vmatpush1.bf16.msra.mxu0 %v2154
    %2659 = vmatprep.subr.bf16.mxu0 %v2151
    %2660 = vmatpush1.bf16.msra.mxu0 %v2150
    %2661 = vmatprep.subr.bf16.mxu0 %v2147
    %2662 = vmatpush1.bf16.msra.mxu0 %v2146
    %2663 = vmatprep.subr.bf16.mxu0 %v2143
    %2664 = vmatpush1.bf16.msra.mxu0 %v2142
    %2665 = vmatprep.subr.bf16.mxu0 %v2139
    %2666 = vmatpush1.bf16.msra.mxu0 %v2138
    %2667 = vmatprep.subr.bf16.mxu0 %v2135
    %2668 = vmatpush1.bf16.msra.mxu0 %v2134
    %2669 = vmatprep.subr.bf16.mxu0 %v2131
    %2670 = vmatpush1.bf16.msra.mxu0 %v2130
    %2671 = vmatprep.subr.bf16.mxu0 %v2127
    %2672 = vmatpush1.bf16.msra.mxu0 %v2126
    %2673 = vmatprep.subr.bf16.mxu0 0
    %2674 = vmatpush2.bf16.msra.mxu0 0
    %2675 = vmatprep.subr.bf16.mxu0 0
    %2676 = vmatpush2.bf16.msra.mxu0 0
    %2677 = vmatprep.subr.bf16.mxu0 0
    %2678 = vmatpush2.bf16.msra.mxu0 0
    %2679 = vmatprep.subr.bf16.mxu0 0
    %2680 = vmatpush2.bf16.msra.mxu0 0
    %2681 = vmatprep.subr.bf16.mxu0 0
    %2682 = vmatpush2.bf16.msra.mxu0 0
    %2683 = vmatprep.subr.bf16.mxu0 0
    %2684 = vmatpush2.bf16.msra.mxu0 0
    %2685 = vmatprep.subr.bf16.mxu0 0
    %2686 = vmatpush2.bf16.msra.mxu0 0
    %2687 = vmatprep.subr.bf16.mxu0 0
    %2688 = vmatpush2.bf16.msra.mxu0 0
    %2689 = vmatprep.mubr.bf16.mxu0 0
    %2690 = vmatmul.mubr.bf16.gmra.mxu0 %v2610
    %v2691 = vpop.f32.mrf.mxu0
    %v2692 = vadd.f32 0.0, %v2691
    %v2693 = vpop.f32.mrf.mxu0
    %v2694 = vadd.f32 0.0, %v2693
    %v2695 = vpop.f32.mrf.mxu0
    %v2696 = vpop.f32.mrf.mxu0
    %2697 = vdwg.mxu0
    %v2698 = vadd.f32 %v2612, %v2651
    %v2699 = vadd.f32 %v2613, %v2653
    %v2700 = vadd.f32 %v2614, %v2692
    %v2701 = vadd.f32 %v2615, %v2694
    %v2702 = vtanh.pop %v2698
    %v2703 = vtanh.pop %v2699
    %v2704 = vtanh.pop %v2700
    %v2705 = vtanh.pop %v2701
    %v2706 = vadd.f32 %v2702, 1.0
    %v2707 = vmul.f32 %v2706, 0.5
    %v2708 = vadd.f32 %v2703, 1.0
    %v2709 = vmul.f32 %v2708, 0.5
    %v2710 = vadd.f32 %v2705, 1.0
    %v2711 = vmul.f32 %v2710, 0.5
    %v2712 = vmul.f32 %v2709, %v2607
    %v2713 = vmul.f32 %v2707, %v2704
    %v2714 = vadd.f32 %v2712, %v2713
    %v2715 = vtanh.pop %v2714
    %v2716 = vmul.f32 %v2711, %v2715
    %v2717 = vpack.c.bf16 %v2716, %v2716
    %2718 = vst [vmem:[#allocation2 + $0x10] sm:$0xf] %v2717
    %v2719 = vld [vmem:[#allocation3 + $0xa0] sm:$0xff]
    %v2720 = vld [vmem:[#allocation3 + $0xa8] sm:$0xff]
    %v2721 = vld [vmem:[#allocation3 + $0xb0] sm:$0xff]
    %v2722 = vld [vmem:[#allocation3 + $0xb8] sm:$0xff]
    %2723 = vmatprep.subr.bf16.mxu0 %v2153
    %2724 = vmatpush1.bf16.msra.mxu0 %v2152
    %2725 = vmatprep.subr.bf16.mxu0 %v2149
    %2726 = vmatpush1.bf16.msra.mxu0 %v2148
    %2727 = vmatprep.subr.bf16.mxu0 %v2145
    %2728 = vmatpush1.bf16.msra.mxu0 %v2144
    %2729 = vmatprep.subr.bf16.mxu0 %v2141
    %2730 = vmatpush1.bf16.msra.mxu0 %v2140
    %2731 = vmatprep.subr.bf16.mxu0 %v2137
    %2732 = vmatpush1.bf16.msra.mxu0 %v2136
    %2733 = vmatprep.subr.bf16.mxu0 %v2133
    %2734 = vmatpush1.bf16.msra.mxu0 %v2132
    %2735 = vmatprep.subr.bf16.mxu0 %v2129
    %2736 = vmatpush1.bf16.msra.mxu0 %v2128
    %2737 = vmatprep.subr.bf16.mxu0 %v2125
    %2738 = vmatpush1.bf16.msra.mxu0 %v2124
    %2739 = vmatprep.subr.bf16.mxu0 0
    %2740 = vmatpush2.bf16.msra.mxu0 0
    %2741 = vmatprep.subr.bf16.mxu0 0
    %2742 = vmatpush2.bf16.msra.mxu0 0
    %2743 = vmatprep.subr.bf16.mxu0 0
    %2744 = vmatpush2.bf16.msra.mxu0 0
    %2745 = vmatprep.subr.bf16.mxu0 0
    %2746 = vmatpush2.bf16.msra.mxu0 0
    %2747 = vmatprep.subr.bf16.mxu0 0
    %2748 = vmatpush2.bf16.msra.mxu0 0
    %2749 = vmatprep.subr.bf16.mxu0 0
    %2750 = vmatpush2.bf16.msra.mxu0 0
    %2751 = vmatprep.subr.bf16.mxu0 0
    %2752 = vmatpush2.bf16.msra.mxu0 0
    %2753 = vmatprep.subr.bf16.mxu0 0
    %2754 = vmatpush2.bf16.msra.mxu0 0
    %2755 = vmatprep.mubr.bf16.mxu0 0
    %2756 = vmatmul.mubr.bf16.gmra.mxu0 %v2717
    %v2757 = vpop.f32.mrf.mxu0
    %v2758 = vadd.f32 0.0, %v2757
    %v2759 = vpop.f32.mrf.mxu0
    %v2760 = vadd.f32 0.0, %v2759
    %v2761 = vpop.f32.mrf.mxu0
    %v2762 = vpop.f32.mrf.mxu0
    %2763 = vdwg.mxu0
    %2764 = vmatprep.subr.bf16.mxu0 %v2155
    %2765 = vmatpush1.bf16.msra.mxu0 %v2154
    %2766 = vmatprep.subr.bf16.mxu0 %v2151
    %2767 = vmatpush1.bf16.msra.mxu0 %v2150
    %2768 = vmatprep.subr.bf16.mxu0 %v2147
    %2769 = vmatpush1.bf16.msra.mxu0 %v2146
    %2770 = vmatprep.subr.bf16.mxu0 %v2143
    %2771 = vmatpush1.bf16.msra.mxu0 %v2142
    %2772 = vmatprep.subr.bf16.mxu0 %v2139
    %2773 = vmatpush1.bf16.msra.mxu0 %v2138
    %2774 = vmatprep.subr.bf16.mxu0 %v2135
    %2775 = vmatpush1.bf16.msra.mxu0 %v2134
    %2776 = vmatprep.subr.bf16.mxu0 %v2131
    %2777 = vmatpush1.bf16.msra.mxu0 %v2130
    %2778 = vmatprep.subr.bf16.mxu0 %v2127
    %2779 = vmatpush1.bf16.msra.mxu0 %v2126
    %2780 = vmatprep.subr.bf16.mxu0 0
    %2781 = vmatpush2.bf16.msra.mxu0 0
    %2782 = vmatprep.subr.bf16.mxu0 0
    %2783 = vmatpush2.bf16.msra.mxu0 0
    %2784 = vmatprep.subr.bf16.mxu0 0
    %2785 = vmatpush2.bf16.msra.mxu0 0
    %2786 = vmatprep.subr.bf16.mxu0 0
    %2787 = vmatpush2.bf16.msra.mxu0 0
    %2788 = vmatprep.subr.bf16.mxu0 0
    %2789 = vmatpush2.bf16.msra.mxu0 0
    %2790 = vmatprep.subr.bf16.mxu0 0
    %2791 = vmatpush2.bf16.msra.mxu0 0
    %2792 = vmatprep.subr.bf16.mxu0 0
    %2793 = vmatpush2.bf16.msra.mxu0 0
    %2794 = vmatprep.subr.bf16.mxu0 0
    %2795 = vmatpush2.bf16.msra.mxu0 0
    %2796 = vmatprep.mubr.bf16.mxu0 0
    %2797 = vmatmul.mubr.bf16.gmra.mxu0 %v2717
    %v2798 = vpop.f32.mrf.mxu0
    %v2799 = vadd.f32 0.0, %v2798
    %v2800 = vpop.f32.mrf.mxu0
    %v2801 = vadd.f32 0.0, %v2800
    %v2802 = vpop.f32.mrf.mxu0
    %v2803 = vpop.f32.mrf.mxu0
    %2804 = vdwg.mxu0
    %v2805 = vadd.f32 %v2719, %v2758
    %v2806 = vadd.f32 %v2720, %v2760
    %v2807 = vadd.f32 %v2721, %v2799
    %v2808 = vadd.f32 %v2722, %v2801
    %v2809 = vtanh.pop %v2805
    %v2810 = vtanh.pop %v2806
    %v2811 = vtanh.pop %v2807
    %v2812 = vtanh.pop %v2808
    %v2813 = vadd.f32 %v2809, 1.0
    %v2814 = vmul.f32 %v2813, 0.5
    %v2815 = vadd.f32 %v2810, 1.0
    %v2816 = vmul.f32 %v2815, 0.5
    %v2817 = vadd.f32 %v2812, 1.0
    %v2818 = vmul.f32 %v2817, 0.5
    %v2819 = vmul.f32 %v2816, %v2714
    %v2820 = vmul.f32 %v2814, %v2811
    %v2821 = vadd.f32 %v2819, %v2820
    %v2822 = vtanh.pop %v2821
    %v2823 = vmul.f32 %v2818, %v2822
    %v2824 = vpack.c.bf16 %v2823, %v2823
    %2825 = vst [vmem:[#allocation2 + $0x14] sm:$0xf] %v2824
    %v2826 = vld [vmem:[#allocation3 + $0xc0] sm:$0xff]
    %v2827 = vld [vmem:[#allocation3 + $0xc8] sm:$0xff]
    %v2828 = vld [vmem:[#allocation3 + $0xd0] sm:$0xff]
    %v2829 = vld [vmem:[#allocation3 + $0xd8] sm:$0xff]
    %2830 = vmatprep.subr.bf16.mxu0 %v2153
    %2831 = vmatpush1.bf16.msra.mxu0 %v2152
    %2832 = vmatprep.subr.bf16.mxu0 %v2149
    %2833 = vmatpush1.bf16.msra.mxu0 %v2148
    %2834 = vmatprep.subr.bf16.mxu0 %v2145
    %2835 = vmatpush1.bf16.msra.mxu0 %v2144
    %2836 = vmatprep.subr.bf16.mxu0 %v2141
    %2837 = vmatpush1.bf16.msra.mxu0 %v2140
    %2838 = vmatprep.subr.bf16.mxu0 %v2137
    %2839 = vmatpush1.bf16.msra.mxu0 %v2136
    %2840 = vmatprep.subr.bf16.mxu0 %v2133
    %2841 = vmatpush1.bf16.msra.mxu0 %v2132
    %2842 = vmatprep.subr.bf16.mxu0 %v2129
    %2843 = vmatpush1.bf16.msra.mxu0 %v2128
    %2844 = vmatprep.subr.bf16.mxu0 %v2125
    %2845 = vmatpush1.bf16.msra.mxu0 %v2124
    %2846 = vmatprep.subr.bf16.mxu0 0
    %2847 = vmatpush2.bf16.msra.mxu0 0
    %2848 = vmatprep.subr.bf16.mxu0 0
    %2849 = vmatpush2.bf16.msra.mxu0 0
    %2850 = vmatprep.subr.bf16.mxu0 0
    %2851 = vmatpush2.bf16.msra.mxu0 0
    %2852 = vmatprep.subr.bf16.mxu0 0
    %2853 = vmatpush2.bf16.msra.mxu0 0
    %2854 = vmatprep.subr.bf16.mxu0 0
    %2855 = vmatpush2.bf16.msra.mxu0 0
    %2856 = vmatprep.subr.bf16.mxu0 0
    %2857 = vmatpush2.bf16.msra.mxu0 0
    %2858 = vmatprep.subr.bf16.mxu0 0
    %2859 = vmatpush2.bf16.msra.mxu0 0
    %2860 = vmatprep.subr.bf16.mxu0 0
    %2861 = vmatpush2.bf16.msra.mxu0 0
    %2862 = vmatprep.mubr.bf16.mxu0 0
    %2863 = vmatmul.mubr.bf16.gmra.mxu0 %v2824
    %v2864 = vpop.f32.mrf.mxu0
    %v2865 = vadd.f32 0.0, %v2864
    %v2866 = vpop.f32.mrf.mxu0
    %v2867 = vadd.f32 0.0, %v2866
    %v2868 = vpop.f32.mrf.mxu0
    %v2869 = vpop.f32.mrf.mxu0
    %2870 = vdwg.mxu0
    %2871 = vmatprep.subr.bf16.mxu0 %v2155
    %2872 = vmatpush1.bf16.msra.mxu0 %v2154
    %2873 = vmatprep.subr.bf16.mxu0 %v2151
    %2874 = vmatpush1.bf16.msra.mxu0 %v2150
    %2875 = vmatprep.subr.bf16.mxu0 %v2147
    %2876 = vmatpush1.bf16.msra.mxu0 %v2146
    %2877 = vmatprep.subr.bf16.mxu0 %v2143
    %2878 = vmatpush1.bf16.msra.mxu0 %v2142
    %2879 = vmatprep.subr.bf16.mxu0 %v2139
    %2880 = vmatpush1.bf16.msra.mxu0 %v2138
    %2881 = vmatprep.subr.bf16.mxu0 %v2135
    %2882 = vmatpush1.bf16.msra.mxu0 %v2134
    %2883 = vmatprep.subr.bf16.mxu0 %v2131
    %2884 = vmatpush1.bf16.msra.mxu0 %v2130
    %2885 = vmatprep.subr.bf16.mxu0 %v2127
    %2886 = vmatpush1.bf16.msra.mxu0 %v2126
    %2887 = vmatprep.subr.bf16.mxu0 0
    %2888 = vmatpush2.bf16.msra.mxu0 0
    %2889 = vmatprep.subr.bf16.mxu0 0
    %2890 = vmatpush2.bf16.msra.mxu0 0
    %2891 = vmatprep.subr.bf16.mxu0 0
    %2892 = vmatpush2.bf16.msra.mxu0 0
    %2893 = vmatprep.subr.bf16.mxu0 0
    %2894 = vmatpush2.bf16.msra.mxu0 0
    %2895 = vmatprep.subr.bf16.mxu0 0
    %2896 = vmatpush2.bf16.msra.mxu0 0
    %2897 = vmatprep.subr.bf16.mxu0 0
    %2898 = vmatpush2.bf16.msra.mxu0 0
    %2899 = vmatprep.subr.bf16.mxu0 0
    %2900 = vmatpush2.bf16.msra.mxu0 0
    %2901 = vmatprep.subr.bf16.mxu0 0
    %2902 = vmatpush2.bf16.msra.mxu0 0
    %2903 = vmatprep.mubr.bf16.mxu0 0
    %2904 = vmatmul.mubr.bf16.gmra.mxu0 %v2824
    %v2905 = vpop.f32.mrf.mxu0
    %v2906 = vadd.f32 0.0, %v2905
    %v2907 = vpop.f32.mrf.mxu0
    %v2908 = vadd.f32 0.0, %v2907
    %v2909 = vpop.f32.mrf.mxu0
    %v2910 = vpop.f32.mrf.mxu0
    %2911 = vdwg.mxu0
    %v2912 = vadd.f32 %v2826, %v2865
    %v2913 = vadd.f32 %v2827, %v2867
    %v2914 = vadd.f32 %v2828, %v2906
    %v2915 = vadd.f32 %v2829, %v2908
    %v2916 = vtanh.pop %v2912
    %v2917 = vtanh.pop %v2913
    %v2918 = vtanh.pop %v2914
    %v2919 = vtanh.pop %v2915
    %v2920 = vadd.f32 %v2916, 1.0
    %v2921 = vmul.f32 %v2920, 0.5
    %v2922 = vadd.f32 %v2917, 1.0
    %v2923 = vmul.f32 %v2922, 0.5
    %v2924 = vadd.f32 %v2919, 1.0
    %v2925 = vmul.f32 %v2924, 0.5
    %v2926 = vmul.f32 %v2923, %v2821
    %v2927 = vmul.f32 %v2921, %v2918
    %v2928 = vadd.f32 %v2926, %v2927
    %v2929 = vtanh.pop %v2928
    %v2930 = vmul.f32 %v2925, %v2929
    %v2931 = vpack.c.bf16 %v2930, %v2930
    %2932 = vst [vmem:[#allocation2 + $0x18] sm:$0xf] %v2931
    %v2933 = vld [vmem:[#allocation3 + $0xe0] sm:$0xff]
    %v2934 = vld [vmem:[#allocation3 + $0xe8] sm:$0xff]
    %v2935 = vld [vmem:[#allocation3 + $0xf0] sm:$0xff]
    %v2936 = vld [vmem:[#allocation3 + $0xf8] sm:$0xff]
    %2937 = vmatprep.subr.bf16.mxu0 %v2153
    %2938 = vmatpush1.bf16.msra.mxu0 %v2152
    %2939 = vmatprep.subr.bf16.mxu0 %v2149
    %2940 = vmatpush1.bf16.msra.mxu0 %v2148
    %2941 = vmatprep.subr.bf16.mxu0 %v2145
    %2942 = vmatpush1.bf16.msra.mxu0 %v2144
    %2943 = vmatprep.subr.bf16.mxu0 %v2141
    %2944 = vmatpush1.bf16.msra.mxu0 %v2140
    %2945 = vmatprep.subr.bf16.mxu0 %v2137
    %2946 = vmatpush1.bf16.msra.mxu0 %v2136
    %2947 = vmatprep.subr.bf16.mxu0 %v2133
    %2948 = vmatpush1.bf16.msra.mxu0 %v2132
    %2949 = vmatprep.subr.bf16.mxu0 %v2129
    %2950 = vmatpush1.bf16.msra.mxu0 %v2128
    %2951 = vmatprep.subr.bf16.mxu0 %v2125
    %2952 = vmatpush1.bf16.msra.mxu0 %v2124
    %2953 = vmatprep.subr.bf16.mxu0 0
    %2954 = vmatpush2.bf16.msra.mxu0 0
    %2955 = vmatprep.subr.bf16.mxu0 0
    %2956 = vmatpush2.bf16.msra.mxu0 0
    %2957 = vmatprep.subr.bf16.mxu0 0
    %2958 = vmatpush2.bf16.msra.mxu0 0
    %2959 = vmatprep.subr.bf16.mxu0 0
    %2960 = vmatpush2.bf16.msra.mxu0 0
    %2961 = vmatprep.subr.bf16.mxu0 0
    %2962 = vmatpush2.bf16.msra.mxu0 0
    %2963 = vmatprep.subr.bf16.mxu0 0
    %2964 = vmatpush2.bf16.msra.mxu0 0
    %2965 = vmatprep.subr.bf16.mxu0 0
    %2966 = vmatpush2.bf16.msra.mxu0 0
    %2967 = vmatprep.subr.bf16.mxu0 0
    %2968 = vmatpush2.bf16.msra.mxu0 0
    %2969 = vmatprep.mubr.bf16.mxu0 0
    %2970 = vmatmul.mubr.bf16.gmra.mxu0 %v2931
    %v2971 = vpop.f32.mrf.mxu0
    %v2972 = vadd.f32 0.0, %v2971
    %v2973 = vpop.f32.mrf.mxu0
    %v2974 = vadd.f32 0.0, %v2973
    %v2975 = vpop.f32.mrf.mxu0
    %v2976 = vpop.f32.mrf.mxu0
    %2977 = vdwg.mxu0
    %2978 = vmatprep.subr.bf16.mxu0 %v2155
    %2979 = vmatpush1.bf16.msra.mxu0 %v2154
    %2980 = vmatprep.subr.bf16.mxu0 %v2151
    %2981 = vmatpush1.bf16.msra.mxu0 %v2150
    %2982 = vmatprep.subr.bf16.mxu0 %v2147
    %2983 = vmatpush1.bf16.msra.mxu0 %v2146
    %2984 = vmatprep.subr.bf16.mxu0 %v2143
    %2985 = vmatpush1.bf16.msra.mxu0 %v2142
    %2986 = vmatprep.subr.bf16.mxu0 %v2139
    %2987 = vmatpush1.bf16.msra.mxu0 %v2138
    %2988 = vmatprep.subr.bf16.mxu0 %v2135
    %2989 = vmatpush1.bf16.msra.mxu0 %v2134
    %2990 = vmatprep.subr.bf16.mxu0 %v2131
    %2991 = vmatpush1.bf16.msra.mxu0 %v2130
    %2992 = vmatprep.subr.bf16.mxu0 %v2127
    %2993 = vmatpush1.bf16.msra.mxu0 %v2126
    %2994 = vmatprep.subr.bf16.mxu0 0
    %2995 = vmatpush2.bf16.msra.mxu0 0
    %2996 = vmatprep.subr.bf16.mxu0 0
    %2997 = vmatpush2.bf16.msra.mxu0 0
    %2998 = vmatprep.subr.bf16.mxu0 0
    %2999 = vmatpush2.bf16.msra.mxu0 0
    %3000 = vmatprep.subr.bf16.mxu0 0
    %3001 = vmatpush2.bf16.msra.mxu0 0
    %3002 = vmatprep.subr.bf16.mxu0 0
    %3003 = vmatpush2.bf16.msra.mxu0 0
    %3004 = vmatprep.subr.bf16.mxu0 0
    %3005 = vmatpush2.bf16.msra.mxu0 0
    %3006 = vmatprep.subr.bf16.mxu0 0
    %3007 = vmatpush2.bf16.msra.mxu0 0
    %3008 = vmatprep.subr.bf16.mxu0 0
    %3009 = vmatpush2.bf16.msra.mxu0 0
    %3010 = vmatprep.mubr.bf16.mxu0 0
    %3011 = vmatmul.mubr.bf16.gmra.mxu0 %v2931
    %v3012 = vpop.f32.mrf.mxu0
    %v3013 = vadd.f32 0.0, %v3012
    %v3014 = vpop.f32.mrf.mxu0
    %v3015 = vadd.f32 0.0, %v3014
    %v3016 = vpop.f32.mrf.mxu0
    %v3017 = vpop.f32.mrf.mxu0
    %3018 = vdwg.mxu0
    %v3019 = vadd.f32 %v2933, %v2972
    %v3020 = vadd.f32 %v2934, %v2974
    %v3021 = vadd.f32 %v2935, %v3013
    %v3022 = vadd.f32 %v2936, %v3015
    %v3023 = vtanh.pop %v3019
    %v3024 = vtanh.pop %v3020
    %v3025 = vtanh.pop %v3021
    %v3026 = vtanh.pop %v3022
    %v3027 = vadd.f32 %v3023, 1.0
    %v3028 = vmul.f32 %v3027, 0.5
    %v3029 = vadd.f32 %v3024, 1.0
    %v3030 = vmul.f32 %v3029, 0.5
    %v3031 = vadd.f32 %v3026, 1.0
    %v3032 = vmul.f32 %v3031, 0.5
    %v3033 = vmul.f32 %v3030, %v2928
    %v3034 = vmul.f32 %v3028, %v3025
    %v3035 = vadd.f32 %v3033, %v3034
    %v3036 = vtanh.pop %v3035
    %v3037 = vmul.f32 %v3032, %v3036
    %v3038 = vpack.c.bf16 %v3037, %v3037
    %3039 = vst [vmem:[#allocation2 + $0x1c] sm:$0xf] %v3038
    %v3040 = vld [vmem:[#allocation2] sm:$0xf]
    %v3041 = vld [vmem:[#allocation2 + $0x4] sm:$0xf]
    %v3042 = vld [vmem:[#allocation2 + $0x8] sm:$0xf]
    %v3043 = vld [vmem:[#allocation2 + $0xc] sm:$0xf]
    %v3044 = vld [vmem:[#allocation2 + $0x10] sm:$0xf]
    %v3045 = vld [vmem:[#allocation2 + $0x14] sm:$0xf]
    %v3046 = vld [vmem:[#allocation2 + $0x18] sm:$0xf]
    %v3047 = vld [vmem:[#allocation2 + $0x1c] sm:$0xf]
    %v3048 = vld [vmem:[#allocation12] sm:$0xf]
    %v3049 = vld [vmem:[#allocation12 + $0x4] sm:$0xf]
    %v3050 = vld [vmem:[#allocation12 + $0x8] sm:$0xf]
    %v3051 = vld [vmem:[#allocation12 + $0xc] sm:$0xf]
    %v3052 = vld [vmem:[#allocation12 + $0x10] sm:$0xf]
    %v3053 = vld [vmem:[#allocation12 + $0x14] sm:$0xf]
    %v3054 = vld [vmem:[#allocation12 + $0x18] sm:$0xf]
    %v3055 = vld [vmem:[#allocation12 + $0x1c] sm:$0xf]
    %v3056 = vld [vmem:[#allocation12 + $0x20] sm:$0xf]
    %v3057 = vld [vmem:[#allocation12 + $0x24] sm:$0xf]
    %v3058 = vld [vmem:[#allocation12 + $0x28] sm:$0xf]
    %v3059 = vld [vmem:[#allocation12 + $0x2c] sm:$0xf]
    %v3060 = vld [vmem:[#allocation12 + $0x30] sm:$0xf]
    %v3061 = vld [vmem:[#allocation12 + $0x34] sm:$0xf]
    %v3062 = vld [vmem:[#allocation12 + $0x38] sm:$0xf]
    %v3063 = vld [vmem:[#allocation12 + $0x3c] sm:$0xf]
    %v3064 = vld [vmem:[%s5] sm:$0x1]
    %v3066 = vlaneseq
    %v3067 = vshrl.u32 %v3066, 7
    %v3068 = vsub.s32 0, %v3067
    %v3069 = vrot.slane %v3064, %v3068
    %v3079 = vunpack.c.l.b16 %v3040
    %v3080 = vunpack.c.l.b16 %v3041
    %v3081 = vunpack.c.l.b16 %v3042
    %v3082 = vunpack.c.l.b16 %v3043
    %v3083 = vunpack.c.l.b16 %v3044
    %v3084 = vunpack.c.l.b16 %v3045
    %v3085 = vunpack.c.l.b16 %v3046
    %v3086 = vunpack.c.l.b16 %v3047
    %v3087 = vpack.c.b16 %v3080, %v3079
    %v3088 = vpack.c.b16 %v3082, %v3081
    %v3089 = vpack.c.b16 %v3084, %v3083
    %v3090 = vpack.c.b16 %v3086, %v3085
    %v3111 = vunpack.c.l.b16 %v3048
    %v3112 = vunpack.c.l.b16 %v3049
    %v3113 = vunpack.c.l.b16 %v3050
    %v3114 = vunpack.c.l.b16 %v3051
    %v3115 = vunpack.c.l.b16 %v3052
    %v3116 = vunpack.c.l.b16 %v3053
    %v3117 = vunpack.c.l.b16 %v3054
    %v3118 = vunpack.c.l.b16 %v3055
    %v3119 = vunpack.c.l.b16 %v3056
    %v3120 = vunpack.c.l.b16 %v3057
    %v3121 = vunpack.c.l.b16 %v3058
    %v3122 = vunpack.c.l.b16 %v3059
    %v3123 = vunpack.c.l.b16 %v3060
    %v3124 = vunpack.c.l.b16 %v3061
    %v3125 = vunpack.c.l.b16 %v3062
    %v3126 = vunpack.c.l.b16 %v3063
    %v3127 = vpack.c.b16 %v3112, %v3111
    %v3128 = vpack.c.b16 %v3114, %v3113
    %v3129 = vpack.c.b16 %v3116, %v3115
    %v3130 = vpack.c.b16 %v3118, %v3117
    %v3131 = vpack.c.b16 %v3120, %v3119
    %v3132 = vpack.c.b16 %v3122, %v3121
    %v3133 = vpack.c.b16 %v3124, %v3123
    %v3134 = vpack.c.b16 %v3126, %v3125
    %3143 = vmatprep.subr.bf16.mxu0 0
    %3144 = vmatpush1.bf16.msra.mxu0 %v3134
    %3145 = vmatprep.subr.bf16.mxu0 0
    %3146 = vmatpush1.bf16.msra.mxu0 %v3133
    %3147 = vmatprep.subr.bf16.mxu0 0
    %3148 = vmatpush1.bf16.msra.mxu0 %v3132
    %3149 = vmatprep.subr.bf16.mxu0 0
    %3150 = vmatpush1.bf16.msra.mxu0 %v3131
    %3151 = vmatprep.subr.bf16.mxu0 0
    %3152 = vmatpush1.bf16.msra.mxu0 %v3130
    %3153 = vmatprep.subr.bf16.mxu0 0
    %3154 = vmatpush1.bf16.msra.mxu0 %v3129
    %3155 = vmatprep.subr.bf16.mxu0 0
    %3156 = vmatpush1.bf16.msra.mxu0 %v3128
    %3157 = vmatprep.subr.bf16.mxu0 0
    %3158 = vmatpush1.bf16.msra.mxu0 %v3127
    %3159 = vmatprep.subr.bf16.mxu0 0
    %3160 = vmatpush2.bf16.msra.mxu0 0
    %3161 = vmatprep.subr.bf16.mxu0 0
    %3162 = vmatpush2.bf16.msra.mxu0 0
    %3163 = vmatprep.subr.bf16.mxu0 0
    %3164 = vmatpush2.bf16.msra.mxu0 0
    %3165 = vmatprep.subr.bf16.mxu0 0
    %3166 = vmatpush2.bf16.msra.mxu0 0
    %3167 = vmatprep.subr.bf16.mxu0 0
    %3168 = vmatpush2.bf16.msra.mxu0 0
    %3169 = vmatprep.subr.bf16.mxu0 0
    %3170 = vmatpush2.bf16.msra.mxu0 0
    %3171 = vmatprep.subr.bf16.mxu0 0
    %3172 = vmatpush2.bf16.msra.mxu0 0
    %3173 = vmatprep.subr.bf16.mxu0 0
    %3174 = vmatpush2.bf16.msra.mxu0 0
    %3175 = vmatprep.mubr.bf16.mxu0 0
    %3176 = vmatmul.mubr.bf16.gmra.mxu0 %v3087
    %v3177 = vpop.f32.mrf.mxu0
    %v3178 = vadd.f32 %v3069, %v3177
    %v3179 = vpop.f32.mrf.mxu0
    %v3180 = vpop.f32.mrf.mxu0
    %v3181 = vadd.f32 %v3069, %v3180
    %v3182 = vpop.f32.mrf.mxu0
    %3183 = vmatprep.mubr.bf16.mxu0 0
    %3184 = vmatmul.mubr.bf16.gmra.mxu0 %v3088
    %v3185 = vpop.f32.mrf.mxu0
    %v3186 = vadd.f32 %v3069, %v3185
    %v3187 = vpop.f32.mrf.mxu0
    %v3188 = vpop.f32.mrf.mxu0
    %v3189 = vadd.f32 %v3069, %v3188
    %v3190 = vpop.f32.mrf.mxu0
    %3191 = vmatprep.mubr.bf16.mxu0 0
    %3192 = vmatmul.mubr.bf16.gmra.mxu0 %v3089
    %v3193 = vpop.f32.mrf.mxu0
    %v3194 = vadd.f32 %v3069, %v3193
    %v3195 = vpop.f32.mrf.mxu0
    %v3196 = vpop.f32.mrf.mxu0
    %v3197 = vadd.f32 %v3069, %v3196
    %v3198 = vpop.f32.mrf.mxu0
    %3199 = vmatprep.mubr.bf16.mxu0 0
    %3200 = vmatmul.mubr.bf16.gmra.mxu0 %v3090
    %v3201 = vpop.f32.mrf.mxu0
    %v3202 = vadd.f32 %v3069, %v3201
    %v3203 = vpop.f32.mrf.mxu0
    %v3204 = vpop.f32.mrf.mxu0
    %v3205 = vadd.f32 %v3069, %v3204
    %v3206 = vpop.f32.mrf.mxu0
    %3207 = vdwg.mxu0
    %v3208 = vmul.f32 %v3178, 0.5
    %v3209 = vmul.f32 %v3181, 0.5
    %v3210 = vmul.f32 %v3186, 0.5
    %v3211 = vmul.f32 %v3189, 0.5
    %v3212 = vmul.f32 %v3194, 0.5
    %v3213 = vmul.f32 %v3197, 0.5
    %v3214 = vmul.f32 %v3202, 0.5
    %v3215 = vmul.f32 %v3205, 0.5
    %v3216 = vtanh.pop %v3208
    %v3217 = vtanh.pop %v3209
    %v3218 = vtanh.pop %v3210
    %v3219 = vtanh.pop %v3211
    %v3220 = vtanh.pop %v3212
    %v3221 = vtanh.pop %v3213
    %v3222 = vtanh.pop %v3214
    %v3223 = vtanh.pop %v3215
    %v3224 = vadd.f32 %v3216, 1.0
    %v3225 = vadd.f32 %v3217, 1.0
    %v3226 = vadd.f32 %v3218, 1.0
    %v3227 = vadd.f32 %v3219, 1.0
    %v3228 = vadd.f32 %v3220, 1.0
    %v3229 = vadd.f32 %v3221, 1.0
    %v3230 = vadd.f32 %v3222, 1.0
    %v3231 = vadd.f32 %v3223, 1.0
    %v3232 = vmul.f32 %v3224, 0.5
    %v3233 = vmul.f32 %v3225, 0.5
    %v3234 = vmul.f32 %v3226, 0.5
    %v3235 = vmul.f32 %v3227, 0.5
    %v3236 = vmul.f32 %v3228, 0.5
    %v3237 = vmul.f32 %v3229, 0.5
    %v3238 = vmul.f32 %v3230, 0.5
    %v3239 = vmul.f32 %v3231, 0.5
    %3240 = vst [vmem:[#allocation13] sm:$0xff] %v3232
    %3241 = vst [vmem:[#allocation13 + $0x8] sm:$0xff] %v3233
    %3242 = vst [vmem:[#allocation13 + $0x10] sm:$0xff] %v3234
    %3243 = vst [vmem:[#allocation13 + $0x18] sm:$0xff] %v3235
    %3244 = vst [vmem:[#allocation13 + $0x20] sm:$0xff] %v3236
    %3245 = vst [vmem:[#allocation13 + $0x28] sm:$0xff] %v3237
    %3246 = vst [vmem:[#allocation13 + $0x30] sm:$0xff] %v3238
    %3247 = vst [vmem:[#allocation13 + $0x38] sm:$0xff] %v3239
    // Predicated region
    $region46: #{tpu_custom_call.1} parent=1 // pred_check
      _
    $region47: #{tpu_custom_call.1} parent=1 // pred_check_branch
      %3249 = sbr.rel (0) target = $region49
    $region48: #{tpu_custom_call.1} parent=1 // pred_region
      %s3251 = ssub.s32 1024, 1024
      %3252 = vsyncadd [#allocation6], %s3251
      %s3253 = sshll.u32 [#allocation13], 4
      %s3254 = int_to_ptr.vmem [resolvable:$true] %s3253
      %3259 = dma.vmem_to_hbm [thread:$0]  %s3254, 1024, %s6, [#allocation6], 128, 128, 8
    $region49: #{tpu_custom_call.1} parent=1 // pred_fallthru
      _
    // Predicated region
    $region50: #{tpu_custom_call.1} parent=1 // pred_check
      _
    $region51: #{tpu_custom_call.1} parent=1 // pred_check_branch
      %3261 = sbr.rel (0) target = $region53
    $region52: #{tpu_custom_call.1} parent=1 // pred_region
      %3262 = dma.done [#allocation6], 1024
    $region53: #{tpu_custom_call.1} parent=1 // pred_fallthru
      _
    %3263 = vsyncpa [#allocation5], 1
    %3264 = vsyncpa [#allocation8], 1
    %3265 = vsyncpa [#allocation11], 1
    %3266 = vsyncpa [#allocation6], 1

// kernel: tpu_custom_call.1
$region0: #{tpu_custom_call.1}
  #allocation0 [shape = 'u32[]', space=smem, size = 0x4, offset = 0x4, fixed_abs, tag = 'smem constant byte address 0x4 - core index']
  #allocation1 [shape = 'u32[144,128]{1,0:T(1,128)}', space=vmem, size = 0x12000, scoped, tag = 'internal scratch']
  #allocation2 [shape = 'bf16[64,128]{1,0:T(8,128)(2,1)}', space=vmem, size = 0x4000, scoped, tag = 'scratch operand']
  #allocation3 [shape = 'f32[64,512]{1,0:T(8,128)}', space=vmem, size = 0x20000, scoped, tag = 'scratch operand']
  %s0 = inlined_call_operand.hbm [shape: bf16[1,64,128], index: 0, kind: input, shape index: {}]
  %s1 = inlined_call_operand.hbm [shape: bf16[2,128,512], index: 1, kind: input, shape index: {}]
  %s2 = inlined_call_operand.hbm [shape: bf16[2,128,512], index: 2, kind: input, shape index: {}]
  %s3 = inlined_call_operand.hbm [shape: f32[2,1,512], index: 3, kind: input, shape index: {}]
  %s4 = inlined_call_operand.hbm [shape: bf16[128,128], index: 4, kind: input, shape index: {}]
  %s5 = inlined_call_operand.vmem [shape: f32[1,128], index: 5, kind: input, shape index: {}]
  %s6 = inlined_call_operand.hbm [shape: f32[1,64,128], index: 6, kind: output, shape index: {}]
  %s7 = sld [smem:[#allocation0]]
  $region54: #{tpu_custom_call.1} parent=0
    _
  %s9 = ssub.s32 1, %s7
  %s10 = scalar_select 0, %s9, %s7
  $region1: #{tpu_custom_call.1} parent=0
    #allocation4 [shape = 'u8[16384]{0}', space=vmem, size = 0x4000, scoped, tag = 'input window, operand 0, single buffered']
    #allocation5 [shape = 's32[1]{0}', space=sflag, size = 0x4, scoped, tag = 'scoped memory for tpu_custom_call.1']
    #allocation6 [shape = 's32[1]{0}', space=sflag, size = 0x4, scoped, tag = 'scoped memory for tpu_custom_call.1']
    #allocation7 [shape = 'u8[262144]{0}', space=vmem, size = 0x40000, scoped, tag = 'input window, operand 1, single buffered']
    #allocation8 [shape = 's32[1]{0}', space=sflag, size = 0x4, scoped, tag = 'scoped memory for tpu_custom_call.1']
    #allocation9 [shape = 'u8[262144]{0}', space=vmem, size = 0x40000, scoped, tag = 'input window, operand 2, single buffered']
    #allocation10 [shape = 'u8[4096]{0}', space=vmem, size = 0x1000, scoped, tag = 'input window, operand 3, single buffered']
    #allocation11 [shape = 's32[1]{0}', space=sflag, size = 0x4, scoped, tag = 'scoped memory for tpu_custom_call.1']
    #allocation12 [shape = 'u8[32768]{0}', space=vmem, size = 0x8000, scoped, tag = 'input window, operand 4, single buffered']
    #allocation13 [shape = 'u8[32768]{0}', space=vmem, size = 0x8000, scoped, tag = 'output window, operand 0, single buffered']
    %11 = vsyncpa [#allocation5], 0
    %12 = vsyncpa [#allocation8], 0
    %13 = vsyncpa [#allocation11], 0
    %14 = vsyncpa [#allocation6], 0
    // Predicated region
    $region2: #{tpu_custom_call.1} parent=1 // pred_check
      _
    $region3: #{tpu_custom_call.1} parent=1 // pred_check_branch
      %16 = sbr.rel (0) target = $region5
    $region4: #{tpu_custom_call.1} parent=1 // pred_region
      %s18 = ssub.s32 512, 512
      %19 = vsyncadd [#allocation5], %s18
      %s20 = sshll.u32 [#allocation4], 4
      %s21 = int_to_ptr.vmem [resolvable:$true] %s20
      %26 = dma.hbm_to_vmem [thread:$0]  %s0, 512, %s21, [#allocation5], 64, 64, 4
    $region5: #{tpu_custom_call.1} parent=1 // pred_fallthru
      _
    // Predicated region
    $region6: #{tpu_custom_call.1} parent=1 // pred_check
      _
    $region7: #{tpu_custom_call.1} parent=1 // pred_check_branch
      %28 = sbr.rel (0) target = $region9
    $region8: #{tpu_custom_call.1} parent=1 // pred_region
      %s30 = ssub.s32 8192, 8192
      %31 = vsyncadd [#allocation8], %s30
      %s32 = sshll.u32 [#allocation7], 4
      %s33 = int_to_ptr.vmem [resolvable:$true] %s32
      %38 = dma.hbm_to_vmem [thread:$0]  %s1, 8192, %s33, [#allocation8], 256, 256, 16
    $region9: #{tpu_custom_call.1} parent=1 // pred_fallthru
      _
    // Predicated region
    $region10: #{tpu_custom_call.1} parent=1 // pred_check
      _
    $region11: #{tpu_custom_call.1} parent=1 // pred_check_branch
      %40 = sbr.rel (0) target = $region13
    $region12: #{tpu_custom_call.1} parent=1 // pred_region
      %s42 = ssub.s32 8192, 8192
      %43 = vsyncadd [#allocation8], %s42
      %s44 = sshll.u32 [#allocation9], 4
      %s45 = int_to_ptr.vmem [resolvable:$true] %s44
      %50 = dma.hbm_to_vmem [thread:$0]  %s2, 8192, %s45, [#allocation8], 256, 256, 16
    $region13: #{tpu_custom_call.1} parent=1 // pred_fallthru
      _
    // Predicated region
    $region14: #{tpu_custom_call.1} parent=1 // pred_check
      _
    $region15: #{tpu_custom_call.1} parent=1 // pred_check_branch
      %52 = sbr.rel (0) target = $region17
    $region16: #{tpu_custom_call.1} parent=1 // pred_region
      %s54 = ssub.s32 128, 128
      %55 = vsyncadd [#allocation11], %s54
      %s56 = sshll.u32 [#allocation10], 4
      %s57 = int_to_ptr.vmem [resolvable:$true] %s56
      %62 = dma.hbm_to_vmem [thread:$0]  %s3, 128, %s57, [#allocation11], 64, 64, 4
    $region17: #{tpu_custom_call.1} parent=1 // pred_fallthru
      _
    // Predicated region
    $region18: #{tpu_custom_call.1} parent=1 // pred_check
      _
    $region19: #{tpu_custom_call.1} parent=1 // pred_check_branch
      %64 = sbr.rel (0) target = $region21
    $region20: #{tpu_custom_call.1} parent=1 // pred_region
      %s66 = ssub.s32 1024, 1024
      %67 = vsyncadd [#allocation11], %s66
      %s68 = sshll.u32 [#allocation12], 4
      %s69 = int_to_ptr.vmem [resolvable:$true] %s68
      %74 = dma.hbm_to_vmem [thread:$0]  %s4, 1024, %s69, [#allocation11], 64, 64, 4
    $region21: #{tpu_custom_call.1} parent=1 // pred_fallthru
      _
    // Predicated region
    $region22: #{tpu_custom_call.1} parent=1 // pred_check
      _
    $region23: #{tpu_custom_call.1} parent=1 // pred_check_branch
      %76 = sbr.rel (0) target = $region25
    $region24: #{tpu_custom_call.1} parent=1 // pred_region
      _
    $region25: #{tpu_custom_call.1} parent=1 // pred_fallthru
      _
    // Predicated region
    $region26: #{tpu_custom_call.1} parent=1 // pred_check
      _
    $region27: #{tpu_custom_call.1} parent=1 // pred_check_branch
      %78 = sbr.rel (0) target = $region29
    $region28: #{tpu_custom_call.1} parent=1 // pred_region
      %79 = dma.done [#allocation5], 512
    $region29: #{tpu_custom_call.1} parent=1 // pred_fallthru
      _
    // Predicated region
    $region30: #{tpu_custom_call.1} parent=1 // pred_check
      _
    $region31: #{tpu_custom_call.1} parent=1 // pred_check_branch
      %81 = sbr.rel (0) target = $region33
    $region32: #{tpu_custom_call.1} parent=1 // pred_region
      %82 = dma.done [#allocation8], 8192
    $region33: #{tpu_custom_call.1} parent=1 // pred_fallthru
      _
    // Predicated region
    $region34: #{tpu_custom_call.1} parent=1 // pred_check
      _
    $region35: #{tpu_custom_call.1} parent=1 // pred_check_branch
      %84 = sbr.rel (0) target = $region37
    $region36: #{tpu_custom_call.1} parent=1 // pred_region
      %85 = dma.done [#allocation8], 8192
    $region37: #{tpu_custom_call.1} parent=1 // pred_fallthru
      _
    // Predicated region
    $region38: #{tpu_custom_call.1} parent=1 // pred_check
      _
    $region39: #{tpu_custom_call.1} parent=1 // pred_check_branch
      %87 = sbr.rel (0) target = $region41
    $region40: #{tpu_custom_call.1} parent=1 // pred_region
      %88 = dma.done [#allocation11], 128
    $region41: #{tpu_custom_call.1} parent=1 // pred_fallthru
      _
    // Predicated region
    $region42: #{tpu_custom_call.1} parent=1 // pred_check
      _
    $region43: #{tpu_custom_call.1} parent=1 // pred_check_branch
      %90 = sbr.rel (0) target = $region45
    $region44: #{tpu_custom_call.1} parent=1 // pred_region
      %91 = dma.done [#allocation11], 1024
    $region45: #{tpu_custom_call.1} parent=1 // pred_fallthru
      _
    %v93 = vld [vmem:[#allocation7] sm:$0xff]
    %v94 = vld [vmem:[#allocation7 + $0x8] sm:$0xff]
    %v95 = vld [vmem:[#allocation7 + $0x10] sm:$0xff]
    %v96 = vld [vmem:[#allocation7 + $0x18] sm:$0xff]
    %v97 = vld [vmem:[#allocation7 + $0x20] sm:$0xff]
    %v98 = vld [vmem:[#allocation7 + $0x28] sm:$0xff]
    %v99 = vld [vmem:[#allocation7 + $0x30] sm:$0xff]
    %v100 = vld [vmem:[#allocation7 + $0x38] sm:$0xff]
    %v101 = vld [vmem:[#allocation7 + $0x40] sm:$0xff]
    %v102 = vld [vmem:[#allocation7 + $0x48] sm:$0xff]
    %v103 = vld [vmem:[#allocation7 + $0x50] sm:$0xff]
    %v104 = vld [vmem:[#allocation7 + $0x58] sm:$0xff]
    %v105 = vld [vmem:[#allocation7 + $0x60] sm:$0xff]
    %v106 = vld [vmem:[#allocation7 + $0x68] sm:$0xff]
    %v107 = vld [vmem:[#allocation7 + $0x70] sm:$0xff]
    %v108 = vld [vmem:[#allocation7 + $0x78] sm:$0xff]
    %v109 = vld [vmem:[#allocation7 + $0x80] sm:$0xff]
    %v110 = vld [vmem:[#allocation7 + $0x88] sm:$0xff]
    %v111 = vld [vmem:[#allocation7 + $0x90] sm:$0xff]
    %v112 = vld [vmem:[#allocation7 + $0x98] sm:$0xff]
    %v113 = vld [vmem:[#allocation7 + $0xa0] sm:$0xff]
    %v114 = vld [vmem:[#allocation7 + $0xa8] sm:$0xff]
    %v115 = vld [vmem:[#allocation7 + $0xb0] sm:$0xff]
    %v116 = vld [vmem:[#allocation7 + $0xb8] sm:$0xff]
    %v117 = vld [vmem:[#allocation7 + $0xc0] sm:$0xff]
    %v118 = vld [vmem:[#allocation7 + $0xc8] sm:$0xff]
    %v119 = vld [vmem:[#allocation7 + $0xd0] sm:$0xff]
    %v120 = vld [vmem:[#allocation7 + $0xd8] sm:$0xff]
    %v121 = vld [vmem:[#allocation7 + $0xe0] sm:$0xff]
    %v122 = vld [vmem:[#allocation7 + $0xe8] sm:$0xff]
    %v123 = vld [vmem:[#allocation7 + $0xf0] sm:$0xff]
    %v124 = vld [vmem:[#allocation7 + $0xf8] sm:$0xff]
    %v125 = vld [vmem:[#allocation9] sm:$0xff]
    %v126 = vld [vmem:[#allocation9 + $0x8] sm:$0xff]
    %v127 = vld [vmem:[#allocation9 + $0x10] sm:$0xff]
    %v128 = vld [vmem:[#allocation9 + $0x18] sm:$0xff]
    %v129 = vld [vmem:[#allocation9 + $0x20] sm:$0xff]
    %v130 = vld [vmem:[#allocation9 + $0x28] sm:$0xff]
    %v131 = vld [vmem:[#allocation9 + $0x30] sm:$0xff]
    %v132 = vld [vmem:[#allocation9 + $0x38] sm:$0xff]
    %v133 = vld [vmem:[#allocation9 + $0x40] sm:$0xff]
    %v134 = vld [vmem:[#allocation9 + $0x48] sm:$0xff]
    %v135 = vld [vmem:[#allocation9 + $0x50] sm:$0xff]
    %v136 = vld [vmem:[#allocation9 + $0x58] sm:$0xff]
    %v137 = vld [vmem:[#allocation9 + $0x60] sm:$0xff]
    %v138 = vld [vmem:[#allocation9 + $0x68] sm:$0xff]
    %v139 = vld [vmem:[#allocation9 + $0x70] sm:$0xff]
    %v140 = vld [vmem:[#allocation9 + $0x78] sm:$0xff]
    %v141 = vld [vmem:[#allocation9 + $0x80] sm:$0xff]
    %v142 = vld [vmem:[#allocation9 + $0x88] sm:$0xff]
    %v143 = vld [vmem:[#allocation9 + $0x90] sm:$0xff]
    %v144 = vld [vmem:[#allocation9 + $0x98] sm:$0xff]
    %v145 = vld [vmem:[#allocation9 + $0xa0] sm:$0xff]
    %v146 = vld [vmem:[#allocation9 + $0xa8] sm:$0xff]
    %v147 = vld [vmem:[#allocation9 + $0xb0] sm:$0xff]
    %v148 = vld [vmem:[#allocation9 + $0xb8] sm:$0xff]
    %v149 = vld [vmem:[#allocation9 + $0xc0] sm:$0xff]
    %v150 = vld [vmem:[#allocation9 + $0xc8] sm:$0xff]
    %v151 = vld [vmem:[#allocation9 + $0xd0] sm:$0xff]
    %v152 = vld [vmem:[#allocation9 + $0xd8] sm:$0xff]
    %v153 = vld [vmem:[#allocation9 + $0xe0] sm:$0xff]
    %v154 = vld [vmem:[#allocation9 + $0xe8] sm:$0xff]
    %v155 = vld [vmem:[#allocation9 + $0xf0] sm:$0xff]
    %v156 = vld [vmem:[#allocation9 + $0xf8] sm:$0xff]
    %v157 = vld [vmem:[#allocation10] sm:$0xf]
    %v158 = vld [vmem:[#allocation4] sm:$0xf]
    %v159 = vld [vmem:[#allocation4 + $0x4] sm:$0xf]
    %v160 = vld [vmem:[#allocation4 + $0x8] sm:$0xf]
    %v161 = vld [vmem:[#allocation4 + $0xc] sm:$0xf]
    %v162 = vld [vmem:[#allocation4 + $0x10] sm:$0xf]
    %v163 = vld [vmem:[#allocation4 + $0x14] sm:$0xf]
    %v164 = vld [vmem:[#allocation4 + $0x18] sm:$0xf]
    %v165 = vld [vmem:[#allocation4 + $0x1c] sm:$0xf]
    %v167 = vlaneseq
    %v168 = vshrl.u32 %v167, 7
    %v169 = vsub.s32 0, %v168
    %v170 = vrot.slane %v157, %v169
    %v171 = vlaneseq
    %v172 = vshrl.u32 %v171, 7
    %v173 = vsub.s32 1, %v172
    %v174 = vrot.slane %v157, %v173
    %v175 = vlaneseq
    %v176 = vshrl.u32 %v175, 7
    %v177 = vsub.s32 2, %v176
    %v178 = vrot.slane %v157, %v177
    %v179 = vlaneseq
    %v180 = vshrl.u32 %v179, 7
    %v181 = vsub.s32 3, %v180
    %v182 = vrot.slane %v157, %v181
    %v195 = vunpack.c.l.b16 %v158
    %v196 = vunpack.c.l.b16 %v159
    %v197 = vunpack.c.l.b16 %v160
    %v198 = vunpack.c.l.b16 %v161
    %v199 = vunpack.c.l.b16 %v162
    %v200 = vunpack.c.l.b16 %v163
    %v201 = vunpack.c.l.b16 %v164
    %v202 = vunpack.c.l.b16 %v165
    %v203 = vpack.c.b16 %v196, %v195
    %v204 = vpack.c.b16 %v198, %v197
    %v205 = vpack.c.b16 %v200, %v199
    %v206 = vpack.c.b16 %v202, %v201
    %v243 = vunpack.c.l.b16 %v93
    %v244 = vunpack.c.h.b16 %v93
    %v245 = vunpack.c.l.b16 %v94
    %v246 = vunpack.c.h.b16 %v94
    %v247 = vunpack.c.l.b16 %v95
    %v248 = vunpack.c.h.b16 %v95
    %v249 = vunpack.c.l.b16 %v96
    %v250 = vunpack.c.h.b16 %v96
    %v251 = vunpack.c.l.b16 %v97
    %v252 = vunpack.c.h.b16 %v97
    %v253 = vunpack.c.l.b16 %v98
    %v254 = vunpack.c.h.b16 %v98
    %v255 = vunpack.c.l.b16 %v99
    %v256 = vunpack.c.h.b16 %v99
    %v257 = vunpack.c.l.b16 %v100
    %v258 = vunpack.c.h.b16 %v100
    %v259 = vunpack.c.l.b16 %v101
    %v260 = vunpack.c.h.b16 %v101
    %v261 = vunpack.c.l.b16 %v102
    %v262 = vunpack.c.h.b16 %v102
    %v263 = vunpack.c.l.b16 %v103
    %v264 = vunpack.c.h.b16 %v103
    %v265 = vunpack.c.l.b16 %v104
    %v266 = vunpack.c.h.b16 %v104
    %v267 = vunpack.c.l.b16 %v105
    %v268 = vunpack.c.h.b16 %v105
    %v269 = vunpack.c.l.b16 %v106
    %v270 = vunpack.c.h.b16 %v106
    %v271 = vunpack.c.l.b16 %v107
    %v272 = vunpack.c.h.b16 %v107
    %v273 = vunpack.c.l.b16 %v108
    %v274 = vunpack.c.h.b16 %v108
    %v275 = vunpack.c.l.b16 %v109
    %v276 = vunpack.c.h.b16 %v109
    %v277 = vunpack.c.l.b16 %v110
    %v278 = vunpack.c.h.b16 %v110
    %v279 = vunpack.c.l.b16 %v111
    %v280 = vunpack.c.h.b16 %v111
    %v281 = vunpack.c.l.b16 %v112
    %v282 = vunpack.c.h.b16 %v112
    %v283 = vunpack.c.l.b16 %v113
    %v284 = vunpack.c.h.b16 %v113
    %v285 = vunpack.c.l.b16 %v114
    %v286 = vunpack.c.h.b16 %v114
    %v287 = vunpack.c.l.b16 %v115
    %v288 = vunpack.c.h.b16 %v115
    %v289 = vunpack.c.l.b16 %v116
    %v290 = vunpack.c.h.b16 %v116
    %v291 = vunpack.c.l.b16 %v117
    %v292 = vunpack.c.h.b16 %v117
    %v293 = vunpack.c.l.b16 %v118
    %v294 = vunpack.c.h.b16 %v118
    %v295 = vunpack.c.l.b16 %v119
    %v296 = vunpack.c.h.b16 %v119
    %v297 = vunpack.c.l.b16 %v120
    %v298 = vunpack.c.h.b16 %v120
    %v299 = vunpack.c.l.b16 %v121
    %v300 = vunpack.c.h.b16 %v121
    %v301 = vunpack.c.l.b16 %v122
    %v302 = vunpack.c.h.b16 %v122
    %v303 = vunpack.c.l.b16 %v123
    %v304 = vunpack.c.h.b16 %v123
    %v305 = vunpack.c.l.b16 %v124
    %v306 = vunpack.c.h.b16 %v124
    %v307 = vpack.c.b16 %v247, %v243
    %v308 = vpack.c.b16 %v248, %v244
    %v309 = vpack.c.b16 %v249, %v245
    %v310 = vpack.c.b16 %v250, %v246
    %v311 = vpack.c.b16 %v255, %v251
    %v312 = vpack.c.b16 %v256, %v252
    %v313 = vpack.c.b16 %v257, %v253
    %v314 = vpack.c.b16 %v258, %v254
    %v315 = vpack.c.b16 %v263, %v259
    %v316 = vpack.c.b16 %v264, %v260
    %v317 = vpack.c.b16 %v265, %v261
    %v318 = vpack.c.b16 %v266, %v262
    %v319 = vpack.c.b16 %v271, %v267
    %v320 = vpack.c.b16 %v272, %v268
    %v321 = vpack.c.b16 %v273, %v269
    %v322 = vpack.c.b16 %v274, %v270
    %v323 = vpack.c.b16 %v279, %v275
    %v324 = vpack.c.b16 %v280, %v276
    %v325 = vpack.c.b16 %v281, %v277
    %v326 = vpack.c.b16 %v282, %v278
    %v327 = vpack.c.b16 %v287, %v283
    %v328 = vpack.c.b16 %v288, %v284
    %v329 = vpack.c.b16 %v289, %v285
    %v330 = vpack.c.b16 %v290, %v286
    %v331 = vpack.c.b16 %v295, %v291
    %v332 = vpack.c.b16 %v296, %v292
    %v333 = vpack.c.b16 %v297, %v293
    %v334 = vpack.c.b16 %v298, %v294
    %v335 = vpack.c.b16 %v303, %v299
    %v336 = vpack.c.b16 %v304, %v300
    %v337 = vpack.c.b16 %v305, %v301
    %v338 = vpack.c.b16 %v306, %v302
    %371 = vmatprep.subr.bf16.mxu0 %v336
    %372 = vmatpush1.bf16.msra.mxu0 %v335
    %373 = vmatprep.subr.bf16.mxu0 %v332
    %374 = vmatpush1.bf16.msra.mxu0 %v331
    %375 = vmatprep.subr.bf16.mxu0 %v328
    %376 = vmatpush1.bf16.msra.mxu0 %v327
    %377 = vmatprep.subr.bf16.mxu0 %v324
    %378 = vmatpush1.bf16.msra.mxu0 %v323
    %379 = vmatprep.subr.bf16.mxu0 %v320
    %380 = vmatpush1.bf16.msra.mxu0 %v319
    %381 = vmatprep.subr.bf16.mxu0 %v316
    %382 = vmatpush1.bf16.msra.mxu0 %v315
    %383 = vmatprep.subr.bf16.mxu0 %v312
    %384 = vmatpush1.bf16.msra.mxu0 %v311
    %385 = vmatprep.subr.bf16.mxu0 %v308
    %386 = vmatpush1.bf16.msra.mxu0 %v307
    %387 = vmatprep.subr.bf16.mxu0 0
    %388 = vmatpush2.bf16.msra.mxu0 0
    %389 = vmatprep.subr.bf16.mxu0 0
    %390 = vmatpush2.bf16.msra.mxu0 0
    %391 = vmatprep.subr.bf16.mxu0 0
    %392 = vmatpush2.bf16.msra.mxu0 0
    %393 = vmatprep.subr.bf16.mxu0 0
    %394 = vmatpush2.bf16.msra.mxu0 0
    %395 = vmatprep.subr.bf16.mxu0 0
    %396 = vmatpush2.bf16.msra.mxu0 0
    %397 = vmatprep.subr.bf16.mxu0 0
    %398 = vmatpush2.bf16.msra.mxu0 0
    %399 = vmatprep.subr.bf16.mxu0 0
    %400 = vmatpush2.bf16.msra.mxu0 0
    %401 = vmatprep.subr.bf16.mxu0 0
    %402 = vmatpush2.bf16.msra.mxu0 0
    %403 = vmatprep.mubr.bf16.mxu0 0
    %404 = vmatmul.mubr.bf16.gmra.mxu0 %v203
    %v405 = vpop.f32.mrf.mxu0
    %v406 = vadd.f32 %v170, %v405
    %v407 = vpop.f32.mrf.mxu0
    %v408 = vadd.f32 %v174, %v407
    %v409 = vpop.f32.mrf.mxu0
    %v410 = vadd.f32 %v170, %v409
    %v411 = vpop.f32.mrf.mxu0
    %v412 = vadd.f32 %v174, %v411
    %413 = vmatprep.mubr.bf16.mxu0 0
    %414 = vmatmul.mubr.bf16.gmra.mxu0 %v204
    %v415 = vpop.f32.mrf.mxu0
    %v416 = vadd.f32 %v170, %v415
    %v417 = vpop.f32.mrf.mxu0
    %v418 = vadd.f32 %v174, %v417
    %v419 = vpop.f32.mrf.mxu0
    %v420 = vadd.f32 %v170, %v419
    %v421 = vpop.f32.mrf.mxu0
    %v422 = vadd.f32 %v174, %v421
    %423 = vmatprep.mubr.bf16.mxu0 0
    %424 = vmatmul.mubr.bf16.gmra.mxu0 %v205
    %v425 = vpop.f32.mrf.mxu0
    %v426 = vadd.f32 %v170, %v425
    %v427 = vpop.f32.mrf.mxu0
    %v428 = vadd.f32 %v174, %v427
    %v429 = vpop.f32.mrf.mxu0
    %v430 = vadd.f32 %v170, %v429
    %v431 = vpop.f32.mrf.mxu0
    %v432 = vadd.f32 %v174, %v431
    %433 = vmatprep.mubr.bf16.mxu0 0
    %434 = vmatmul.mubr.bf16.gmra.mxu0 %v206
    %v435 = vpop.f32.mrf.mxu0
    %v436 = vadd.f32 %v170, %v435
    %v437 = vpop.f32.mrf.mxu0
    %v438 = vadd.f32 %v174, %v437
    %v439 = vpop.f32.mrf.mxu0
    %v440 = vadd.f32 %v170, %v439
    %v441 = vpop.f32.mrf.mxu0
    %v442 = vadd.f32 %v174, %v441
    %443 = vdwg.mxu0
    %444 = vmatprep.subr.bf16.mxu0 %v338
    %445 = vmatpush1.bf16.msra.mxu0 %v337
    %446 = vmatprep.subr.bf16.mxu0 %v334
    %447 = vmatpush1.bf16.msra.mxu0 %v333
    %448 = vmatprep.subr.bf16.mxu0 %v330
    %449 = vmatpush1.bf16.msra.mxu0 %v329
    %450 = vmatprep.subr.bf16.mxu0 %v326
    %451 = vmatpush1.bf16.msra.mxu0 %v325
    %452 = vmatprep.subr.bf16.mxu0 %v322
    %453 = vmatpush1.bf16.msra.mxu0 %v321
    %454 = vmatprep.subr.bf16.mxu0 %v318
    %455 = vmatpush1.bf16.msra.mxu0 %v317
    %456 = vmatprep.subr.bf16.mxu0 %v314
    %457 = vmatpush1.bf16.msra.mxu0 %v313
    %458 = vmatprep.subr.bf16.mxu0 %v310
    %459 = vmatpush1.bf16.msra.mxu0 %v309
    %460 = vmatprep.subr.bf16.mxu0 0
    %461 = vmatpush2.bf16.msra.mxu0 0
    %462 = vmatprep.subr.bf16.mxu0 0
    %463 = vmatpush2.bf16.msra.mxu0 0
    %464 = vmatprep.subr.bf16.mxu0 0
    %465 = vmatpush2.bf16.msra.mxu0 0
    %466 = vmatprep.subr.bf16.mxu0 0
    %467 = vmatpush2.bf16.msra.mxu0 0
    %468 = vmatprep.subr.bf16.mxu0 0
    %469 = vmatpush2.bf16.msra.mxu0 0
    %470 = vmatprep.subr.bf16.mxu0 0
    %471 = vmatpush2.bf16.msra.mxu0 0
    %472 = vmatprep.subr.bf16.mxu0 0
    %473 = vmatpush2.bf16.msra.mxu0 0
    %474 = vmatprep.subr.bf16.mxu0 0
    %475 = vmatpush2.bf16.msra.mxu0 0
    %476 = vmatprep.mubr.bf16.mxu0 0
    %477 = vmatmul.mubr.bf16.gmra.mxu0 %v203
    %v478 = vpop.f32.mrf.mxu0
    %v479 = vadd.f32 %v178, %v478
    %v480 = vpop.f32.mrf.mxu0
    %v481 = vadd.f32 %v182, %v480
    %v482 = vpop.f32.mrf.mxu0
    %v483 = vadd.f32 %v178, %v482
    %v484 = vpop.f32.mrf.mxu0
    %v485 = vadd.f32 %v182, %v484
    %486 = vmatprep.mubr.bf16.mxu0 0
    %487 = vmatmul.mubr.bf16.gmra.mxu0 %v204
    %v488 = vpop.f32.mrf.mxu0
    %v489 = vadd.f32 %v178, %v488
    %v490 = vpop.f32.mrf.mxu0
    %v491 = vadd.f32 %v182, %v490
    %v492 = vpop.f32.mrf.mxu0
    %v493 = vadd.f32 %v178, %v492
    %v494 = vpop.f32.mrf.mxu0
    %v495 = vadd.f32 %v182, %v494
    %496 = vmatprep.mubr.bf16.mxu0 0
    %497 = vmatmul.mubr.bf16.gmra.mxu0 %v205
    %v498 = vpop.f32.mrf.mxu0
    %v499 = vadd.f32 %v178, %v498
    %v500 = vpop.f32.mrf.mxu0
    %v501 = vadd.f32 %v182, %v500
    %v502 = vpop.f32.mrf.mxu0
    %v503 = vadd.f32 %v178, %v502
    %v504 = vpop.f32.mrf.mxu0
    %v505 = vadd.f32 %v182, %v504
    %506 = vmatprep.mubr.bf16.mxu0 0
    %507 = vmatmul.mubr.bf16.gmra.mxu0 %v206
    %v508 = vpop.f32.mrf.mxu0
    %v509 = vadd.f32 %v178, %v508
    %v510 = vpop.f32.mrf.mxu0
    %v511 = vadd.f32 %v182, %v510
    %v512 = vpop.f32.mrf.mxu0
    %v513 = vadd.f32 %v178, %v512
    %v514 = vpop.f32.mrf.mxu0
    %v515 = vadd.f32 %v182, %v514
    %516 = vdwg.mxu0
    %517 = vst [vmem:[#allocation3] sm:$0xff] %v406
    %518 = vst [vmem:[#allocation3 + $0x8] sm:$0xff] %v408
    %519 = vst [vmem:[#allocation3 + $0x10] sm:$0xff] %v479
    %520 = vst [vmem:[#allocation3 + $0x18] sm:$0xff] %v481
    %521 = vst [vmem:[#allocation3 + $0x20] sm:$0xff] %v410
    %522 = vst [vmem:[#allocation3 + $0x28] sm:$0xff] %v412
    %523 = vst [vmem:[#allocation3 + $0x30] sm:$0xff] %v483
    %524 = vst [vmem:[#allocation3 + $0x38] sm:$0xff] %v485
    %525 = vst [vmem:[#allocation3 + $0x40] sm:$0xff] %v416
    %526 = vst [vmem:[#allocation3 + $0x48] sm:$0xff] %v418
    %527 = vst [vmem:[#allocation3 + $0x50] sm:$0xff] %v489
    %528 = vst [vmem:[#allocation3 + $0x58] sm:$0xff] %v491
    %529 = vst [vmem:[#allocation3 + $0x60] sm:$0xff] %v420
    %530 = vst [vmem:[#allocation3 + $0x68] sm:$0xff] %v422
    %531 = vst [vmem:[#allocation3 + $0x70] sm:$0xff] %v493
    %532 = vst [vmem:[#allocation3 + $0x78] sm:$0xff] %v495
    %533 = vst [vmem:[#allocation3 + $0x80] sm:$0xff] %v426
    %534 = vst [vmem:[#allocation3 + $0x88] sm:$0xff] %v428
    %535 = vst [vmem:[#allocation3 + $0x90] sm:$0xff] %v499
    %536 = vst [vmem:[#allocation3 + $0x98] sm:$0xff] %v501
    %537 = vst [vmem:[#allocation3 + $0xa0] sm:$0xff] %v430
    %538 = vst [vmem:[#allocation3 + $0xa8] sm:$0xff] %v432
    %539 = vst [vmem:[#allocation3 + $0xb0] sm:$0xff] %v503
    %540 = vst [vmem:[#allocation3 + $0xb8] sm:$0xff] %v505
    %541 = vst [vmem:[#allocation3 + $0xc0] sm:$0xff] %v436
    %542 = vst [vmem:[#allocation3 + $0xc8] sm:$0xff] %v438
    %543 = vst [vmem:[#allocation3 + $0xd0] sm:$0xff] %v509
    %544 = vst [vmem:[#allocation3 + $0xd8] sm:$0xff] %v511
    %545 = vst [vmem:[#allocation3 + $0xe0] sm:$0xff] %v440
    %546 = vst [vmem:[#allocation3 + $0xe8] sm:$0xff] %v442
    %547 = vst [vmem:[#allocation3 + $0xf0] sm:$0xff] %v513
    %548 = vst [vmem:[#allocation3 + $0xf8] sm:$0xff] %v515
    %v549 = vld [vmem:[#allocation3] sm:$0xff]
    %v550 = vld [vmem:[#allocation3 + $0x8] sm:$0xff]
    %v551 = vld [vmem:[#allocation3 + $0x10] sm:$0xff]
    %v552 = vld [vmem:[#allocation3 + $0x18] sm:$0xff]
    %v585 = vunpack.c.l.b16 %v125
    %v586 = vunpack.c.h.b16 %v125
    %v587 = vunpack.c.l.b16 %v126
    %v588 = vunpack.c.h.b16 %v126
    %v589 = vunpack.c.l.b16 %v127
    %v590 = vunpack.c.h.b16 %v127
    %v591 = vunpack.c.l.b16 %v128
    %v592 = vunpack.c.h.b16 %v128
    %v593 = vunpack.c.l.b16 %v129
    %v594 = vunpack.c.h.b16 %v129
    %v595 = vunpack.c.l.b16 %v130
    %v596 = vunpack.c.h.b16 %v130
    %v597 = vunpack.c.l.b16 %v131
    %v598 = vunpack.c.h.b16 %v131
    %v599 = vunpack.c.l.b16 %v132
    %v600 = vunpack.c.h.b16 %v132
    %v601 = vunpack.c.l.b16 %v133
    %v602 = vunpack.c.h.b16 %v133
    %v603 = vunpack.c.l.b16 %v134
    %v604 = vunpack.c.h.b16 %v134
    %v605 = vunpack.c.l.b16 %v135
    %v606 = vunpack.c.h.b16 %v135
    %v607 = vunpack.c.l.b16 %v136
    %v608 = vunpack.c.h.b16 %v136
    %v609 = vunpack.c.l.b16 %v137
    %v610 = vunpack.c.h.b16 %v137
    %v611 = vunpack.c.l.b16 %v138
    %v612 = vunpack.c.h.b16 %v138
    %v613 = vunpack.c.l.b16 %v139
    %v614 = vunpack.c.h.b16 %v139
    %v615 = vunpack.c.l.b16 %v140
    %v616 = vunpack.c.h.b16 %v140
    %v617 = vunpack.c.l.b16 %v141
    %v618 = vunpack.c.h.b16 %v141
    %v619 = vunpack.c.l.b16 %v142
    %v620 = vunpack.c.h.b16 %v142
    %v621 = vunpack.c.l.b16 %v143
    %v622 = vunpack.c.h.b16 %v143
    %v623 = vunpack.c.l.b16 %v144
    %v624 = vunpack.c.h.b16 %v144
    %v625 = vunpack.c.l.b16 %v145
    %v626 = vunpack.c.h.b16 %v145
    %v627 = vunpack.c.l.b16 %v146
    %v628 = vunpack.c.h.b16 %v146
    %v629 = vunpack.c.l.b16 %v147
    %v630 = vunpack.c.h.b16 %v147
    %v631 = vunpack.c.l.b16 %v148
    %v632 = vunpack.c.h.b16 %v148
    %v633 = vunpack.c.l.b16 %v149
    %v634 = vunpack.c.h.b16 %v149
    %v635 = vunpack.c.l.b16 %v150
    %v636 = vunpack.c.h.b16 %v150
    %v637 = vunpack.c.l.b16 %v151
    %v638 = vunpack.c.h.b16 %v151
    %v639 = vunpack.c.l.b16 %v152
    %v640 = vunpack.c.h.b16 %v152
    %v641 = vunpack.c.l.b16 %v153
    %v642 = vunpack.c.h.b16 %v153
    %v643 = vunpack.c.l.b16 %v154
    %v644 = vunpack.c.h.b16 %v154
    %v645 = vunpack.c.l.b16 %v155
    %v646 = vunpack.c.h.b16 %v155
    %v647 = vunpack.c.l.b16 %v156
    %v648 = vunpack.c.h.b16 %v156
    %v649 = vpack.c.b16 %v589, %v585
    %v650 = vpack.c.b16 %v590, %v586
    %v651 = vpack.c.b16 %v591, %v587
    %v652 = vpack.c.b16 %v592, %v588
    %v653 = vpack.c.b16 %v597, %v593
    %v654 = vpack.c.b16 %v598, %v594
    %v655 = vpack.c.b16 %v599, %v595
    %v656 = vpack.c.b16 %v600, %v596
    %v657 = vpack.c.b16 %v605, %v601
    %v658 = vpack.c.b16 %v606, %v602
    %v659 = vpack.c.b16 %v607, %v603
    %v660 = vpack.c.b16 %v608, %v604
    %v661 = vpack.c.b16 %v613, %v609
    %v662 = vpack.c.b16 %v614, %v610
    %v663 = vpack.c.b16 %v615, %v611
    %v664 = vpack.c.b16 %v616, %v612
    %v665 = vpack.c.b16 %v621, %v617
    %v666 = vpack.c.b16 %v622, %v618
    %v667 = vpack.c.b16 %v623, %v619
    %v668 = vpack.c.b16 %v624, %v620
    %v669 = vpack.c.b16 %v629, %v625
    %v670 = vpack.c.b16 %v630, %v626
    %v671 = vpack.c.b16 %v631, %v627
    %v672 = vpack.c.b16 %v632, %v628
    %v673 = vpack.c.b16 %v637, %v633
    %v674 = vpack.c.b16 %v638, %v634
    %v675 = vpack.c.b16 %v639, %v635
    %v676 = vpack.c.b16 %v640, %v636
    %v677 = vpack.c.b16 %v645, %v641
    %v678 = vpack.c.b16 %v646, %v642
    %v679 = vpack.c.b16 %v647, %v643
    %v680 = vpack.c.b16 %v648, %v644
    %713 = vmatprep.subr.bf16.mxu0 %v678
    %714 = vmatpush1.bf16.msra.mxu0 %v677
    %715 = vmatprep.subr.bf16.mxu0 %v674
    %716 = vmatpush1.bf16.msra.mxu0 %v673
    %717 = vmatprep.subr.bf16.mxu0 %v670
    %718 = vmatpush1.bf16.msra.mxu0 %v669
    %719 = vmatprep.subr.bf16.mxu0 %v666
    %720 = vmatpush1.bf16.msra.mxu0 %v665
    %721 = vmatprep.subr.bf16.mxu0 %v662
    %722 = vmatpush1.bf16.msra.mxu0 %v661
    %723 = vmatprep.subr.bf16.mxu0 %v658
    %724 = vmatpush1.bf16.msra.mxu0 %v657
    %725 = vmatprep.subr.bf16.mxu0 %v654
    %726 = vmatpush1.bf16.msra.mxu0 %v653
    %727 = vmatprep.subr.bf16.mxu0 %v650
    %728 = vmatpush1.bf16.msra.mxu0 %v649
    %729 = vmatprep.subr.bf16.mxu0 0
    %730 = vmatpush2.bf16.msra.mxu0 0
    %731 = vmatprep.subr.bf16.mxu0 0
    %732 = vmatpush2.bf16.msra.mxu0 0
    %733 = vmatprep.subr.bf16.mxu0 0
    %734 = vmatpush2.bf16.msra.mxu0 0
    %735 = vmatprep.subr.bf16.mxu0 0
    %736 = vmatpush2.bf16.msra.mxu0 0
    %737 = vmatprep.subr.bf16.mxu0 0
    %738 = vmatpush2.bf16.msra.mxu0 0
    %739 = vmatprep.subr.bf16.mxu0 0
    %740 = vmatpush2.bf16.msra.mxu0 0
    %741 = vmatprep.subr.bf16.mxu0 0
    %742 = vmatpush2.bf16.msra.mxu0 0
    %743 = vmatprep.subr.bf16.mxu0 0
    %744 = vmatpush2.bf16.msra.mxu0 0
    %745 = vmatprep.mubr.bf16.mxu0 0
    %746 = vmatmul.mubr.bf16.gmra.mxu0 0
    %v747 = vpop.f32.mrf.mxu0
    %v748 = vadd.f32 0.0, %v747
    %v749 = vpop.f32.mrf.mxu0
    %v750 = vadd.f32 0.0, %v749
    %v751 = vpop.f32.mrf.mxu0
    %v752 = vpop.f32.mrf.mxu0
    %753 = vdwg.mxu0
    %754 = vmatprep.subr.bf16.mxu0 %v680
    %755 = vmatpush1.bf16.msra.mxu0 %v679
    %756 = vmatprep.subr.bf16.mxu0 %v676
    %757 = vmatpush1.bf16.msra.mxu0 %v675
    %758 = vmatprep.subr.bf16.mxu0 %v672
    %759 = vmatpush1.bf16.msra.mxu0 %v671
    %760 = vmatprep.subr.bf16.mxu0 %v668
    %761 = vmatpush1.bf16.msra.mxu0 %v667
    %762 = vmatprep.subr.bf16.mxu0 %v664
    %763 = vmatpush1.bf16.msra.mxu0 %v663
    %764 = vmatprep.subr.bf16.mxu0 %v660
    %765 = vmatpush1.bf16.msra.mxu0 %v659
    %766 = vmatprep.subr.bf16.mxu0 %v656
    %767 = vmatpush1.bf16.msra.mxu0 %v655
    %768 = vmatprep.subr.bf16.mxu0 %v652
    %769 = vmatpush1.bf16.msra.mxu0 %v651
    %770 = vmatprep.subr.bf16.mxu0 0
    %771 = vmatpush2.bf16.msra.mxu0 0
    %772 = vmatprep.subr.bf16.mxu0 0
    %773 = vmatpush2.bf16.msra.mxu0 0
    %774 = vmatprep.subr.bf16.mxu0 0
    %775 = vmatpush2.bf16.msra.mxu0 0
    %776 = vmatprep.subr.bf16.mxu0 0
    %777 = vmatpush2.bf16.msra.mxu0 0
    %778 = vmatprep.subr.bf16.mxu0 0
    %779 = vmatpush2.bf16.msra.mxu0 0
    %780 = vmatprep.subr.bf16.mxu0 0
    %781 = vmatpush2.bf16.msra.mxu0 0
    %782 = vmatprep.subr.bf16.mxu0 0
    %783 = vmatpush2.bf16.msra.mxu0 0
    %784 = vmatprep.subr.bf16.mxu0 0
    %785 = vmatpush2.bf16.msra.mxu0 0
    %786 = vmatprep.mubr.bf16.mxu0 0
    %787 = vmatmul.mubr.bf16.gmra.mxu0 0
    %v788 = vpop.f32.mrf.mxu0
    %v789 = vadd.f32 0.0, %v788
    %v790 = vpop.f32.mrf.mxu0
    %v791 = vadd.f32 0.0, %v790
    %v792 = vpop.f32.mrf.mxu0
    %v793 = vpop.f32.mrf.mxu0
    %794 = vdwg.mxu0
    %v795 = vadd.f32 %v549, %v748
    %v796 = vadd.f32 %v550, %v750
    %v797 = vadd.f32 %v551, %v789
    %v798 = vadd.f32 %v552, %v791
    %v799 = vtanh.pop %v795
    %v800 = vtanh.pop %v796
    %v801 = vtanh.pop %v797
    %v802 = vtanh.pop %v798
    %v803 = vadd.f32 %v799, 1.0
    %v804 = vmul.f32 %v803, 0.5
    %v805 = vadd.f32 %v800, 1.0
    %v806 = vmul.f32 %v805, 0.5
    %v807 = vadd.f32 %v802, 1.0
    %v808 = vmul.f32 %v807, 0.5
    %v809 = vmul.f32 %v806, 0.0
    %v810 = vmul.f32 %v804, %v801
    %v811 = vadd.f32 %v809, %v810
    %v812 = vtanh.pop %v811
    %v813 = vmul.f32 %v808, %v812
    %v814 = vpack.c.bf16 %v813, %v813
    %815 = vst [vmem:[#allocation2] sm:$0xf] %v814
    %v816 = vld [vmem:[#allocation3 + $0x20] sm:$0xff]
    %v817 = vld [vmem:[#allocation3 + $0x28] sm:$0xff]
    %v818 = vld [vmem:[#allocation3 + $0x30] sm:$0xff]
    %v819 = vld [vmem:[#allocation3 + $0x38] sm:$0xff]
    %820 = vmatprep.subr.bf16.mxu0 %v678
    %821 = vmatpush1.bf16.msra.mxu0 %v677
    %822 = vmatprep.subr.bf16.mxu0 %v674
    %823 = vmatpush1.bf16.msra.mxu0 %v673
    %824 = vmatprep.subr.bf16.mxu0 %v670
    %825 = vmatpush1.bf16.msra.mxu0 %v669
    %826 = vmatprep.subr.bf16.mxu0 %v666
    %827 = vmatpush1.bf16.msra.mxu0 %v665
    %828 = vmatprep.subr.bf16.mxu0 %v662
    %829 = vmatpush1.bf16.msra.mxu0 %v661
    %830 = vmatprep.subr.bf16.mxu0 %v658
    %831 = vmatpush1.bf16.msra.mxu0 %v657
    %832 = vmatprep.subr.bf16.mxu0 %v654
    %833 = vmatpush1.bf16.msra.mxu0 %v653
    %834 = vmatprep.subr.bf16.mxu0 %v650
    %835 = vmatpush1.bf16.msra.mxu0 %v649
    %836 = vmatprep.subr.bf16.mxu0 0
    %837 = vmatpush2.bf16.msra.mxu0 0
    %838 = vmatprep.subr.bf16.mxu0 0
    %839 = vmatpush2.bf16.msra.mxu0 0
    %840 = vmatprep.subr.bf16.mxu0 0
    %841 = vmatpush2.bf16.msra.mxu0 0
    %842 = vmatprep.subr.bf16.mxu0 0
    %843 = vmatpush2.bf16.msra.mxu0 0
    %844 = vmatprep.subr.bf16.mxu0 0
    %845 = vmatpush2.bf16.msra.mxu0 0
    %846 = vmatprep.subr.bf16.mxu0 0
    %847 = vmatpush2.bf16.msra.mxu0 0
    %848 = vmatprep.subr.bf16.mxu0 0
    %849 = vmatpush2.bf16.msra.mxu0 0
    %850 = vmatprep.subr.bf16.mxu0 0
    %851 = vmatpush2.bf16.msra.mxu0 0
    %852 = vmatprep.mubr.bf16.mxu0 0
    %853 = vmatmul.mubr.bf16.gmra.mxu0 %v814
    %v854 = vpop.f32.mrf.mxu0
    %v855 = vadd.f32 0.0, %v854
    %v856 = vpop.f32.mrf.mxu0
    %v857 = vadd.f32 0.0, %v856
    %v858 = vpop.f32.mrf.mxu0
    %v859 = vpop.f32.mrf.mxu0
    %860 = vdwg.mxu0
    %861 = vmatprep.subr.bf16.mxu0 %v680
    %862 = vmatpush1.bf16.msra.mxu0 %v679
    %863 = vmatprep.subr.bf16.mxu0 %v676
    %864 = vmatpush1.bf16.msra.mxu0 %v675
    %865 = vmatprep.subr.bf16.mxu0 %v672
    %866 = vmatpush1.bf16.msra.mxu0 %v671
    %867 = vmatprep.subr.bf16.mxu0 %v668
    %868 = vmatpush1.bf16.msra.mxu0 %v667
    %869 = vmatprep.subr.bf16.mxu0 %v664
    %870 = vmatpush1.bf16.msra.mxu0 %v663
    %871 = vmatprep.subr.bf16.mxu0 %v660
    %872 = vmatpush1.bf16.msra.mxu0 %v659
    %873 = vmatprep.subr.bf16.mxu0 %v656
    %874 = vmatpush1.bf16.msra.mxu0 %v655
    %875 = vmatprep.subr.bf16.mxu0 %v652
    %876 = vmatpush1.bf16.msra.mxu0 %v651
    %877 = vmatprep.subr.bf16.mxu0 0
    %878 = vmatpush2.bf16.msra.mxu0 0
    %879 = vmatprep.subr.bf16.mxu0 0
    %880 = vmatpush2.bf16.msra.mxu0 0
    %881 = vmatprep.subr.bf16.mxu0 0
    %882 = vmatpush2.bf16.msra.mxu0 0
    %883 = vmatprep.subr.bf16.mxu0 0
    %884 = vmatpush2.bf16.msra.mxu0 0
    %885 = vmatprep.subr.bf16.mxu0 0
    %886 = vmatpush2.bf16.msra.mxu0 0
    %887 = vmatprep.subr.bf16.mxu0 0
    %888 = vmatpush2.bf16.msra.mxu0 0
    %889 = vmatprep.subr.bf16.mxu0 0
    %890 = vmatpush2.bf16.msra.mxu0 0
    %891 = vmatprep.subr.bf16.mxu0 0
    %892 = vmatpush2.bf16.msra.mxu0 0
    %893 = vmatprep.mubr.bf16.mxu0 0
    %894 = vmatmul.mubr.bf16.gmra.mxu0 %v814
    %v895 = vpop.f32.mrf.mxu0
    %v896 = vadd.f32 0.0, %v895
    %v897 = vpop.f32.mrf.mxu0
    %v898 = vadd.f32 0.0, %v897
    %v899 = vpop.f32.mrf.mxu0
    %v900 = vpop.f32.mrf.mxu0
    %901 = vdwg.mxu0
    %v902 = vadd.f32 %v816, %v855
    %v903 = vadd.f32 %v817, %v857
    %v904 = vadd.f32 %v818, %v896
    %v905 = vadd.f32 %v819, %v898
    %v906 = vtanh.pop %v902
    %v907 = vtanh.pop %v903
    %v908 = vtanh.pop %v904
    %v909 = vtanh.pop %v905
    %v910 = vadd.f32 %v906, 1.0
    %v911 = vmul.f32 %v910, 0.5
    %v912 = vadd.f32 %v907, 1.0
    %v913 = vmul.f32 %v912, 0.5
    %v914 = vadd.f32 %v909, 1.0
    %v915 = vmul.f32 %v914, 0.5
    %v916 = vmul.f32 %v913, %v811
    %v917 = vmul.f32 %v911, %v908
    %v918 = vadd.f32 %v916, %v917
    %v919 = vtanh.pop %v918
    %v920 = vmul.f32 %v915, %v919
    %v921 = vpack.c.bf16 %v920, %v920
    %922 = vst [vmem:[#allocation2 + $0x4] sm:$0xf] %v921
    %v923 = vld [vmem:[#allocation3 + $0x40] sm:$0xff]
    %v924 = vld [vmem:[#allocation3 + $0x48] sm:$0xff]
    %v925 = vld [vmem:[#allocation3 + $0x50] sm:$0xff]
    %v926 = vld [vmem:[#allocation3 + $0x58] sm:$0xff]
    %927 = vmatprep.subr.bf16.mxu0 %v678
    %928 = vmatpush1.bf16.msra.mxu0 %v677
    %929 = vmatprep.subr.bf16.mxu0 %v674
    %930 = vmatpush1.bf16.msra.mxu0 %v673
    %931 = vmatprep.subr.bf16.mxu0 %v670
    %932 = vmatpush1.bf16.msra.mxu0 %v669
    %933 = vmatprep.subr.bf16.mxu0 %v666
    %934 = vmatpush1.bf16.msra.mxu0 %v665
    %935 = vmatprep.subr.bf16.mxu0 %v662
    %936 = vmatpush1.bf16.msra.mxu0 %v661
    %937 = vmatprep.subr.bf16.mxu0 %v658
    %938 = vmatpush1.bf16.msra.mxu0 %v657
    %939 = vmatprep.subr.bf16.mxu0 %v654
    %940 = vmatpush1.bf16.msra.mxu0 %v653
    %941 = vmatprep.subr.bf16.mxu0 %v650
    %942 = vmatpush1.bf16.msra.mxu0 %v649
    %943 = vmatprep.subr.bf16.mxu0 0
    %944 = vmatpush2.bf16.msra.mxu0 0
    %945 = vmatprep.subr.bf16.mxu0 0
    %946 = vmatpush2.bf16.msra.mxu0 0
    %947 = vmatprep.subr.bf16.mxu0 0
    %948 = vmatpush2.bf16.msra.mxu0 0
    %949 = vmatprep.subr.bf16.mxu0 0
    %950 = vmatpush2.bf16.msra.mxu0 0
    %951 = vmatprep.subr.bf16.mxu0 0
    %952 = vmatpush2.bf16.msra.mxu0 0
    %953 = vmatprep.subr.bf16.mxu0 0
    %954 = vmatpush2.bf16.msra.mxu0 0
    %955 = vmatprep.subr.bf16.mxu0 0
    %956 = vmatpush2.bf16.msra.mxu0 0
    %957 = vmatprep.subr.bf16.mxu0 0
    %958 = vmatpush2.bf16.msra.mxu0 0
    %959 = vmatprep.mubr.bf16.mxu0 0
    %960 = vmatmul.mubr.bf16.gmra.mxu0 %v921
    %v961 = vpop.f32.mrf.mxu0
    %v962 = vadd.f32 0.0, %v961
    %v963 = vpop.f32.mrf.mxu0
    %v964 = vadd.f32 0.0, %v963
    %v965 = vpop.f32.mrf.mxu0
    %v966 = vpop.f32.mrf.mxu0
    %967 = vdwg.mxu0
    %968 = vmatprep.subr.bf16.mxu0 %v680
    %969 = vmatpush1.bf16.msra.mxu0 %v679
    %970 = vmatprep.subr.bf16.mxu0 %v676
    %971 = vmatpush1.bf16.msra.mxu0 %v675
    %972 = vmatprep.subr.bf16.mxu0 %v672
    %973 = vmatpush1.bf16.msra.mxu0 %v671
    %974 = vmatprep.subr.bf16.mxu0 %v668
    %975 = vmatpush1.bf16.msra.mxu0 %v667
    %976 = vmatprep.subr.bf16.mxu0 %v664
    %977 = vmatpush1.bf16.msra.mxu0 %v663
    %978 = vmatprep.subr.bf16.mxu0 %v660
    %979 = vmatpush1.bf16.msra.mxu0 %v659
    %980 = vmatprep.subr.bf16.mxu0 %v656
    %981 = vmatpush1.bf16.msra.mxu0 %v655
    %982 = vmatprep.subr.bf16.mxu0 %v652
    %983 = vmatpush1.bf16.msra.mxu0 %v651
    %984 = vmatprep.subr.bf16.mxu0 0
    %985 = vmatpush2.bf16.msra.mxu0 0
    %986 = vmatprep.subr.bf16.mxu0 0
    %987 = vmatpush2.bf16.msra.mxu0 0
    %988 = vmatprep.subr.bf16.mxu0 0
    %989 = vmatpush2.bf16.msra.mxu0 0
    %990 = vmatprep.subr.bf16.mxu0 0
    %991 = vmatpush2.bf16.msra.mxu0 0
    %992 = vmatprep.subr.bf16.mxu0 0
    %993 = vmatpush2.bf16.msra.mxu0 0
    %994 = vmatprep.subr.bf16.mxu0 0
    %995 = vmatpush2.bf16.msra.mxu0 0
    %996 = vmatprep.subr.bf16.mxu0 0
    %997 = vmatpush2.bf16.msra.mxu0 0
    %998 = vmatprep.subr.bf16.mxu0 0
    %999 = vmatpush2.bf16.msra.mxu0 0
    %1000 = vmatprep.mubr.bf16.mxu0 0
    %1001 = vmatmul.mubr.bf16.gmra.mxu0 %v921
    %v1002 = vpop.f32.mrf.mxu0
    %v1003 = vadd.f32 0.0, %v1002
    %v1004 = vpop.f32.mrf.mxu0
    %v1005 = vadd.f32 0.0, %v1004
    %v1006 = vpop.f32.mrf.mxu0
    %v1007 = vpop.f32.mrf.mxu0
    %1008 = vdwg.mxu0
    %v1009 = vadd.f32 %v923, %v962
    %v1010 = vadd.f32 %v924, %v964
    %v1011 = vadd.f32 %v925, %v1003
    %v1012 = vadd.f32 %v926, %v1005
    %v1013 = vtanh.pop %v1009
    %v1014 = vtanh.pop %v1010
    %v1015 = vtanh.pop %v1011
    %v1016 = vtanh.pop %v1012
    %v1017 = vadd.f32 %v1013, 1.0
    %v1018 = vmul.f32 %v1017, 0.5
    %v1019 = vadd.f32 %v1014, 1.0
    %v1020 = vmul.f32 %v1019, 0.5
    %v1021 = vadd.f32 %v1016, 1.0
    %v1022 = vmul.f32 %v1021, 0.5
    %v1023 = vmul.f32 %v1020, %v918
    %v1024 = vmul.f32 %v1018, %v1015
    %v1025 = vadd.f32 %v1023, %v1024
    %v1026 = vtanh.pop %v1025
    %v1027 = vmul.f32 %v1022, %v1026
    %v1028 = vpack.c.bf16 %v1027, %v1027
    %1029 = vst [vmem:[#allocation2 + $0x8] sm:$0xf] %v1028
    %v1030 = vld [vmem:[#allocation3 + $0x60] sm:$0xff]
    %v1031 = vld [vmem:[#allocation3 + $0x68] sm:$0xff]
    %v1032 = vld [vmem:[#allocation3 + $0x70] sm:$0xff]
    %v1033 = vld [vmem:[#allocation3 + $0x78] sm:$0xff]
    %1034 = vmatprep.subr.bf16.mxu0 %v678
    %1035 = vmatpush1.bf16.msra.mxu0 %v677
    %1036 = vmatprep.subr.bf16.mxu0 %v674
    %1037 = vmatpush1.bf16.msra.mxu0 %v673
    %1038 = vmatprep.subr.bf16.mxu0 %v670
    %1039 = vmatpush1.bf16.msra.mxu0 %v669
    %1040 = vmatprep.subr.bf16.mxu0 %v666
    %1041 = vmatpush1.bf16.msra.mxu0 %v665
    %1042 = vmatprep.subr.bf16.mxu0 %v662
    %1043 = vmatpush1.bf16.msra.mxu0 %v661
    %1044 = vmatprep.subr.bf16.mxu0 %v658
    %1045 = vmatpush1.bf16.msra.mxu0 %v657
    %1046 = vmatprep.subr.bf16.mxu0 %v654
    %1047 = vmatpush1.bf16.msra.mxu0 %v653
    %1048 = vmatprep.subr.bf16.mxu0 %v650
    %1049 = vmatpush1.bf16.msra.mxu0 %v649
    %1050 = vmatprep.subr.bf16.mxu0 0
    %1051 = vmatpush2.bf16.msra.mxu0 0
    %1052 = vmatprep.subr.bf16.mxu0 0
    %1053 = vmatpush2.bf16.msra.mxu0 0
    %1054 = vmatprep.subr.bf16.mxu0 0
    %1055 = vmatpush2.bf16.msra.mxu0 0
    %1056 = vmatprep.subr.bf16.mxu0 0
    %1057 = vmatpush2.bf16.msra.mxu0 0
    %1058 = vmatprep.subr.bf16.mxu0 0
    %1059 = vmatpush2.bf16.msra.mxu0 0
    %1060 = vmatprep.subr.bf16.mxu0 0
    %1061 = vmatpush2.bf16.msra.mxu0 0
    %1062 = vmatprep.subr.bf16.mxu0 0
    %1063 = vmatpush2.bf16.msra.mxu0 0
    %1064 = vmatprep.subr.bf16.mxu0 0
    %1065 = vmatpush2.bf16.msra.mxu0 0
    %1066 = vmatprep.mubr.bf16.mxu0 0
    %1067 = vmatmul.mubr.bf16.gmra.mxu0 %v1028
    %v1068 = vpop.f32.mrf.mxu0
    %v1069 = vadd.f32 0.0, %v1068
    %v1070 = vpop.f32.mrf.mxu0
    %v1071 = vadd.f32 0.0, %v1070
    %v1072 = vpop.f32.mrf.mxu0
    %v1073 = vpop.f32.mrf.mxu0
    %1074 = vdwg.mxu0
    %1075 = vmatprep.subr.bf16.mxu0 %v680
    %1076 = vmatpush1.bf16.msra.mxu0 %v679
    %1077 = vmatprep.subr.bf16.mxu0 %v676
    %1078 = vmatpush1.bf16.msra.mxu0 %v675
    %1079 = vmatprep.subr.bf16.mxu0 %v672
    %1080 = vmatpush1.bf16.msra.mxu0 %v671
    %1081 = vmatprep.subr.bf16.mxu0 %v668
    %1082 = vmatpush1.bf16.msra.mxu0 %v667
    %1083 = vmatprep.subr.bf16.mxu0 %v664
    %1084 = vmatpush1.bf16.msra.mxu0 %v663
    %1085 = vmatprep.subr.bf16.mxu0 %v660
    %1086 = vmatpush1.bf16.msra.mxu0 %v659
    %1087 = vmatprep.subr.bf16.mxu0 %v656
    %1088 = vmatpush1.bf16.msra.mxu0 %v655
    %1089 = vmatprep.subr.bf16.mxu0 %v652
    %1090 = vmatpush1.bf16.msra.mxu0 %v651
    %1091 = vmatprep.subr.bf16.mxu0 0
    %1092 = vmatpush2.bf16.msra.mxu0 0
    %1093 = vmatprep.subr.bf16.mxu0 0
    %1094 = vmatpush2.bf16.msra.mxu0 0
    %1095 = vmatprep.subr.bf16.mxu0 0
    %1096 = vmatpush2.bf16.msra.mxu0 0
    %1097 = vmatprep.subr.bf16.mxu0 0
    %1098 = vmatpush2.bf16.msra.mxu0 0
    %1099 = vmatprep.subr.bf16.mxu0 0
    %1100 = vmatpush2.bf16.msra.mxu0 0
    %1101 = vmatprep.subr.bf16.mxu0 0
    %1102 = vmatpush2.bf16.msra.mxu0 0
    %1103 = vmatprep.subr.bf16.mxu0 0
    %1104 = vmatpush2.bf16.msra.mxu0 0
    %1105 = vmatprep.subr.bf16.mxu0 0
    %1106 = vmatpush2.bf16.msra.mxu0 0
    %1107 = vmatprep.mubr.bf16.mxu0 0
    %1108 = vmatmul.mubr.bf16.gmra.mxu0 %v1028
    %v1109 = vpop.f32.mrf.mxu0
    %v1110 = vadd.f32 0.0, %v1109
    %v1111 = vpop.f32.mrf.mxu0
    %v1112 = vadd.f32 0.0, %v1111
    %v1113 = vpop.f32.mrf.mxu0
    %v1114 = vpop.f32.mrf.mxu0
    %1115 = vdwg.mxu0
    %v1116 = vadd.f32 %v1030, %v1069
    %v1117 = vadd.f32 %v1031, %v1071
    %v1118 = vadd.f32 %v1032, %v1110
    %v1119 = vadd.f32 %v1033, %v1112
    %v1120 = vtanh.pop %v1116
    %v1121 = vtanh.pop %v1117
    %v1122 = vtanh.pop %v1118
    %v1123 = vtanh.pop %v1119
    %v1124 = vadd.f32 %v1120, 1.0
    %v1125 = vmul.f32 %v1124, 0.5
    %v1126 = vadd.f32 %v1121, 1.0
    %v1127 = vmul.f32 %v1126, 0.5
    %v1128 = vadd.f32 %v1123, 1.0
    %v1129 = vmul.f32 %v1128, 0.5
    %v1130 = vmul.f32 %v1127, %v1025
    %v1131 = vmul.f32 %v1125, %v1122
    %v1132 = vadd.f32 %v1130, %v1131
    %v1133 = vtanh.pop %v1132
    %v1134 = vmul.f32 %v1129, %v1133
    %v1135 = vpack.c.bf16 %v1134, %v1134
    %1136 = vst [vmem:[#allocation2 + $0xc] sm:$0xf] %v1135
    %v1137 = vld [vmem:[#allocation3 + $0x80] sm:$0xff]
    %v1138 = vld [vmem:[#allocation3 + $0x88] sm:$0xff]
    %v1139 = vld [vmem:[#allocation3 + $0x90] sm:$0xff]
    %v1140 = vld [vmem:[#allocation3 + $0x98] sm:$0xff]
    %1141 = vmatprep.subr.bf16.mxu0 %v678
    %1142 = vmatpush1.bf16.msra.mxu0 %v677
    %1143 = vmatprep.subr.bf16.mxu0 %v674
    %1144 = vmatpush1.bf16.msra.mxu0 %v673
    %1145 = vmatprep.subr.bf16.mxu0 %v670
    %1146 = vmatpush1.bf16.msra.mxu0 %v669
    %1147 = vmatprep.subr.bf16.mxu0 %v666
    %1148 = vmatpush1.bf16.msra.mxu0 %v665
    %1149 = vmatprep.subr.bf16.mxu0 %v662
    %1150 = vmatpush1.bf16.msra.mxu0 %v661
    %1151 = vmatprep.subr.bf16.mxu0 %v658
    %1152 = vmatpush1.bf16.msra.mxu0 %v657
    %1153 = vmatprep.subr.bf16.mxu0 %v654
    %1154 = vmatpush1.bf16.msra.mxu0 %v653
    %1155 = vmatprep.subr.bf16.mxu0 %v650
    %1156 = vmatpush1.bf16.msra.mxu0 %v649
    %1157 = vmatprep.subr.bf16.mxu0 0
    %1158 = vmatpush2.bf16.msra.mxu0 0
    %1159 = vmatprep.subr.bf16.mxu0 0
    %1160 = vmatpush2.bf16.msra.mxu0 0
    %1161 = vmatprep.subr.bf16.mxu0 0
    %1162 = vmatpush2.bf16.msra.mxu0 0
    %1163 = vmatprep.subr.bf16.mxu0 0
    %1164 = vmatpush2.bf16.msra.mxu0 0
    %1165 = vmatprep.subr.bf16.mxu0 0
    %1166 = vmatpush2.bf16.msra.mxu0 0
    %1167 = vmatprep.subr.bf16.mxu0 0
    %1168 = vmatpush2.bf16.msra.mxu0 0
    %1169 = vmatprep.subr.bf16.mxu0 0
    %1170 = vmatpush2.bf16.msra.mxu0 0
    %1171 = vmatprep.subr.bf16.mxu0 0
    %1172 = vmatpush2.bf16.msra.mxu0 0
    %1173 = vmatprep.mubr.bf16.mxu0 0
    %1174 = vmatmul.mubr.bf16.gmra.mxu0 %v1135
    %v1175 = vpop.f32.mrf.mxu0
    %v1176 = vadd.f32 0.0, %v1175
    %v1177 = vpop.f32.mrf.mxu0
    %v1178 = vadd.f32 0.0, %v1177
    %v1179 = vpop.f32.mrf.mxu0
    %v1180 = vpop.f32.mrf.mxu0
    %1181 = vdwg.mxu0
    %1182 = vmatprep.subr.bf16.mxu0 %v680
    %1183 = vmatpush1.bf16.msra.mxu0 %v679
    %1184 = vmatprep.subr.bf16.mxu0 %v676
    %1185 = vmatpush1.bf16.msra.mxu0 %v675
    %1186 = vmatprep.subr.bf16.mxu0 %v672
    %1187 = vmatpush1.bf16.msra.mxu0 %v671
    %1188 = vmatprep.subr.bf16.mxu0 %v668
    %1189 = vmatpush1.bf16.msra.mxu0 %v667
    %1190 = vmatprep.subr.bf16.mxu0 %v664
    %1191 = vmatpush1.bf16.msra.mxu0 %v663
    %1192 = vmatprep.subr.bf16.mxu0 %v660
    %1193 = vmatpush1.bf16.msra.mxu0 %v659
    %1194 = vmatprep.subr.bf16.mxu0 %v656
    %1195 = vmatpush1.bf16.msra.mxu0 %v655
    %1196 = vmatprep.subr.bf16.mxu0 %v652
    %1197 = vmatpush1.bf16.msra.mxu0 %v651
    %1198 = vmatprep.subr.bf16.mxu0 0
    %1199 = vmatpush2.bf16.msra.mxu0 0
    %1200 = vmatprep.subr.bf16.mxu0 0
    %1201 = vmatpush2.bf16.msra.mxu0 0
    %1202 = vmatprep.subr.bf16.mxu0 0
    %1203 = vmatpush2.bf16.msra.mxu0 0
    %1204 = vmatprep.subr.bf16.mxu0 0
    %1205 = vmatpush2.bf16.msra.mxu0 0
    %1206 = vmatprep.subr.bf16.mxu0 0
    %1207 = vmatpush2.bf16.msra.mxu0 0
    %1208 = vmatprep.subr.bf16.mxu0 0
    %1209 = vmatpush2.bf16.msra.mxu0 0
    %1210 = vmatprep.subr.bf16.mxu0 0
    %1211 = vmatpush2.bf16.msra.mxu0 0
    %1212 = vmatprep.subr.bf16.mxu0 0
    %1213 = vmatpush2.bf16.msra.mxu0 0
    %1214 = vmatprep.mubr.bf16.mxu0 0
    %1215 = vmatmul.mubr.bf16.gmra.mxu0 %v1135
    %v1216 = vpop.f32.mrf.mxu0
    %v1217 = vadd.f32 0.0, %v1216
    %v1218 = vpop.f32.mrf.mxu0
    %v1219 = vadd.f32 0.0, %v1218
    %v1220 = vpop.f32.mrf.mxu0
    %v1221 = vpop.f32.mrf.mxu0
    %1222 = vdwg.mxu0
    %v1223 = vadd.f32 %v1137, %v1176
    %v1224 = vadd.f32 %v1138, %v1178
    %v1225 = vadd.f32 %v1139, %v1217
    %v1226 = vadd.f32 %v1140, %v1219
    %v1227 = vtanh.pop %v1223
    %v1228 = vtanh.pop %v1224
    %v1229 = vtanh.pop %v1225
    %v1230 = vtanh.pop %v1226
    %v1231 = vadd.f32 %v1227, 1.0
    %v1232 = vmul.f32 %v1231, 0.5
    %v1233 = vadd.f32 %v1228, 1.0
    %v1234 = vmul.f32 %v1233, 0.5
    %v1235 = vadd.f32 %v1230, 1.0
    %v1236 = vmul.f32 %v1235, 0.5
    %v1237 = vmul.f32 %v1234, %v1132
    %v1238 = vmul.f32 %v1232, %v1229
    %v1239 = vadd.f32 %v1237, %v1238
    %v1240 = vtanh.pop %v1239
    %v1241 = vmul.f32 %v1236, %v1240
    %v1242 = vpack.c.bf16 %v1241, %v1241
    %1243 = vst [vmem:[#allocation2 + $0x10] sm:$0xf] %v1242
    %v1244 = vld [vmem:[#allocation3 + $0xa0] sm:$0xff]
    %v1245 = vld [vmem:[#allocation3 + $0xa8] sm:$0xff]
    %v1246 = vld [vmem:[#allocation3 + $0xb0] sm:$0xff]
    %v1247 = vld [vmem:[#allocation3 + $0xb8] sm:$0xff]
    %1248 = vmatprep.subr.bf16.mxu0 %v678
    %1249 = vmatpush1.bf16.msra.mxu0 %v677
    %1250 = vmatprep.subr.bf16.mxu0 %v674
    %1251 = vmatpush1.bf16.msra.mxu0 %v673
    %1252 = vmatprep.subr.bf16.mxu0 %v670
    %1253 = vmatpush1.bf16.msra.mxu0 %v669
    %1254 = vmatprep.subr.bf16.mxu0 %v666
    %1255 = vmatpush1.bf16.msra.mxu0 %v665
    %1256 = vmatprep.subr.bf16.mxu0 %v662
    %1257 = vmatpush1.bf16.msra.mxu0 %v661
    %1258 = vmatprep.subr.bf16.mxu0 %v658
    %1259 = vmatpush1.bf16.msra.mxu0 %v657
    %1260 = vmatprep.subr.bf16.mxu0 %v654
    %1261 = vmatpush1.bf16.msra.mxu0 %v653
    %1262 = vmatprep.subr.bf16.mxu0 %v650
    %1263 = vmatpush1.bf16.msra.mxu0 %v649
    %1264 = vmatprep.subr.bf16.mxu0 0
    %1265 = vmatpush2.bf16.msra.mxu0 0
    %1266 = vmatprep.subr.bf16.mxu0 0
    %1267 = vmatpush2.bf16.msra.mxu0 0
    %1268 = vmatprep.subr.bf16.mxu0 0
    %1269 = vmatpush2.bf16.msra.mxu0 0
    %1270 = vmatprep.subr.bf16.mxu0 0
    %1271 = vmatpush2.bf16.msra.mxu0 0
    %1272 = vmatprep.subr.bf16.mxu0 0
    %1273 = vmatpush2.bf16.msra.mxu0 0
    %1274 = vmatprep.subr.bf16.mxu0 0
    %1275 = vmatpush2.bf16.msra.mxu0 0
    %1276 = vmatprep.subr.bf16.mxu0 0
    %1277 = vmatpush2.bf16.msra.mxu0 0
    %1278 = vmatprep.subr.bf16.mxu0 0
    %1279 = vmatpush2.bf16.msra.mxu0 0
    %1280 = vmatprep.mubr.bf16.mxu0 0
    %1281 = vmatmul.mubr.bf16.gmra.mxu0 %v1242
    %v1282 = vpop.f32.mrf.mxu0
    %v1283 = vadd.f32 0.0, %v1282
    %v1284 = vpop.f32.mrf.mxu0
    %v1285 = vadd.f32 0.0, %v1284
    %v1286 = vpop.f32.mrf.mxu0
    %v1287 = vpop.f32.mrf.mxu0
    %1288 = vdwg.mxu0
    %1289 = vmatprep.subr.bf16.mxu0 %v680
    %1290 = vmatpush1.bf16.msra.mxu0 %v679
    %1291 = vmatprep.subr.bf16.mxu0 %v676
    %1292 = vmatpush1.bf16.msra.mxu0 %v675
    %1293 = vmatprep.subr.bf16.mxu0 %v672
    %1294 = vmatpush1.bf16.msra.mxu0 %v671
    %1295 = vmatprep.subr.bf16.mxu0 %v668
    %1296 = vmatpush1.bf16.msra.mxu0 %v667
    %1297 = vmatprep.subr.bf16.mxu0 %v664
    %1298 = vmatpush1.bf16.msra.mxu0 %v663
    %1299 = vmatprep.subr.bf16.mxu0 %v660
    %1300 = vmatpush1.bf16.msra.mxu0 %v659
    %1301 = vmatprep.subr.bf16.mxu0 %v656
    %1302 = vmatpush1.bf16.msra.mxu0 %v655
    %1303 = vmatprep.subr.bf16.mxu0 %v652
    %1304 = vmatpush1.bf16.msra.mxu0 %v651
    %1305 = vmatprep.subr.bf16.mxu0 0
    %1306 = vmatpush2.bf16.msra.mxu0 0
    %1307 = vmatprep.subr.bf16.mxu0 0
    %1308 = vmatpush2.bf16.msra.mxu0 0
    %1309 = vmatprep.subr.bf16.mxu0 0
    %1310 = vmatpush2.bf16.msra.mxu0 0
    %1311 = vmatprep.subr.bf16.mxu0 0
    %1312 = vmatpush2.bf16.msra.mxu0 0
    %1313 = vmatprep.subr.bf16.mxu0 0
    %1314 = vmatpush2.bf16.msra.mxu0 0
    %1315 = vmatprep.subr.bf16.mxu0 0
    %1316 = vmatpush2.bf16.msra.mxu0 0
    %1317 = vmatprep.subr.bf16.mxu0 0
    %1318 = vmatpush2.bf16.msra.mxu0 0
    %1319 = vmatprep.subr.bf16.mxu0 0
    %1320 = vmatpush2.bf16.msra.mxu0 0
    %1321 = vmatprep.mubr.bf16.mxu0 0
    %1322 = vmatmul.mubr.bf16.gmra.mxu0 %v1242
    %v1323 = vpop.f32.mrf.mxu0
    %v1324 = vadd.f32 0.0, %v1323
    %v1325 = vpop.f32.mrf.mxu0
    %v1326 = vadd.f32 0.0, %v1325
    %v1327 = vpop.f32.mrf.mxu0
    %v1328 = vpop.f32.mrf.mxu0
    %1329 = vdwg.mxu0
    %v1330 = vadd.f32 %v1244, %v1283
    %v1331 = vadd.f32 %v1245, %v1285
    %v1332 = vadd.f32 %v1246, %v1324
    %v1333 = vadd.f32 %v1247, %v1326
    %v1334 = vtanh.pop %v1330
    %v1335 = vtanh.pop %v1331
    %v1336 = vtanh.pop %v1332
    %v1337 = vtanh.pop %v1333
    %v1338 = vadd.f32 %v1334, 1.0
    %v1339 = vmul.f32 %v1338, 0.5
    %v1340 = vadd.f32 %v1335, 1.0
    %v1341 = vmul.f32 %v1340, 0.5
    %v1342 = vadd.f32 %v1337, 1.0
    %v1343 = vmul.f32 %v1342, 0.5
    %v1344 = vmul.f32 %v1341, %v1239
    %v1345 = vmul.f32 %v1339, %v1336
    %v1346 = vadd.f32 %v1344, %v1345
    %v1347 = vtanh.pop %v1346
    %v1348 = vmul.f32 %v1343, %v1347
    %v1349 = vpack.c.bf16 %v1348, %v1348
    %1350 = vst [vmem:[#allocation2 + $0x14] sm:$0xf] %v1349
    %v1351 = vld [vmem:[#allocation3 + $0xc0] sm:$0xff]
    %v1352 = vld [vmem:[#allocation3 + $0xc8] sm:$0xff]
    %v1353 = vld [vmem:[#allocation3 + $0xd0] sm:$0xff]
    %v1354 = vld [vmem:[#allocation3 + $0xd8] sm:$0xff]
    %1355 = vmatprep.subr.bf16.mxu0 %v678
    %1356 = vmatpush1.bf16.msra.mxu0 %v677
    %1357 = vmatprep.subr.bf16.mxu0 %v674
    %1358 = vmatpush1.bf16.msra.mxu0 %v673
    %1359 = vmatprep.subr.bf16.mxu0 %v670
    %1360 = vmatpush1.bf16.msra.mxu0 %v669
    %1361 = vmatprep.subr.bf16.mxu0 %v666
    %1362 = vmatpush1.bf16.msra.mxu0 %v665
    %1363 = vmatprep.subr.bf16.mxu0 %v662
    %1364 = vmatpush1.bf16.msra.mxu0 %v661
    %1365 = vmatprep.subr.bf16.mxu0 %v658
    %1366 = vmatpush1.bf16.msra.mxu0 %v657
    %1367 = vmatprep.subr.bf16.mxu0 %v654
    %1368 = vmatpush1.bf16.msra.mxu0 %v653
    %1369 = vmatprep.subr.bf16.mxu0 %v650
    %1370 = vmatpush1.bf16.msra.mxu0 %v649
    %1371 = vmatprep.subr.bf16.mxu0 0
    %1372 = vmatpush2.bf16.msra.mxu0 0
    %1373 = vmatprep.subr.bf16.mxu0 0
    %1374 = vmatpush2.bf16.msra.mxu0 0
    %1375 = vmatprep.subr.bf16.mxu0 0
    %1376 = vmatpush2.bf16.msra.mxu0 0
    %1377 = vmatprep.subr.bf16.mxu0 0
    %1378 = vmatpush2.bf16.msra.mxu0 0
    %1379 = vmatprep.subr.bf16.mxu0 0
    %1380 = vmatpush2.bf16.msra.mxu0 0
    %1381 = vmatprep.subr.bf16.mxu0 0
    %1382 = vmatpush2.bf16.msra.mxu0 0
    %1383 = vmatprep.subr.bf16.mxu0 0
    %1384 = vmatpush2.bf16.msra.mxu0 0
    %1385 = vmatprep.subr.bf16.mxu0 0
    %1386 = vmatpush2.bf16.msra.mxu0 0
    %1387 = vmatprep.mubr.bf16.mxu0 0
    %1388 = vmatmul.mubr.bf16.gmra.mxu0 %v1349
    %v1389 = vpop.f32.mrf.mxu0
    %v1390 = vadd.f32 0.0, %v1389
    %v1391 = vpop.f32.mrf.mxu0
    %v1392 = vadd.f32 0.0, %v1391
    %v1393 = vpop.f32.mrf.mxu0
    %v1394 = vpop.f32.mrf.mxu0
    %1395 = vdwg.mxu0
    %1396 = vmatprep.subr.bf16.mxu0 %v680
    %1397 = vmatpush1.bf16.msra.mxu0 %v679
    %1398 = vmatprep.subr.bf16.mxu0 %v676
    %1399 = vmatpush1.bf16.msra.mxu0 %v675
    %1400 = vmatprep.subr.bf16.mxu0 %v672
    %1401 = vmatpush1.bf16.msra.mxu0 %v671
    %1402 = vmatprep.subr.bf16.mxu0 %v668
    %1403 = vmatpush1.bf16.msra.mxu0 %v667
    %1404 = vmatprep.subr.bf16.mxu0 %v664
    %1405 = vmatpush1.bf16.msra.mxu0 %v663
    %1406 = vmatprep.subr.bf16.mxu0 %v660
    %1407 = vmatpush1.bf16.msra.mxu0 %v659
    %1408 = vmatprep.subr.bf16.mxu0 %v656
    %1409 = vmatpush1.bf16.msra.mxu0 %v655
    %1410 = vmatprep.subr.bf16.mxu0 %v652
    %1411 = vmatpush1.bf16.msra.mxu0 %v651
    %1412 = vmatprep.subr.bf16.mxu0 0
    %1413 = vmatpush2.bf16.msra.mxu0 0
    %1414 = vmatprep.subr.bf16.mxu0 0
    %1415 = vmatpush2.bf16.msra.mxu0 0
    %1416 = vmatprep.subr.bf16.mxu0 0
    %1417 = vmatpush2.bf16.msra.mxu0 0
    %1418 = vmatprep.subr.bf16.mxu0 0
    %1419 = vmatpush2.bf16.msra.mxu0 0
    %1420 = vmatprep.subr.bf16.mxu0 0
    %1421 = vmatpush2.bf16.msra.mxu0 0
    %1422 = vmatprep.subr.bf16.mxu0 0
    %1423 = vmatpush2.bf16.msra.mxu0 0
    %1424 = vmatprep.subr.bf16.mxu0 0
    %1425 = vmatpush2.bf16.msra.mxu0 0
    %1426 = vmatprep.subr.bf16.mxu0 0
    %1427 = vmatpush2.bf16.msra.mxu0 0
    %1428 = vmatprep.mubr.bf16.mxu0 0
    %1429 = vmatmul.mubr.bf16.gmra.mxu0 %v1349
    %v1430 = vpop.f32.mrf.mxu0
    %v1431 = vadd.f32 0.0, %v1430
    %v1432 = vpop.f32.mrf.mxu0
    %v1433 = vadd.f32 0.0, %v1432
    %v1434 = vpop.f32.mrf.mxu0
    %v1435 = vpop.f32.mrf.mxu0
    %1436 = vdwg.mxu0
    %v1437 = vadd.f32 %v1351, %v1390
    %v1438 = vadd.f32 %v1352, %v1392
    %v1439 = vadd.f32 %v1353, %v1431
    %v1440 = vadd.f32 %v1354, %v1433
    %v1441 = vtanh.pop %v1437
    %v1442 = vtanh.pop %v1438
    %v1443 = vtanh.pop %v1439
    %v1444 = vtanh.pop %v1440
    %v1445 = vadd.f32 %v1441, 1.0
    %v1446 = vmul.f32 %v1445, 0.5
    %v1447 = vadd.f32 %v1442, 1.0
    %v1448 = vmul.f32 %v1447, 0.5
    %v1449 = vadd.f32 %v1444, 1.0
    %v1450 = vmul.f32 %v1449, 0.5
    %v1451 = vmul.f32 %v1448, %v1346
    %v1452 = vmul.f32 %v1446, %v1443
    %v1453 = vadd.f32 %v1451, %v1452
    %v1454 = vtanh.pop %v1453
    %v1455 = vmul.f32 %v1450, %v1454
    %v1456 = vpack.c.bf16 %v1455, %v1455
    %1457 = vst [vmem:[#allocation2 + $0x18] sm:$0xf] %v1456
    %v1458 = vld [vmem:[#allocation3 + $0xe0] sm:$0xff]
    %v1459 = vld [vmem:[#allocation3 + $0xe8] sm:$0xff]
    %v1460 = vld [vmem:[#allocation3 + $0xf0] sm:$0xff]
    %v1461 = vld [vmem:[#allocation3 + $0xf8] sm:$0xff]
    %1462 = vmatprep.subr.bf16.mxu0 %v678
    %1463 = vmatpush1.bf16.msra.mxu0 %v677
    %1464 = vmatprep.subr.bf16.mxu0 %v674
    %1465 = vmatpush1.bf16.msra.mxu0 %v673
    %1466 = vmatprep.subr.bf16.mxu0 %v670
    %1467 = vmatpush1.bf16.msra.mxu0 %v669
    %1468 = vmatprep.subr.bf16.mxu0 %v666
    %1469 = vmatpush1.bf16.msra.mxu0 %v665
    %1470 = vmatprep.subr.bf16.mxu0 %v662
    %1471 = vmatpush1.bf16.msra.mxu0 %v661
    %1472 = vmatprep.subr.bf16.mxu0 %v658
    %1473 = vmatpush1.bf16.msra.mxu0 %v657
    %1474 = vmatprep.subr.bf16.mxu0 %v654
    %1475 = vmatpush1.bf16.msra.mxu0 %v653
    %1476 = vmatprep.subr.bf16.mxu0 %v650
    %1477 = vmatpush1.bf16.msra.mxu0 %v649
    %1478 = vmatprep.subr.bf16.mxu0 0
    %1479 = vmatpush2.bf16.msra.mxu0 0
    %1480 = vmatprep.subr.bf16.mxu0 0
    %1481 = vmatpush2.bf16.msra.mxu0 0
    %1482 = vmatprep.subr.bf16.mxu0 0
    %1483 = vmatpush2.bf16.msra.mxu0 0
    %1484 = vmatprep.subr.bf16.mxu0 0
    %1485 = vmatpush2.bf16.msra.mxu0 0
    %1486 = vmatprep.subr.bf16.mxu0 0
    %1487 = vmatpush2.bf16.msra.mxu0 0
    %1488 = vmatprep.subr.bf16.mxu0 0
    %1489 = vmatpush2.bf16.msra.mxu0 0
    %1490 = vmatprep.subr.bf16.mxu0 0
    %1491 = vmatpush2.bf16.msra.mxu0 0
    %1492 = vmatprep.subr.bf16.mxu0 0
    %1493 = vmatpush2.bf16.msra.mxu0 0
    %1494 = vmatprep.mubr.bf16.mxu0 0
    %1495 = vmatmul.mubr.bf16.gmra.mxu0 %v1456
    %v1496 = vpop.f32.mrf.mxu0
    %v1497 = vadd.f32 0.0, %v1496
    %v1498 = vpop.f32.mrf.mxu0
    %v1499 = vadd.f32 0.0, %v1498
    %v1500 = vpop.f32.mrf.mxu0
    %v1501 = vpop.f32.mrf.mxu0
    %1502 = vdwg.mxu0
    %1503 = vmatprep.subr.bf16.mxu0 %v680
    %1504 = vmatpush1.bf16.msra.mxu0 %v679
    %1505 = vmatprep.subr.bf16.mxu0 %v676
    %1506 = vmatpush1.bf16.msra.mxu0 %v675
    %1507 = vmatprep.subr.bf16.mxu0 %v672
    %1508 = vmatpush1.bf16.msra.mxu0 %v671
    %1509 = vmatprep.subr.bf16.mxu0 %v668
    %1510 = vmatpush1.bf16.msra.mxu0 %v667
    %1511 = vmatprep.subr.bf16.mxu0 %v664
    %1512 = vmatpush1.bf16.msra.mxu0 %v663
    %1513 = vmatprep.subr.bf16.mxu0 %v660
    %1514 = vmatpush1.bf16.msra.mxu0 %v659
    %1515 = vmatprep.subr.bf16.mxu0 %v656
    %1516 = vmatpush1.bf16.msra.mxu0 %v655
    %1517 = vmatprep.subr.bf16.mxu0 %v652
    %1518 = vmatpush1.bf16.msra.mxu0 %v651
    %1519 = vmatprep.subr.bf16.mxu0 0
    %1520 = vmatpush2.bf16.msra.mxu0 0
    %1521 = vmatprep.subr.bf16.mxu0 0
    %1522 = vmatpush2.bf16.msra.mxu0 0
    %1523 = vmatprep.subr.bf16.mxu0 0
    %1524 = vmatpush2.bf16.msra.mxu0 0
    %1525 = vmatprep.subr.bf16.mxu0 0
    %1526 = vmatpush2.bf16.msra.mxu0 0
    %1527 = vmatprep.subr.bf16.mxu0 0
    %1528 = vmatpush2.bf16.msra.mxu0 0
    %1529 = vmatprep.subr.bf16.mxu0 0
    %1530 = vmatpush2.bf16.msra.mxu0 0
    %1531 = vmatprep.subr.bf16.mxu0 0
    %1532 = vmatpush2.bf16.msra.mxu0 0
    %1533 = vmatprep.subr.bf16.mxu0 0
    %1534 = vmatpush2.bf16.msra.mxu0 0
    %1535 = vmatprep.mubr.bf16.mxu0 0
    %1536 = vmatmul.mubr.bf16.gmra.mxu0 %v1456
    %v1537 = vpop.f32.mrf.mxu0
    %v1538 = vadd.f32 0.0, %v1537
    %v1539 = vpop.f32.mrf.mxu0
    %v1540 = vadd.f32 0.0, %v1539
    %v1541 = vpop.f32.mrf.mxu0
    %v1542 = vpop.f32.mrf.mxu0
    %1543 = vdwg.mxu0
    %v1544 = vadd.f32 %v1458, %v1497
    %v1545 = vadd.f32 %v1459, %v1499
    %v1546 = vadd.f32 %v1460, %v1538
    %v1547 = vadd.f32 %v1461, %v1540
    %v1548 = vtanh.pop %v1544
    %v1549 = vtanh.pop %v1545
    %v1550 = vtanh.pop %v1546
    %v1551 = vtanh.pop %v1547
    %v1552 = vadd.f32 %v1548, 1.0
    %v1553 = vmul.f32 %v1552, 0.5
    %v1554 = vadd.f32 %v1549, 1.0
    %v1555 = vmul.f32 %v1554, 0.5
    %v1556 = vadd.f32 %v1551, 1.0
    %v1557 = vmul.f32 %v1556, 0.5
    %v1558 = vmul.f32 %v1555, %v1453
    %v1559 = vmul.f32 %v1553, %v1550
    %v1560 = vadd.f32 %v1558, %v1559
    %v1561 = vtanh.pop %v1560
    %v1562 = vmul.f32 %v1557, %v1561
    %v1563 = vpack.c.bf16 %v1562, %v1562
    %1564 = vst [vmem:[#allocation2 + $0x1c] sm:$0xf] %v1563
    %s1565 = scalar_lea.vmem [#allocation7], 256
    %v1566 = vld [vmem:[%s1565] sm:$0xff]
    %v1567 = vld [vmem:[%s1565 + $0x8] sm:$0xff]
    %v1568 = vld [vmem:[%s1565 + $0x10] sm:$0xff]
    %v1569 = vld [vmem:[%s1565 + $0x18] sm:$0xff]
    %v1570 = vld [vmem:[%s1565 + $0x20] sm:$0xff]
    %v1571 = vld [vmem:[%s1565 + $0x28] sm:$0xff]
    %v1572 = vld [vmem:[%s1565 + $0x30] sm:$0xff]
    %v1573 = vld [vmem:[%s1565 + $0x38] sm:$0xff]
    %v1574 = vld [vmem:[%s1565 + $0x40] sm:$0xff]
    %v1575 = vld [vmem:[%s1565 + $0x48] sm:$0xff]
    %v1576 = vld [vmem:[%s1565 + $0x50] sm:$0xff]
    %v1577 = vld [vmem:[%s1565 + $0x58] sm:$0xff]
    %v1578 = vld [vmem:[%s1565 + $0x60] sm:$0xff]
    %v1579 = vld [vmem:[%s1565 + $0x68] sm:$0xff]
    %v1580 = vld [vmem:[%s1565 + $0x70] sm:$0xff]
    %v1581 = vld [vmem:[%s1565 + $0x78] sm:$0xff]
    %v1582 = vld [vmem:[%s1565 + $0x80] sm:$0xff]
    %v1583 = vld [vmem:[%s1565 + $0x88] sm:$0xff]
    %v1584 = vld [vmem:[%s1565 + $0x90] sm:$0xff]
    %v1585 = vld [vmem:[%s1565 + $0x98] sm:$0xff]
    %v1586 = vld [vmem:[%s1565 + $0xa0] sm:$0xff]
    %v1587 = vld [vmem:[%s1565 + $0xa8] sm:$0xff]
    %v1588 = vld [vmem:[%s1565 + $0xb0] sm:$0xff]
    %v1589 = vld [vmem:[%s1565 + $0xb8] sm:$0xff]
    %v1590 = vld [vmem:[%s1565 + $0xc0] sm:$0xff]
    %v1591 = vld [vmem:[%s1565 + $0xc8] sm:$0xff]
    %v1592 = vld [vmem:[%s1565 + $0xd0] sm:$0xff]
    %v1593 = vld [vmem:[%s1565 + $0xd8] sm:$0xff]
    %v1594 = vld [vmem:[%s1565 + $0xe0] sm:$0xff]
    %v1595 = vld [vmem:[%s1565 + $0xe8] sm:$0xff]
    %v1596 = vld [vmem:[%s1565 + $0xf0] sm:$0xff]
    %v1597 = vld [vmem:[%s1565 + $0xf8] sm:$0xff]
    %s1598 = scalar_lea.vmem [#allocation9], 256
    %v1599 = vld [vmem:[%s1598] sm:$0xff]
    %v1600 = vld [vmem:[%s1598 + $0x8] sm:$0xff]
    %v1601 = vld [vmem:[%s1598 + $0x10] sm:$0xff]
    %v1602 = vld [vmem:[%s1598 + $0x18] sm:$0xff]
    %v1603 = vld [vmem:[%s1598 + $0x20] sm:$0xff]
    %v1604 = vld [vmem:[%s1598 + $0x28] sm:$0xff]
    %v1605 = vld [vmem:[%s1598 + $0x30] sm:$0xff]
    %v1606 = vld [vmem:[%s1598 + $0x38] sm:$0xff]
    %v1607 = vld [vmem:[%s1598 + $0x40] sm:$0xff]
    %v1608 = vld [vmem:[%s1598 + $0x48] sm:$0xff]
    %v1609 = vld [vmem:[%s1598 + $0x50] sm:$0xff]
    %v1610 = vld [vmem:[%s1598 + $0x58] sm:$0xff]
    %v1611 = vld [vmem:[%s1598 + $0x60] sm:$0xff]
    %v1612 = vld [vmem:[%s1598 + $0x68] sm:$0xff]
    %v1613 = vld [vmem:[%s1598 + $0x70] sm:$0xff]
    %v1614 = vld [vmem:[%s1598 + $0x78] sm:$0xff]
    %v1615 = vld [vmem:[%s1598 + $0x80] sm:$0xff]
    %v1616 = vld [vmem:[%s1598 + $0x88] sm:$0xff]
    %v1617 = vld [vmem:[%s1598 + $0x90] sm:$0xff]
    %v1618 = vld [vmem:[%s1598 + $0x98] sm:$0xff]
    %v1619 = vld [vmem:[%s1598 + $0xa0] sm:$0xff]
    %v1620 = vld [vmem:[%s1598 + $0xa8] sm:$0xff]
    %v1621 = vld [vmem:[%s1598 + $0xb0] sm:$0xff]
    %v1622 = vld [vmem:[%s1598 + $0xb8] sm:$0xff]
    %v1623 = vld [vmem:[%s1598 + $0xc0] sm:$0xff]
    %v1624 = vld [vmem:[%s1598 + $0xc8] sm:$0xff]
    %v1625 = vld [vmem:[%s1598 + $0xd0] sm:$0xff]
    %v1626 = vld [vmem:[%s1598 + $0xd8] sm:$0xff]
    %v1627 = vld [vmem:[%s1598 + $0xe0] sm:$0xff]
    %v1628 = vld [vmem:[%s1598 + $0xe8] sm:$0xff]
    %v1629 = vld [vmem:[%s1598 + $0xf0] sm:$0xff]
    %v1630 = vld [vmem:[%s1598 + $0xf8] sm:$0xff]
    %s1631 = scalar_lea.vmem [#allocation10], 4
    %v1632 = vld [vmem:[%s1631] sm:$0xf]
    %v1633 = vld [vmem:[#allocation2] sm:$0xf]
    %v1634 = vld [vmem:[#allocation2 + $0x4] sm:$0xf]
    %v1635 = vld [vmem:[#allocation2 + $0x8] sm:$0xf]
    %v1636 = vld [vmem:[#allocation2 + $0xc] sm:$0xf]
    %v1637 = vld [vmem:[#allocation2 + $0x10] sm:$0xf]
    %v1638 = vld [vmem:[#allocation2 + $0x14] sm:$0xf]
    %v1639 = vld [vmem:[#allocation2 + $0x18] sm:$0xf]
    %v1640 = vld [vmem:[#allocation2 + $0x1c] sm:$0xf]
    %v1642 = vlaneseq
    %v1643 = vshrl.u32 %v1642, 7
    %v1644 = vsub.s32 0, %v1643
    %v1645 = vrot.slane %v1632, %v1644
    %v1646 = vlaneseq
    %v1647 = vshrl.u32 %v1646, 7
    %v1648 = vsub.s32 1, %v1647
    %v1649 = vrot.slane %v1632, %v1648
    %v1650 = vlaneseq
    %v1651 = vshrl.u32 %v1650, 7
    %v1652 = vsub.s32 2, %v1651
    %v1653 = vrot.slane %v1632, %v1652
    %v1654 = vlaneseq
    %v1655 = vshrl.u32 %v1654, 7
    %v1656 = vsub.s32 3, %v1655
    %v1657 = vrot.slane %v1632, %v1656
    %v1670 = vunpack.c.l.b16 %v1633
    %v1671 = vunpack.c.l.b16 %v1634
    %v1672 = vunpack.c.l.b16 %v1635
    %v1673 = vunpack.c.l.b16 %v1636
    %v1674 = vunpack.c.l.b16 %v1637
    %v1675 = vunpack.c.l.b16 %v1638
    %v1676 = vunpack.c.l.b16 %v1639
    %v1677 = vunpack.c.l.b16 %v1640
    %v1678 = vpack.c.b16 %v1671, %v1670
    %v1679 = vpack.c.b16 %v1673, %v1672
    %v1680 = vpack.c.b16 %v1675, %v1674
    %v1681 = vpack.c.b16 %v1677, %v1676
    %v1718 = vunpack.c.l.b16 %v1566
    %v1719 = vunpack.c.h.b16 %v1566
    %v1720 = vunpack.c.l.b16 %v1567
    %v1721 = vunpack.c.h.b16 %v1567
    %v1722 = vunpack.c.l.b16 %v1568
    %v1723 = vunpack.c.h.b16 %v1568
    %v1724 = vunpack.c.l.b16 %v1569
    %v1725 = vunpack.c.h.b16 %v1569
    %v1726 = vunpack.c.l.b16 %v1570
    %v1727 = vunpack.c.h.b16 %v1570
    %v1728 = vunpack.c.l.b16 %v1571
    %v1729 = vunpack.c.h.b16 %v1571
    %v1730 = vunpack.c.l.b16 %v1572
    %v1731 = vunpack.c.h.b16 %v1572
    %v1732 = vunpack.c.l.b16 %v1573
    %v1733 = vunpack.c.h.b16 %v1573
    %v1734 = vunpack.c.l.b16 %v1574
    %v1735 = vunpack.c.h.b16 %v1574
    %v1736 = vunpack.c.l.b16 %v1575
    %v1737 = vunpack.c.h.b16 %v1575
    %v1738 = vunpack.c.l.b16 %v1576
    %v1739 = vunpack.c.h.b16 %v1576
    %v1740 = vunpack.c.l.b16 %v1577
    %v1741 = vunpack.c.h.b16 %v1577
    %v1742 = vunpack.c.l.b16 %v1578
    %v1743 = vunpack.c.h.b16 %v1578
    %v1744 = vunpack.c.l.b16 %v1579
    %v1745 = vunpack.c.h.b16 %v1579
    %v1746 = vunpack.c.l.b16 %v1580
    %v1747 = vunpack.c.h.b16 %v1580
    %v1748 = vunpack.c.l.b16 %v1581
    %v1749 = vunpack.c.h.b16 %v1581
    %v1750 = vunpack.c.l.b16 %v1582
    %v1751 = vunpack.c.h.b16 %v1582
    %v1752 = vunpack.c.l.b16 %v1583
    %v1753 = vunpack.c.h.b16 %v1583
    %v1754 = vunpack.c.l.b16 %v1584
    %v1755 = vunpack.c.h.b16 %v1584
    %v1756 = vunpack.c.l.b16 %v1585
    %v1757 = vunpack.c.h.b16 %v1585
    %v1758 = vunpack.c.l.b16 %v1586
    %v1759 = vunpack.c.h.b16 %v1586
    %v1760 = vunpack.c.l.b16 %v1587
    %v1761 = vunpack.c.h.b16 %v1587
    %v1762 = vunpack.c.l.b16 %v1588
    %v1763 = vunpack.c.h.b16 %v1588
    %v1764 = vunpack.c.l.b16 %v1589
    %v1765 = vunpack.c.h.b16 %v1589
    %v1766 = vunpack.c.l.b16 %v1590
    %v1767 = vunpack.c.h.b16 %v1590
    %v1768 = vunpack.c.l.b16 %v1591
    %v1769 = vunpack.c.h.b16 %v1591
    %v1770 = vunpack.c.l.b16 %v1592
    %v1771 = vunpack.c.h.b16 %v1592
    %v1772 = vunpack.c.l.b16 %v1593
    %v1773 = vunpack.c.h.b16 %v1593
    %v1774 = vunpack.c.l.b16 %v1594
    %v1775 = vunpack.c.h.b16 %v1594
    %v1776 = vunpack.c.l.b16 %v1595
    %v1777 = vunpack.c.h.b16 %v1595
    %v1778 = vunpack.c.l.b16 %v1596
    %v1779 = vunpack.c.h.b16 %v1596
    %v1780 = vunpack.c.l.b16 %v1597
    %v1781 = vunpack.c.h.b16 %v1597
    %v1782 = vpack.c.b16 %v1722, %v1718
    %v1783 = vpack.c.b16 %v1723, %v1719
    %v1784 = vpack.c.b16 %v1724, %v1720
    %v1785 = vpack.c.b16 %v1725, %v1721
    %v1786 = vpack.c.b16 %v1730, %v1726
    %v1787 = vpack.c.b16 %v1731, %v1727
    %v1788 = vpack.c.b16 %v1732, %v1728
    %v1789 = vpack.c.b16 %v1733, %v1729
    %v1790 = vpack.c.b16 %v1738, %v1734
    %v1791 = vpack.c.b16 %v1739, %v1735
    %v1792 = vpack.c.b16 %v1740, %v1736
    %v1793 = vpack.c.b16 %v1741, %v1737
    %v1794 = vpack.c.b16 %v1746, %v1742
    %v1795 = vpack.c.b16 %v1747, %v1743
    %v1796 = vpack.c.b16 %v1748, %v1744
    %v1797 = vpack.c.b16 %v1749, %v1745
    %v1798 = vpack.c.b16 %v1754, %v1750
    %v1799 = vpack.c.b16 %v1755, %v1751
    %v1800 = vpack.c.b16 %v1756, %v1752
    %v1801 = vpack.c.b16 %v1757, %v1753
    %v1802 = vpack.c.b16 %v1762, %v1758
    %v1803 = vpack.c.b16 %v1763, %v1759
    %v1804 = vpack.c.b16 %v1764, %v1760
    %v1805 = vpack.c.b16 %v1765, %v1761
    %v1806 = vpack.c.b16 %v1770, %v1766
    %v1807 = vpack.c.b16 %v1771, %v1767
    %v1808 = vpack.c.b16 %v1772, %v1768
    %v1809 = vpack.c.b16 %v1773, %v1769
    %v1810 = vpack.c.b16 %v1778, %v1774
    %v1811 = vpack.c.b16 %v1779, %v1775
    %v1812 = vpack.c.b16 %v1780, %v1776
    %v1813 = vpack.c.b16 %v1781, %v1777
    %1846 = vmatprep.subr.bf16.mxu0 %v1811
    %1847 = vmatpush1.bf16.msra.mxu0 %v1810
    %1848 = vmatprep.subr.bf16.mxu0 %v1807
    %1849 = vmatpush1.bf16.msra.mxu0 %v1806
    %1850 = vmatprep.subr.bf16.mxu0 %v1803
    %1851 = vmatpush1.bf16.msra.mxu0 %v1802
    %1852 = vmatprep.subr.bf16.mxu0 %v1799
    %1853 = vmatpush1.bf16.msra.mxu0 %v1798
    %1854 = vmatprep.subr.bf16.mxu0 %v1795
    %1855 = vmatpush1.bf16.msra.mxu0 %v1794
    %1856 = vmatprep.subr.bf16.mxu0 %v1791
    %1857 = vmatpush1.bf16.msra.mxu0 %v1790
    %1858 = vmatprep.subr.bf16.mxu0 %v1787
    %1859 = vmatpush1.bf16.msra.mxu0 %v1786
    %1860 = vmatprep.subr.bf16.mxu0 %v1783
    %1861 = vmatpush1.bf16.msra.mxu0 %v1782
    %1862 = vmatprep.subr.bf16.mxu0 0
    %1863 = vmatpush2.bf16.msra.mxu0 0
    %1864 = vmatprep.subr.bf16.mxu0 0
    %1865 = vmatpush2.bf16.msra.mxu0 0
    %1866 = vmatprep.subr.bf16.mxu0 0
    %1867 = vmatpush2.bf16.msra.mxu0 0
    %1868 = vmatprep.subr.bf16.mxu0 0
    %1869 = vmatpush2.bf16.msra.mxu0 0
    %1870 = vmatprep.subr.bf16.mxu0 0
    %1871 = vmatpush2.bf16.msra.mxu0 0
    %1872 = vmatprep.subr.bf16.mxu0 0
    %1873 = vmatpush2.bf16.msra.mxu0 0
    %1874 = vmatprep.subr.bf16.mxu0 0
    %1875 = vmatpush2.bf16.msra.mxu0 0
    %1876 = vmatprep.subr.bf16.mxu0 0
    %1877 = vmatpush2.bf16.msra.mxu0 0
    %1878 = vmatprep.mubr.bf16.mxu0 0
    %1879 = vmatmul.mubr.bf16.gmra.mxu0 %v1678
    %v1880 = vpop.f32.mrf.mxu0
    %v1881 = vadd.f32 %v1645, %v1880
    %v1882 = vpop.f32.mrf.mxu0
    %v1883 = vadd.f32 %v1649, %v1882
    %v1884 = vpop.f32.mrf.mxu0
    %v1885 = vadd.f32 %v1645, %v1884
    %v1886 = vpop.f32.mrf.mxu0
    %v1887 = vadd.f32 %v1649, %v1886
    %1888 = vmatprep.mubr.bf16.mxu0 0
    %1889 = vmatmul.mubr.bf16.gmra.mxu0 %v1679
    %v1890 = vpop.f32.mrf.mxu0
    %v1891 = vadd.f32 %v1645, %v1890
    %v1892 = vpop.f32.mrf.mxu0
    %v1893 = vadd.f32 %v1649, %v1892
    %v1894 = vpop.f32.mrf.mxu0
    %v1895 = vadd.f32 %v1645, %v1894
    %v1896 = vpop.f32.mrf.mxu0
    %v1897 = vadd.f32 %v1649, %v1896
    %1898 = vmatprep.mubr.bf16.mxu0 0
    %1899 = vmatmul.mubr.bf16.gmra.mxu0 %v1680
    %v1900 = vpop.f32.mrf.mxu0
    %v1901 = vadd.f32 %v1645, %v1900
    %v1902 = vpop.f32.mrf.mxu0
    %v1903 = vadd.f32 %v1649, %v1902
    %v1904 = vpop.f32.mrf.mxu0
    %v1905 = vadd.f32 %v1645, %v1904
    %v1906 = vpop.f32.mrf.mxu0
    %v1907 = vadd.f32 %v1649, %v1906
    %1908 = vmatprep.mubr.bf16.mxu0 0
    %1909 = vmatmul.mubr.bf16.gmra.mxu0 %v1681
    %v1910 = vpop.f32.mrf.mxu0
    %v1911 = vadd.f32 %v1645, %v1910
    %v1912 = vpop.f32.mrf.mxu0
    %v1913 = vadd.f32 %v1649, %v1912
    %v1914 = vpop.f32.mrf.mxu0
    %v1915 = vadd.f32 %v1645, %v1914
    %v1916 = vpop.f32.mrf.mxu0
    %v1917 = vadd.f32 %v1649, %v1916
    %1918 = vdwg.mxu0
    %1919 = vmatprep.subr.bf16.mxu0 %v1813
    %1920 = vmatpush1.bf16.msra.mxu0 %v1812
    %1921 = vmatprep.subr.bf16.mxu0 %v1809
    %1922 = vmatpush1.bf16.msra.mxu0 %v1808
    %1923 = vmatprep.subr.bf16.mxu0 %v1805
    %1924 = vmatpush1.bf16.msra.mxu0 %v1804
    %1925 = vmatprep.subr.bf16.mxu0 %v1801
    %1926 = vmatpush1.bf16.msra.mxu0 %v1800
    %1927 = vmatprep.subr.bf16.mxu0 %v1797
    %1928 = vmatpush1.bf16.msra.mxu0 %v1796
    %1929 = vmatprep.subr.bf16.mxu0 %v1793
    %1930 = vmatpush1.bf16.msra.mxu0 %v1792
    %1931 = vmatprep.subr.bf16.mxu0 %v1789
    %1932 = vmatpush1.bf16.msra.mxu0 %v1788
    %1933 = vmatprep.subr.bf16.mxu0 %v1785
    %1934 = vmatpush1.bf16.msra.mxu0 %v1784
    %1935 = vmatprep.subr.bf16.mxu0 0
    %1936 = vmatpush2.bf16.msra.mxu0 0
    %1937 = vmatprep.subr.bf16.mxu0 0
    %1938 = vmatpush2.bf16.msra.mxu0 0
    %1939 = vmatprep.subr.bf16.mxu0 0
    %1940 = vmatpush2.bf16.msra.mxu0 0
    %1941 = vmatprep.subr.bf16.mxu0 0
    %1942 = vmatpush2.bf16.msra.mxu0 0
    %1943 = vmatprep.subr.bf16.mxu0 0
    %1944 = vmatpush2.bf16.msra.mxu0 0
    %1945 = vmatprep.subr.bf16.mxu0 0
    %1946 = vmatpush2.bf16.msra.mxu0 0
    %1947 = vmatprep.subr.bf16.mxu0 0
    %1948 = vmatpush2.bf16.msra.mxu0 0
    %1949 = vmatprep.subr.bf16.mxu0 0
    %1950 = vmatpush2.bf16.msra.mxu0 0
    %1951 = vmatprep.mubr.bf16.mxu0 0
    %1952 = vmatmul.mubr.bf16.gmra.mxu0 %v1678
    %v1953 = vpop.f32.mrf.mxu0
    %v1954 = vadd.f32 %v1653, %v1953
    %v1955 = vpop.f32.mrf.mxu0
    %v1956 = vadd.f32 %v1657, %v1955
    %v1957 = vpop.f32.mrf.mxu0
    %v1958 = vadd.f32 %v1653, %v1957
    %v1959 = vpop.f32.mrf.mxu0
    %v1960 = vadd.f32 %v1657, %v1959
    %1961 = vmatprep.mubr.bf16.mxu0 0
    %1962 = vmatmul.mubr.bf16.gmra.mxu0 %v1679
    %v1963 = vpop.f32.mrf.mxu0
    %v1964 = vadd.f32 %v1653, %v1963
    %v1965 = vpop.f32.mrf.mxu0
    %v1966 = vadd.f32 %v1657, %v1965
    %v1967 = vpop.f32.mrf.mxu0
    %v1968 = vadd.f32 %v1653, %v1967
    %v1969 = vpop.f32.mrf.mxu0
    %v1970 = vadd.f32 %v1657, %v1969
    %1971 = vmatprep.mubr.bf16.mxu0 0
    %1972 = vmatmul.mubr.bf16.gmra.mxu0 %v1680
    %v1973 = vpop.f32.mrf.mxu0
    %v1974 = vadd.f32 %v1653, %v1973
    %v1975 = vpop.f32.mrf.mxu0
    %v1976 = vadd.f32 %v1657, %v1975
    %v1977 = vpop.f32.mrf.mxu0
    %v1978 = vadd.f32 %v1653, %v1977
    %v1979 = vpop.f32.mrf.mxu0
    %v1980 = vadd.f32 %v1657, %v1979
    %1981 = vmatprep.mubr.bf16.mxu0 0
    %1982 = vmatmul.mubr.bf16.gmra.mxu0 %v1681
    %v1983 = vpop.f32.mrf.mxu0
    %v1984 = vadd.f32 %v1653, %v1983
    %v1985 = vpop.f32.mrf.mxu0
    %v1986 = vadd.f32 %v1657, %v1985
    %v1987 = vpop.f32.mrf.mxu0
    %v1988 = vadd.f32 %v1653, %v1987
    %v1989 = vpop.f32.mrf.mxu0
    %v1990 = vadd.f32 %v1657, %v1989
    %1991 = vdwg.mxu0
    %1992 = vst [vmem:[#allocation3] sm:$0xff] %v1881
    %1993 = vst [vmem:[#allocation3 + $0x8] sm:$0xff] %v1883
    %1994 = vst [vmem:[#allocation3 + $0x10] sm:$0xff] %v1954
    %1995 = vst [vmem:[#allocation3 + $0x18] sm:$0xff] %v1956
    %1996 = vst [vmem:[#allocation3 + $0x20] sm:$0xff] %v1885
    %1997 = vst [vmem:[#allocation3 + $0x28] sm:$0xff] %v1887
    %1998 = vst [vmem:[#allocation3 + $0x30] sm:$0xff] %v1958
    %1999 = vst [vmem:[#allocation3 + $0x38] sm:$0xff] %v1960
    %2000 = vst [vmem:[#allocation3 + $0x40] sm:$0xff] %v1891
    %2001 = vst [vmem:[#allocation3 + $0x48] sm:$0xff] %v1893
    %2002 = vst [vmem:[#allocation3 + $0x50] sm:$0xff] %v1964
    %2003 = vst [vmem:[#allocation3 + $0x58] sm:$0xff] %v1966
    %2004 = vst [vmem:[#allocation3 + $0x60] sm:$0xff] %v1895
    %2005 = vst [vmem:[#allocation3 + $0x68] sm:$0xff] %v1897
    %2006 = vst [vmem:[#allocation3 + $0x70] sm:$0xff] %v1968
    %2007 = vst [vmem:[#allocation3 + $0x78] sm:$0xff] %v1970
    %2008 = vst [vmem:[#allocation3 + $0x80] sm:$0xff] %v1901
    %2009 = vst [vmem:[#allocation3 + $0x88] sm:$0xff] %v1903
    %2010 = vst [vmem:[#allocation3 + $0x90] sm:$0xff] %v1974
    %2011 = vst [vmem:[#allocation3 + $0x98] sm:$0xff] %v1976
    %2012 = vst [vmem:[#allocation3 + $0xa0] sm:$0xff] %v1905
    %2013 = vst [vmem:[#allocation3 + $0xa8] sm:$0xff] %v1907
    %2014 = vst [vmem:[#allocation3 + $0xb0] sm:$0xff] %v1978
    %2015 = vst [vmem:[#allocation3 + $0xb8] sm:$0xff] %v1980
    %2016 = vst [vmem:[#allocation3 + $0xc0] sm:$0xff] %v1911
    %2017 = vst [vmem:[#allocation3 + $0xc8] sm:$0xff] %v1913
    %2018 = vst [vmem:[#allocation3 + $0xd0] sm:$0xff] %v1984
    %2019 = vst [vmem:[#allocation3 + $0xd8] sm:$0xff] %v1986
    %2020 = vst [vmem:[#allocation3 + $0xe0] sm:$0xff] %v1915
    %2021 = vst [vmem:[#allocation3 + $0xe8] sm:$0xff] %v1917
    %2022 = vst [vmem:[#allocation3 + $0xf0] sm:$0xff] %v1988
    %2023 = vst [vmem:[#allocation3 + $0xf8] sm:$0xff] %v1990
    %v2024 = vld [vmem:[#allocation3] sm:$0xff]
    %v2025 = vld [vmem:[#allocation3 + $0x8] sm:$0xff]
    %v2026 = vld [vmem:[#allocation3 + $0x10] sm:$0xff]
    %v2027 = vld [vmem:[#allocation3 + $0x18] sm:$0xff]
    %v2060 = vunpack.c.l.b16 %v1599
    %v2061 = vunpack.c.h.b16 %v1599
    %v2062 = vunpack.c.l.b16 %v1600
    %v2063 = vunpack.c.h.b16 %v1600
    %v2064 = vunpack.c.l.b16 %v1601
    %v2065 = vunpack.c.h.b16 %v1601
    %v2066 = vunpack.c.l.b16 %v1602
    %v2067 = vunpack.c.h.b16 %v1602
    %v2068 = vunpack.c.l.b16 %v1603
    %v2069 = vunpack.c.h.b16 %v1603
    %v2070 = vunpack.c.l.b16 %v1604
    %v2071 = vunpack.c.h.b16 %v1604
    %v2072 = vunpack.c.l.b16 %v1605
    %v2073 = vunpack.c.h.b16 %v1605
    %v2074 = vunpack.c.l.b16 %v1606
    %v2075 = vunpack.c.h.b16 %v1606
    %v2076 = vunpack.c.l.b16 %v1607
    %v2077 = vunpack.c.h.b16 %v1607
    %v2078 = vunpack.c.l.b16 %v1608
    %v2079 = vunpack.c.h.b16 %v1608
    %v2080 = vunpack.c.l.b16 %v1609
    %v2081 = vunpack.c.h.b16 %v1609
    %v2082 = vunpack.c.l.b16 %v1610
    %v2083 = vunpack.c.h.b16 %v1610
    %v2084 = vunpack.c.l.b16 %v1611
    %v2085 = vunpack.c.h.b16 %v1611
    %v2086 = vunpack.c.l.b16 %v1612
    %v2087 = vunpack.c.h.b16 %v1612
    %v2088 = vunpack.c.l.b16 %v1613
    %v2089 = vunpack.c.h.b16 %v1613
    %v2090 = vunpack.c.l.b16 %v1614
    %v2091 = vunpack.c.h.b16 %v1614
    %v2092 = vunpack.c.l.b16 %v1615
    %v2093 = vunpack.c.h.b16 %v1615
    %v2094 = vunpack.c.l.b16 %v1616
    %v2095 = vunpack.c.h.b16 %v1616
    %v2096 = vunpack.c.l.b16 %v1617
    %v2097 = vunpack.c.h.b16 %v1617
    %v2098 = vunpack.c.l.b16 %v1618
    %v2099 = vunpack.c.h.b16 %v1618
    %v2100 = vunpack.c.l.b16 %v1619
    %v2101 = vunpack.c.h.b16 %v1619
    %v2102 = vunpack.c.l.b16 %v1620
    %v2103 = vunpack.c.h.b16 %v1620
    %v2104 = vunpack.c.l.b16 %v1621
    %v2105 = vunpack.c.h.b16 %v1621
    %v2106 = vunpack.c.l.b16 %v1622
    %v2107 = vunpack.c.h.b16 %v1622
    %v2108 = vunpack.c.l.b16 %v1623
    %v2109 = vunpack.c.h.b16 %v1623
    %v2110 = vunpack.c.l.b16 %v1624
    %v2111 = vunpack.c.h.b16 %v1624
    %v2112 = vunpack.c.l.b16 %v1625
    %v2113 = vunpack.c.h.b16 %v1625
    %v2114 = vunpack.c.l.b16 %v1626
    %v2115 = vunpack.c.h.b16 %v1626
    %v2116 = vunpack.c.l.b16 %v1627
    %v2117 = vunpack.c.h.b16 %v1627
    %v2118 = vunpack.c.l.b16 %v1628
    %v2119 = vunpack.c.h.b16 %v1628
    %v2120 = vunpack.c.l.b16 %v1629
    %v2121 = vunpack.c.h.b16 %v1629
    %v2122 = vunpack.c.l.b16 %v1630
    %v2123 = vunpack.c.h.b16 %v1630
    %v2124 = vpack.c.b16 %v2064, %v2060
    %v2125 = vpack.c.b16 %v2065, %v2061
    %v2126 = vpack.c.b16 %v2066, %v2062
    %v2127 = vpack.c.b16 %v2067, %v2063
    %v2128 = vpack.c.b16 %v2072, %v2068
    %v2129 = vpack.c.b16 %v2073, %v2069
    %v2130 = vpack.c.b16 %v2074, %v2070
    %v2131 = vpack.c.b16 %v2075, %v2071
    %v2132 = vpack.c.b16 %v2080, %v2076
    %v2133 = vpack.c.b16 %v2081, %v2077
    %v2134 = vpack.c.b16 %v2082, %v2078
    %v2135 = vpack.c.b16 %v2083, %v2079
    %v2136 = vpack.c.b16 %v2088, %v2084
    %v2137 = vpack.c.b16 %v2089, %v2085
    %v2138 = vpack.c.b16 %v2090, %v2086
    %v2139 = vpack.c.b16 %v2091, %v2087
    %v2140 = vpack.c.b16 %v2096, %v2092
    %v2141 = vpack.c.b16 %v2097, %v2093
    %v2142 = vpack.c.b16 %v2098, %v2094
    %v2143 = vpack.c.b16 %v2099, %v2095
    %v2144 = vpack.c.b16 %v2104, %v2100
    %v2145 = vpack.c.b16 %v2105, %v2101
    %v2146 = vpack.c.b16 %v2106, %v2102
    %v2147 = vpack.c.b16 %v2107, %v2103
    %v2148 = vpack.c.b16 %v2112, %v2108
    %v2149 = vpack.c.b16 %v2113, %v2109
    %v2150 = vpack.c.b16 %v2114, %v2110
    %v2151 = vpack.c.b16 %v2115, %v2111
    %v2152 = vpack.c.b16 %v2120, %v2116
    %v2153 = vpack.c.b16 %v2121, %v2117
    %v2154 = vpack.c.b16 %v2122, %v2118
    %v2155 = vpack.c.b16 %v2123, %v2119
    %2188 = vmatprep.subr.bf16.mxu0 %v2153
    %2189 = vmatpush1.bf16.msra.mxu0 %v2152
    %2190 = vmatprep.subr.bf16.mxu0 %v2149
    %2191 = vmatpush1.bf16.msra.mxu0 %v2148
    %2192 = vmatprep.subr.bf16.mxu0 %v2145
    %2193 = vmatpush1.bf16.msra.mxu0 %v2144
    %2194 = vmatprep.subr.bf16.mxu0 %v2141
    %2195 = vmatpush1.bf16.msra.mxu0 %v2140
    %2196 = vmatprep.subr.bf16.mxu0 %v2137
    %2197 = vmatpush1.bf16.msra.mxu0 %v2136
    %2198 = vmatprep.subr.bf16.mxu0 %v2133
    %2199 = vmatpush1.bf16.msra.mxu0 %v2132
    %2200 = vmatprep.subr.bf16.mxu0 %v2129
    %2201 = vmatpush1.bf16.msra.mxu0 %v2128
    %2202 = vmatprep.subr.bf16.mxu0 %v2125
    %2203 = vmatpush1.bf16.msra.mxu0 %v2124
    %2204 = vmatprep.subr.bf16.mxu0 0
    %2205 = vmatpush2.bf16.msra.mxu0 0
    %2206 = vmatprep.subr.bf16.mxu0 0
    %2207 = vmatpush2.bf16.msra.mxu0 0
    %2208 = vmatprep.subr.bf16.mxu0 0
    %2209 = vmatpush2.bf16.msra.mxu0 0
    %2210 = vmatprep.subr.bf16.mxu0 0
    %2211 = vmatpush2.bf16.msra.mxu0 0
    %2212 = vmatprep.subr.bf16.mxu0 0
    %2213 = vmatpush2.bf16.msra.mxu0 0
    %2214 = vmatprep.subr.bf16.mxu0 0
    %2215 = vmatpush2.bf16.msra.mxu0 0
    %2216 = vmatprep.subr.bf16.mxu0 0
    %2217 = vmatpush2.bf16.msra.mxu0 0
    %2218 = vmatprep.subr.bf16.mxu0 0
    %2219 = vmatpush2.bf16.msra.mxu0 0
    %2220 = vmatprep.mubr.bf16.mxu0 0
    %2221 = vmatmul.mubr.bf16.gmra.mxu0 0
    %v2222 = vpop.f32.mrf.mxu0
    %v2223 = vadd.f32 0.0, %v2222
    %v2224 = vpop.f32.mrf.mxu0
    %v2225 = vadd.f32 0.0, %v2224
    %v2226 = vpop.f32.mrf.mxu0
    %v2227 = vpop.f32.mrf.mxu0
    %2228 = vdwg.mxu0
    %2229 = vmatprep.subr.bf16.mxu0 %v2155
    %2230 = vmatpush1.bf16.msra.mxu0 %v2154
    %2231 = vmatprep.subr.bf16.mxu0 %v2151
    %2232 = vmatpush1.bf16.msra.mxu0 %v2150
    %2233 = vmatprep.subr.bf16.mxu0 %v2147
    %2234 = vmatpush1.bf16.msra.mxu0 %v2146
    %2235 = vmatprep.subr.bf16.mxu0 %v2143
    %2236 = vmatpush1.bf16.msra.mxu0 %v2142
    %2237 = vmatprep.subr.bf16.mxu0 %v2139
    %2238 = vmatpush1.bf16.msra.mxu0 %v2138
    %2239 = vmatprep.subr.bf16.mxu0 %v2135
    %2240 = vmatpush1.bf16.msra.mxu0 %v2134
    %2241 = vmatprep.subr.bf16.mxu0 %v2131
    %2242 = vmatpush1.bf16.msra.mxu0 %v2130
    %2243 = vmatprep.subr.bf16.mxu0 %v2127
    %2244 = vmatpush1.bf16.msra.mxu0 %v2126
    %2245 = vmatprep.subr.bf16.mxu0 0
    %2246 = vmatpush2.bf16.msra.mxu0 0
    %2247 = vmatprep.subr.bf16.mxu0 0
    %2248 = vmatpush2.bf16.msra.mxu0 0
    %2249 = vmatprep.subr.bf16.mxu0 0
    %2250 = vmatpush2.bf16.msra.mxu0 0
    %2251 = vmatprep.subr.bf16.mxu0 0
    %2252 = vmatpush2.bf16.msra.mxu0 0
    %2253 = vmatprep.subr.bf16.mxu0 0
    %2254 = vmatpush2.bf16.msra.mxu0 0
    %2255 = vmatprep.subr.bf16.mxu0 0
    %2256 = vmatpush2.bf16.msra.mxu0 0
    %2257 = vmatprep.subr.bf16.mxu0 0
    %2258 = vmatpush2.bf16.msra.mxu0 0
    %2259 = vmatprep.subr.bf16.mxu0 0
    %2260 = vmatpush2.bf16.msra.mxu0 0
    %2261 = vmatprep.mubr.bf16.mxu0 0
    %2262 = vmatmul.mubr.bf16.gmra.mxu0 0
    %v2263 = vpop.f32.mrf.mxu0
    %v2264 = vadd.f32 0.0, %v2263
    %v2265 = vpop.f32.mrf.mxu0
    %v2266 = vadd.f32 0.0, %v2265
    %v2267 = vpop.f32.mrf.mxu0
    %v2268 = vpop.f32.mrf.mxu0
    %2269 = vdwg.mxu0
    %v2270 = vadd.f32 %v2024, %v2223
    %v2271 = vadd.f32 %v2025, %v2225
    %v2272 = vadd.f32 %v2026, %v2264
    %v2273 = vadd.f32 %v2027, %v2266
    %v2274 = vtanh.pop %v2270
    %v2275 = vtanh.pop %v2271
    %v2276 = vtanh.pop %v2272
    %v2277 = vtanh.pop %v2273
    %v2278 = vadd.f32 %v2274, 1.0
    %v2279 = vmul.f32 %v2278, 0.5
    %v2280 = vadd.f32 %v2275, 1.0
    %v2281 = vmul.f32 %v2280, 0.5
    %v2282 = vadd.f32 %v2277, 1.0
    %v2283 = vmul.f32 %v2282, 0.5
    %v2284 = vmul.f32 %v2281, 0.0
    %v2285 = vmul.f32 %v2279, %v2276
    %v2286 = vadd.f32 %v2284, %v2285
    %v2287 = vtanh.pop %v2286
    %v2288 = vmul.f32 %v2283, %v2287
    %v2289 = vpack.c.bf16 %v2288, %v2288
    %2290 = vst [vmem:[#allocation2] sm:$0xf] %v2289
    %v2291 = vld [vmem:[#allocation3 + $0x20] sm:$0xff]
    %v2292 = vld [vmem:[#allocation3 + $0x28] sm:$0xff]
    %v2293 = vld [vmem:[#allocation3 + $0x30] sm:$0xff]
    %v2294 = vld [vmem:[#allocation3 + $0x38] sm:$0xff]
    %2295 = vmatprep.subr.bf16.mxu0 %v2153
    %2296 = vmatpush1.bf16.msra.mxu0 %v2152
    %2297 = vmatprep.subr.bf16.mxu0 %v2149
    %2298 = vmatpush1.bf16.msra.mxu0 %v2148
    %2299 = vmatprep.subr.bf16.mxu0 %v2145
    %2300 = vmatpush1.bf16.msra.mxu0 %v2144
    %2301 = vmatprep.subr.bf16.mxu0 %v2141
    %2302 = vmatpush1.bf16.msra.mxu0 %v2140
    %2303 = vmatprep.subr.bf16.mxu0 %v2137
    %2304 = vmatpush1.bf16.msra.mxu0 %v2136
    %2305 = vmatprep.subr.bf16.mxu0 %v2133
    %2306 = vmatpush1.bf16.msra.mxu0 %v2132
    %2307 = vmatprep.subr.bf16.mxu0 %v2129
    %2308 = vmatpush1.bf16.msra.mxu0 %v2128
    %2309 = vmatprep.subr.bf16.mxu0 %v2125
    %2310 = vmatpush1.bf16.msra.mxu0 %v2124
    %2311 = vmatprep.subr.bf16.mxu0 0
    %2312 = vmatpush2.bf16.msra.mxu0 0
    %2313 = vmatprep.subr.bf16.mxu0 0
    %2314 = vmatpush2.bf16.msra.mxu0 0
    %2315 = vmatprep.subr.bf16.mxu0 0
    %2316 = vmatpush2.bf16.msra.mxu0 0
    %2317 = vmatprep.subr.bf16.mxu0 0
    %2318 = vmatpush2.bf16.msra.mxu0 0
    %2319 = vmatprep.subr.bf16.mxu0 0
    %2320 = vmatpush2.bf16.msra.mxu0 0
    %2321 = vmatprep.subr.bf16.mxu0 0
    %2322 = vmatpush2.bf16.msra.mxu0 0
    %2323 = vmatprep.subr.bf16.mxu0 0
    %2324 = vmatpush2.bf16.msra.mxu0 0
    %2325 = vmatprep.subr.bf16.mxu0 0
    %2326 = vmatpush2.bf16.msra.mxu0 0
    %2327 = vmatprep.mubr.bf16.mxu0 0
    %2328 = vmatmul.mubr.bf16.gmra.mxu0 %v2289
    %v2329 = vpop.f32.mrf.mxu0
    %v2330 = vadd.f32 0.0, %v2329
    %v2331 = vpop.f32.mrf.mxu0
    %v2332 = vadd.f32 0.0, %v2331
    %v2333 = vpop.f32.mrf.mxu0
    %v2334 = vpop.f32.mrf.mxu0
    %2335 = vdwg.mxu0
    %2336 = vmatprep.subr.bf16.mxu0 %v2155
    %2337 = vmatpush1.bf16.msra.mxu0 %v2154
    %2338 = vmatprep.subr.bf16.mxu0 %v2151
    %2339 = vmatpush1.bf16.msra.mxu0 %v2150
    %2340 = vmatprep.subr.bf16.mxu0 %v2147
    %2341 = vmatpush1.bf16.msra.mxu0 %v2146
    %2342 = vmatprep.subr.bf16.mxu0 %v2143
    %2343 = vmatpush1.bf16.msra.mxu0 %v2142
    %2344 = vmatprep.subr.bf16.mxu0 %v2139
    %2345 = vmatpush1.bf16.msra.mxu0 %v2138
    %2346 = vmatprep.subr.bf16.mxu0 %v2135
    %2347 = vmatpush1.bf16.msra.mxu0 %v2134
    %2348 = vmatprep.subr.bf16.mxu0 %v2131
    %2349 = vmatpush1.bf16.msra.mxu0 %v2130
    %2350 = vmatprep.subr.bf16.mxu0 %v2127
    %2351 = vmatpush1.bf16.msra.mxu0 %v2126
    %2352 = vmatprep.subr.bf16.mxu0 0
    %2353 = vmatpush2.bf16.msra.mxu0 0
    %2354 = vmatprep.subr.bf16.mxu0 0
    %2355 = vmatpush2.bf16.msra.mxu0 0
    %2356 = vmatprep.subr.bf16.mxu0 0
    %2357 = vmatpush2.bf16.msra.mxu0 0
    %2358 = vmatprep.subr.bf16.mxu0 0
    %2359 = vmatpush2.bf16.msra.mxu0 0
    %2360 = vmatprep.subr.bf16.mxu0 0
    %2361 = vmatpush2.bf16.msra.mxu0 0
    %2362 = vmatprep.subr.bf16.mxu0 0
    %2363 = vmatpush2.bf16.msra.mxu0 0
    %2364 = vmatprep.subr.bf16.mxu0 0
    %2365 = vmatpush2.bf16.msra.mxu0 0
    %2366 = vmatprep.subr.bf16.mxu0 0
    %2367 = vmatpush2.bf16.msra.mxu0 0
    %2368 = vmatprep.mubr.bf16.mxu0 0
    %2369 = vmatmul.mubr.bf16.gmra.mxu0 %v2289
    %v2370 = vpop.f32.mrf.mxu0
    %v2371 = vadd.f32 0.0, %v2370
    %v2372 = vpop.f32.mrf.mxu0
    %v2373 = vadd.f32 0.0, %v2372
    %v2374 = vpop.f32.mrf.mxu0
    %v2375 = vpop.f32.mrf.mxu0
    %2376 = vdwg.mxu0
    %v2377 = vadd.f32 %v2291, %v2330
    %v2378 = vadd.f32 %v2292, %v2332
    %v2379 = vadd.f32 %v2293, %v2371
    %v2380 = vadd.f32 %v2294, %v2373
    %v2381 = vtanh.pop %v2377
    %v2382 = vtanh.pop %v2378
    %v2383 = vtanh.pop %v2379
    %v2384 = vtanh.pop %v2380
    %v2385 = vadd.f32 %v2381, 1.0
    %v2386 = vmul.f32 %v2385, 0.5
    %v2387 = vadd.f32 %v2382, 1.0
    %v2388 = vmul.f32 %v2387, 0.5
    %v2389 = vadd.f32 %v2384, 1.0
    %v2390 = vmul.f32 %v2389, 0.5
    %v2391 = vmul.f32 %v2388, %v2286
    %v2392 = vmul.f32 %v2386, %v2383
    %v2393 = vadd.f32 %v2391, %v2392
    %v2394 = vtanh.pop %v2393
    %v2395 = vmul.f32 %v2390, %v2394
    %v2396 = vpack.c.bf16 %v2395, %v2395
    %2397 = vst [vmem:[#allocation2 + $0x4] sm:$0xf] %v2396
    %v2398 = vld [vmem:[#allocation3 + $0x40] sm:$0xff]
    %v2399 = vld [vmem:[#allocation3 + $0x48] sm:$0xff]
    %v2400 = vld [vmem:[#allocation3 + $0x50] sm:$0xff]
    %v2401 = vld [vmem:[#allocation3 + $0x58] sm:$0xff]
    %2402 = vmatprep.subr.bf16.mxu0 %v2153
    %2403 = vmatpush1.bf16.msra.mxu0 %v2152
    %2404 = vmatprep.subr.bf16.mxu0 %v2149
    %2405 = vmatpush1.bf16.msra.mxu0 %v2148
    %2406 = vmatprep.subr.bf16.mxu0 %v2145
    %2407 = vmatpush1.bf16.msra.mxu0 %v2144
    %2408 = vmatprep.subr.bf16.mxu0 %v2141
    %2409 = vmatpush1.bf16.msra.mxu0 %v2140
    %2410 = vmatprep.subr.bf16.mxu0 %v2137
    %2411 = vmatpush1.bf16.msra.mxu0 %v2136
    %2412 = vmatprep.subr.bf16.mxu0 %v2133
    %2413 = vmatpush1.bf16.msra.mxu0 %v2132
    %2414 = vmatprep.subr.bf16.mxu0 %v2129
    %2415 = vmatpush1.bf16.msra.mxu0 %v2128
    %2416 = vmatprep.subr.bf16.mxu0 %v2125
    %2417 = vmatpush1.bf16.msra.mxu0 %v2124
    %2418 = vmatprep.subr.bf16.mxu0 0
    %2419 = vmatpush2.bf16.msra.mxu0 0
    %2420 = vmatprep.subr.bf16.mxu0 0
    %2421 = vmatpush2.bf16.msra.mxu0 0
    %2422 = vmatprep.subr.bf16.mxu0 0
    %2423 = vmatpush2.bf16.msra.mxu0 0
    %2424 = vmatprep.subr.bf16.mxu0 0
    %2425 = vmatpush2.bf16.msra.mxu0 0
    %2426 = vmatprep.subr.bf16.mxu0 0
    %2427 = vmatpush2.bf16.msra.mxu0 0
    %2428 = vmatprep.subr.bf16.mxu0 0
    %2429 = vmatpush2.bf16.msra.mxu0 0
    %2430 = vmatprep.subr.bf16.mxu0 0
    %2431 = vmatpush2.bf16.msra.mxu0 0
    %2432 = vmatprep.subr.bf16.mxu0 0
    %2433 = vmatpush2.bf16.msra.mxu0 0
    %2434 = vmatprep.mubr.bf16.mxu0 0
    %2435 = vmatmul.mubr.bf16.gmra.mxu0 %v2396
    %v2436 = vpop.f32.mrf.mxu0
    %v2437 = vadd.f32 0.0, %v2436
    %v2438 = vpop.f32.mrf.mxu0
    %v2439 = vadd.f32 0.0, %v2438
    %v2440 = vpop.f32.mrf.mxu0
    %v2441 = vpop.f32.mrf.mxu0
    %2442 = vdwg.mxu0
    %2443 = vmatprep.subr.bf16.mxu0 %v2155
    %2444 = vmatpush1.bf16.msra.mxu0 %v2154
    %2445 = vmatprep.subr.bf16.mxu0 %v2151
    %2446 = vmatpush1.bf16.msra.mxu0 %v2150
    %2447 = vmatprep.subr.bf16.mxu0 %v2147
    %2448 = vmatpush1.bf16.msra.mxu0 %v2146
    %2449 = vmatprep.subr.bf16.mxu0 %v2143
    %2450 = vmatpush1.bf16.msra.mxu0 %v2142
    %2451 = vmatprep.subr.bf16.mxu0 %v2139
    %2452 = vmatpush1.bf16.msra.mxu0 %v2138
    %2453 = vmatprep.subr.bf16.mxu0 %v2135
    %2454 = vmatpush1.bf16.msra.mxu0 %v2134
    %2455 = vmatprep.subr.bf16.mxu0 %v2131
    %2456 = vmatpush1.bf16.msra.mxu0 %v2130
    %2457 = vmatprep.subr.bf16.mxu0 %v2127
    %2458 = vmatpush1.bf16.msra.mxu0 %v2126
    %2459 = vmatprep.subr.bf16.mxu0 0
    %2460 = vmatpush2.bf16.msra.mxu0 0
    %2461 = vmatprep.subr.bf16.mxu0 0
    %2462 = vmatpush2.bf16.msra.mxu0 0
    %2463 = vmatprep.subr.bf16.mxu0 0
    %2464 = vmatpush2.bf16.msra.mxu0 0
    %2465 = vmatprep.subr.bf16.mxu0 0
    %2466 = vmatpush2.bf16.msra.mxu0 0
    %2467 = vmatprep.subr.bf16.mxu0 0
    %2468 = vmatpush2.bf16.msra.mxu0 0
    %2469 = vmatprep.subr.bf16.mxu0 0
    %2470 = vmatpush2.bf16.msra.mxu0 0
    %2471 = vmatprep.subr.bf16.mxu0 0
    %2472 = vmatpush2.bf16.msra.mxu0 0
    %2473 = vmatprep.subr.bf16.mxu0 0
    %2474 = vmatpush2.bf16.msra.mxu0 0
    %2475 = vmatprep.mubr.bf16.mxu0 0
    %2476 = vmatmul.mubr.bf16.gmra.mxu0 %v2396
    %v2477 = vpop.f32.mrf.mxu0
    %v2478 = vadd.f32 0.0, %v2477
    %v2479 = vpop.f32.mrf.mxu0
    %v2480 = vadd.f32 0.0, %v2479
    %v2481 = vpop.f32.mrf.mxu0
    %v2482 = vpop.f32.mrf.mxu0
    %2483 = vdwg.mxu0
    %v2484 = vadd.f32 %v2398, %v2437
    %v2485 = vadd.f32 %v2399, %v2439
    %v2486 = vadd.f32 %v2400, %v2478
    %v2487 = vadd.f32 %v2401, %v2480
    %v2488 = vtanh.pop %v2484
    %v2489 = vtanh.pop %v2485
    %v2490 = vtanh.pop %v2486
    %v2491 = vtanh.pop %v2487
    %v2492 = vadd.f32 %v2488, 1.0
    %v2493 = vmul.f32 %v2492, 0.5
    %v2494 = vadd.f32 %v2489, 1.0
    %v2495 = vmul.f32 %v2494, 0.5
    %v2496 = vadd.f32 %v2491, 1.0
    %v2497 = vmul.f32 %v2496, 0.5
    %v2498 = vmul.f32 %v2495, %v2393
    %v2499 = vmul.f32 %v2493, %v2490
    %v2500 = vadd.f32 %v2498, %v2499
    %v2501 = vtanh.pop %v2500
    %v2502 = vmul.f32 %v2497, %v2501
    %v2503 = vpack.c.bf16 %v2502, %v2502
    %2504 = vst [vmem:[#allocation2 + $0x8] sm:$0xf] %v2503
    %v2505 = vld [vmem:[#allocation3 + $0x60] sm:$0xff]
    %v2506 = vld [vmem:[#allocation3 + $0x68] sm:$0xff]
    %v2507 = vld [vmem:[#allocation3 + $0x70] sm:$0xff]
    %v2508 = vld [vmem:[#allocation3 + $0x78] sm:$0xff]
    %2509 = vmatprep.subr.bf16.mxu0 %v2153
    %2510 = vmatpush1.bf16.msra.mxu0 %v2152
    %2511 = vmatprep.subr.bf16.mxu0 %v2149
    %2512 = vmatpush1.bf16.msra.mxu0 %v2148
    %2513 = vmatprep.subr.bf16.mxu0 %v2145
    %2514 = vmatpush1.bf16.msra.mxu0 %v2144
    %2515 = vmatprep.subr.bf16.mxu0 %v2141
    %2516 = vmatpush1.bf16.msra.mxu0 %v2140
    %2517 = vmatprep.subr.bf16.mxu0 %v2137
    %2518 = vmatpush1.bf16.msra.mxu0 %v2136
    %2519 = vmatprep.subr.bf16.mxu0 %v2133
    %2520 = vmatpush1.bf16.msra.mxu0 %v2132
    %2521 = vmatprep.subr.bf16.mxu0 %v2129
    %2522 = vmatpush1.bf16.msra.mxu0 %v2128
    %2523 = vmatprep.subr.bf16.mxu0 %v2125
    %2524 = vmatpush1.bf16.msra.mxu0 %v2124
    %2525 = vmatprep.subr.bf16.mxu0 0
    %2526 = vmatpush2.bf16.msra.mxu0 0
    %2527 = vmatprep.subr.bf16.mxu0 0
    %2528 = vmatpush2.bf16.msra.mxu0 0
    %2529 = vmatprep.subr.bf16.mxu0 0
    %2530 = vmatpush2.bf16.msra.mxu0 0
    %2531 = vmatprep.subr.bf16.mxu0 0
    %2532 = vmatpush2.bf16.msra.mxu0 0
    %2533 = vmatprep.subr.bf16.mxu0 0
    %2534 = vmatpush2.bf16.msra.mxu0 0
    %2535 = vmatprep.subr.bf16.mxu0 0
    %2536 = vmatpush2.bf16.msra.mxu0 0
    %2537 = vmatprep.subr.bf16.mxu0 0
    %2538 = vmatpush2.bf16.msra.mxu0 0
    %2539 = vmatprep.subr.bf16.mxu0 0
    %2540 = vmatpush2.bf16.msra.mxu0 0
    %2541 = vmatprep.mubr.bf16.mxu0 0
    %2542 = vmatmul.mubr.bf16.gmra.mxu0 %v2503
    %v2543 = vpop.f32.mrf.mxu0
    %v2544 = vadd.f32 0.0, %v2543
    %v2545 = vpop.f32.mrf.mxu0
    %v2546 = vadd.f32 0.0, %v2545
    %v2547 = vpop.f32.mrf.mxu0
    %v2548 = vpop.f32.mrf.mxu0
    %2549 = vdwg.mxu0
    %2550 = vmatprep.subr.bf16.mxu0 %v2155
    %2551 = vmatpush1.bf16.msra.mxu0 %v2154
    %2552 = vmatprep.subr.bf16.mxu0 %v2151
    %2553 = vmatpush1.bf16.msra.mxu0 %v2150
    %2554 = vmatprep.subr.bf16.mxu0 %v2147
    %2555 = vmatpush1.bf16.msra.mxu0 %v2146
    %2556 = vmatprep.subr.bf16.mxu0 %v2143
    %2557 = vmatpush1.bf16.msra.mxu0 %v2142
    %2558 = vmatprep.subr.bf16.mxu0 %v2139
    %2559 = vmatpush1.bf16.msra.mxu0 %v2138
    %2560 = vmatprep.subr.bf16.mxu0 %v2135
    %2561 = vmatpush1.bf16.msra.mxu0 %v2134
    %2562 = vmatprep.subr.bf16.mxu0 %v2131
    %2563 = vmatpush1.bf16.msra.mxu0 %v2130
    %2564 = vmatprep.subr.bf16.mxu0 %v2127
    %2565 = vmatpush1.bf16.msra.mxu0 %v2126
    %2566 = vmatprep.subr.bf16.mxu0 0
    %2567 = vmatpush2.bf16.msra.mxu0 0
    %2568 = vmatprep.subr.bf16.mxu0 0
    %2569 = vmatpush2.bf16.msra.mxu0 0
    %2570 = vmatprep.subr.bf16.mxu0 0
    %2571 = vmatpush2.bf16.msra.mxu0 0
    %2572 = vmatprep.subr.bf16.mxu0 0
    %2573 = vmatpush2.bf16.msra.mxu0 0
    %2574 = vmatprep.subr.bf16.mxu0 0
    %2575 = vmatpush2.bf16.msra.mxu0 0
    %2576 = vmatprep.subr.bf16.mxu0 0
    %2577 = vmatpush2.bf16.msra.mxu0 0
    %2578 = vmatprep.subr.bf16.mxu0 0
    %2579 = vmatpush2.bf16.msra.mxu0 0
    %2580 = vmatprep.subr.bf16.mxu0 0
    %2581 = vmatpush2.bf16.msra.mxu0 0
    %2582 = vmatprep.mubr.bf16.mxu0 0
    %2583 = vmatmul.mubr.bf16.gmra.mxu0 %v2503
    %v2584 = vpop.f32.mrf.mxu0
    %v2585 = vadd.f32 0.0, %v2584
    %v2586 = vpop.f32.mrf.mxu0
    %v2587 = vadd.f32 0.0, %v2586
    %v2588 = vpop.f32.mrf.mxu0
    %v2589 = vpop.f32.mrf.mxu0
    %2590 = vdwg.mxu0
    %v2591 = vadd.f32 %v2505, %v2544
    %v2592 = vadd.f32 %v2506, %v2546
    %v2593 = vadd.f32 %v2507, %v2585
    %v2594 = vadd.f32 %v2508, %v2587
    %v2595 = vtanh.pop %v2591
    %v2596 = vtanh.pop %v2592
    %v2597 = vtanh.pop %v2593
    %v2598 = vtanh.pop %v2594
    %v2599 = vadd.f32 %v2595, 1.0
    %v2600 = vmul.f32 %v2599, 0.5
    %v2601 = vadd.f32 %v2596, 1.0
    %v2602 = vmul.f32 %v2601, 0.5
    %v2603 = vadd.f32 %v2598, 1.0
    %v2604 = vmul.f32 %v2603, 0.5
    %v2605 = vmul.f32 %v2602, %v2500
    %v2606 = vmul.f32 %v2600, %v2597
    %v2607 = vadd.f32 %v2605, %v2606
    %v2608 = vtanh.pop %v2607
    %v2609 = vmul.f32 %v2604, %v2608
    %v2610 = vpack.c.bf16 %v2609, %v2609
    %2611 = vst [vmem:[#allocation2 + $0xc] sm:$0xf] %v2610
    %v2612 = vld [vmem:[#allocation3 + $0x80] sm:$0xff]
    %v2613 = vld [vmem:[#allocation3 + $0x88] sm:$0xff]
    %v2614 = vld [vmem:[#allocation3 + $0x90] sm:$0xff]
    %v2615 = vld [vmem:[#allocation3 + $0x98] sm:$0xff]
    %2616 = vmatprep.subr.bf16.mxu0 %v2153
    %2617 = vmatpush1.bf16.msra.mxu0 %v2152
    %2618 = vmatprep.subr.bf16.mxu0 %v2149
    %2619 = vmatpush1.bf16.msra.mxu0 %v2148
    %2620 = vmatprep.subr.bf16.mxu0 %v2145
    %2621 = vmatpush1.bf16.msra.mxu0 %v2144
    %2622 = vmatprep.subr.bf16.mxu0 %v2141
    %2623 = vmatpush1.bf16.msra.mxu0 %v2140
    %2624 = vmatprep.subr.bf16.mxu0 %v2137
    %2625 = vmatpush1.bf16.msra.mxu0 %v2136
    %2626 = vmatprep.subr.bf16.mxu0 %v2133
    %2627 = vmatpush1.bf16.msra.mxu0 %v2132
    %2628 = vmatprep.subr.bf16.mxu0 %v2129
    %2629 = vmatpush1.bf16.msra.mxu0 %v2128
    %2630 = vmatprep.subr.bf16.mxu0 %v2125
    %2631 = vmatpush1.bf16.msra.mxu0 %v2124
    %2632 = vmatprep.subr.bf16.mxu0 0
    %2633 = vmatpush2.bf16.msra.mxu0 0
    %2634 = vmatprep.subr.bf16.mxu0 0
    %2635 = vmatpush2.bf16.msra.mxu0 0
    %2636 = vmatprep.subr.bf16.mxu0 0
    %2637 = vmatpush2.bf16.msra.mxu0 0
    %2638 = vmatprep.subr.bf16.mxu0 0
    %2639 = vmatpush2.bf16.msra.mxu0 0
    %2640 = vmatprep.subr.bf16.mxu0 0
    %2641 = vmatpush2.bf16.msra.mxu0 0
    %2642 = vmatprep.subr.bf16.mxu0 0
    %2643 = vmatpush2.bf16.msra.mxu0 0
    %2644 = vmatprep.subr.bf16.mxu0 0
    %2645 = vmatpush2.bf16.msra.mxu0 0
    %2646 = vmatprep.subr.bf16.mxu0 0
    %2647 = vmatpush2.bf16.msra.mxu0 0
    %2648 = vmatprep.mubr.bf16.mxu0 0
    %2649 = vmatmul.mubr.bf16.gmra.mxu0 %v2610
    %v2650 = vpop.f32.mrf.mxu0
    %v2651 = vadd.f32 0.0, %v2650
    %v2652 = vpop.f32.mrf.mxu0
    %v2653 = vadd.f32 0.0, %v2652
    %v2654 = vpop.f32.mrf.mxu0
    %v2655 = vpop.f32.mrf.mxu0
    %2656 = vdwg.mxu0
    %2657 = vmatprep.subr.bf16.mxu0 %v2155
    %2658 = vmatpush1.bf16.msra.mxu0 %v2154
    %2659 = vmatprep.subr.bf16.mxu0 %v2151
    %2660 = vmatpush1.bf16.msra.mxu0 %v2150
    %2661 = vmatprep.subr.bf16.mxu0 %v2147
    %2662 = vmatpush1.bf16.msra.mxu0 %v2146
    %2663 = vmatprep.subr.bf16.mxu0 %v2143
    %2664 = vmatpush1.bf16.msra.mxu0 %v2142
    %2665 = vmatprep.subr.bf16.mxu0 %v2139
    %2666 = vmatpush1.bf16.msra.mxu0 %v2138
    %2667 = vmatprep.subr.bf16.mxu0 %v2135
    %2668 = vmatpush1.bf16.msra.mxu0 %v2134
    %2669 = vmatprep.subr.bf16.mxu0 %v2131
    %2670 = vmatpush1.bf16.msra.mxu0 %v2130
    %2671 = vmatprep.subr.bf16.mxu0 %v2127
    %2672 = vmatpush1.bf16.msra.mxu0 %v2126
    %2673 = vmatprep.subr.bf16.mxu0 0
    %2674 = vmatpush2.bf16.msra.mxu0 0
    %2675 = vmatprep.subr.bf16.mxu0 0
    %2676 = vmatpush2.bf16.msra.mxu0 0
    %2677 = vmatprep.subr.bf16.mxu0 0
    %2678 = vmatpush2.bf16.msra.mxu0 0
    %2679 = vmatprep.subr.bf16.mxu0 0
    %2680 = vmatpush2.bf16.msra.mxu0 0
    %2681 = vmatprep.subr.bf16.mxu0 0
    %2682 = vmatpush2.bf16.msra.mxu0 0
    %2683 = vmatprep.subr.bf16.mxu0 0
    %2684 = vmatpush2.bf16.msra.mxu0 0
    %2685 = vmatprep.subr.bf16.mxu0 0
    %2686 = vmatpush2.bf16.msra.mxu0 0
    %2687 = vmatprep.subr.bf16.mxu0 0
    %2688 = vmatpush2.bf16.msra.mxu0 0
    %2689 = vmatprep.mubr.bf16.mxu0 0
    %2690 = vmatmul.mubr.bf16.gmra.mxu0 %v2610
    %v2691 = vpop.f32.mrf.mxu0
    %v2692 = vadd.f32 0.0, %v2691
    %v2693 = vpop.f32.mrf.mxu0
    %v2694 = vadd.f32 0.0, %v2693
    %v2695 = vpop.f32.mrf.mxu0
    %v2696 = vpop.f32.mrf.mxu0
    %2697 = vdwg.mxu0
    %v2698 = vadd.f32 %v2612, %v2651
    %v2699 = vadd.f32 %v2613, %v2653
    %v2700 = vadd.f32 %v2614, %v2692
    %v2701 = vadd.f32 %v2615, %v2694
    %v2702 = vtanh.pop %v2698
    %v2703 = vtanh.pop %v2699
    %v2704 = vtanh.pop %v2700
    %v2705 = vtanh.pop %v2701
    %v2706 = vadd.f32 %v2702, 1.0
    %v2707 = vmul.f32 %v2706, 0.5
    %v2708 = vadd.f32 %v2703, 1.0
    %v2709 = vmul.f32 %v2708, 0.5
    %v2710 = vadd.f32 %v2705, 1.0
    %v2711 = vmul.f32 %v2710, 0.5
    %v2712 = vmul.f32 %v2709, %v2607
    %v2713 = vmul.f32 %v2707, %v2704
    %v2714 = vadd.f32 %v2712, %v2713
    %v2715 = vtanh.pop %v2714
    %v2716 = vmul.f32 %v2711, %v2715
    %v2717 = vpack.c.bf16 %v2716, %v2716
    %2718 = vst [vmem:[#allocation2 + $0x10] sm:$0xf] %v2717
    %v2719 = vld [vmem:[#allocation3 + $0xa0] sm:$0xff]
    %v2720 = vld [vmem:[#allocation3 + $0xa8] sm:$0xff]
    %v2721 = vld [vmem:[#allocation3 + $0xb0] sm:$0xff]
    %v2722 = vld [vmem:[#allocation3 + $0xb8] sm:$0xff]
    %2723 = vmatprep.subr.bf16.mxu0 %v2153
    %2724 = vmatpush1.bf16.msra.mxu0 %v2152
    %2725 = vmatprep.subr.bf16.mxu0 %v2149
    %2726 = vmatpush1.bf16.msra.mxu0 %v2148
    %2727 = vmatprep.subr.bf16.mxu0 %v2145
    %2728 = vmatpush1.bf16.msra.mxu0 %v2144
    %2729 = vmatprep.subr.bf16.mxu0 %v2141
    %2730 = vmatpush1.bf16.msra.mxu0 %v2140
    %2731 = vmatprep.subr.bf16.mxu0 %v2137
    %2732 = vmatpush1.bf16.msra.mxu0 %v2136
    %2733 = vmatprep.subr.bf16.mxu0 %v2133
    %2734 = vmatpush1.bf16.msra.mxu0 %v2132
    %2735 = vmatprep.subr.bf16.mxu0 %v2129
    %2736 = vmatpush1.bf16.msra.mxu0 %v2128
    %2737 = vmatprep.subr.bf16.mxu0 %v2125
    %2738 = vmatpush1.bf16.msra.mxu0 %v2124
    %2739 = vmatprep.subr.bf16.mxu0 0
    %2740 = vmatpush2.bf16.msra.mxu0 0
    %2741 = vmatprep.subr.bf16.mxu0 0
    %2742 = vmatpush2.bf16.msra.mxu0 0
    %2743 = vmatprep.subr.bf16.mxu0 0
    %2744 = vmatpush2.bf16.msra.mxu0 0
    %2745 = vmatprep.subr.bf16.mxu0 0
    %2746 = vmatpush2.bf16.msra.mxu0 0
    %2747 = vmatprep.subr.bf16.mxu0 0
    %2748 = vmatpush2.bf16.msra.mxu0 0
    %2749 = vmatprep.subr.bf16.mxu0 0
    %2750 = vmatpush2.bf16.msra.mxu0 0
    %2751 = vmatprep.subr.bf16.mxu0 0
    %2752 = vmatpush2.bf16.msra.mxu0 0
    %2753 = vmatprep.subr.bf16.mxu0 0
    %2754 = vmatpush2.bf16.msra.mxu0 0
    %2755 = vmatprep.mubr.bf16.mxu0 0
    %2756 = vmatmul.mubr.bf16.gmra.mxu0 %v2717
    %v2757 = vpop.f32.mrf.mxu0
    %v2758 = vadd.f32 0.0, %v2757
    %v2759 = vpop.f32.mrf.mxu0
    %v2760 = vadd.f32 0.0, %v2759
    %v2761 = vpop.f32.mrf.mxu0
    %v2762 = vpop.f32.mrf.mxu0
    %2763 = vdwg.mxu0
    %2764 = vmatprep.subr.bf16.mxu0 %v2155
    %2765 = vmatpush1.bf16.msra.mxu0 %v2154
    %2766 = vmatprep.subr.bf16.mxu0 %v2151
    %2767 = vmatpush1.bf16.msra.mxu0 %v2150
    %2768 = vmatprep.subr.bf16.mxu0 %v2147
    %2769 = vmatpush1.bf16.msra.mxu0 %v2146
    %2770 = vmatprep.subr.bf16.mxu0 %v2143
    %2771 = vmatpush1.bf16.msra.mxu0 %v2142
    %2772 = vmatprep.subr.bf16.mxu0 %v2139
    %2773 = vmatpush1.bf16.msra.mxu0 %v2138
    %2774 = vmatprep.subr.bf16.mxu0 %v2135
    %2775 = vmatpush1.bf16.msra.mxu0 %v2134
    %2776 = vmatprep.subr.bf16.mxu0 %v2131
    %2777 = vmatpush1.bf16.msra.mxu0 %v2130
    %2778 = vmatprep.subr.bf16.mxu0 %v2127
    %2779 = vmatpush1.bf16.msra.mxu0 %v2126
    %2780 = vmatprep.subr.bf16.mxu0 0
    %2781 = vmatpush2.bf16.msra.mxu0 0
    %2782 = vmatprep.subr.bf16.mxu0 0
    %2783 = vmatpush2.bf16.msra.mxu0 0
    %2784 = vmatprep.subr.bf16.mxu0 0
    %2785 = vmatpush2.bf16.msra.mxu0 0
    %2786 = vmatprep.subr.bf16.mxu0 0
    %2787 = vmatpush2.bf16.msra.mxu0 0
    %2788 = vmatprep.subr.bf16.mxu0 0
    %2789 = vmatpush2.bf16.msra.mxu0 0
    %2790 = vmatprep.subr.bf16.mxu0 0
    %2791 = vmatpush2.bf16.msra.mxu0 0
    %2792 = vmatprep.subr.bf16.mxu0 0
    %2793 = vmatpush2.bf16.msra.mxu0 0
    %2794 = vmatprep.subr.bf16.mxu0 0
    %2795 = vmatpush2.bf16.msra.mxu0 0
    %2796 = vmatprep.mubr.bf16.mxu0 0
    %2797 = vmatmul.mubr.bf16.gmra.mxu0 %v2717
    %v2798 = vpop.f32.mrf.mxu0
    %v2799 = vadd.f32 0.0, %v2798
    %v2800 = vpop.f32.mrf.mxu0
    %v2801 = vadd.f32 0.0, %v2800
    %v2802 = vpop.f32.mrf.mxu0
    %v2803 = vpop.f32.mrf.mxu0
    %2804 = vdwg.mxu0
    %v2805 = vadd.f32 %v2719, %v2758
    %v2806 = vadd.f32 %v2720, %v2760
    %v2807 = vadd.f32 %v2721, %v2799
    %v2808 = vadd.f32 %v2722, %v2801
    %v2809 = vtanh.pop %v2805
    %v2810 = vtanh.pop %v2806
    %v2811 = vtanh.pop %v2807
    %v2812 = vtanh.pop %v2808
    %v2813 = vadd.f32 %v2809, 1.0
    %v2814 = vmul.f32 %v2813, 0.5
    %v2815 = vadd.f32 %v2810, 1.0
    %v2816 = vmul.f32 %v2815, 0.5
    %v2817 = vadd.f32 %v2812, 1.0
    %v2818 = vmul.f32 %v2817, 0.5
    %v2819 = vmul.f32 %v2816, %v2714
    %v2820 = vmul.f32 %v2814, %v2811
    %v2821 = vadd.f32 %v2819, %v2820
    %v2822 = vtanh.pop %v2821
    %v2823 = vmul.f32 %v2818, %v2822
    %v2824 = vpack.c.bf16 %v2823, %v2823
    %2825 = vst [vmem:[#allocation2 + $0x14] sm:$0xf] %v2824
    %v2826 = vld [vmem:[#allocation3 + $0xc0] sm:$0xff]
    %v2827 = vld [vmem:[#allocation3 + $0xc8] sm:$0xff]
    %v2828 = vld [vmem:[#allocation3 + $0xd0] sm:$0xff]
    %v2829 = vld [vmem:[#allocation3 + $0xd8] sm:$0xff]
    %2830 = vmatprep.subr.bf16.mxu0 %v2153
    %2831 = vmatpush1.bf16.msra.mxu0 %v2152
    %2832 = vmatprep.subr.bf16.mxu0 %v2149
    %2833 = vmatpush1.bf16.msra.mxu0 %v2148
    %2834 = vmatprep.subr.bf16.mxu0 %v2145
    %2835 = vmatpush1.bf16.msra.mxu0 %v2144
    %2836 = vmatprep.subr.bf16.mxu0 %v2141
    %2837 = vmatpush1.bf16.msra.mxu0 %v2140
    %2838 = vmatprep.subr.bf16.mxu0 %v2137
    %2839 = vmatpush1.bf16.msra.mxu0 %v2136
    %2840 = vmatprep.subr.bf16.mxu0 %v2133
    %2841 = vmatpush1.bf16.msra.mxu0 %v2132
    %2842 = vmatprep.subr.bf16.mxu0 %v2129
    %2843 = vmatpush1.bf16.msra.mxu0 %v2128
    %2844 = vmatprep.subr.bf16.mxu0 %v2125
    %2845 = vmatpush1.bf16.msra.mxu0 %v2124
    %2846 = vmatprep.subr.bf16.mxu0 0
    %2847 = vmatpush2.bf16.msra.mxu0 0
    %2848 = vmatprep.subr.bf16.mxu0 0
    %2849 = vmatpush2.bf16.msra.mxu0 0
    %2850 = vmatprep.subr.bf16.mxu0 0
    %2851 = vmatpush2.bf16.msra.mxu0 0
    %2852 = vmatprep.subr.bf16.mxu0 0
    %2853 = vmatpush2.bf16.msra.mxu0 0
    %2854 = vmatprep.subr.bf16.mxu0 0
    %2855 = vmatpush2.bf16.msra.mxu0 0
    %2856 = vmatprep.subr.bf16.mxu0 0
    %2857 = vmatpush2.bf16.msra.mxu0 0
    %2858 = vmatprep.subr.bf16.mxu0 0
    %2859 = vmatpush2.bf16.msra.mxu0 0
    %2860 = vmatprep.subr.bf16.mxu0 0
    %2861 = vmatpush2.bf16.msra.mxu0 0
    %2862 = vmatprep.mubr.bf16.mxu0 0
    %2863 = vmatmul.mubr.bf16.gmra.mxu0 %v2824
    %v2864 = vpop.f32.mrf.mxu0
    %v2865 = vadd.f32 0.0, %v2864
    %v2866 = vpop.f32.mrf.mxu0
    %v2867 = vadd.f32 0.0, %v2866
    %v2868 = vpop.f32.mrf.mxu0
    %v2869 = vpop.f32.mrf.mxu0
    %2870 = vdwg.mxu0
    %2871 = vmatprep.subr.bf16.mxu0 %v2155
    %2872 = vmatpush1.bf16.msra.mxu0 %v2154
    %2873 = vmatprep.subr.bf16.mxu0 %v2151
    %2874 = vmatpush1.bf16.msra.mxu0 %v2150
    %2875 = vmatprep.subr.bf16.mxu0 %v2147
    %2876 = vmatpush1.bf16.msra.mxu0 %v2146
    %2877 = vmatprep.subr.bf16.mxu0 %v2143
    %2878 = vmatpush1.bf16.msra.mxu0 %v2142
    %2879 = vmatprep.subr.bf16.mxu0 %v2139
    %2880 = vmatpush1.bf16.msra.mxu0 %v2138
    %2881 = vmatprep.subr.bf16.mxu0 %v2135
    %2882 = vmatpush1.bf16.msra.mxu0 %v2134
    %2883 = vmatprep.subr.bf16.mxu0 %v2131
    %2884 = vmatpush1.bf16.msra.mxu0 %v2130
    %2885 = vmatprep.subr.bf16.mxu0 %v2127
    %2886 = vmatpush1.bf16.msra.mxu0 %v2126
    %2887 = vmatprep.subr.bf16.mxu0 0
    %2888 = vmatpush2.bf16.msra.mxu0 0
    %2889 = vmatprep.subr.bf16.mxu0 0
    %2890 = vmatpush2.bf16.msra.mxu0 0
    %2891 = vmatprep.subr.bf16.mxu0 0
    %2892 = vmatpush2.bf16.msra.mxu0 0
    %2893 = vmatprep.subr.bf16.mxu0 0
    %2894 = vmatpush2.bf16.msra.mxu0 0
    %2895 = vmatprep.subr.bf16.mxu0 0
    %2896 = vmatpush2.bf16.msra.mxu0 0
    %2897 = vmatprep.subr.bf16.mxu0 0
    %2898 = vmatpush2.bf16.msra.mxu0 0
    %2899 = vmatprep.subr.bf16.mxu0 0
    %2900 = vmatpush2.bf16.msra.mxu0 0
    %2901 = vmatprep.subr.bf16.mxu0 0
    %2902 = vmatpush2.bf16.msra.mxu0 0
    %2903 = vmatprep.mubr.bf16.mxu0 0
    %2904 = vmatmul.mubr.bf16.gmra.mxu0 %v2824
    %v2905 = vpop.f32.mrf.mxu0
    %v2906 = vadd.f32 0.0, %v2905
    %v2907 = vpop.f32.mrf.mxu0
    %v2908 = vadd.f32 0.0, %v2907
    %v2909 = vpop.f32.mrf.mxu0
    %v2910 = vpop.f32.mrf.mxu0
    %2911 = vdwg.mxu0
    %v2912 = vadd.f32 %v2826, %v2865
    %v2913 = vadd.f32 %v2827, %v2867
    %v2914 = vadd.f32 %v2828, %v2906
    %v2915 = vadd.f32 %v2829, %v2908
    %v2916 = vtanh.pop %v2912
    %v2917 = vtanh.pop %v2913
    %v2918 = vtanh.pop %v2914
    %v2919 = vtanh.pop %v2915
    %v2920 = vadd.f32 %v2916, 1.0
    %v2921 = vmul.f32 %v2920, 0.5
    %v2922 = vadd.f32 %v2917, 1.0
    %v2923 = vmul.f32 %v2922, 0.5
    %v2924 = vadd.f32 %v2919, 1.0
    %v2925 = vmul.f32 %v2924, 0.5
    %v2926 = vmul.f32 %v2923, %v2821
    %v2927 = vmul.f32 %v2921, %v2918
    %v2928 = vadd.f32 %v2926, %v2927
    %v2929 = vtanh.pop %v2928
    %v2930 = vmul.f32 %v2925, %v2929
    %v2931 = vpack.c.bf16 %v2930, %v2930
    %2932 = vst [vmem:[#allocation2 + $0x18] sm:$0xf] %v2931
    %v2933 = vld [vmem:[#allocation3 + $0xe0] sm:$0xff]
    %v2934 = vld [vmem:[#allocation3 + $0xe8] sm:$0xff]
    %v2935 = vld [vmem:[#allocation3 + $0xf0] sm:$0xff]
    %v2936 = vld [vmem:[#allocation3 + $0xf8] sm:$0xff]
    %2937 = vmatprep.subr.bf16.mxu0 %v2153
    %2938 = vmatpush1.bf16.msra.mxu0 %v2152
    %2939 = vmatprep.subr.bf16.mxu0 %v2149
    %2940 = vmatpush1.bf16.msra.mxu0 %v2148
    %2941 = vmatprep.subr.bf16.mxu0 %v2145
    %2942 = vmatpush1.bf16.msra.mxu0 %v2144
    %2943 = vmatprep.subr.bf16.mxu0 %v2141
    %2944 = vmatpush1.bf16.msra.mxu0 %v2140
    %2945 = vmatprep.subr.bf16.mxu0 %v2137
    %2946 = vmatpush1.bf16.msra.mxu0 %v2136
    %2947 = vmatprep.subr.bf16.mxu0 %v2133
    %2948 = vmatpush1.bf16.msra.mxu0 %v2132
    %2949 = vmatprep.subr.bf16.mxu0 %v2129
    %2950 = vmatpush1.bf16.msra.mxu0 %v2128
    %2951 = vmatprep.subr.bf16.mxu0 %v2125
    %2952 = vmatpush1.bf16.msra.mxu0 %v2124
    %2953 = vmatprep.subr.bf16.mxu0 0
    %2954 = vmatpush2.bf16.msra.mxu0 0
    %2955 = vmatprep.subr.bf16.mxu0 0
    %2956 = vmatpush2.bf16.msra.mxu0 0
    %2957 = vmatprep.subr.bf16.mxu0 0
    %2958 = vmatpush2.bf16.msra.mxu0 0
    %2959 = vmatprep.subr.bf16.mxu0 0
    %2960 = vmatpush2.bf16.msra.mxu0 0
    %2961 = vmatprep.subr.bf16.mxu0 0
    %2962 = vmatpush2.bf16.msra.mxu0 0
    %2963 = vmatprep.subr.bf16.mxu0 0
    %2964 = vmatpush2.bf16.msra.mxu0 0
    %2965 = vmatprep.subr.bf16.mxu0 0
    %2966 = vmatpush2.bf16.msra.mxu0 0
    %2967 = vmatprep.subr.bf16.mxu0 0
    %2968 = vmatpush2.bf16.msra.mxu0 0
    %2969 = vmatprep.mubr.bf16.mxu0 0
    %2970 = vmatmul.mubr.bf16.gmra.mxu0 %v2931
    %v2971 = vpop.f32.mrf.mxu0
    %v2972 = vadd.f32 0.0, %v2971
    %v2973 = vpop.f32.mrf.mxu0
    %v2974 = vadd.f32 0.0, %v2973
    %v2975 = vpop.f32.mrf.mxu0
    %v2976 = vpop.f32.mrf.mxu0
    %2977 = vdwg.mxu0
    %2978 = vmatprep.subr.bf16.mxu0 %v2155
    %2979 = vmatpush1.bf16.msra.mxu0 %v2154
    %2980 = vmatprep.subr.bf16.mxu0 %v2151
    %2981 = vmatpush1.bf16.msra.mxu0 %v2150
    %2982 = vmatprep.subr.bf16.mxu0 %v2147
    %2983 = vmatpush1.bf16.msra.mxu0 %v2146
    %2984 = vmatprep.subr.bf16.mxu0 %v2143
    %2985 = vmatpush1.bf16.msra.mxu0 %v2142
    %2986 = vmatprep.subr.bf16.mxu0 %v2139
    %2987 = vmatpush1.bf16.msra.mxu0 %v2138
    %2988 = vmatprep.subr.bf16.mxu0 %v2135
    %2989 = vmatpush1.bf16.msra.mxu0 %v2134
    %2990 = vmatprep.subr.bf16.mxu0 %v2131
    %2991 = vmatpush1.bf16.msra.mxu0 %v2130
    %2992 = vmatprep.subr.bf16.mxu0 %v2127
    %2993 = vmatpush1.bf16.msra.mxu0 %v2126
    %2994 = vmatprep.subr.bf16.mxu0 0
    %2995 = vmatpush2.bf16.msra.mxu0 0
    %2996 = vmatprep.subr.bf16.mxu0 0
    %2997 = vmatpush2.bf16.msra.mxu0 0
    %2998 = vmatprep.subr.bf16.mxu0 0
    %2999 = vmatpush2.bf16.msra.mxu0 0
    %3000 = vmatprep.subr.bf16.mxu0 0
    %3001 = vmatpush2.bf16.msra.mxu0 0
    %3002 = vmatprep.subr.bf16.mxu0 0
    %3003 = vmatpush2.bf16.msra.mxu0 0
    %3004 = vmatprep.subr.bf16.mxu0 0
    %3005 = vmatpush2.bf16.msra.mxu0 0
    %3006 = vmatprep.subr.bf16.mxu0 0
    %3007 = vmatpush2.bf16.msra.mxu0 0
    %3008 = vmatprep.subr.bf16.mxu0 0
    %3009 = vmatpush2.bf16.msra.mxu0 0
    %3010 = vmatprep.mubr.bf16.mxu0 0
    %3011 = vmatmul.mubr.bf16.gmra.mxu0 %v2931
    %v3012 = vpop.f32.mrf.mxu0
    %v3013 = vadd.f32 0.0, %v3012
    %v3014 = vpop.f32.mrf.mxu0
    %v3015 = vadd.f32 0.0, %v3014
    %v3016 = vpop.f32.mrf.mxu0
    %v3017 = vpop.f32.mrf.mxu0
    %3018 = vdwg.mxu0
    %v3019 = vadd.f32 %v2933, %v2972
    %v3020 = vadd.f32 %v2934, %v2974
    %v3021 = vadd.f32 %v2935, %v3013
    %v3022 = vadd.f32 %v2936, %v3015
    %v3023 = vtanh.pop %v3019
    %v3024 = vtanh.pop %v3020
    %v3025 = vtanh.pop %v3021
    %v3026 = vtanh.pop %v3022
    %v3027 = vadd.f32 %v3023, 1.0
    %v3028 = vmul.f32 %v3027, 0.5
    %v3029 = vadd.f32 %v3024, 1.0
    %v3030 = vmul.f32 %v3029, 0.5
    %v3031 = vadd.f32 %v3026, 1.0
    %v3032 = vmul.f32 %v3031, 0.5
    %v3033 = vmul.f32 %v3030, %v2928
    %v3034 = vmul.f32 %v3028, %v3025
    %v3035 = vadd.f32 %v3033, %v3034
    %v3036 = vtanh.pop %v3035
    %v3037 = vmul.f32 %v3032, %v3036
    %v3038 = vpack.c.bf16 %v3037, %v3037
    %3039 = vst [vmem:[#allocation2 + $0x1c] sm:$0xf] %v3038
    %v3040 = vld [vmem:[#allocation2] sm:$0xf]
    %v3041 = vld [vmem:[#allocation2 + $0x4] sm:$0xf]
    %v3042 = vld [vmem:[#allocation2 + $0x8] sm:$0xf]
    %v3043 = vld [vmem:[#allocation2 + $0xc] sm:$0xf]
    %v3044 = vld [vmem:[#allocation2 + $0x10] sm:$0xf]
    %v3045 = vld [vmem:[#allocation2 + $0x14] sm:$0xf]
    %v3046 = vld [vmem:[#allocation2 + $0x18] sm:$0xf]
    %v3047 = vld [vmem:[#allocation2 + $0x1c] sm:$0xf]
    %v3048 = vld [vmem:[#allocation12] sm:$0xf]
    %v3049 = vld [vmem:[#allocation12 + $0x4] sm:$0xf]
    %v3050 = vld [vmem:[#allocation12 + $0x8] sm:$0xf]
    %v3051 = vld [vmem:[#allocation12 + $0xc] sm:$0xf]
    %v3052 = vld [vmem:[#allocation12 + $0x10] sm:$0xf]
    %v3053 = vld [vmem:[#allocation12 + $0x14] sm:$0xf]
    %v3054 = vld [vmem:[#allocation12 + $0x18] sm:$0xf]
    %v3055 = vld [vmem:[#allocation12 + $0x1c] sm:$0xf]
    %v3056 = vld [vmem:[#allocation12 + $0x20] sm:$0xf]
    %v3057 = vld [vmem:[#allocation12 + $0x24] sm:$0xf]
    %v3058 = vld [vmem:[#allocation12 + $0x28] sm:$0xf]
    %v3059 = vld [vmem:[#allocation12 + $0x2c] sm:$0xf]
    %v3060 = vld [vmem:[#allocation12 + $0x30] sm:$0xf]
    %v3061 = vld [vmem:[#allocation12 + $0x34] sm:$0xf]
    %v3062 = vld [vmem:[#allocation12 + $0x38] sm:$0xf]
    %v3063 = vld [vmem:[#allocation12 + $0x3c] sm:$0xf]
    %v3064 = vld [vmem:[%s5] sm:$0x1]
    %v3066 = vlaneseq
    %v3067 = vshrl.u32 %v3066, 7
    %v3068 = vsub.s32 0, %v3067
    %v3069 = vrot.slane %v3064, %v3068
    %v3079 = vunpack.c.l.b16 %v3040
    %v3080 = vunpack.c.l.b16 %v3041
    %v3081 = vunpack.c.l.b16 %v3042
    %v3082 = vunpack.c.l.b16 %v3043
    %v3083 = vunpack.c.l.b16 %v3044
    %v3084 = vunpack.c.l.b16 %v3045
    %v3085 = vunpack.c.l.b16 %v3046
    %v3086 = vunpack.c.l.b16 %v3047
    %v3087 = vpack.c.b16 %v3080, %v3079
    %v3088 = vpack.c.b16 %v3082, %v3081
    %v3089 = vpack.c.b16 %v3084, %v3083
    %v3090 = vpack.c.b16 %v3086, %v3085
    %v3111 = vunpack.c.l.b16 %v3048
    %v3112 = vunpack.c.l.b16 %v3049
    %v3113 = vunpack.c.l.b16 %v3050
    %v3114 = vunpack.c.l.b16 %v3051
    %v3115 = vunpack.c.l.b16 %v3052
    %v3116 = vunpack.c.l.b16 %v3053
    %v3117 = vunpack.c.l.b16 %v3054
    %v3118 = vunpack.c.l.b16 %v3055
    %v3119 = vunpack.c.l.b16 %v3056
    %v3120 = vunpack.c.l.b16 %v3057
    %v3121 = vunpack.c.l.b16 %v3058
    %v3122 = vunpack.c.l.b16 %v3059
    %v3123 = vunpack.c.l.b16 %v3060
    %v3124 = vunpack.c.l.b16 %v3061
    %v3125 = vunpack.c.l.b16 %v3062
    %v3126 = vunpack.c.l.b16 %v3063
    %v3127 = vpack.c.b16 %v3112, %v3111
    %v3128 = vpack.c.b16 %v3114, %v3113
    %v3129 = vpack.c.b16 %v3116, %v3115
    %v3130 = vpack.c.b16 %v3118, %v3117
    %v3131 = vpack.c.b16 %v3120, %v3119
    %v3132 = vpack.c.b16 %v3122, %v3121
    %v3133 = vpack.c.b16 %v3124, %v3123
    %v3134 = vpack.c.b16 %v3126, %v3125
    %3143 = vmatprep.subr.bf16.mxu0 0
    %3144 = vmatpush1.bf16.msra.mxu0 %v3134
    %3145 = vmatprep.subr.bf16.mxu0 0
    %3146 = vmatpush1.bf16.msra.mxu0 %v3133
    %3147 = vmatprep.subr.bf16.mxu0 0
    %3148 = vmatpush1.bf16.msra.mxu0 %v3132
    %3149 = vmatprep.subr.bf16.mxu0 0
    %3150 = vmatpush1.bf16.msra.mxu0 %v3131
    %3151 = vmatprep.subr.bf16.mxu0 0
    %3152 = vmatpush1.bf16.msra.mxu0 %v3130
    %3153 = vmatprep.subr.bf16.mxu0 0
    %3154 = vmatpush1.bf16.msra.mxu0 %v3129
    %3155 = vmatprep.subr.bf16.mxu0 0
    %3156 = vmatpush1.bf16.msra.mxu0 %v3128
    %3157 = vmatprep.subr.bf16.mxu0 0
    %3158 = vmatpush1.bf16.msra.mxu0 %v3127
    %3159 = vmatprep.subr.bf16.mxu0 0
    %3160 = vmatpush2.bf16.msra.mxu0 0
    %3161 = vmatprep.subr.bf16.mxu0 0
    %3162 = vmatpush2.bf16.msra.mxu0 0
    %3163 = vmatprep.subr.bf16.mxu0 0
    %3164 = vmatpush2.bf16.msra.mxu0 0
    %3165 = vmatprep.subr.bf16.mxu0 0
    %3166 = vmatpush2.bf16.msra.mxu0 0
    %3167 = vmatprep.subr.bf16.mxu0 0
    %3168 = vmatpush2.bf16.msra.mxu0 0
    %3169 = vmatprep.subr.bf16.mxu0 0
    %3170 = vmatpush2.bf16.msra.mxu0 0
    %3171 = vmatprep.subr.bf16.mxu0 0
    %3172 = vmatpush2.bf16.msra.mxu0 0
    %3173 = vmatprep.subr.bf16.mxu0 0
    %3174 = vmatpush2.bf16.msra.mxu0 0
    %3175 = vmatprep.mubr.bf16.mxu0 0
    %3176 = vmatmul.mubr.bf16.gmra.mxu0 %v3087
    %v3177 = vpop.f32.mrf.mxu0
    %v3178 = vadd.f32 %v3069, %v3177
    %v3179 = vpop.f32.mrf.mxu0
    %v3180 = vpop.f32.mrf.mxu0
    %v3181 = vadd.f32 %v3069, %v3180
    %v3182 = vpop.f32.mrf.mxu0
    %3183 = vmatprep.mubr.bf16.mxu0 0
    %3184 = vmatmul.mubr.bf16.gmra.mxu0 %v3088
    %v3185 = vpop.f32.mrf.mxu0
    %v3186 = vadd.f32 %v3069, %v3185
    %v3187 = vpop.f32.mrf.mxu0
    %v3188 = vpop.f32.mrf.mxu0
    %v3189 = vadd.f32 %v3069, %v3188
    %v3190 = vpop.f32.mrf.mxu0
    %3191 = vmatprep.mubr.bf16.mxu0 0
    %3192 = vmatmul.mubr.bf16.gmra.mxu0 %v3089
    %v3193 = vpop.f32.mrf.mxu0
    %v3194 = vadd.f32 %v3069, %v3193
    %v3195 = vpop.f32.mrf.mxu0
    %v3196 = vpop.f32.mrf.mxu0
    %v3197 = vadd.f32 %v3069, %v3196
    %v3198 = vpop.f32.mrf.mxu0
    %3199 = vmatprep.mubr.bf16.mxu0 0
    %3200 = vmatmul.mubr.bf16.gmra.mxu0 %v3090
    %v3201 = vpop.f32.mrf.mxu0
    %v3202 = vadd.f32 %v3069, %v3201
    %v3203 = vpop.f32.mrf.mxu0
    %v3204 = vpop.f32.mrf.mxu0
    %v3205 = vadd.f32 %v3069, %v3204
    %v3206 = vpop.f32.mrf.mxu0
    %3207 = vdwg.mxu0
    %v3208 = vmul.f32 %v3178, 0.5
    %v3209 = vmul.f32 %v3181, 0.5
    %v3210 = vmul.f32 %v3186, 0.5
    %v3211 = vmul.f32 %v3189, 0.5
    %v3212 = vmul.f32 %v3194, 0.5
    %v3213 = vmul.f32 %v3197, 0.5
    %v3214 = vmul.f32 %v3202, 0.5
    %v3215 = vmul.f32 %v3205, 0.5
    %v3216 = vtanh.pop %v3208
    %v3217 = vtanh.pop %v3209
    %v3218 = vtanh.pop %v3210
    %v3219 = vtanh.pop %v3211
    %v3220 = vtanh.pop %v3212
    %v3221 = vtanh.pop %v3213
    %v3222 = vtanh.pop %v3214
    %v3223 = vtanh.pop %v3215
    %v3224 = vadd.f32 %v3216, 1.0
    %v3225 = vadd.f32 %v3217, 1.0
    %v3226 = vadd.f32 %v3218, 1.0
    %v3227 = vadd.f32 %v3219, 1.0
    %v3228 = vadd.f32 %v3220, 1.0
    %v3229 = vadd.f32 %v3221, 1.0
    %v3230 = vadd.f32 %v3222, 1.0
    %v3231 = vadd.f32 %v3223, 1.0
    %v3232 = vmul.f32 %v3224, 0.5
    %v3233 = vmul.f32 %v3225, 0.5
    %v3234 = vmul.f32 %v3226, 0.5
    %v3235 = vmul.f32 %v3227, 0.5
    %v3236 = vmul.f32 %v3228, 0.5
    %v3237 = vmul.f32 %v3229, 0.5
    %v3238 = vmul.f32 %v3230, 0.5
    %v3239 = vmul.f32 %v3231, 0.5
    %3240 = vst [vmem:[#allocation13] sm:$0xff] %v3232
    %3241 = vst [vmem:[#allocation13 + $0x8] sm:$0xff] %v3233
    %3242 = vst [vmem:[#allocation13 + $0x10] sm:$0xff] %v3234
    %3243 = vst [vmem:[#allocation13 + $0x18] sm:$0xff] %v3235
    %3244 = vst [vmem:[#allocation13 + $0x20] sm:$0xff] %v3236
    %3245 = vst [vmem:[#allocation13 + $0x28] sm:$0xff] %v3237
    %3246 = vst [vmem:[#allocation13 + $0x30] sm:$0xff] %v3238
    %3247 = vst [vmem:[#allocation13 + $0x38] sm:$0xff] %v3239
    // Predicated region
    $region46: #{tpu_custom_call.1} parent=1 // pred_check
      _
    $region47: #{tpu_custom_call.1} parent=1 // pred_check_branch
      %3249 = sbr.rel (0) target = $region49
    $region48: #{tpu_custom_call.1} parent=1 // pred_region
      %s3251 = ssub.s32 1024, 1024
      %3252 = vsyncadd [#allocation6], %s3251
      %s3253 = sshll.u32 [#allocation13], 4
      %s3254 = int_to_ptr.vmem [resolvable:$true] %s3253
      %3259 = dma.vmem_to_hbm [thread:$0]  %s3254, 1024, %s6, [#allocation6], 128, 128, 8
    $region49: #{tpu_custom_call.1} parent=1 // pred_fallthru
      _
    // Predicated region
    $region50: #{tpu_custom_call.1} parent=1 // pred_check
      _
    $region51: #{tpu_custom_call.1} parent=1 // pred_check_branch
      %3261 = sbr.rel (0) target = $region53
    $region52: #{tpu_custom_call.1} parent=1 // pred_region
      %3262 = dma.done [#allocation6], 1024
    $region53: #{tpu_custom_call.1} parent=1 // pred_fallthru
      _
    %3263 = vsyncpa [#allocation5], 1
    %3264 = vsyncpa [#allocation8], 1
    %3265 = vsyncpa [#allocation11], 1
    %3266 = vsyncpa [#allocation6], 1

</llo_original>
